<compile_context>
chip_gen: v5e
topology: v5e:2x2
jax: 0.10.0
libtpu: 0.0.40
codegen_flags: <defaults>
</compile_context>

<pallas_src>
import functools
import math

import jax
import jax.numpy as jnp
from jax.experimental import pallas as pl
from jax.experimental.pallas import tpu as pltpu

LN_EPS = 1e-12          # BertConfig.layer_norm_eps default
MASK_BIAS = -10000.0    # classic HF extended-attention-mask fill value


# ---------------------------------------------------------------------------
# In-kernel helpers
# ---------------------------------------------------------------------------
def _layernorm(x, gamma, beta):
    mean = jnp.mean(x, axis=-1, keepdims=True)
    xc = x - mean
    var = jnp.mean(xc * xc, axis=-1, keepdims=True)
    return xc * jax.lax.rsqrt(var + LN_EPS) * gamma + beta


def _gelu_exact(x):
    # erf-based ("exact") GELU, matching nn.GELU() / BERT hidden_act="gelu".
    # TODO(synk): no native lax.erf lowering in Mosaic; erf is approximated with
    # Abramowitz–Stegun 7.1.26 (|abs err| < 1.5e-7).  A tanh-GELU (single EUP op)
    # would be cheaper on v5e but deviates more from nn.GELU, so the poly is kept.
    z = x * (1.0 / math.sqrt(2.0))
    a = jnp.abs(z)
    t = 1.0 / (1.0 + 0.3275911 * a)
    poly = t * (0.254829592 + t * (-0.284496736 + t * (1.421413741
                + t * (-1.453152027 + t * 1.061405429))))
    erf_abs = 1.0 - poly * jnp.exp(-a * a)
    erf = jnp.where(z >= 0.0, erf_abs, -erf_abs)
    return 0.5 * x * (1.0 + erf)


def _softmax_lastdim(s):
    s = s - jnp.max(s, axis=-1, keepdims=True)
    p = jnp.exp(s)
    return p / jnp.sum(p, axis=-1, keepdims=True)


# ---------------------------------------------------------------------------
# Fused kernel: embedding LN -> L BERT layers -> masked-mean pool -> disc MLP
# ---------------------------------------------------------------------------
def seq_disc_kernel(emb_ref, mask_ref, wqkv_ref, wo_ref, wi_ref, wo2_ref,
                    vec_ref, bi_ref, head_w_ref, small_ref, out_ref,
                    *, num_layers, num_heads, batch, seq):
    M, D = emb_ref.shape                   # M = B*S tokens (flat slab for matmuls)
    B, S, H = batch, seq, num_heads
    hd = D // H
    scale = 1.0 / math.sqrt(hd)
    bf16 = jnp.bfloat16

    # (B, 1, S) additive key-mask bias built in-kernel from the raw (B, S) mask:
    # 0 for valid keys, -10000 for masked keys (probs underflow to exactly 0).
    maskf = mask_ref[...]                                       # (B, S) f32
    bias = ((maskf - 1.0) * (-MASK_BIAS))[:, None, :]           # (B, 1, S)

    # Embedding LayerNorm (dropout = identity at inference).
    x = _layernorm(emb_ref[...], small_ref[0:1], small_ref[1:2])   # (M, D) f32

    for l in range(num_layers):                 # static unroll, L small
        vec_l = vec_ref[l]                      # (9, D): bq bk bv bo g1 b1 bo2 g2 b2

        # ---- fused QKV projection: one lane-dense (M,D)x(D,3D) bf16 matmul ----
        qkv = jnp.dot(x.astype(bf16), wqkv_ref[l],
                      preferred_element_type=jnp.float32)          # (M, 3D) f32
        q = (qkv[:, 0 * D:1 * D] + vec_l[0:1]).reshape(B, S, D)
        k = (qkv[:, 1 * D:2 * D] + vec_l[1:2]).reshape(B, S, D)
        v = (qkv[:, 2 * D:3 * D] + vec_l[2:3]).reshape(B, S, D)

        # ---- per-sequence attention; heads handled as lane slices so the only
        #      einsum batch dim is the leading B (no cross-sublane relayout) ----
        ctx_heads = []
        for h in range(H):
            lo, hi = h * hd, (h + 1) * hd
            s = jnp.einsum('bqd,bkd->bqk',
                           q[:, :, lo:hi].astype(bf16),
                           k[:, :, lo:hi].astype(bf16),
                           preferred_element_type=jnp.float32) * scale + bias
            p = _softmax_lastdim(s)                                # (B, S, S) f32
            ctx_heads.append(jnp.einsum('bqk,bkd->bqd',
                                        p.astype(bf16),
                                        v[:, :, lo:hi].astype(bf16),
                                        preferred_element_type=jnp.float32))
        ctx = jnp.concatenate(ctx_heads, axis=-1).reshape(M, D)    # heads on lanes

        # ---- fused output projection: single (M,D)x(D,D) matmul ----
        attn = jnp.dot(ctx.astype(bf16), wo_ref[l],
                       preferred_element_type=jnp.float32) + vec_l[3:4]
        x = _layernorm(x + attn, vec_l[4:5], vec_l[5:6])

        # ---- feed-forward ----
        hmid = _gelu_exact(jnp.dot(x.astype(bf16), wi_ref[l],
                                   preferred_element_type=jnp.float32) + bi_ref[l])
        ffn = jnp.dot(hmid.astype(bf16), wo2_ref[l],
                      preferred_element_type=jnp.float32) + vec_l[6:7]
        x = _layernorm(x + ffn, vec_l[7:8], vec_l[8:9])

    # ---- masked mean pool (denominator guarded) + disc MLP head ----
    denom = jnp.maximum(jnp.sum(maskf, axis=1, keepdims=True), 1.0)    # (B, 1)
    poolw = maskf / denom                                              # (B, S)
    pooled = jnp.sum(x.reshape(B, S, D) * poolw[:, :, None], axis=1)   # (B, D) f32

    z = _gelu_exact(jnp.dot(pooled.astype(bf16), head_w_ref[0],
                            preferred_element_type=jnp.float32) + small_ref[2:3])
    z = _gelu_exact(jnp.dot(z.astype(bf16), head_w_ref[1],
                            preferred_element_type=jnp.float32) + small_ref[3:4])
    # Final (D -> 1) linear as a lane reduce (avoids an N=1 masked-store matmul).
    out_ref[...] = (jnp.sum(z * small_ref[4:5], axis=-1, keepdims=True)
                    + small_ref[5:6, 0:1])


# ---------------------------------------------------------------------------
# Parameter init (deterministic, synthetic; BERT-style N(0, 0.02))
# ---------------------------------------------------------------------------
def init_params(key, dim, layer_num, vocab, max_pos, intermediate):
    std = 0.02
    keys = iter(jax.random.split(key, 8 * layer_num + 16))

    def dense(shape):
        return std * jax.random.normal(next(keys), shape, jnp.float32)

    params = {
        "word_emb": dense((vocab, dim)),
        "pos_emb": dense((max_pos, dim)),
        "type_emb": dense((2, dim)),
        "emb_ln_g": jnp.ones((1, dim), jnp.float32),
        "emb_ln_b": jnp.zeros((1, dim), jnp.float32),
        "layers": [],
    }
    for _ in range(layer_num):
        layer = (
            dense((dim, dim)), jnp.zeros((1, dim), jnp.float32),   # Wq, bq
            dense((dim, dim)), jnp.zeros((1, dim), jnp.float32),   # Wk, bk
            dense((dim, dim)), jnp.zeros((1, dim), jnp.float32),   # Wv, bv
            dense((dim, dim)), jnp.zeros((1, dim), jnp.float32),   # Wo, bo
            jnp.ones((1, dim), jnp.float32), jnp.zeros((1, dim), jnp.float32),   # LN1
            dense((dim, intermediate)), jnp.zeros((1, intermediate), jnp.float32),  # Wi, bi
            dense((intermediate, dim)), jnp.zeros((1, dim), jnp.float32),            # Wo2, bo2
            jnp.ones((1, dim), jnp.float32), jnp.zeros((1, dim), jnp.float32),   # LN2
        )
        params["layers"].append(layer)
    params["head"] = (
        dense((dim, dim)), jnp.zeros((1, dim), jnp.float32),
        dense((dim, dim)), jnp.zeros((1, dim), jnp.float32),
        dense((dim, 1)), jnp.zeros((1, 1), jnp.float32),
    )
    return params


# ---------------------------------------------------------------------------
# Full forward (mirrors SequenceDiscriminator.forward), one pallas_call
# ---------------------------------------------------------------------------
def sequence_discriminator(params, input_ids, mask=None, *, head_num=8):
    B, S = input_ids.shape
    D = params["word_emb"].shape[1]
    L = len(params["layers"])
    M = B * S
    f32, bf16 = jnp.float32, jnp.bfloat16

    maskf = jnp.ones((B, S), f32) if mask is None else mask.astype(f32)

    # BertEmbeddings gathers stay in XLA; tokens flattened to a (B*S, D) slab.
    emb = (jnp.take(params["word_emb"], input_ids, axis=0)
           + params["pos_emb"][:S][None, :, :]
           + params["type_emb"][0][None, None, :]).reshape(M, D).astype(f32)

    Ls = params["layers"]
    # Fused QKV slab (L, D, 3D); remaining matmul weights stacked over layers.
    wqkv = jnp.stack([jnp.concatenate([lp[0], lp[2], lp[4]], axis=1)
                      for lp in Ls]).astype(bf16)              # (L, D, 3D)
    wo = jnp.stack([lp[6] for lp in Ls]).astype(bf16)          # (L, D, D)
    wi = jnp.stack([lp[10] for lp in Ls]).astype(bf16)         # (L, D, I)
    wo2 = jnp.stack([lp[12] for lp in Ls]).astype(bf16)        # (L, I, D)
    # All D-wide per-layer vectors in one slab: rows = bq bk bv bo g1 b1 bo2 g2 b2.
    vec = jnp.stack([jnp.concatenate([lp[1], lp[3], lp[5], lp[7], lp[8], lp[9],
                                      lp[13], lp[14], lp[15]], axis=0)
                     for lp in Ls]).astype(f32)                # (L, 9, D)
    bi = jnp.stack([lp[11] for lp in Ls]).astype(f32)          # (L, 1, I)

    hw1, hb1, hw2, hb2, hw3, hb3 = params["head"]
    head_w = jnp.stack([hw1, hw2]).astype(bf16)                # (2, D, D)
    hb3_row = jnp.zeros((1, D), f32).at[0, 0].set(hb3[0, 0])
    # Small f32 slab: rows = emb_ln_g, emb_ln_b, hb1, hb2, hw3 (as row), hb3 (col 0).
    small = jnp.concatenate([params["emb_ln_g"], params["emb_ln_b"],
                             hb1, hb2, hw3.reshape(1, D), hb3_row],
                            axis=0).astype(f32)                # (6, D)

    out = pl.pallas_call(
        functools.partial(seq_disc_kernel, num_layers=L, num_heads=head_num,
                          batch=B, seq=S),
        out_shape=jax.ShapeDtypeStruct((B, 1), f32),
        # No grid: the whole model (<1 MiB of weights/activations here) stays
        # resident in VMEM for a single invocation.
        # TODO(synk): at real sizes, add a parallel batch/row-tile grid so v7x's
        # second TensorCore is used and the matmul M dim feeds full MXU rows.
        compiler_params=pltpu.CompilerParams(vmem_limit_bytes=16 * 1024 * 1024),
    )(emb, maskf, wqkv, wo, wi, wo2, vec, bi, head_w, small)
    return out[:, 0]                                           # .squeeze(-1)


if __name__ == "__main__":
    B, S, DIM = 2, 8, 64
    LAYERS, HEADS = 3, 8
    VOCAB, MAX_POS = 100, 64
    INTER = 4 * DIM   # BertConfig default intermediate ratio (4x hidden)

    key = jax.random.PRNGKey(0)
    kp, kid = jax.random.split(key)
    params = init_params(kp, DIM, LAYERS, VOCAB, MAX_POS, INTER)
    input_ids = jax.random.randint(kid, (B, S), 0, VOCAB, dtype=jnp.int32)
    mask = jnp.array([[1, 1, 1, 1, 1, 1, 1, 1],
                      [1, 1, 1, 1, 1, 1, 0, 0]], dtype=jnp.float32)

    out = sequence_discriminator(params, input_ids, mask, head_num=HEADS)
    out = jax.block_until_ready(out)
    assert out.shape == (B,), out.shape
    assert bool(jnp.all(jnp.isfinite(out)))

    # mask=None path (plain mean pooling) also exercised.
    out2 = jax.block_until_ready(sequence_discriminator(params, input_ids, None,
                                                        head_num=HEADS))
    assert out2.shape == (B,) and bool(jnp.all(jnp.isfinite(out2)))
    print("KERNEL_OK")
</pallas_src>

<mosaic_0001>
module attributes {stable_mosaic.version = 11 : i64} {
  func.func @seq_disc_kernel(%arg0: memref<16x64xf32, #tpu.memory_space<vmem>>, %arg1: memref<2x8xf32, #tpu.memory_space<vmem>>, %arg2: memref<3x64x192xbf16, #tpu.memory_space<vmem>>, %arg3: memref<3x64x64xbf16, #tpu.memory_space<vmem>>, %arg4: memref<3x64x256xbf16, #tpu.memory_space<vmem>>, %arg5: memref<3x256x64xbf16, #tpu.memory_space<vmem>>, %arg6: memref<3x9x64xf32, #tpu.memory_space<vmem>>, %arg7: memref<3x1x256xf32, #tpu.memory_space<vmem>>, %arg8: memref<2x64x64xbf16, #tpu.memory_space<vmem>>, %arg9: memref<6x64xf32, #tpu.memory_space<vmem>>, %arg10: memref<2x1xf32, #tpu.memory_space<vmem>>) attributes {dimension_semantics = [], scalar_prefetch = 0 : i64, scratch_operands = 0 : i64, tpu.core_type = #tpu.core_type<tc>} {
    %c0 = arith.constant 0 : index
    %c0_0 = arith.constant 0 : index
    %0 = vector.load %arg1[%c0, %c0_0] : memref<2x8xf32, #tpu.memory_space<vmem>>, vector<2x8xf32>
    %cst = arith.constant 1.000000e+00 : f32
    %1 = vector.broadcast %cst : f32 to vector<2x8xf32>
    %2 = arith.subf %0, %1 : vector<2x8xf32>
    %cst_1 = arith.constant 1.000000e+04 : f32
    %3 = vector.broadcast %cst_1 : f32 to vector<2x8xf32>
    %4 = arith.mulf %2, %3 : vector<2x8xf32>
    %5 = vector.shape_cast %4 : vector<2x8xf32> to vector<2x1x8xf32>
    %c0_2 = arith.constant 0 : index
    %c0_3 = arith.constant 0 : index
    %6 = vector.load %arg0[%c0_2, %c0_3] : memref<16x64xf32, #tpu.memory_space<vmem>>, vector<16x64xf32>
    %c0_4 = arith.constant 0 : index
    %c0_5 = arith.constant 0 : index
    %7 = vector.load %arg9[%c0_4, %c0_5] : memref<6x64xf32, #tpu.memory_space<vmem>>, vector<1x64xf32>
    %c1 = arith.constant 1 : index
    %c0_6 = arith.constant 0 : index
    %8 = vector.load %arg9[%c1, %c0_6] : memref<6x64xf32, #tpu.memory_space<vmem>>, vector<1x64xf32>
    %cst_7 = arith.constant dense<0.000000e+00> : vector<16xf32>
    %9 = vector.multi_reduction <add>, %6, %cst_7 [1] : vector<16x64xf32> to vector<16xf32>
    %10 = vector.shape_cast %9 : vector<16xf32> to vector<16x1xf32>
    %cst_8 = arith.constant 6.400000e+01 : f32
    %11 = vector.broadcast %cst_8 : f32 to vector<16x1xf32>
    %12 = arith.divf %10, %11 : vector<16x1xf32>
    %13 = vector.broadcast %12 : vector<16x1xf32> to vector<16x64xf32>
    %14 = arith.subf %6, %13 : vector<16x64xf32>
    %15 = arith.mulf %14, %14 : vector<16x64xf32>
    %cst_9 = arith.constant dense<0.000000e+00> : vector<16xf32>
    %16 = vector.multi_reduction <add>, %15, %cst_9 [1] : vector<16x64xf32> to vector<16xf32>
    %17 = vector.shape_cast %16 : vector<16xf32> to vector<16x1xf32>
    %cst_10 = arith.constant 6.400000e+01 : f32
    %18 = vector.broadcast %cst_10 : f32 to vector<16x1xf32>
    %19 = arith.divf %17, %18 : vector<16x1xf32>
    %cst_11 = arith.constant 9.99999996E-13 : f32
    %20 = vector.broadcast %cst_11 : f32 to vector<16x1xf32>
    %21 = arith.addf %19, %20 : vector<16x1xf32>
    %22 = math.rsqrt %21 : vector<16x1xf32>
    %23 = vector.broadcast %22 : vector<16x1xf32> to vector<16x64xf32>
    %24 = arith.mulf %14, %23 : vector<16x64xf32>
    %25 = vector.broadcast %7 : vector<1x64xf32> to vector<16x64xf32>
    %26 = arith.mulf %24, %25 : vector<16x64xf32>
    %27 = vector.broadcast %8 : vector<1x64xf32> to vector<16x64xf32>
    %28 = arith.addf %26, %27 : vector<16x64xf32>
    %c0_12 = arith.constant 0 : index
    %c0_13 = arith.constant 0 : index
    %c0_14 = arith.constant 0 : index
    %29 = vector.load %arg6[%c0_12, %c0_13, %c0_14] : memref<3x9x64xf32, #tpu.memory_space<vmem>>, vector<1x9x64xf32>
    %30 = vector.shape_cast %29 : vector<1x9x64xf32> to vector<9x64xf32>
    %31 = arith.truncf %28 : vector<16x64xf32> to vector<16x64xbf16>
    %c0_15 = arith.constant 0 : index
    %c0_16 = arith.constant 0 : index
    %c0_17 = arith.constant 0 : index
    %32 = vector.load %arg2[%c0_15, %c0_16, %c0_17] : memref<3x64x192xbf16, #tpu.memory_space<vmem>>, vector<1x64x192xbf16>
    %33 = vector.shape_cast %32 : vector<1x64x192xbf16> to vector<64x192xbf16>
    %cst_18 = arith.constant dense<0.000000e+00> : vector<16x192xf32>
    %34 = tpu.matmul %31, %33, %cst_18 {dimension_numbers = #tpu.dot_dimension_numbers<[1], [0], [0], [1], [0, 0, 1, 1], [], []>} : vector<16x64xbf16>, vector<64x192xbf16>, vector<16x192xf32> -> vector<16x192xf32>
    %35 = vector.extract_strided_slice %34 {offsets = [0, 0], sizes = [16, 64], strides = [1, 1]} : vector<16x192xf32> to vector<16x64xf32>
    %36 = vector.extract_strided_slice %30 {offsets = [0, 0], sizes = [1, 64], strides = [1, 1]} : vector<9x64xf32> to vector<1x64xf32>
    %37 = vector.broadcast %36 : vector<1x64xf32> to vector<16x64xf32>
    %38 = arith.addf %35, %37 : vector<16x64xf32>
    %39 = vector.shape_cast %38 : vector<16x64xf32> to vector<2x8x64xf32>
    %40 = vector.extract_strided_slice %34 {offsets = [0, 64], sizes = [16, 64], strides = [1, 1]} : vector<16x192xf32> to vector<16x64xf32>
    %41 = vector.extract_strided_slice %30 {offsets = [1, 0], sizes = [1, 64], strides = [1, 1]} : vector<9x64xf32> to vector<1x64xf32>
    %42 = vector.broadcast %41 : vector<1x64xf32> to vector<16x64xf32>
    %43 = arith.addf %40, %42 : vector<16x64xf32>
    %44 = vector.shape_cast %43 : vector<16x64xf32> to vector<2x8x64xf32>
    %45 = vector.extract_strided_slice %34 {offsets = [0, 128], sizes = [16, 64], strides = [1, 1]} : vector<16x192xf32> to vector<16x64xf32>
    %46 = vector.extract_strided_slice %30 {offsets = [2, 0], sizes = [1, 64], strides = [1, 1]} : vector<9x64xf32> to vector<1x64xf32>
    %47 = vector.broadcast %46 : vector<1x64xf32> to vector<16x64xf32>
    %48 = arith.addf %45, %47 : vector<16x64xf32>
    %49 = vector.shape_cast %48 : vector<16x64xf32> to vector<2x8x64xf32>
    %50 = vector.extract_strided_slice %39 {offsets = [0, 0, 0], sizes = [2, 8, 8], strides = [1, 1, 1]} : vector<2x8x64xf32> to vector<2x8x8xf32>
    %51 = arith.truncf %50 : vector<2x8x8xf32> to vector<2x8x8xbf16>
    %52 = vector.extract_strided_slice %44 {offsets = [0, 0, 0], sizes = [2, 8, 8], strides = [1, 1, 1]} : vector<2x8x64xf32> to vector<2x8x8xf32>
    %53 = arith.truncf %52 : vector<2x8x8xf32> to vector<2x8x8xbf16>
    "tpu.trace_start"() <{level = 10 : i32, message = "bqd,bkd->bqk"}> : () -> ()
    %cst_19 = arith.constant dense<0.000000e+00> : vector<2x8x8xf32>
    %54 = tpu.matmul %51, %53, %cst_19 {dimension_numbers = #tpu.dot_dimension_numbers<[2], [2], [1], [1], [0, 0, 0, 1, 1, 1], [0], [0]>} : vector<2x8x8xbf16>, vector<2x8x8xbf16>, vector<2x8x8xf32> -> vector<2x8x8xf32>
    "tpu.trace_stop"() : () -> ()
    %cst_20 = arith.constant 0.353553385 : f32
    %55 = vector.broadcast %cst_20 : f32 to vector<2x8x8xf32>
    %56 = arith.mulf %54, %55 : vector<2x8x8xf32>
    %57 = vector.broadcast %5 : vector<2x1x8xf32> to vector<2x8x8xf32>
    %58 = arith.addf %56, %57 : vector<2x8x8xf32>
    %cst_21 = arith.constant dense<0xFF800000> : vector<2x8xf32>
    %59 = vector.multi_reduction <maximumf>, %58, %cst_21 [2] : vector<2x8x8xf32> to vector<2x8xf32>
    %60 = vector.shape_cast %59 : vector<2x8xf32> to vector<2x8x1xf32>
    %61 = vector.broadcast %60 : vector<2x8x1xf32> to vector<2x8x8xf32>
    %62 = arith.subf %58, %61 : vector<2x8x8xf32>
    %63 = math.exp %62 : vector<2x8x8xf32>
    %cst_22 = arith.constant dense<0.000000e+00> : vector<2x8xf32>
    %64 = vector.multi_reduction <add>, %63, %cst_22 [2] : vector<2x8x8xf32> to vector<2x8xf32>
    %65 = vector.shape_cast %64 : vector<2x8xf32> to vector<2x8x1xf32>
    %66 = vector.broadcast %65 : vector<2x8x1xf32> to vector<2x8x8xf32>
    %67 = arith.divf %63, %66 : vector<2x8x8xf32>
    %68 = arith.truncf %67 : vector<2x8x8xf32> to vector<2x8x8xbf16>
    %69 = vector.extract_strided_slice %49 {offsets = [0, 0, 0], sizes = [2, 8, 8], strides = [1, 1, 1]} : vector<2x8x64xf32> to vector<2x8x8xf32>
    %70 = arith.truncf %69 : vector<2x8x8xf32> to vector<2x8x8xbf16>
    "tpu.trace_start"() <{level = 10 : i32, message = "bqk,bkd->bqd"}> : () -> ()
    %cst_23 = arith.constant dense<0.000000e+00> : vector<2x8x8xf32>
    %71 = tpu.matmul %68, %70, %cst_23 {dimension_numbers = #tpu.dot_dimension_numbers<[2], [1], [1], [2], [0, 0, 0, 1, 1, 2], [0], [0]>} : vector<2x8x8xbf16>, vector<2x8x8xbf16>, vector<2x8x8xf32> -> vector<2x8x8xf32>
    "tpu.trace_stop"() : () -> ()
    %72 = vector.extract_strided_slice %39 {offsets = [0, 0, 8], sizes = [2, 8, 8], strides = [1, 1, 1]} : vector<2x8x64xf32> to vector<2x8x8xf32>
    %73 = arith.truncf %72 : vector<2x8x8xf32> to vector<2x8x8xbf16>
    %74 = vector.extract_strided_slice %44 {offsets = [0, 0, 8], sizes = [2, 8, 8], strides = [1, 1, 1]} : vector<2x8x64xf32> to vector<2x8x8xf32>
    %75 = arith.truncf %74 : vector<2x8x8xf32> to vector<2x8x8xbf16>
    "tpu.trace_start"() <{level = 10 : i32, message = "bqd,bkd->bqk"}> : () -> ()
    %cst_24 = arith.constant dense<0.000000e+00> : vector<2x8x8xf32>
    %76 = tpu.matmul %73, %75, %cst_24 {dimension_numbers = #tpu.dot_dimension_numbers<[2], [2], [1], [1], [0, 0, 0, 1, 1, 1], [0], [0]>} : vector<2x8x8xbf16>, vector<2x8x8xbf16>, vector<2x8x8xf32> -> vector<2x8x8xf32>
    "tpu.trace_stop"() : () -> ()
    %cst_25 = arith.constant 0.353553385 : f32
    %77 = vector.broadcast %cst_25 : f32 to vector<2x8x8xf32>
    %78 = arith.mulf %76, %77 : vector<2x8x8xf32>
    %79 = vector.broadcast %5 : vector<2x1x8xf32> to vector<2x8x8xf32>
    %80 = arith.addf %78, %79 : vector<2x8x8xf32>
    %cst_26 = arith.constant dense<0xFF800000> : vector<2x8xf32>
    %81 = vector.multi_reduction <maximumf>, %80, %cst_26 [2] : vector<2x8x8xf32> to vector<2x8xf32>
    %82 = vector.shape_cast %81 : vector<2x8xf32> to vector<2x8x1xf32>
    %83 = vector.broadcast %82 : vector<2x8x1xf32> to vector<2x8x8xf32>
    %84 = arith.subf %80, %83 : vector<2x8x8xf32>
    %85 = math.exp %84 : vector<2x8x8xf32>
    %cst_27 = arith.constant dense<0.000000e+00> : vector<2x8xf32>
    %86 = vector.multi_reduction <add>, %85, %cst_27 [2] : vector<2x8x8xf32> to vector<2x8xf32>
    %87 = vector.shape_cast %86 : vector<2x8xf32> to vector<2x8x1xf32>
    %88 = vector.broadcast %87 : vector<2x8x1xf32> to vector<2x8x8xf32>
    %89 = arith.divf %85, %88 : vector<2x8x8xf32>
    %90 = arith.truncf %89 : vector<2x8x8xf32> to vector<2x8x8xbf16>
    %91 = vector.extract_strided_slice %49 {offsets = [0, 0, 8], sizes = [2, 8, 8], strides = [1, 1, 1]} : vector<2x8x64xf32> to vector<2x8x8xf32>
    %92 = arith.truncf %91 : vector<2x8x8xf32> to vector<2x8x8xbf16>
    "tpu.trace_start"() <{level = 10 : i32, message = "bqk,bkd->bqd"}> : () -> ()
    %cst_28 = arith.constant dense<0.000000e+00> : vector<2x8x8xf32>
    %93 = tpu.matmul %90, %92, %cst_28 {dimension_numbers = #tpu.dot_dimension_numbers<[2], [1], [1], [2], [0, 0, 0, 1, 1, 2], [0], [0]>} : vector<2x8x8xbf16>, vector<2x8x8xbf16>, vector<2x8x8xf32> -> vector<2x8x8xf32>
    "tpu.trace_stop"() : () -> ()
    %94 = vector.extract_strided_slice %39 {offsets = [0, 0, 16], sizes = [2, 8, 8], strides = [1, 1, 1]} : vector<2x8x64xf32> to vector<2x8x8xf32>
    %95 = arith.truncf %94 : vector<2x8x8xf32> to vector<2x8x8xbf16>
    %96 = vector.extract_strided_slice %44 {offsets = [0, 0, 16], sizes = [2, 8, 8], strides = [1, 1, 1]} : vector<2x8x64xf32> to vector<2x8x8xf32>
    %97 = arith.truncf %96 : vector<2x8x8xf32> to vector<2x8x8xbf16>
    "tpu.trace_start"() <{level = 10 : i32, message = "bqd,bkd->bqk"}> : () -> ()
    %cst_29 = arith.constant dense<0.000000e+00> : vector<2x8x8xf32>
    %98 = tpu.matmul %95, %97, %cst_29 {dimension_numbers = #tpu.dot_dimension_numbers<[2], [2], [1], [1], [0, 0, 0, 1, 1, 1], [0], [0]>} : vector<2x8x8xbf16>, vector<2x8x8xbf16>, vector<2x8x8xf32> -> vector<2x8x8xf32>
    "tpu.trace_stop"() : () -> ()
    %cst_30 = arith.constant 0.353553385 : f32
    %99 = vector.broadcast %cst_30 : f32 to vector<2x8x8xf32>
    %100 = arith.mulf %98, %99 : vector<2x8x8xf32>
    %101 = vector.broadcast %5 : vector<2x1x8xf32> to vector<2x8x8xf32>
    %102 = arith.addf %100, %101 : vector<2x8x8xf32>
    %cst_31 = arith.constant dense<0xFF800000> : vector<2x8xf32>
    %103 = vector.multi_reduction <maximumf>, %102, %cst_31 [2] : vector<2x8x8xf32> to vector<2x8xf32>
    %104 = vector.shape_cast %103 : vector<2x8xf32> to vector<2x8x1xf32>
    %105 = vector.broadcast %104 : vector<2x8x1xf32> to vector<2x8x8xf32>
    %106 = arith.subf %102, %105 : vector<2x8x8xf32>
    %107 = math.exp %106 : vector<2x8x8xf32>
    %cst_32 = arith.constant dense<0.000000e+00> : vector<2x8xf32>
    %108 = vector.multi_reduction <add>, %107, %cst_32 [2] : vector<2x8x8xf32> to vector<2x8xf32>
    %109 = vector.shape_cast %108 : vector<2x8xf32> to vector<2x8x1xf32>
    %110 = vector.broadcast %109 : vector<2x8x1xf32> to vector<2x8x8xf32>
    %111 = arith.divf %107, %110 : vector<2x8x8xf32>
    %112 = arith.truncf %111 : vector<2x8x8xf32> to vector<2x8x8xbf16>
    %113 = vector.extract_strided_slice %49 {offsets = [0, 0, 16], sizes = [2, 8, 8], strides = [1, 1, 1]} : vector<2x8x64xf32> to vector<2x8x8xf32>
    %114 = arith.truncf %113 : vector<2x8x8xf32> to vector<2x8x8xbf16>
    "tpu.trace_start"() <{level = 10 : i32, message = "bqk,bkd->bqd"}> : () -> ()
    %cst_33 = arith.constant dense<0.000000e+00> : vector<2x8x8xf32>
    %115 = tpu.matmul %112, %114, %cst_33 {dimension_numbers = #tpu.dot_dimension_numbers<[2], [1], [1], [2], [0, 0, 0, 1, 1, 2], [0], [0]>} : vector<2x8x8xbf16>, vector<2x8x8xbf16>, vector<2x8x8xf32> -> vector<2x8x8xf32>
    "tpu.trace_stop"() : () -> ()
    %116 = vector.extract_strided_slice %39 {offsets = [0, 0, 24], sizes = [2, 8, 8], strides = [1, 1, 1]} : vector<2x8x64xf32> to vector<2x8x8xf32>
    %117 = arith.truncf %116 : vector<2x8x8xf32> to vector<2x8x8xbf16>
    %118 = vector.extract_strided_slice %44 {offsets = [0, 0, 24], sizes = [2, 8, 8], strides = [1, 1, 1]} : vector<2x8x64xf32> to vector<2x8x8xf32>
    %119 = arith.truncf %118 : vector<2x8x8xf32> to vector<2x8x8xbf16>
    "tpu.trace_start"() <{level = 10 : i32, message = "bqd,bkd->bqk"}> : () -> ()
    %cst_34 = arith.constant dense<0.000000e+00> : vector<2x8x8xf32>
    %120 = tpu.matmul %117, %119, %cst_34 {dimension_numbers = #tpu.dot_dimension_numbers<[2], [2], [1], [1], [0, 0, 0, 1, 1, 1], [0], [0]>} : vector<2x8x8xbf16>, vector<2x8x8xbf16>, vector<2x8x8xf32> -> vector<2x8x8xf32>
    "tpu.trace_stop"() : () -> ()
    %cst_35 = arith.constant 0.353553385 : f32
    %121 = vector.broadcast %cst_35 : f32 to vector<2x8x8xf32>
    %122 = arith.mulf %120, %121 : vector<2x8x8xf32>
    %123 = vector.broadcast %5 : vector<2x1x8xf32> to vector<2x8x8xf32>
    %124 = arith.addf %122, %123 : vector<2x8x8xf32>
    %cst_36 = arith.constant dense<0xFF800000> : vector<2x8xf32>
    %125 = vector.multi_reduction <maximumf>, %124, %cst_36 [2] : vector<2x8x8xf32> to vector<2x8xf32>
    %126 = vector.shape_cast %125 : vector<2x8xf32> to vector<2x8x1xf32>
    %127 = vector.broadcast %126 : vector<2x8x1xf32> to vector<2x8x8xf32>
    %128 = arith.subf %124, %127 : vector<2x8x8xf32>
    %129 = math.exp %128 : vector<2x8x8xf32>
    %cst_37 = arith.constant dense<0.000000e+00> : vector<2x8xf32>
    %130 = vector.multi_reduction <add>, %129, %cst_37 [2] : vector<2x8x8xf32> to vector<2x8xf32>
    %131 = vector.shape_cast %130 : vector<2x8xf32> to vector<2x8x1xf32>
    %132 = vector.broadcast %131 : vector<2x8x1xf32> to vector<2x8x8xf32>
    %133 = arith.divf %129, %132 : vector<2x8x8xf32>
    %134 = arith.truncf %133 : vector<2x8x8xf32> to vector<2x8x8xbf16>
    %135 = vector.extract_strided_slice %49 {offsets = [0, 0, 24], sizes = [2, 8, 8], strides = [1, 1, 1]} : vector<2x8x64xf32> to vector<2x8x8xf32>
    %136 = arith.truncf %135 : vector<2x8x8xf32> to vector<2x8x8xbf16>
    "tpu.trace_start"() <{level = 10 : i32, message = "bqk,bkd->bqd"}> : () -> ()
    %cst_38 = arith.constant dense<0.000000e+00> : vector<2x8x8xf32>
    %137 = tpu.matmul %134, %136, %cst_38 {dimension_numbers = #tpu.dot_dimension_numbers<[2], [1], [1], [2], [0, 0, 0, 1, 1, 2], [0], [0]>} : vector<2x8x8xbf16>, vector<2x8x8xbf16>, vector<2x8x8xf32> -> vector<2x8x8xf32>
    "tpu.trace_stop"() : () -> ()
    %138 = vector.extract_strided_slice %39 {offsets = [0, 0, 32], sizes = [2, 8, 8], strides = [1, 1, 1]} : vector<2x8x64xf32> to vector<2x8x8xf32>
    %139 = arith.truncf %138 : vector<2x8x8xf32> to vector<2x8x8xbf16>
    %140 = vector.extract_strided_slice %44 {offsets = [0, 0, 32], sizes = [2, 8, 8], strides = [1, 1, 1]} : vector<2x8x64xf32> to vector<2x8x8xf32>
    %141 = arith.truncf %140 : vector<2x8x8xf32> to vector<2x8x8xbf16>
    "tpu.trace_start"() <{level = 10 : i32, message = "bqd,bkd->bqk"}> : () -> ()
    %cst_39 = arith.constant dense<0.000000e+00> : vector<2x8x8xf32>
    %142 = tpu.matmul %139, %141, %cst_39 {dimension_numbers = #tpu.dot_dimension_numbers<[2], [2], [1], [1], [0, 0, 0, 1, 1, 1], [0], [0]>} : vector<2x8x8xbf16>, vector<2x8x8xbf16>, vector<2x8x8xf32> -> vector<2x8x8xf32>
    "tpu.trace_stop"() : () -> ()
    %cst_40 = arith.constant 0.353553385 : f32
    %143 = vector.broadcast %cst_40 : f32 to vector<2x8x8xf32>
    %144 = arith.mulf %142, %143 : vector<2x8x8xf32>
    %145 = vector.broadcast %5 : vector<2x1x8xf32> to vector<2x8x8xf32>
    %146 = arith.addf %144, %145 : vector<2x8x8xf32>
    %cst_41 = arith.constant dense<0xFF800000> : vector<2x8xf32>
    %147 = vector.multi_reduction <maximumf>, %146, %cst_41 [2] : vector<2x8x8xf32> to vector<2x8xf32>
    %148 = vector.shape_cast %147 : vector<2x8xf32> to vector<2x8x1xf32>
    %149 = vector.broadcast %148 : vector<2x8x1xf32> to vector<2x8x8xf32>
    %150 = arith.subf %146, %149 : vector<2x8x8xf32>
    %151 = math.exp %150 : vector<2x8x8xf32>
    %cst_42 = arith.constant dense<0.000000e+00> : vector<2x8xf32>
    %152 = vector.multi_reduction <add>, %151, %cst_42 [2] : vector<2x8x8xf32> to vector<2x8xf32>
    %153 = vector.shape_cast %152 : vector<2x8xf32> to vector<2x8x1xf32>
    %154 = vector.broadcast %153 : vector<2x8x1xf32> to vector<2x8x8xf32>
    %155 = arith.divf %151, %154 : vector<2x8x8xf32>
    %156 = arith.truncf %155 : vector<2x8x8xf32> to vector<2x8x8xbf16>
    %157 = vector.extract_strided_slice %49 {offsets = [0, 0, 32], sizes = [2, 8, 8], strides = [1, 1, 1]} : vector<2x8x64xf32> to vector<2x8x8xf32>
    %158 = arith.truncf %157 : vector<2x8x8xf32> to vector<2x8x8xbf16>
    "tpu.trace_start"() <{level = 10 : i32, message = "bqk,bkd->bqd"}> : () -> ()
    %cst_43 = arith.constant dense<0.000000e+00> : vector<2x8x8xf32>
    %159 = tpu.matmul %156, %158, %cst_43 {dimension_numbers = #tpu.dot_dimension_numbers<[2], [1], [1], [2], [0, 0, 0, 1, 1, 2], [0], [0]>} : vector<2x8x8xbf16>, vector<2x8x8xbf16>, vector<2x8x8xf32> -> vector<2x8x8xf32>
    "tpu.trace_stop"() : () -> ()
    %160 = vector.extract_strided_slice %39 {offsets = [0, 0, 40], sizes = [2, 8, 8], strides = [1, 1, 1]} : vector<2x8x64xf32> to vector<2x8x8xf32>
    %161 = arith.truncf %160 : vector<2x8x8xf32> to vector<2x8x8xbf16>
    %162 = vector.extract_strided_slice %44 {offsets = [0, 0, 40], sizes = [2, 8, 8], strides = [1, 1, 1]} : vector<2x8x64xf32> to vector<2x8x8xf32>
    %163 = arith.truncf %162 : vector<2x8x8xf32> to vector<2x8x8xbf16>
    "tpu.trace_start"() <{level = 10 : i32, message = "bqd,bkd->bqk"}> : () -> ()
    %cst_44 = arith.constant dense<0.000000e+00> : vector<2x8x8xf32>
    %164 = tpu.matmul %161, %163, %cst_44 {dimension_numbers = #tpu.dot_dimension_numbers<[2], [2], [1], [1], [0, 0, 0, 1, 1, 1], [0], [0]>} : vector<2x8x8xbf16>, vector<2x8x8xbf16>, vector<2x8x8xf32> -> vector<2x8x8xf32>
    "tpu.trace_stop"() : () -> ()
    %cst_45 = arith.constant 0.353553385 : f32
    %165 = vector.broadcast %cst_45 : f32 to vector<2x8x8xf32>
    %166 = arith.mulf %164, %165 : vector<2x8x8xf32>
    %167 = vector.broadcast %5 : vector<2x1x8xf32> to vector<2x8x8xf32>
    %168 = arith.addf %166, %167 : vector<2x8x8xf32>
    %cst_46 = arith.constant dense<0xFF800000> : vector<2x8xf32>
    %169 = vector.multi_reduction <maximumf>, %168, %cst_46 [2] : vector<2x8x8xf32> to vector<2x8xf32>
    %170 = vector.shape_cast %169 : vector<2x8xf32> to vector<2x8x1xf32>
    %171 = vector.broadcast %170 : vector<2x8x1xf32> to vector<2x8x8xf32>
    %172 = arith.subf %168, %171 : vector<2x8x8xf32>
    %173 = math.exp %172 : vector<2x8x8xf32>
    %cst_47 = arith.constant dense<0.000000e+00> : vector<2x8xf32>
    %174 = vector.multi_reduction <add>, %173, %cst_47 [2] : vector<2x8x8xf32> to vector<2x8xf32>
    %175 = vector.shape_cast %174 : vector<2x8xf32> to vector<2x8x1xf32>
    %176 = vector.broadcast %175 : vector<2x8x1xf32> to vector<2x8x8xf32>
    %177 = arith.divf %173, %176 : vector<2x8x8xf32>
    %178 = arith.truncf %177 : vector<2x8x8xf32> to vector<2x8x8xbf16>
    %179 = vector.extract_strided_slice %49 {offsets = [0, 0, 40], sizes = [2, 8, 8], strides = [1, 1, 1]} : vector<2x8x64xf32> to vector<2x8x8xf32>
    %180 = arith.truncf %179 : vector<2x8x8xf32> to vector<2x8x8xbf16>
    "tpu.trace_start"() <{level = 10 : i32, message = "bqk,bkd->bqd"}> : () -> ()
    %cst_48 = arith.constant dense<0.000000e+00> : vector<2x8x8xf32>
    %181 = tpu.matmul %178, %180, %cst_48 {dimension_numbers = #tpu.dot_dimension_numbers<[2], [1], [1], [2], [0, 0, 0, 1, 1, 2], [0], [0]>} : vector<2x8x8xbf16>, vector<2x8x8xbf16>, vector<2x8x8xf32> -> vector<2x8x8xf32>
    "tpu.trace_stop"() : () -> ()
    %182 = vector.extract_strided_slice %39 {offsets = [0, 0, 48], sizes = [2, 8, 8], strides = [1, 1, 1]} : vector<2x8x64xf32> to vector<2x8x8xf32>
    %183 = arith.truncf %182 : vector<2x8x8xf32> to vector<2x8x8xbf16>
    %184 = vector.extract_strided_slice %44 {offsets = [0, 0, 48], sizes = [2, 8, 8], strides = [1, 1, 1]} : vector<2x8x64xf32> to vector<2x8x8xf32>
    %185 = arith.truncf %184 : vector<2x8x8xf32> to vector<2x8x8xbf16>
    "tpu.trace_start"() <{level = 10 : i32, message = "bqd,bkd->bqk"}> : () -> ()
    %cst_49 = arith.constant dense<0.000000e+00> : vector<2x8x8xf32>
    %186 = tpu.matmul %183, %185, %cst_49 {dimension_numbers = #tpu.dot_dimension_numbers<[2], [2], [1], [1], [0, 0, 0, 1, 1, 1], [0], [0]>} : vector<2x8x8xbf16>, vector<2x8x8xbf16>, vector<2x8x8xf32> -> vector<2x8x8xf32>
    "tpu.trace_stop"() : () -> ()
    %cst_50 = arith.constant 0.353553385 : f32
    %187 = vector.broadcast %cst_50 : f32 to vector<2x8x8xf32>
    %188 = arith.mulf %186, %187 : vector<2x8x8xf32>
    %189 = vector.broadcast %5 : vector<2x1x8xf32> to vector<2x8x8xf32>
    %190 = arith.addf %188, %189 : vector<2x8x8xf32>
    %cst_51 = arith.constant dense<0xFF800000> : vector<2x8xf32>
    %191 = vector.multi_reduction <maximumf>, %190, %cst_51 [2] : vector<2x8x8xf32> to vector<2x8xf32>
    %192 = vector.shape_cast %191 : vector<2x8xf32> to vector<2x8x1xf32>
    %193 = vector.broadcast %192 : vector<2x8x1xf32> to vector<2x8x8xf32>
    %194 = arith.subf %190, %193 : vector<2x8x8xf32>
    %195 = math.exp %194 : vector<2x8x8xf32>
    %cst_52 = arith.constant dense<0.000000e+00> : vector<2x8xf32>
    %196 = vector.multi_reduction <add>, %195, %cst_52 [2] : vector<2x8x8xf32> to vector<2x8xf32>
    %197 = vector.shape_cast %196 : vector<2x8xf32> to vector<2x8x1xf32>
    %198 = vector.broadcast %197 : vector<2x8x1xf32> to vector<2x8x8xf32>
    %199 = arith.divf %195, %198 : vector<2x8x8xf32>
    %200 = arith.truncf %199 : vector<2x8x8xf32> to vector<2x8x8xbf16>
    %201 = vector.extract_strided_slice %49 {offsets = [0, 0, 48], sizes = [2, 8, 8], strides = [1, 1, 1]} : vector<2x8x64xf32> to vector<2x8x8xf32>
    %202 = arith.truncf %201 : vector<2x8x8xf32> to vector<2x8x8xbf16>
    "tpu.trace_start"() <{level = 10 : i32, message = "bqk,bkd->bqd"}> : () -> ()
    %cst_53 = arith.constant dense<0.000000e+00> : vector<2x8x8xf32>
    %203 = tpu.matmul %200, %202, %cst_53 {dimension_numbers = #tpu.dot_dimension_numbers<[2], [1], [1], [2], [0, 0, 0, 1, 1, 2], [0], [0]>} : vector<2x8x8xbf16>, vector<2x8x8xbf16>, vector<2x8x8xf32> -> vector<2x8x8xf32>
    "tpu.trace_stop"() : () -> ()
    %204 = vector.extract_strided_slice %39 {offsets = [0, 0, 56], sizes = [2, 8, 8], strides = [1, 1, 1]} : vector<2x8x64xf32> to vector<2x8x8xf32>
    %205 = arith.truncf %204 : vector<2x8x8xf32> to vector<2x8x8xbf16>
    %206 = vector.extract_strided_slice %44 {offsets = [0, 0, 56], sizes = [2, 8, 8], strides = [1, 1, 1]} : vector<2x8x64xf32> to vector<2x8x8xf32>
    %207 = arith.truncf %206 : vector<2x8x8xf32> to vector<2x8x8xbf16>
    "tpu.trace_start"() <{level = 10 : i32, message = "bqd,bkd->bqk"}> : () -> ()
    %cst_54 = arith.constant dense<0.000000e+00> : vector<2x8x8xf32>
    %208 = tpu.matmul %205, %207, %cst_54 {dimension_numbers = #tpu.dot_dimension_numbers<[2], [2], [1], [1], [0, 0, 0, 1, 1, 1], [0], [0]>} : vector<2x8x8xbf16>, vector<2x8x8xbf16>, vector<2x8x8xf32> -> vector<2x8x8xf32>
    "tpu.trace_stop"() : () -> ()
    %cst_55 = arith.constant 0.353553385 : f32
    %209 = vector.broadcast %cst_55 : f32 to vector<2x8x8xf32>
    %210 = arith.mulf %208, %209 : vector<2x8x8xf32>
    %211 = vector.broadcast %5 : vector<2x1x8xf32> to vector<2x8x8xf32>
    %212 = arith.addf %210, %211 : vector<2x8x8xf32>
    %cst_56 = arith.constant dense<0xFF800000> : vector<2x8xf32>
    %213 = vector.multi_reduction <maximumf>, %212, %cst_56 [2] : vector<2x8x8xf32> to vector<2x8xf32>
    %214 = vector.shape_cast %213 : vector<2x8xf32> to vector<2x8x1xf32>
    %215 = vector.broadcast %214 : vector<2x8x1xf32> to vector<2x8x8xf32>
    %216 = arith.subf %212, %215 : vector<2x8x8xf32>
    %217 = math.exp %216 : vector<2x8x8xf32>
    %cst_57 = arith.constant dense<0.000000e+00> : vector<2x8xf32>
    %218 = vector.multi_reduction <add>, %217, %cst_57 [2] : vector<2x8x8xf32> to vector<2x8xf32>
    %219 = vector.shape_cast %218 : vector<2x8xf32> to vector<2x8x1xf32>
    %220 = vector.broadcast %219 : vector<2x8x1xf32> to vector<2x8x8xf32>
    %221 = arith.divf %217, %220 : vector<2x8x8xf32>
    %222 = arith.truncf %221 : vector<2x8x8xf32> to vector<2x8x8xbf16>
    %223 = vector.extract_strided_slice %49 {offsets = [0, 0, 56], sizes = [2, 8, 8], strides = [1, 1, 1]} : vector<2x8x64xf32> to vector<2x8x8xf32>
    %224 = arith.truncf %223 : vector<2x8x8xf32> to vector<2x8x8xbf16>
    "tpu.trace_start"() <{level = 10 : i32, message = "bqk,bkd->bqd"}> : () -> ()
    %cst_58 = arith.constant dense<0.000000e+00> : vector<2x8x8xf32>
    %225 = tpu.matmul %222, %224, %cst_58 {dimension_numbers = #tpu.dot_dimension_numbers<[2], [1], [1], [2], [0, 0, 0, 1, 1, 2], [0], [0]>} : vector<2x8x8xbf16>, vector<2x8x8xbf16>, vector<2x8x8xf32> -> vector<2x8x8xf32>
    "tpu.trace_stop"() : () -> ()
    %226 = tpu.concatenate %71, %93, %115, %137, %159, %181, %203, %225 in 2 : vector<2x8x8xf32>, vector<2x8x8xf32>, vector<2x8x8xf32>, vector<2x8x8xf32>, vector<2x8x8xf32>, vector<2x8x8xf32>, vector<2x8x8xf32>, vector<2x8x8xf32> -> vector<2x8x64xf32>
    %227 = vector.shape_cast %226 : vector<2x8x64xf32> to vector<16x64xf32>
    %228 = arith.truncf %227 : vector<16x64xf32> to vector<16x64xbf16>
    %c0_59 = arith.constant 0 : index
    %c0_60 = arith.constant 0 : index
    %c0_61 = arith.constant 0 : index
    %229 = vector.load %arg3[%c0_59, %c0_60, %c0_61] : memref<3x64x64xbf16, #tpu.memory_space<vmem>>, vector<1x64x64xbf16>
    %230 = vector.shape_cast %229 : vector<1x64x64xbf16> to vector<64x64xbf16>
    %cst_62 = arith.constant dense<0.000000e+00> : vector<16x64xf32>
    %231 = tpu.matmul %228, %230, %cst_62 {dimension_numbers = #tpu.dot_dimension_numbers<[1], [0], [0], [1], [0, 0, 1, 1], [], []>} : vector<16x64xbf16>, vector<64x64xbf16>, vector<16x64xf32> -> vector<16x64xf32>
    %232 = vector.extract_strided_slice %30 {offsets = [3, 0], sizes = [1, 64], strides = [1, 1]} : vector<9x64xf32> to vector<1x64xf32>
    %233 = vector.broadcast %232 : vector<1x64xf32> to vector<16x64xf32>
    %234 = arith.addf %231, %233 : vector<16x64xf32>
    %235 = arith.addf %28, %234 : vector<16x64xf32>
    %236 = vector.extract_strided_slice %30 {offsets = [4, 0], sizes = [1, 64], strides = [1, 1]} : vector<9x64xf32> to vector<1x64xf32>
    %237 = vector.extract_strided_slice %30 {offsets = [5, 0], sizes = [1, 64], strides = [1, 1]} : vector<9x64xf32> to vector<1x64xf32>
    %cst_63 = arith.constant dense<0.000000e+00> : vector<16xf32>
    %238 = vector.multi_reduction <add>, %235, %cst_63 [1] : vector<16x64xf32> to vector<16xf32>
    %239 = vector.shape_cast %238 : vector<16xf32> to vector<16x1xf32>
    %cst_64 = arith.constant 6.400000e+01 : f32
    %240 = vector.broadcast %cst_64 : f32 to vector<16x1xf32>
    %241 = arith.divf %239, %240 : vector<16x1xf32>
    %242 = vector.broadcast %241 : vector<16x1xf32> to vector<16x64xf32>
    %243 = arith.subf %235, %242 : vector<16x64xf32>
    %244 = arith.mulf %243, %243 : vector<16x64xf32>
    %cst_65 = arith.constant dense<0.000000e+00> : vector<16xf32>
    %245 = vector.multi_reduction <add>, %244, %cst_65 [1] : vector<16x64xf32> to vector<16xf32>
    %246 = vector.shape_cast %245 : vector<16xf32> to vector<16x1xf32>
    %cst_66 = arith.constant 6.400000e+01 : f32
    %247 = vector.broadcast %cst_66 : f32 to vector<16x1xf32>
    %248 = arith.divf %246, %247 : vector<16x1xf32>
    %cst_67 = arith.constant 9.99999996E-13 : f32
    %249 = vector.broadcast %cst_67 : f32 to vector<16x1xf32>
    %250 = arith.addf %248, %249 : vector<16x1xf32>
    %251 = math.rsqrt %250 : vector<16x1xf32>
    %252 = vector.broadcast %251 : vector<16x1xf32> to vector<16x64xf32>
    %253 = arith.mulf %243, %252 : vector<16x64xf32>
    %254 = vector.broadcast %236 : vector<1x64xf32> to vector<16x64xf32>
    %255 = arith.mulf %253, %254 : vector<16x64xf32>
    %256 = vector.broadcast %237 : vector<1x64xf32> to vector<16x64xf32>
    %257 = arith.addf %255, %256 : vector<16x64xf32>
    %258 = arith.truncf %257 : vector<16x64xf32> to vector<16x64xbf16>
    %c0_68 = arith.constant 0 : index
    %c0_69 = arith.constant 0 : index
    %c0_70 = arith.constant 0 : index
    %259 = vector.load %arg4[%c0_68, %c0_69, %c0_70] : memref<3x64x256xbf16, #tpu.memory_space<vmem>>, vector<1x64x256xbf16>
    %260 = vector.shape_cast %259 : vector<1x64x256xbf16> to vector<64x256xbf16>
    %cst_71 = arith.constant dense<0.000000e+00> : vector<16x256xf32>
    %261 = tpu.matmul %258, %260, %cst_71 {dimension_numbers = #tpu.dot_dimension_numbers<[1], [0], [0], [1], [0, 0, 1, 1], [], []>} : vector<16x64xbf16>, vector<64x256xbf16>, vector<16x256xf32> -> vector<16x256xf32>
    %c0_72 = arith.constant 0 : index
    %c0_73 = arith.constant 0 : index
    %c0_74 = arith.constant 0 : index
    %262 = vector.load %arg7[%c0_72, %c0_73, %c0_74] : memref<3x1x256xf32, #tpu.memory_space<vmem>>, vector<1x1x256xf32>
    %263 = vector.shape_cast %262 : vector<1x1x256xf32> to vector<1x256xf32>
    %264 = vector.broadcast %263 : vector<1x256xf32> to vector<16x256xf32>
    %265 = arith.addf %261, %264 : vector<16x256xf32>
    %cst_75 = arith.constant 0.707106769 : f32
    %266 = vector.broadcast %cst_75 : f32 to vector<16x256xf32>
    %267 = arith.mulf %265, %266 : vector<16x256xf32>
    %268 = math.absf %267 : vector<16x256xf32>
    %cst_76 = arith.constant 0.327591091 : f32
    %269 = vector.broadcast %cst_76 : f32 to vector<16x256xf32>
    %270 = arith.mulf %269, %268 : vector<16x256xf32>
    %cst_77 = arith.constant 1.000000e+00 : f32
    %271 = vector.broadcast %cst_77 : f32 to vector<16x256xf32>
    %272 = arith.addf %271, %270 : vector<16x256xf32>
    %cst_78 = arith.constant 1.000000e+00 : f32
    %273 = vector.broadcast %cst_78 : f32 to vector<16x256xf32>
    %274 = arith.divf %273, %272 : vector<16x256xf32>
    %cst_79 = arith.constant 1.06140542 : f32
    %275 = vector.broadcast %cst_79 : f32 to vector<16x256xf32>
    %276 = arith.mulf %274, %275 : vector<16x256xf32>
    %cst_80 = arith.constant -1.45315206 : f32
    %277 = vector.broadcast %cst_80 : f32 to vector<16x256xf32>
    %278 = arith.addf %277, %276 : vector<16x256xf32>
    %279 = arith.mulf %274, %278 : vector<16x256xf32>
    %cst_81 = arith.constant 1.42141378 : f32
    %280 = vector.broadcast %cst_81 : f32 to vector<16x256xf32>
    %281 = arith.addf %280, %279 : vector<16x256xf32>
    %282 = arith.mulf %274, %281 : vector<16x256xf32>
    %cst_82 = arith.constant -0.284496725 : f32
    %283 = vector.broadcast %cst_82 : f32 to vector<16x256xf32>
    %284 = arith.addf %283, %282 : vector<16x256xf32>
    %285 = arith.mulf %274, %284 : vector<16x256xf32>
    %cst_83 = arith.constant 0.254829586 : f32
    %286 = vector.broadcast %cst_83 : f32 to vector<16x256xf32>
    %287 = arith.addf %286, %285 : vector<16x256xf32>
    %288 = arith.mulf %274, %287 : vector<16x256xf32>
    %cst_84 = arith.constant 0.000000e+00 : f32
    %289 = vector.broadcast %cst_84 : f32 to vector<16x256xf32>
    %290 = arith.subf %289, %268 : vector<16x256xf32>
    %291 = arith.mulf %290, %268 : vector<16x256xf32>
    %292 = math.exp %291 : vector<16x256xf32>
    %293 = arith.mulf %288, %292 : vector<16x256xf32>
    %cst_85 = arith.constant 1.000000e+00 : f32
    %294 = vector.broadcast %cst_85 : f32 to vector<16x256xf32>
    %295 = arith.subf %294, %293 : vector<16x256xf32>
    %cst_86 = arith.constant 0.000000e+00 : f32
    %296 = vector.broadcast %cst_86 : f32 to vector<16x256xf32>
    %297 = arith.cmpf oge, %267, %296 : vector<16x256xf32>
    %cst_87 = arith.constant 0.000000e+00 : f32
    %298 = vector.broadcast %cst_87 : f32 to vector<16x256xf32>
    %299 = arith.subf %298, %295 : vector<16x256xf32>
    %300 = arith.select %297, %295, %299 : vector<16x256xi1>, vector<16x256xf32>
    %cst_88 = arith.constant 5.000000e-01 : f32
    %301 = vector.broadcast %cst_88 : f32 to vector<16x256xf32>
    %302 = arith.mulf %301, %265 : vector<16x256xf32>
    %cst_89 = arith.constant 1.000000e+00 : f32
    %303 = vector.broadcast %cst_89 : f32 to vector<16x256xf32>
    %304 = arith.addf %303, %300 : vector<16x256xf32>
    %305 = arith.mulf %302, %304 : vector<16x256xf32>
    %306 = arith.truncf %305 : vector<16x256xf32> to vector<16x256xbf16>
    %c0_90 = arith.constant 0 : index
    %c0_91 = arith.constant 0 : index
    %c0_92 = arith.constant 0 : index
    %307 = vector.load %arg5[%c0_90, %c0_91, %c0_92] : memref<3x256x64xbf16, #tpu.memory_space<vmem>>, vector<1x256x64xbf16>
    %308 = vector.shape_cast %307 : vector<1x256x64xbf16> to vector<256x64xbf16>
    %cst_93 = arith.constant dense<0.000000e+00> : vector<16x64xf32>
    %309 = tpu.matmul %306, %308, %cst_93 {dimension_numbers = #tpu.dot_dimension_numbers<[1], [0], [0], [1], [0, 0, 1, 1], [], []>} : vector<16x256xbf16>, vector<256x64xbf16>, vector<16x64xf32> -> vector<16x64xf32>
    %310 = vector.extract_strided_slice %30 {offsets = [6, 0], sizes = [1, 64], strides = [1, 1]} : vector<9x64xf32> to vector<1x64xf32>
    %311 = vector.broadcast %310 : vector<1x64xf32> to vector<16x64xf32>
    %312 = arith.addf %309, %311 : vector<16x64xf32>
    %313 = arith.addf %257, %312 : vector<16x64xf32>
    %314 = vector.extract_strided_slice %30 {offsets = [7, 0], sizes = [1, 64], strides = [1, 1]} : vector<9x64xf32> to vector<1x64xf32>
    %315 = vector.extract_strided_slice %30 {offsets = [8, 0], sizes = [1, 64], strides = [1, 1]} : vector<9x64xf32> to vector<1x64xf32>
    %cst_94 = arith.constant dense<0.000000e+00> : vector<16xf32>
    %316 = vector.multi_reduction <add>, %313, %cst_94 [1] : vector<16x64xf32> to vector<16xf32>
    %317 = vector.shape_cast %316 : vector<16xf32> to vector<16x1xf32>
    %cst_95 = arith.constant 6.400000e+01 : f32
    %318 = vector.broadcast %cst_95 : f32 to vector<16x1xf32>
    %319 = arith.divf %317, %318 : vector<16x1xf32>
    %320 = vector.broadcast %319 : vector<16x1xf32> to vector<16x64xf32>
    %321 = arith.subf %313, %320 : vector<16x64xf32>
    %322 = arith.mulf %321, %321 : vector<16x64xf32>
    %cst_96 = arith.constant dense<0.000000e+00> : vector<16xf32>
    %323 = vector.multi_reduction <add>, %322, %cst_96 [1] : vector<16x64xf32> to vector<16xf32>
    %324 = vector.shape_cast %323 : vector<16xf32> to vector<16x1xf32>
    %cst_97 = arith.constant 6.400000e+01 : f32
    %325 = vector.broadcast %cst_97 : f32 to vector<16x1xf32>
    %326 = arith.divf %324, %325 : vector<16x1xf32>
    %cst_98 = arith.constant 9.99999996E-13 : f32
    %327 = vector.broadcast %cst_98 : f32 to vector<16x1xf32>
    %328 = arith.addf %326, %327 : vector<16x1xf32>
    %329 = math.rsqrt %328 : vector<16x1xf32>
    %330 = vector.broadcast %329 : vector<16x1xf32> to vector<16x64xf32>
    %331 = arith.mulf %321, %330 : vector<16x64xf32>
    %332 = vector.broadcast %314 : vector<1x64xf32> to vector<16x64xf32>
    %333 = arith.mulf %331, %332 : vector<16x64xf32>
    %334 = vector.broadcast %315 : vector<1x64xf32> to vector<16x64xf32>
    %335 = arith.addf %333, %334 : vector<16x64xf32>
    %c1_99 = arith.constant 1 : index
    %c0_100 = arith.constant 0 : index
    %c0_101 = arith.constant 0 : index
    %336 = vector.load %arg6[%c1_99, %c0_100, %c0_101] : memref<3x9x64xf32, #tpu.memory_space<vmem>>, vector<1x9x64xf32>
    %337 = vector.shape_cast %336 : vector<1x9x64xf32> to vector<9x64xf32>
    %338 = arith.truncf %335 : vector<16x64xf32> to vector<16x64xbf16>
    %c1_102 = arith.constant 1 : index
    %c0_103 = arith.constant 0 : index
    %c0_104 = arith.constant 0 : index
    %339 = vector.load %arg2[%c1_102, %c0_103, %c0_104] : memref<3x64x192xbf16, #tpu.memory_space<vmem>>, vector<1x64x192xbf16>
    %340 = vector.shape_cast %339 : vector<1x64x192xbf16> to vector<64x192xbf16>
    %cst_105 = arith.constant dense<0.000000e+00> : vector<16x192xf32>
    %341 = tpu.matmul %338, %340, %cst_105 {dimension_numbers = #tpu.dot_dimension_numbers<[1], [0], [0], [1], [0, 0, 1, 1], [], []>} : vector<16x64xbf16>, vector<64x192xbf16>, vector<16x192xf32> -> vector<16x192xf32>
    %342 = vector.extract_strided_slice %341 {offsets = [0, 0], sizes = [16, 64], strides = [1, 1]} : vector<16x192xf32> to vector<16x64xf32>
    %343 = vector.extract_strided_slice %337 {offsets = [0, 0], sizes = [1, 64], strides = [1, 1]} : vector<9x64xf32> to vector<1x64xf32>
    %344 = vector.broadcast %343 : vector<1x64xf32> to vector<16x64xf32>
    %345 = arith.addf %342, %344 : vector<16x64xf32>
    %346 = vector.shape_cast %345 : vector<16x64xf32> to vector<2x8x64xf32>
    %347 = vector.extract_strided_slice %341 {offsets = [0, 64], sizes = [16, 64], strides = [1, 1]} : vector<16x192xf32> to vector<16x64xf32>
    %348 = vector.extract_strided_slice %337 {offsets = [1, 0], sizes = [1, 64], strides = [1, 1]} : vector<9x64xf32> to vector<1x64xf32>
    %349 = vector.broadcast %348 : vector<1x64xf32> to vector<16x64xf32>
    %350 = arith.addf %347, %349 : vector<16x64xf32>
    %351 = vector.shape_cast %350 : vector<16x64xf32> to vector<2x8x64xf32>
    %352 = vector.extract_strided_slice %341 {offsets = [0, 128], sizes = [16, 64], strides = [1, 1]} : vector<16x192xf32> to vector<16x64xf32>
    %353 = vector.extract_strided_slice %337 {offsets = [2, 0], sizes = [1, 64], strides = [1, 1]} : vector<9x64xf32> to vector<1x64xf32>
    %354 = vector.broadcast %353 : vector<1x64xf32> to vector<16x64xf32>
    %355 = arith.addf %352, %354 : vector<16x64xf32>
    %356 = vector.shape_cast %355 : vector<16x64xf32> to vector<2x8x64xf32>
    %357 = vector.extract_strided_slice %346 {offsets = [0, 0, 0], sizes = [2, 8, 8], strides = [1, 1, 1]} : vector<2x8x64xf32> to vector<2x8x8xf32>
    %358 = arith.truncf %357 : vector<2x8x8xf32> to vector<2x8x8xbf16>
    %359 = vector.extract_strided_slice %351 {offsets = [0, 0, 0], sizes = [2, 8, 8], strides = [1, 1, 1]} : vector<2x8x64xf32> to vector<2x8x8xf32>
    %360 = arith.truncf %359 : vector<2x8x8xf32> to vector<2x8x8xbf16>
    "tpu.trace_start"() <{level = 10 : i32, message = "bqd,bkd->bqk"}> : () -> ()
    %cst_106 = arith.constant dense<0.000000e+00> : vector<2x8x8xf32>
    %361 = tpu.matmul %358, %360, %cst_106 {dimension_numbers = #tpu.dot_dimension_numbers<[2], [2], [1], [1], [0, 0, 0, 1, 1, 1], [0], [0]>} : vector<2x8x8xbf16>, vector<2x8x8xbf16>, vector<2x8x8xf32> -> vector<2x8x8xf32>
    "tpu.trace_stop"() : () -> ()
    %cst_107 = arith.constant 0.353553385 : f32
    %362 = vector.broadcast %cst_107 : f32 to vector<2x8x8xf32>
    %363 = arith.mulf %361, %362 : vector<2x8x8xf32>
    %364 = vector.broadcast %5 : vector<2x1x8xf32> to vector<2x8x8xf32>
    %365 = arith.addf %363, %364 : vector<2x8x8xf32>
    %cst_108 = arith.constant dense<0xFF800000> : vector<2x8xf32>
    %366 = vector.multi_reduction <maximumf>, %365, %cst_108 [2] : vector<2x8x8xf32> to vector<2x8xf32>
    %367 = vector.shape_cast %366 : vector<2x8xf32> to vector<2x8x1xf32>
    %368 = vector.broadcast %367 : vector<2x8x1xf32> to vector<2x8x8xf32>
    %369 = arith.subf %365, %368 : vector<2x8x8xf32>
    %370 = math.exp %369 : vector<2x8x8xf32>
    %cst_109 = arith.constant dense<0.000000e+00> : vector<2x8xf32>
    %371 = vector.multi_reduction <add>, %370, %cst_109 [2] : vector<2x8x8xf32> to vector<2x8xf32>
    %372 = vector.shape_cast %371 : vector<2x8xf32> to vector<2x8x1xf32>
    %373 = vector.broadcast %372 : vector<2x8x1xf32> to vector<2x8x8xf32>
    %374 = arith.divf %370, %373 : vector<2x8x8xf32>
    %375 = arith.truncf %374 : vector<2x8x8xf32> to vector<2x8x8xbf16>
    %376 = vector.extract_strided_slice %356 {offsets = [0, 0, 0], sizes = [2, 8, 8], strides = [1, 1, 1]} : vector<2x8x64xf32> to vector<2x8x8xf32>
    %377 = arith.truncf %376 : vector<2x8x8xf32> to vector<2x8x8xbf16>
    "tpu.trace_start"() <{level = 10 : i32, message = "bqk,bkd->bqd"}> : () -> ()
    %cst_110 = arith.constant dense<0.000000e+00> : vector<2x8x8xf32>
    %378 = tpu.matmul %375, %377, %cst_110 {dimension_numbers = #tpu.dot_dimension_numbers<[2], [1], [1], [2], [0, 0, 0, 1, 1, 2], [0], [0]>} : vector<2x8x8xbf16>, vector<2x8x8xbf16>, vector<2x8x8xf32> -> vector<2x8x8xf32>
    "tpu.trace_stop"() : () -> ()
    %379 = vector.extract_strided_slice %346 {offsets = [0, 0, 8], sizes = [2, 8, 8], strides = [1, 1, 1]} : vector<2x8x64xf32> to vector<2x8x8xf32>
    %380 = arith.truncf %379 : vector<2x8x8xf32> to vector<2x8x8xbf16>
    %381 = vector.extract_strided_slice %351 {offsets = [0, 0, 8], sizes = [2, 8, 8], strides = [1, 1, 1]} : vector<2x8x64xf32> to vector<2x8x8xf32>
    %382 = arith.truncf %381 : vector<2x8x8xf32> to vector<2x8x8xbf16>
    "tpu.trace_start"() <{level = 10 : i32, message = "bqd,bkd->bqk"}> : () -> ()
    %cst_111 = arith.constant dense<0.000000e+00> : vector<2x8x8xf32>
    %383 = tpu.matmul %380, %382, %cst_111 {dimension_numbers = #tpu.dot_dimension_numbers<[2], [2], [1], [1], [0, 0, 0, 1, 1, 1], [0], [0]>} : vector<2x8x8xbf16>, vector<2x8x8xbf16>, vector<2x8x8xf32> -> vector<2x8x8xf32>
    "tpu.trace_stop"() : () -> ()
    %cst_112 = arith.constant 0.353553385 : f32
    %384 = vector.broadcast %cst_112 : f32 to vector<2x8x8xf32>
    %385 = arith.mulf %383, %384 : vector<2x8x8xf32>
    %386 = vector.broadcast %5 : vector<2x1x8xf32> to vector<2x8x8xf32>
    %387 = arith.addf %385, %386 : vector<2x8x8xf32>
    %cst_113 = arith.constant dense<0xFF800000> : vector<2x8xf32>
    %388 = vector.multi_reduction <maximumf>, %387, %cst_113 [2] : vector<2x8x8xf32> to vector<2x8xf32>
    %389 = vector.shape_cast %388 : vector<2x8xf32> to vector<2x8x1xf32>
    %390 = vector.broadcast %389 : vector<2x8x1xf32> to vector<2x8x8xf32>
    %391 = arith.subf %387, %390 : vector<2x8x8xf32>
    %392 = math.exp %391 : vector<2x8x8xf32>
    %cst_114 = arith.constant dense<0.000000e+00> : vector<2x8xf32>
    %393 = vector.multi_reduction <add>, %392, %cst_114 [2] : vector<2x8x8xf32> to vector<2x8xf32>
    %394 = vector.shape_cast %393 : vector<2x8xf32> to vector<2x8x1xf32>
    %395 = vector.broadcast %394 : vector<2x8x1xf32> to vector<2x8x8xf32>
    %396 = arith.divf %392, %395 : vector<2x8x8xf32>
    %397 = arith.truncf %396 : vector<2x8x8xf32> to vector<2x8x8xbf16>
    %398 = vector.extract_strided_slice %356 {offsets = [0, 0, 8], sizes = [2, 8, 8], strides = [1, 1, 1]} : vector<2x8x64xf32> to vector<2x8x8xf32>
    %399 = arith.truncf %398 : vector<2x8x8xf32> to vector<2x8x8xbf16>
    "tpu.trace_start"() <{level = 10 : i32, message = "bqk,bkd->bqd"}> : () -> ()
    %cst_115 = arith.constant dense<0.000000e+00> : vector<2x8x8xf32>
    %400 = tpu.matmul %397, %399, %cst_115 {dimension_numbers = #tpu.dot_dimension_numbers<[2], [1], [1], [2], [0, 0, 0, 1, 1, 2], [0], [0]>} : vector<2x8x8xbf16>, vector<2x8x8xbf16>, vector<2x8x8xf32> -> vector<2x8x8xf32>
    "tpu.trace_stop"() : () -> ()
    %401 = vector.extract_strided_slice %346 {offsets = [0, 0, 16], sizes = [2, 8, 8], strides = [1, 1, 1]} : vector<2x8x64xf32> to vector<2x8x8xf32>
    %402 = arith.truncf %401 : vector<2x8x8xf32> to vector<2x8x8xbf16>
    %403 = vector.extract_strided_slice %351 {offsets = [0, 0, 16], sizes = [2, 8, 8], strides = [1, 1, 1]} : vector<2x8x64xf32> to vector<2x8x8xf32>
    %404 = arith.truncf %403 : vector<2x8x8xf32> to vector<2x8x8xbf16>
    "tpu.trace_start"() <{level = 10 : i32, message = "bqd,bkd->bqk"}> : () -> ()
    %cst_116 = arith.constant dense<0.000000e+00> : vector<2x8x8xf32>
    %405 = tpu.matmul %402, %404, %cst_116 {dimension_numbers = #tpu.dot_dimension_numbers<[2], [2], [1], [1], [0, 0, 0, 1, 1, 1], [0], [0]>} : vector<2x8x8xbf16>, vector<2x8x8xbf16>, vector<2x8x8xf32> -> vector<2x8x8xf32>
    "tpu.trace_stop"() : () -> ()
    %cst_117 = arith.constant 0.353553385 : f32
    %406 = vector.broadcast %cst_117 : f32 to vector<2x8x8xf32>
    %407 = arith.mulf %405, %406 : vector<2x8x8xf32>
    %408 = vector.broadcast %5 : vector<2x1x8xf32> to vector<2x8x8xf32>
    %409 = arith.addf %407, %408 : vector<2x8x8xf32>
    %cst_118 = arith.constant dense<0xFF800000> : vector<2x8xf32>
    %410 = vector.multi_reduction <maximumf>, %409, %cst_118 [2] : vector<2x8x8xf32> to vector<2x8xf32>
    %411 = vector.shape_cast %410 : vector<2x8xf32> to vector<2x8x1xf32>
    %412 = vector.broadcast %411 : vector<2x8x1xf32> to vector<2x8x8xf32>
    %413 = arith.subf %409, %412 : vector<2x8x8xf32>
    %414 = math.exp %413 : vector<2x8x8xf32>
    %cst_119 = arith.constant dense<0.000000e+00> : vector<2x8xf32>
    %415 = vector.multi_reduction <add>, %414, %cst_119 [2] : vector<2x8x8xf32> to vector<2x8xf32>
    %416 = vector.shape_cast %415 : vector<2x8xf32> to vector<2x8x1xf32>
    %417 = vector.broadcast %416 : vector<2x8x1xf32> to vector<2x8x8xf32>
    %418 = arith.divf %414, %417 : vector<2x8x8xf32>
    %419 = arith.truncf %418 : vector<2x8x8xf32> to vector<2x8x8xbf16>
    %420 = vector.extract_strided_slice %356 {offsets = [0, 0, 16], sizes = [2, 8, 8], strides = [1, 1, 1]} : vector<2x8x64xf32> to vector<2x8x8xf32>
    %421 = arith.truncf %420 : vector<2x8x8xf32> to vector<2x8x8xbf16>
    "tpu.trace_start"() <{level = 10 : i32, message = "bqk,bkd->bqd"}> : () -> ()
    %cst_120 = arith.constant dense<0.000000e+00> : vector<2x8x8xf32>
    %422 = tpu.matmul %419, %421, %cst_120 {dimension_numbers = #tpu.dot_dimension_numbers<[2], [1], [1], [2], [0, 0, 0, 1, 1, 2], [0], [0]>} : vector<2x8x8xbf16>, vector<2x8x8xbf16>, vector<2x8x8xf32> -> vector<2x8x8xf32>
    "tpu.trace_stop"() : () -> ()
    %423 = vector.extract_strided_slice %346 {offsets = [0, 0, 24], sizes = [2, 8, 8], strides = [1, 1, 1]} : vector<2x8x64xf32> to vector<2x8x8xf32>
    %424 = arith.truncf %423 : vector<2x8x8xf32> to vector<2x8x8xbf16>
    %425 = vector.extract_strided_slice %351 {offsets = [0, 0, 24], sizes = [2, 8, 8], strides = [1, 1, 1]} : vector<2x8x64xf32> to vector<2x8x8xf32>
    %426 = arith.truncf %425 : vector<2x8x8xf32> to vector<2x8x8xbf16>
    "tpu.trace_start"() <{level = 10 : i32, message = "bqd,bkd->bqk"}> : () -> ()
    %cst_121 = arith.constant dense<0.000000e+00> : vector<2x8x8xf32>
    %427 = tpu.matmul %424, %426, %cst_121 {dimension_numbers = #tpu.dot_dimension_numbers<[2], [2], [1], [1], [0, 0, 0, 1, 1, 1], [0], [0]>} : vector<2x8x8xbf16>, vector<2x8x8xbf16>, vector<2x8x8xf32> -> vector<2x8x8xf32>
    "tpu.trace_stop"() : () -> ()
    %cst_122 = arith.constant 0.353553385 : f32
    %428 = vector.broadcast %cst_122 : f32 to vector<2x8x8xf32>
    %429 = arith.mulf %427, %428 : vector<2x8x8xf32>
    %430 = vector.broadcast %5 : vector<2x1x8xf32> to vector<2x8x8xf32>
    %431 = arith.addf %429, %430 : vector<2x8x8xf32>
    %cst_123 = arith.constant dense<0xFF800000> : vector<2x8xf32>
    %432 = vector.multi_reduction <maximumf>, %431, %cst_123 [2] : vector<2x8x8xf32> to vector<2x8xf32>
    %433 = vector.shape_cast %432 : vector<2x8xf32> to vector<2x8x1xf32>
    %434 = vector.broadcast %433 : vector<2x8x1xf32> to vector<2x8x8xf32>
    %435 = arith.subf %431, %434 : vector<2x8x8xf32>
    %436 = math.exp %435 : vector<2x8x8xf32>
    %cst_124 = arith.constant dense<0.000000e+00> : vector<2x8xf32>
    %437 = vector.multi_reduction <add>, %436, %cst_124 [2] : vector<2x8x8xf32> to vector<2x8xf32>
    %438 = vector.shape_cast %437 : vector<2x8xf32> to vector<2x8x1xf32>
    %439 = vector.broadcast %438 : vector<2x8x1xf32> to vector<2x8x8xf32>
    %440 = arith.divf %436, %439 : vector<2x8x8xf32>
    %441 = arith.truncf %440 : vector<2x8x8xf32> to vector<2x8x8xbf16>
    %442 = vector.extract_strided_slice %356 {offsets = [0, 0, 24], sizes = [2, 8, 8], strides = [1, 1, 1]} : vector<2x8x64xf32> to vector<2x8x8xf32>
    %443 = arith.truncf %442 : vector<2x8x8xf32> to vector<2x8x8xbf16>
    "tpu.trace_start"() <{level = 10 : i32, message = "bqk,bkd->bqd"}> : () -> ()
    %cst_125 = arith.constant dense<0.000000e+00> : vector<2x8x8xf32>
    %444 = tpu.matmul %441, %443, %cst_125 {dimension_numbers = #tpu.dot_dimension_numbers<[2], [1], [1], [2], [0, 0, 0, 1, 1, 2], [0], [0]>} : vector<2x8x8xbf16>, vector<2x8x8xbf16>, vector<2x8x8xf32> -> vector<2x8x8xf32>
    "tpu.trace_stop"() : () -> ()
    %445 = vector.extract_strided_slice %346 {offsets = [0, 0, 32], sizes = [2, 8, 8], strides = [1, 1, 1]} : vector<2x8x64xf32> to vector<2x8x8xf32>
    %446 = arith.truncf %445 : vector<2x8x8xf32> to vector<2x8x8xbf16>
    %447 = vector.extract_strided_slice %351 {offsets = [0, 0, 32], sizes = [2, 8, 8], strides = [1, 1, 1]} : vector<2x8x64xf32> to vector<2x8x8xf32>
    %448 = arith.truncf %447 : vector<2x8x8xf32> to vector<2x8x8xbf16>
    "tpu.trace_start"() <{level = 10 : i32, message = "bqd,bkd->bqk"}> : () -> ()
    %cst_126 = arith.constant dense<0.000000e+00> : vector<2x8x8xf32>
    %449 = tpu.matmul %446, %448, %cst_126 {dimension_numbers = #tpu.dot_dimension_numbers<[2], [2], [1], [1], [0, 0, 0, 1, 1, 1], [0], [0]>} : vector<2x8x8xbf16>, vector<2x8x8xbf16>, vector<2x8x8xf32> -> vector<2x8x8xf32>
    "tpu.trace_stop"() : () -> ()
    %cst_127 = arith.constant 0.353553385 : f32
    %450 = vector.broadcast %cst_127 : f32 to vector<2x8x8xf32>
    %451 = arith.mulf %449, %450 : vector<2x8x8xf32>
    %452 = vector.broadcast %5 : vector<2x1x8xf32> to vector<2x8x8xf32>
    %453 = arith.addf %451, %452 : vector<2x8x8xf32>
    %cst_128 = arith.constant dense<0xFF800000> : vector<2x8xf32>
    %454 = vector.multi_reduction <maximumf>, %453, %cst_128 [2] : vector<2x8x8xf32> to vector<2x8xf32>
    %455 = vector.shape_cast %454 : vector<2x8xf32> to vector<2x8x1xf32>
    %456 = vector.broadcast %455 : vector<2x8x1xf32> to vector<2x8x8xf32>
    %457 = arith.subf %453, %456 : vector<2x8x8xf32>
    %458 = math.exp %457 : vector<2x8x8xf32>
    %cst_129 = arith.constant dense<0.000000e+00> : vector<2x8xf32>
    %459 = vector.multi_reduction <add>, %458, %cst_129 [2] : vector<2x8x8xf32> to vector<2x8xf32>
    %460 = vector.shape_cast %459 : vector<2x8xf32> to vector<2x8x1xf32>
    %461 = vector.broadcast %460 : vector<2x8x1xf32> to vector<2x8x8xf32>
    %462 = arith.divf %458, %461 : vector<2x8x8xf32>
    %463 = arith.truncf %462 : vector<2x8x8xf32> to vector<2x8x8xbf16>
    %464 = vector.extract_strided_slice %356 {offsets = [0, 0, 32], sizes = [2, 8, 8], strides = [1, 1, 1]} : vector<2x8x64xf32> to vector<2x8x8xf32>
    %465 = arith.truncf %464 : vector<2x8x8xf32> to vector<2x8x8xbf16>
    "tpu.trace_start"() <{level = 10 : i32, message = "bqk,bkd->bqd"}> : () -> ()
    %cst_130 = arith.constant dense<0.000000e+00> : vector<2x8x8xf32>
    %466 = tpu.matmul %463, %465, %cst_130 {dimension_numbers = #tpu.dot_dimension_numbers<[2], [1], [1], [2], [0, 0, 0, 1, 1, 2], [0], [0]>} : vector<2x8x8xbf16>, vector<2x8x8xbf16>, vector<2x8x8xf32> -> vector<2x8x8xf32>
    "tpu.trace_stop"() : () -> ()
    %467 = vector.extract_strided_slice %346 {offsets = [0, 0, 40], sizes = [2, 8, 8], strides = [1, 1, 1]} : vector<2x8x64xf32> to vector<2x8x8xf32>
    %468 = arith.truncf %467 : vector<2x8x8xf32> to vector<2x8x8xbf16>
    %469 = vector.extract_strided_slice %351 {offsets = [0, 0, 40], sizes = [2, 8, 8], strides = [1, 1, 1]} : vector<2x8x64xf32> to vector<2x8x8xf32>
    %470 = arith.truncf %469 : vector<2x8x8xf32> to vector<2x8x8xbf16>
    "tpu.trace_start"() <{level = 10 : i32, message = "bqd,bkd->bqk"}> : () -> ()
    %cst_131 = arith.constant dense<0.000000e+00> : vector<2x8x8xf32>
    %471 = tpu.matmul %468, %470, %cst_131 {dimension_numbers = #tpu.dot_dimension_numbers<[2], [2], [1], [1], [0, 0, 0, 1, 1, 1], [0], [0]>} : vector<2x8x8xbf16>, vector<2x8x8xbf16>, vector<2x8x8xf32> -> vector<2x8x8xf32>
    "tpu.trace_stop"() : () -> ()
    %cst_132 = arith.constant 0.353553385 : f32
    %472 = vector.broadcast %cst_132 : f32 to vector<2x8x8xf32>
    %473 = arith.mulf %471, %472 : vector<2x8x8xf32>
    %474 = vector.broadcast %5 : vector<2x1x8xf32> to vector<2x8x8xf32>
    %475 = arith.addf %473, %474 : vector<2x8x8xf32>
    %cst_133 = arith.constant dense<0xFF800000> : vector<2x8xf32>
    %476 = vector.multi_reduction <maximumf>, %475, %cst_133 [2] : vector<2x8x8xf32> to vector<2x8xf32>
    %477 = vector.shape_cast %476 : vector<2x8xf32> to vector<2x8x1xf32>
    %478 = vector.broadcast %477 : vector<2x8x1xf32> to vector<2x8x8xf32>
    %479 = arith.subf %475, %478 : vector<2x8x8xf32>
    %480 = math.exp %479 : vector<2x8x8xf32>
    %cst_134 = arith.constant dense<0.000000e+00> : vector<2x8xf32>
    %481 = vector.multi_reduction <add>, %480, %cst_134 [2] : vector<2x8x8xf32> to vector<2x8xf32>
    %482 = vector.shape_cast %481 : vector<2x8xf32> to vector<2x8x1xf32>
    %483 = vector.broadcast %482 : vector<2x8x1xf32> to vector<2x8x8xf32>
    %484 = arith.divf %480, %483 : vector<2x8x8xf32>
    %485 = arith.truncf %484 : vector<2x8x8xf32> to vector<2x8x8xbf16>
    %486 = vector.extract_strided_slice %356 {offsets = [0, 0, 40], sizes = [2, 8, 8], strides = [1, 1, 1]} : vector<2x8x64xf32> to vector<2x8x8xf32>
    %487 = arith.truncf %486 : vector<2x8x8xf32> to vector<2x8x8xbf16>
    "tpu.trace_start"() <{level = 10 : i32, message = "bqk,bkd->bqd"}> : () -> ()
    %cst_135 = arith.constant dense<0.000000e+00> : vector<2x8x8xf32>
    %488 = tpu.matmul %485, %487, %cst_135 {dimension_numbers = #tpu.dot_dimension_numbers<[2], [1], [1], [2], [0, 0, 0, 1, 1, 2], [0], [0]>} : vector<2x8x8xbf16>, vector<2x8x8xbf16>, vector<2x8x8xf32> -> vector<2x8x8xf32>
    "tpu.trace_stop"() : () -> ()
    %489 = vector.extract_strided_slice %346 {offsets = [0, 0, 48], sizes = [2, 8, 8], strides = [1, 1, 1]} : vector<2x8x64xf32> to vector<2x8x8xf32>
    %490 = arith.truncf %489 : vector<2x8x8xf32> to vector<2x8x8xbf16>
    %491 = vector.extract_strided_slice %351 {offsets = [0, 0, 48], sizes = [2, 8, 8], strides = [1, 1, 1]} : vector<2x8x64xf32> to vector<2x8x8xf32>
    %492 = arith.truncf %491 : vector<2x8x8xf32> to vector<2x8x8xbf16>
    "tpu.trace_start"() <{level = 10 : i32, message = "bqd,bkd->bqk"}> : () -> ()
    %cst_136 = arith.constant dense<0.000000e+00> : vector<2x8x8xf32>
    %493 = tpu.matmul %490, %492, %cst_136 {dimension_numbers = #tpu.dot_dimension_numbers<[2], [2], [1], [1], [0, 0, 0, 1, 1, 1], [0], [0]>} : vector<2x8x8xbf16>, vector<2x8x8xbf16>, vector<2x8x8xf32> -> vector<2x8x8xf32>
    "tpu.trace_stop"() : () -> ()
    %cst_137 = arith.constant 0.353553385 : f32
    %494 = vector.broadcast %cst_137 : f32 to vector<2x8x8xf32>
    %495 = arith.mulf %493, %494 : vector<2x8x8xf32>
    %496 = vector.broadcast %5 : vector<2x1x8xf32> to vector<2x8x8xf32>
    %497 = arith.addf %495, %496 : vector<2x8x8xf32>
    %cst_138 = arith.constant dense<0xFF800000> : vector<2x8xf32>
    %498 = vector.multi_reduction <maximumf>, %497, %cst_138 [2] : vector<2x8x8xf32> to vector<2x8xf32>
    %499 = vector.shape_cast %498 : vector<2x8xf32> to vector<2x8x1xf32>
    %500 = vector.broadcast %499 : vector<2x8x1xf32> to vector<2x8x8xf32>
    %501 = arith.subf %497, %500 : vector<2x8x8xf32>
    %502 = math.exp %501 : vector<2x8x8xf32>
    %cst_139 = arith.constant dense<0.000000e+00> : vector<2x8xf32>
    %503 = vector.multi_reduction <add>, %502, %cst_139 [2] : vector<2x8x8xf32> to vector<2x8xf32>
    %504 = vector.shape_cast %503 : vector<2x8xf32> to vector<2x8x1xf32>
    %505 = vector.broadcast %504 : vector<2x8x1xf32> to vector<2x8x8xf32>
    %506 = arith.divf %502, %505 : vector<2x8x8xf32>
    %507 = arith.truncf %506 : vector<2x8x8xf32> to vector<2x8x8xbf16>
    %508 = vector.extract_strided_slice %356 {offsets = [0, 0, 48], sizes = [2, 8, 8], strides = [1, 1, 1]} : vector<2x8x64xf32> to vector<2x8x8xf32>
    %509 = arith.truncf %508 : vector<2x8x8xf32> to vector<2x8x8xbf16>
    "tpu.trace_start"() <{level = 10 : i32, message = "bqk,bkd->bqd"}> : () -> ()
    %cst_140 = arith.constant dense<0.000000e+00> : vector<2x8x8xf32>
    %510 = tpu.matmul %507, %509, %cst_140 {dimension_numbers = #tpu.dot_dimension_numbers<[2], [1], [1], [2], [0, 0, 0, 1, 1, 2], [0], [0]>} : vector<2x8x8xbf16>, vector<2x8x8xbf16>, vector<2x8x8xf32> -> vector<2x8x8xf32>
    "tpu.trace_stop"() : () -> ()
    %511 = vector.extract_strided_slice %346 {offsets = [0, 0, 56], sizes = [2, 8, 8], strides = [1, 1, 1]} : vector<2x8x64xf32> to vector<2x8x8xf32>
    %512 = arith.truncf %511 : vector<2x8x8xf32> to vector<2x8x8xbf16>
    %513 = vector.extract_strided_slice %351 {offsets = [0, 0, 56], sizes = [2, 8, 8], strides = [1, 1, 1]} : vector<2x8x64xf32> to vector<2x8x8xf32>
    %514 = arith.truncf %513 : vector<2x8x8xf32> to vector<2x8x8xbf16>
    "tpu.trace_start"() <{level = 10 : i32, message = "bqd,bkd->bqk"}> : () -> ()
    %cst_141 = arith.constant dense<0.000000e+00> : vector<2x8x8xf32>
    %515 = tpu.matmul %512, %514, %cst_141 {dimension_numbers = #tpu.dot_dimension_numbers<[2], [2], [1], [1], [0, 0, 0, 1, 1, 1], [0], [0]>} : vector<2x8x8xbf16>, vector<2x8x8xbf16>, vector<2x8x8xf32> -> vector<2x8x8xf32>
    "tpu.trace_stop"() : () -> ()
    %cst_142 = arith.constant 0.353553385 : f32
    %516 = vector.broadcast %cst_142 : f32 to vector<2x8x8xf32>
    %517 = arith.mulf %515, %516 : vector<2x8x8xf32>
    %518 = vector.broadcast %5 : vector<2x1x8xf32> to vector<2x8x8xf32>
    %519 = arith.addf %517, %518 : vector<2x8x8xf32>
    %cst_143 = arith.constant dense<0xFF800000> : vector<2x8xf32>
    %520 = vector.multi_reduction <maximumf>, %519, %cst_143 [2] : vector<2x8x8xf32> to vector<2x8xf32>
    %521 = vector.shape_cast %520 : vector<2x8xf32> to vector<2x8x1xf32>
    %522 = vector.broadcast %521 : vector<2x8x1xf32> to vector<2x8x8xf32>
    %523 = arith.subf %519, %522 : vector<2x8x8xf32>
    %524 = math.exp %523 : vector<2x8x8xf32>
    %cst_144 = arith.constant dense<0.000000e+00> : vector<2x8xf32>
    %525 = vector.multi_reduction <add>, %524, %cst_144 [2] : vector<2x8x8xf32> to vector<2x8xf32>
    %526 = vector.shape_cast %525 : vector<2x8xf32> to vector<2x8x1xf32>
    %527 = vector.broadcast %526 : vector<2x8x1xf32> to vector<2x8x8xf32>
    %528 = arith.divf %524, %527 : vector<2x8x8xf32>
    %529 = arith.truncf %528 : vector<2x8x8xf32> to vector<2x8x8xbf16>
    %530 = vector.extract_strided_slice %356 {offsets = [0, 0, 56], sizes = [2, 8, 8], strides = [1, 1, 1]} : vector<2x8x64xf32> to vector<2x8x8xf32>
    %531 = arith.truncf %530 : vector<2x8x8xf32> to vector<2x8x8xbf16>
    "tpu.trace_start"() <{level = 10 : i32, message = "bqk,bkd->bqd"}> : () -> ()
    %cst_145 = arith.constant dense<0.000000e+00> : vector<2x8x8xf32>
    %532 = tpu.matmul %529, %531, %cst_145 {dimension_numbers = #tpu.dot_dimension_numbers<[2], [1], [1], [2], [0, 0, 0, 1, 1, 2], [0], [0]>} : vector<2x8x8xbf16>, vector<2x8x8xbf16>, vector<2x8x8xf32> -> vector<2x8x8xf32>
    "tpu.trace_stop"() : () -> ()
    %533 = tpu.concatenate %378, %400, %422, %444, %466, %488, %510, %532 in 2 : vector<2x8x8xf32>, vector<2x8x8xf32>, vector<2x8x8xf32>, vector<2x8x8xf32>, vector<2x8x8xf32>, vector<2x8x8xf32>, vector<2x8x8xf32>, vector<2x8x8xf32> -> vector<2x8x64xf32>
    %534 = vector.shape_cast %533 : vector<2x8x64xf32> to vector<16x64xf32>
    %535 = arith.truncf %534 : vector<16x64xf32> to vector<16x64xbf16>
    %c1_146 = arith.constant 1 : index
    %c0_147 = arith.constant 0 : index
    %c0_148 = arith.constant 0 : index
    %536 = vector.load %arg3[%c1_146, %c0_147, %c0_148] : memref<3x64x64xbf16, #tpu.memory_space<vmem>>, vector<1x64x64xbf16>
    %537 = vector.shape_cast %536 : vector<1x64x64xbf16> to vector<64x64xbf16>
    %cst_149 = arith.constant dense<0.000000e+00> : vector<16x64xf32>
    %538 = tpu.matmul %535, %537, %cst_149 {dimension_numbers = #tpu.dot_dimension_numbers<[1], [0], [0], [1], [0, 0, 1, 1], [], []>} : vector<16x64xbf16>, vector<64x64xbf16>, vector<16x64xf32> -> vector<16x64xf32>
    %539 = vector.extract_strided_slice %337 {offsets = [3, 0], sizes = [1, 64], strides = [1, 1]} : vector<9x64xf32> to vector<1x64xf32>
    %540 = vector.broadcast %539 : vector<1x64xf32> to vector<16x64xf32>
    %541 = arith.addf %538, %540 : vector<16x64xf32>
    %542 = arith.addf %335, %541 : vector<16x64xf32>
    %543 = vector.extract_strided_slice %337 {offsets = [4, 0], sizes = [1, 64], strides = [1, 1]} : vector<9x64xf32> to vector<1x64xf32>
    %544 = vector.extract_strided_slice %337 {offsets = [5, 0], sizes = [1, 64], strides = [1, 1]} : vector<9x64xf32> to vector<1x64xf32>
    %cst_150 = arith.constant dense<0.000000e+00> : vector<16xf32>
    %545 = vector.multi_reduction <add>, %542, %cst_150 [1] : vector<16x64xf32> to vector<16xf32>
    %546 = vector.shape_cast %545 : vector<16xf32> to vector<16x1xf32>
    %cst_151 = arith.constant 6.400000e+01 : f32
    %547 = vector.broadcast %cst_151 : f32 to vector<16x1xf32>
    %548 = arith.divf %546, %547 : vector<16x1xf32>
    %549 = vector.broadcast %548 : vector<16x1xf32> to vector<16x64xf32>
    %550 = arith.subf %542, %549 : vector<16x64xf32>
    %551 = arith.mulf %550, %550 : vector<16x64xf32>
    %cst_152 = arith.constant dense<0.000000e+00> : vector<16xf32>
    %552 = vector.multi_reduction <add>, %551, %cst_152 [1] : vector<16x64xf32> to vector<16xf32>
    %553 = vector.shape_cast %552 : vector<16xf32> to vector<16x1xf32>
    %cst_153 = arith.constant 6.400000e+01 : f32
    %554 = vector.broadcast %cst_153 : f32 to vector<16x1xf32>
    %555 = arith.divf %553, %554 : vector<16x1xf32>
    %cst_154 = arith.constant 9.99999996E-13 : f32
    %556 = vector.broadcast %cst_154 : f32 to vector<16x1xf32>
    %557 = arith.addf %555, %556 : vector<16x1xf32>
    %558 = math.rsqrt %557 : vector<16x1xf32>
    %559 = vector.broadcast %558 : vector<16x1xf32> to vector<16x64xf32>
    %560 = arith.mulf %550, %559 : vector<16x64xf32>
    %561 = vector.broadcast %543 : vector<1x64xf32> to vector<16x64xf32>
    %562 = arith.mulf %560, %561 : vector<16x64xf32>
    %563 = vector.broadcast %544 : vector<1x64xf32> to vector<16x64xf32>
    %564 = arith.addf %562, %563 : vector<16x64xf32>
    %565 = arith.truncf %564 : vector<16x64xf32> to vector<16x64xbf16>
    %c1_155 = arith.constant 1 : index
    %c0_156 = arith.constant 0 : index
    %c0_157 = arith.constant 0 : index
    %566 = vector.load %arg4[%c1_155, %c0_156, %c0_157] : memref<3x64x256xbf16, #tpu.memory_space<vmem>>, vector<1x64x256xbf16>
    %567 = vector.shape_cast %566 : vector<1x64x256xbf16> to vector<64x256xbf16>
    %cst_158 = arith.constant dense<0.000000e+00> : vector<16x256xf32>
    %568 = tpu.matmul %565, %567, %cst_158 {dimension_numbers = #tpu.dot_dimension_numbers<[1], [0], [0], [1], [0, 0, 1, 1], [], []>} : vector<16x64xbf16>, vector<64x256xbf16>, vector<16x256xf32> -> vector<16x256xf32>
    %c1_159 = arith.constant 1 : index
    %c0_160 = arith.constant 0 : index
    %c0_161 = arith.constant 0 : index
    %569 = vector.load %arg7[%c1_159, %c0_160, %c0_161] : memref<3x1x256xf32, #tpu.memory_space<vmem>>, vector<1x1x256xf32>
    %570 = vector.shape_cast %569 : vector<1x1x256xf32> to vector<1x256xf32>
    %571 = vector.broadcast %570 : vector<1x256xf32> to vector<16x256xf32>
    %572 = arith.addf %568, %571 : vector<16x256xf32>
    %cst_162 = arith.constant 0.707106769 : f32
    %573 = vector.broadcast %cst_162 : f32 to vector<16x256xf32>
    %574 = arith.mulf %572, %573 : vector<16x256xf32>
    %575 = math.absf %574 : vector<16x256xf32>
    %cst_163 = arith.constant 0.327591091 : f32
    %576 = vector.broadcast %cst_163 : f32 to vector<16x256xf32>
    %577 = arith.mulf %576, %575 : vector<16x256xf32>
    %cst_164 = arith.constant 1.000000e+00 : f32
    %578 = vector.broadcast %cst_164 : f32 to vector<16x256xf32>
    %579 = arith.addf %578, %577 : vector<16x256xf32>
    %cst_165 = arith.constant 1.000000e+00 : f32
    %580 = vector.broadcast %cst_165 : f32 to vector<16x256xf32>
    %581 = arith.divf %580, %579 : vector<16x256xf32>
    %cst_166 = arith.constant 1.06140542 : f32
    %582 = vector.broadcast %cst_166 : f32 to vector<16x256xf32>
    %583 = arith.mulf %581, %582 : vector<16x256xf32>
    %cst_167 = arith.constant -1.45315206 : f32
    %584 = vector.broadcast %cst_167 : f32 to vector<16x256xf32>
    %585 = arith.addf %584, %583 : vector<16x256xf32>
    %586 = arith.mulf %581, %585 : vector<16x256xf32>
    %cst_168 = arith.constant 1.42141378 : f32
    %587 = vector.broadcast %cst_168 : f32 to vector<16x256xf32>
    %588 = arith.addf %587, %586 : vector<16x256xf32>
    %589 = arith.mulf %581, %588 : vector<16x256xf32>
    %cst_169 = arith.constant -0.284496725 : f32
    %590 = vector.broadcast %cst_169 : f32 to vector<16x256xf32>
    %591 = arith.addf %590, %589 : vector<16x256xf32>
    %592 = arith.mulf %581, %591 : vector<16x256xf32>
    %cst_170 = arith.constant 0.254829586 : f32
    %593 = vector.broadcast %cst_170 : f32 to vector<16x256xf32>
    %594 = arith.addf %593, %592 : vector<16x256xf32>
    %595 = arith.mulf %581, %594 : vector<16x256xf32>
    %cst_171 = arith.constant 0.000000e+00 : f32
    %596 = vector.broadcast %cst_171 : f32 to vector<16x256xf32>
    %597 = arith.subf %596, %575 : vector<16x256xf32>
    %598 = arith.mulf %597, %575 : vector<16x256xf32>
    %599 = math.exp %598 : vector<16x256xf32>
    %600 = arith.mulf %595, %599 : vector<16x256xf32>
    %cst_172 = arith.constant 1.000000e+00 : f32
    %601 = vector.broadcast %cst_172 : f32 to vector<16x256xf32>
    %602 = arith.subf %601, %600 : vector<16x256xf32>
    %cst_173 = arith.constant 0.000000e+00 : f32
    %603 = vector.broadcast %cst_173 : f32 to vector<16x256xf32>
    %604 = arith.cmpf oge, %574, %603 : vector<16x256xf32>
    %cst_174 = arith.constant 0.000000e+00 : f32
    %605 = vector.broadcast %cst_174 : f32 to vector<16x256xf32>
    %606 = arith.subf %605, %602 : vector<16x256xf32>
    %607 = arith.select %604, %602, %606 : vector<16x256xi1>, vector<16x256xf32>
    %cst_175 = arith.constant 5.000000e-01 : f32
    %608 = vector.broadcast %cst_175 : f32 to vector<16x256xf32>
    %609 = arith.mulf %608, %572 : vector<16x256xf32>
    %cst_176 = arith.constant 1.000000e+00 : f32
    %610 = vector.broadcast %cst_176 : f32 to vector<16x256xf32>
    %611 = arith.addf %610, %607 : vector<16x256xf32>
    %612 = arith.mulf %609, %611 : vector<16x256xf32>
    %613 = arith.truncf %612 : vector<16x256xf32> to vector<16x256xbf16>
    %c1_177 = arith.constant 1 : index
    %c0_178 = arith.constant 0 : index
    %c0_179 = arith.constant 0 : index
    %614 = vector.load %arg5[%c1_177, %c0_178, %c0_179] : memref<3x256x64xbf16, #tpu.memory_space<vmem>>, vector<1x256x64xbf16>
    %615 = vector.shape_cast %614 : vector<1x256x64xbf16> to vector<256x64xbf16>
    %cst_180 = arith.constant dense<0.000000e+00> : vector<16x64xf32>
    %616 = tpu.matmul %613, %615, %cst_180 {dimension_numbers = #tpu.dot_dimension_numbers<[1], [0], [0], [1], [0, 0, 1, 1], [], []>} : vector<16x256xbf16>, vector<256x64xbf16>, vector<16x64xf32> -> vector<16x64xf32>
    %617 = vector.extract_strided_slice %337 {offsets = [6, 0], sizes = [1, 64], strides = [1, 1]} : vector<9x64xf32> to vector<1x64xf32>
    %618 = vector.broadcast %617 : vector<1x64xf32> to vector<16x64xf32>
    %619 = arith.addf %616, %618 : vector<16x64xf32>
    %620 = arith.addf %564, %619 : vector<16x64xf32>
    %621 = vector.extract_strided_slice %337 {offsets = [7, 0], sizes = [1, 64], strides = [1, 1]} : vector<9x64xf32> to vector<1x64xf32>
    %622 = vector.extract_strided_slice %337 {offsets = [8, 0], sizes = [1, 64], strides = [1, 1]} : vector<9x64xf32> to vector<1x64xf32>
    %cst_181 = arith.constant dense<0.000000e+00> : vector<16xf32>
    %623 = vector.multi_reduction <add>, %620, %cst_181 [1] : vector<16x64xf32> to vector<16xf32>
    %624 = vector.shape_cast %623 : vector<16xf32> to vector<16x1xf32>
    %cst_182 = arith.constant 6.400000e+01 : f32
    %625 = vector.broadcast %cst_182 : f32 to vector<16x1xf32>
    %626 = arith.divf %624, %625 : vector<16x1xf32>
    %627 = vector.broadcast %626 : vector<16x1xf32> to vector<16x64xf32>
    %628 = arith.subf %620, %627 : vector<16x64xf32>
    %629 = arith.mulf %628, %628 : vector<16x64xf32>
    %cst_183 = arith.constant dense<0.000000e+00> : vector<16xf32>
    %630 = vector.multi_reduction <add>, %629, %cst_183 [1] : vector<16x64xf32> to vector<16xf32>
    %631 = vector.shape_cast %630 : vector<16xf32> to vector<16x1xf32>
    %cst_184 = arith.constant 6.400000e+01 : f32
    %632 = vector.broadcast %cst_184 : f32 to vector<16x1xf32>
    %633 = arith.divf %631, %632 : vector<16x1xf32>
    %cst_185 = arith.constant 9.99999996E-13 : f32
    %634 = vector.broadcast %cst_185 : f32 to vector<16x1xf32>
    %635 = arith.addf %633, %634 : vector<16x1xf32>
    %636 = math.rsqrt %635 : vector<16x1xf32>
    %637 = vector.broadcast %636 : vector<16x1xf32> to vector<16x64xf32>
    %638 = arith.mulf %628, %637 : vector<16x64xf32>
    %639 = vector.broadcast %621 : vector<1x64xf32> to vector<16x64xf32>
    %640 = arith.mulf %638, %639 : vector<16x64xf32>
    %641 = vector.broadcast %622 : vector<1x64xf32> to vector<16x64xf32>
    %642 = arith.addf %640, %641 : vector<16x64xf32>
    %c2 = arith.constant 2 : index
    %c0_186 = arith.constant 0 : index
    %c0_187 = arith.constant 0 : index
    %643 = vector.load %arg6[%c2, %c0_186, %c0_187] : memref<3x9x64xf32, #tpu.memory_space<vmem>>, vector<1x9x64xf32>
    %644 = vector.shape_cast %643 : vector<1x9x64xf32> to vector<9x64xf32>
    %645 = arith.truncf %642 : vector<16x64xf32> to vector<16x64xbf16>
    %c2_188 = arith.constant 2 : index
    %c0_189 = arith.constant 0 : index
    %c0_190 = arith.constant 0 : index
    %646 = vector.load %arg2[%c2_188, %c0_189, %c0_190] : memref<3x64x192xbf16, #tpu.memory_space<vmem>>, vector<1x64x192xbf16>
    %647 = vector.shape_cast %646 : vector<1x64x192xbf16> to vector<64x192xbf16>
    %cst_191 = arith.constant dense<0.000000e+00> : vector<16x192xf32>
    %648 = tpu.matmul %645, %647, %cst_191 {dimension_numbers = #tpu.dot_dimension_numbers<[1], [0], [0], [1], [0, 0, 1, 1], [], []>} : vector<16x64xbf16>, vector<64x192xbf16>, vector<16x192xf32> -> vector<16x192xf32>
    %649 = vector.extract_strided_slice %648 {offsets = [0, 0], sizes = [16, 64], strides = [1, 1]} : vector<16x192xf32> to vector<16x64xf32>
    %650 = vector.extract_strided_slice %644 {offsets = [0, 0], sizes = [1, 64], strides = [1, 1]} : vector<9x64xf32> to vector<1x64xf32>
    %651 = vector.broadcast %650 : vector<1x64xf32> to vector<16x64xf32>
    %652 = arith.addf %649, %651 : vector<16x64xf32>
    %653 = vector.shape_cast %652 : vector<16x64xf32> to vector<2x8x64xf32>
    %654 = vector.extract_strided_slice %648 {offsets = [0, 64], sizes = [16, 64], strides = [1, 1]} : vector<16x192xf32> to vector<16x64xf32>
    %655 = vector.extract_strided_slice %644 {offsets = [1, 0], sizes = [1, 64], strides = [1, 1]} : vector<9x64xf32> to vector<1x64xf32>
    %656 = vector.broadcast %655 : vector<1x64xf32> to vector<16x64xf32>
    %657 = arith.addf %654, %656 : vector<16x64xf32>
    %658 = vector.shape_cast %657 : vector<16x64xf32> to vector<2x8x64xf32>
    %659 = vector.extract_strided_slice %648 {offsets = [0, 128], sizes = [16, 64], strides = [1, 1]} : vector<16x192xf32> to vector<16x64xf32>
    %660 = vector.extract_strided_slice %644 {offsets = [2, 0], sizes = [1, 64], strides = [1, 1]} : vector<9x64xf32> to vector<1x64xf32>
    %661 = vector.broadcast %660 : vector<1x64xf32> to vector<16x64xf32>
    %662 = arith.addf %659, %661 : vector<16x64xf32>
    %663 = vector.shape_cast %662 : vector<16x64xf32> to vector<2x8x64xf32>
    %664 = vector.extract_strided_slice %653 {offsets = [0, 0, 0], sizes = [2, 8, 8], strides = [1, 1, 1]} : vector<2x8x64xf32> to vector<2x8x8xf32>
    %665 = arith.truncf %664 : vector<2x8x8xf32> to vector<2x8x8xbf16>
    %666 = vector.extract_strided_slice %658 {offsets = [0, 0, 0], sizes = [2, 8, 8], strides = [1, 1, 1]} : vector<2x8x64xf32> to vector<2x8x8xf32>
    %667 = arith.truncf %666 : vector<2x8x8xf32> to vector<2x8x8xbf16>
    "tpu.trace_start"() <{level = 10 : i32, message = "bqd,bkd->bqk"}> : () -> ()
    %cst_192 = arith.constant dense<0.000000e+00> : vector<2x8x8xf32>
    %668 = tpu.matmul %665, %667, %cst_192 {dimension_numbers = #tpu.dot_dimension_numbers<[2], [2], [1], [1], [0, 0, 0, 1, 1, 1], [0], [0]>} : vector<2x8x8xbf16>, vector<2x8x8xbf16>, vector<2x8x8xf32> -> vector<2x8x8xf32>
    "tpu.trace_stop"() : () -> ()
    %cst_193 = arith.constant 0.353553385 : f32
    %669 = vector.broadcast %cst_193 : f32 to vector<2x8x8xf32>
    %670 = arith.mulf %668, %669 : vector<2x8x8xf32>
    %671 = vector.broadcast %5 : vector<2x1x8xf32> to vector<2x8x8xf32>
    %672 = arith.addf %670, %671 : vector<2x8x8xf32>
    %cst_194 = arith.constant dense<0xFF800000> : vector<2x8xf32>
    %673 = vector.multi_reduction <maximumf>, %672, %cst_194 [2] : vector<2x8x8xf32> to vector<2x8xf32>
    %674 = vector.shape_cast %673 : vector<2x8xf32> to vector<2x8x1xf32>
    %675 = vector.broadcast %674 : vector<2x8x1xf32> to vector<2x8x8xf32>
    %676 = arith.subf %672, %675 : vector<2x8x8xf32>
    %677 = math.exp %676 : vector<2x8x8xf32>
    %cst_195 = arith.constant dense<0.000000e+00> : vector<2x8xf32>
    %678 = vector.multi_reduction <add>, %677, %cst_195 [2] : vector<2x8x8xf32> to vector<2x8xf32>
    %679 = vector.shape_cast %678 : vector<2x8xf32> to vector<2x8x1xf32>
    %680 = vector.broadcast %679 : vector<2x8x1xf32> to vector<2x8x8xf32>
    %681 = arith.divf %677, %680 : vector<2x8x8xf32>
    %682 = arith.truncf %681 : vector<2x8x8xf32> to vector<2x8x8xbf16>
    %683 = vector.extract_strided_slice %663 {offsets = [0, 0, 0], sizes = [2, 8, 8], strides = [1, 1, 1]} : vector<2x8x64xf32> to vector<2x8x8xf32>
    %684 = arith.truncf %683 : vector<2x8x8xf32> to vector<2x8x8xbf16>
    "tpu.trace_start"() <{level = 10 : i32, message = "bqk,bkd->bqd"}> : () -> ()
    %cst_196 = arith.constant dense<0.000000e+00> : vector<2x8x8xf32>
    %685 = tpu.matmul %682, %684, %cst_196 {dimension_numbers = #tpu.dot_dimension_numbers<[2], [1], [1], [2], [0, 0, 0, 1, 1, 2], [0], [0]>} : vector<2x8x8xbf16>, vector<2x8x8xbf16>, vector<2x8x8xf32> -> vector<2x8x8xf32>
    "tpu.trace_stop"() : () -> ()
    %686 = vector.extract_strided_slice %653 {offsets = [0, 0, 8], sizes = [2, 8, 8], strides = [1, 1, 1]} : vector<2x8x64xf32> to vector<2x8x8xf32>
    %687 = arith.truncf %686 : vector<2x8x8xf32> to vector<2x8x8xbf16>
    %688 = vector.extract_strided_slice %658 {offsets = [0, 0, 8], sizes = [2, 8, 8], strides = [1, 1, 1]} : vector<2x8x64xf32> to vector<2x8x8xf32>
    %689 = arith.truncf %688 : vector<2x8x8xf32> to vector<2x8x8xbf16>
    "tpu.trace_start"() <{level = 10 : i32, message = "bqd,bkd->bqk"}> : () -> ()
    %cst_197 = arith.constant dense<0.000000e+00> : vector<2x8x8xf32>
    %690 = tpu.matmul %687, %689, %cst_197 {dimension_numbers = #tpu.dot_dimension_numbers<[2], [2], [1], [1], [0, 0, 0, 1, 1, 1], [0], [0]>} : vector<2x8x8xbf16>, vector<2x8x8xbf16>, vector<2x8x8xf32> -> vector<2x8x8xf32>
    "tpu.trace_stop"() : () -> ()
    %cst_198 = arith.constant 0.353553385 : f32
    %691 = vector.broadcast %cst_198 : f32 to vector<2x8x8xf32>
    %692 = arith.mulf %690, %691 : vector<2x8x8xf32>
    %693 = vector.broadcast %5 : vector<2x1x8xf32> to vector<2x8x8xf32>
    %694 = arith.addf %692, %693 : vector<2x8x8xf32>
    %cst_199 = arith.constant dense<0xFF800000> : vector<2x8xf32>
    %695 = vector.multi_reduction <maximumf>, %694, %cst_199 [2] : vector<2x8x8xf32> to vector<2x8xf32>
    %696 = vector.shape_cast %695 : vector<2x8xf32> to vector<2x8x1xf32>
    %697 = vector.broadcast %696 : vector<2x8x1xf32> to vector<2x8x8xf32>
    %698 = arith.subf %694, %697 : vector<2x8x8xf32>
    %699 = math.exp %698 : vector<2x8x8xf32>
    %cst_200 = arith.constant dense<0.000000e+00> : vector<2x8xf32>
    %700 = vector.multi_reduction <add>, %699, %cst_200 [2] : vector<2x8x8xf32> to vector<2x8xf32>
    %701 = vector.shape_cast %700 : vector<2x8xf32> to vector<2x8x1xf32>
    %702 = vector.broadcast %701 : vector<2x8x1xf32> to vector<2x8x8xf32>
    %703 = arith.divf %699, %702 : vector<2x8x8xf32>
    %704 = arith.truncf %703 : vector<2x8x8xf32> to vector<2x8x8xbf16>
    %705 = vector.extract_strided_slice %663 {offsets = [0, 0, 8], sizes = [2, 8, 8], strides = [1, 1, 1]} : vector<2x8x64xf32> to vector<2x8x8xf32>
    %706 = arith.truncf %705 : vector<2x8x8xf32> to vector<2x8x8xbf16>
    "tpu.trace_start"() <{level = 10 : i32, message = "bqk,bkd->bqd"}> : () -> ()
    %cst_201 = arith.constant dense<0.000000e+00> : vector<2x8x8xf32>
    %707 = tpu.matmul %704, %706, %cst_201 {dimension_numbers = #tpu.dot_dimension_numbers<[2], [1], [1], [2], [0, 0, 0, 1, 1, 2], [0], [0]>} : vector<2x8x8xbf16>, vector<2x8x8xbf16>, vector<2x8x8xf32> -> vector<2x8x8xf32>
    "tpu.trace_stop"() : () -> ()
    %708 = vector.extract_strided_slice %653 {offsets = [0, 0, 16], sizes = [2, 8, 8], strides = [1, 1, 1]} : vector<2x8x64xf32> to vector<2x8x8xf32>
    %709 = arith.truncf %708 : vector<2x8x8xf32> to vector<2x8x8xbf16>
    %710 = vector.extract_strided_slice %658 {offsets = [0, 0, 16], sizes = [2, 8, 8], strides = [1, 1, 1]} : vector<2x8x64xf32> to vector<2x8x8xf32>
    %711 = arith.truncf %710 : vector<2x8x8xf32> to vector<2x8x8xbf16>
    "tpu.trace_start"() <{level = 10 : i32, message = "bqd,bkd->bqk"}> : () -> ()
    %cst_202 = arith.constant dense<0.000000e+00> : vector<2x8x8xf32>
    %712 = tpu.matmul %709, %711, %cst_202 {dimension_numbers = #tpu.dot_dimension_numbers<[2], [2], [1], [1], [0, 0, 0, 1, 1, 1], [0], [0]>} : vector<2x8x8xbf16>, vector<2x8x8xbf16>, vector<2x8x8xf32> -> vector<2x8x8xf32>
    "tpu.trace_stop"() : () -> ()
    %cst_203 = arith.constant 0.353553385 : f32
    %713 = vector.broadcast %cst_203 : f32 to vector<2x8x8xf32>
    %714 = arith.mulf %712, %713 : vector<2x8x8xf32>
    %715 = vector.broadcast %5 : vector<2x1x8xf32> to vector<2x8x8xf32>
    %716 = arith.addf %714, %715 : vector<2x8x8xf32>
    %cst_204 = arith.constant dense<0xFF800000> : vector<2x8xf32>
    %717 = vector.multi_reduction <maximumf>, %716, %cst_204 [2] : vector<2x8x8xf32> to vector<2x8xf32>
    %718 = vector.shape_cast %717 : vector<2x8xf32> to vector<2x8x1xf32>
    %719 = vector.broadcast %718 : vector<2x8x1xf32> to vector<2x8x8xf32>
    %720 = arith.subf %716, %719 : vector<2x8x8xf32>
    %721 = math.exp %720 : vector<2x8x8xf32>
    %cst_205 = arith.constant dense<0.000000e+00> : vector<2x8xf32>
    %722 = vector.multi_reduction <add>, %721, %cst_205 [2] : vector<2x8x8xf32> to vector<2x8xf32>
    %723 = vector.shape_cast %722 : vector<2x8xf32> to vector<2x8x1xf32>
    %724 = vector.broadcast %723 : vector<2x8x1xf32> to vector<2x8x8xf32>
    %725 = arith.divf %721, %724 : vector<2x8x8xf32>
    %726 = arith.truncf %725 : vector<2x8x8xf32> to vector<2x8x8xbf16>
    %727 = vector.extract_strided_slice %663 {offsets = [0, 0, 16], sizes = [2, 8, 8], strides = [1, 1, 1]} : vector<2x8x64xf32> to vector<2x8x8xf32>
    %728 = arith.truncf %727 : vector<2x8x8xf32> to vector<2x8x8xbf16>
    "tpu.trace_start"() <{level = 10 : i32, message = "bqk,bkd->bqd"}> : () -> ()
    %cst_206 = arith.constant dense<0.000000e+00> : vector<2x8x8xf32>
    %729 = tpu.matmul %726, %728, %cst_206 {dimension_numbers = #tpu.dot_dimension_numbers<[2], [1], [1], [2], [0, 0, 0, 1, 1, 2], [0], [0]>} : vector<2x8x8xbf16>, vector<2x8x8xbf16>, vector<2x8x8xf32> -> vector<2x8x8xf32>
    "tpu.trace_stop"() : () -> ()
    %730 = vector.extract_strided_slice %653 {offsets = [0, 0, 24], sizes = [2, 8, 8], strides = [1, 1, 1]} : vector<2x8x64xf32> to vector<2x8x8xf32>
    %731 = arith.truncf %730 : vector<2x8x8xf32> to vector<2x8x8xbf16>
    %732 = vector.extract_strided_slice %658 {offsets = [0, 0, 24], sizes = [2, 8, 8], strides = [1, 1, 1]} : vector<2x8x64xf32> to vector<2x8x8xf32>
    %733 = arith.truncf %732 : vector<2x8x8xf32> to vector<2x8x8xbf16>
    "tpu.trace_start"() <{level = 10 : i32, message = "bqd,bkd->bqk"}> : () -> ()
    %cst_207 = arith.constant dense<0.000000e+00> : vector<2x8x8xf32>
    %734 = tpu.matmul %731, %733, %cst_207 {dimension_numbers = #tpu.dot_dimension_numbers<[2], [2], [1], [1], [0, 0, 0, 1, 1, 1], [0], [0]>} : vector<2x8x8xbf16>, vector<2x8x8xbf16>, vector<2x8x8xf32> -> vector<2x8x8xf32>
    "tpu.trace_stop"() : () -> ()
    %cst_208 = arith.constant 0.353553385 : f32
    %735 = vector.broadcast %cst_208 : f32 to vector<2x8x8xf32>
    %736 = arith.mulf %734, %735 : vector<2x8x8xf32>
    %737 = vector.broadcast %5 : vector<2x1x8xf32> to vector<2x8x8xf32>
    %738 = arith.addf %736, %737 : vector<2x8x8xf32>
    %cst_209 = arith.constant dense<0xFF800000> : vector<2x8xf32>
    %739 = vector.multi_reduction <maximumf>, %738, %cst_209 [2] : vector<2x8x8xf32> to vector<2x8xf32>
    %740 = vector.shape_cast %739 : vector<2x8xf32> to vector<2x8x1xf32>
    %741 = vector.broadcast %740 : vector<2x8x1xf32> to vector<2x8x8xf32>
    %742 = arith.subf %738, %741 : vector<2x8x8xf32>
    %743 = math.exp %742 : vector<2x8x8xf32>
    %cst_210 = arith.constant dense<0.000000e+00> : vector<2x8xf32>
    %744 = vector.multi_reduction <add>, %743, %cst_210 [2] : vector<2x8x8xf32> to vector<2x8xf32>
    %745 = vector.shape_cast %744 : vector<2x8xf32> to vector<2x8x1xf32>
    %746 = vector.broadcast %745 : vector<2x8x1xf32> to vector<2x8x8xf32>
    %747 = arith.divf %743, %746 : vector<2x8x8xf32>
    %748 = arith.truncf %747 : vector<2x8x8xf32> to vector<2x8x8xbf16>
    %749 = vector.extract_strided_slice %663 {offsets = [0, 0, 24], sizes = [2, 8, 8], strides = [1, 1, 1]} : vector<2x8x64xf32> to vector<2x8x8xf32>
    %750 = arith.truncf %749 : vector<2x8x8xf32> to vector<2x8x8xbf16>
    "tpu.trace_start"() <{level = 10 : i32, message = "bqk,bkd->bqd"}> : () -> ()
    %cst_211 = arith.constant dense<0.000000e+00> : vector<2x8x8xf32>
    %751 = tpu.matmul %748, %750, %cst_211 {dimension_numbers = #tpu.dot_dimension_numbers<[2], [1], [1], [2], [0, 0, 0, 1, 1, 2], [0], [0]>} : vector<2x8x8xbf16>, vector<2x8x8xbf16>, vector<2x8x8xf32> -> vector<2x8x8xf32>
    "tpu.trace_stop"() : () -> ()
    %752 = vector.extract_strided_slice %653 {offsets = [0, 0, 32], sizes = [2, 8, 8], strides = [1, 1, 1]} : vector<2x8x64xf32> to vector<2x8x8xf32>
    %753 = arith.truncf %752 : vector<2x8x8xf32> to vector<2x8x8xbf16>
    %754 = vector.extract_strided_slice %658 {offsets = [0, 0, 32], sizes = [2, 8, 8], strides = [1, 1, 1]} : vector<2x8x64xf32> to vector<2x8x8xf32>
    %755 = arith.truncf %754 : vector<2x8x8xf32> to vector<2x8x8xbf16>
    "tpu.trace_start"() <{level = 10 : i32, message = "bqd,bkd->bqk"}> : () -> ()
    %cst_212 = arith.constant dense<0.000000e+00> : vector<2x8x8xf32>
    %756 = tpu.matmul %753, %755, %cst_212 {dimension_numbers = #tpu.dot_dimension_numbers<[2], [2], [1], [1], [0, 0, 0, 1, 1, 1], [0], [0]>} : vector<2x8x8xbf16>, vector<2x8x8xbf16>, vector<2x8x8xf32> -> vector<2x8x8xf32>
    "tpu.trace_stop"() : () -> ()
    %cst_213 = arith.constant 0.353553385 : f32
    %757 = vector.broadcast %cst_213 : f32 to vector<2x8x8xf32>
    %758 = arith.mulf %756, %757 : vector<2x8x8xf32>
    %759 = vector.broadcast %5 : vector<2x1x8xf32> to vector<2x8x8xf32>
    %760 = arith.addf %758, %759 : vector<2x8x8xf32>
    %cst_214 = arith.constant dense<0xFF800000> : vector<2x8xf32>
    %761 = vector.multi_reduction <maximumf>, %760, %cst_214 [2] : vector<2x8x8xf32> to vector<2x8xf32>
    %762 = vector.shape_cast %761 : vector<2x8xf32> to vector<2x8x1xf32>
    %763 = vector.broadcast %762 : vector<2x8x1xf32> to vector<2x8x8xf32>
    %764 = arith.subf %760, %763 : vector<2x8x8xf32>
    %765 = math.exp %764 : vector<2x8x8xf32>
    %cst_215 = arith.constant dense<0.000000e+00> : vector<2x8xf32>
    %766 = vector.multi_reduction <add>, %765, %cst_215 [2] : vector<2x8x8xf32> to vector<2x8xf32>
    %767 = vector.shape_cast %766 : vector<2x8xf32> to vector<2x8x1xf32>
    %768 = vector.broadcast %767 : vector<2x8x1xf32> to vector<2x8x8xf32>
    %769 = arith.divf %765, %768 : vector<2x8x8xf32>
    %770 = arith.truncf %769 : vector<2x8x8xf32> to vector<2x8x8xbf16>
    %771 = vector.extract_strided_slice %663 {offsets = [0, 0, 32], sizes = [2, 8, 8], strides = [1, 1, 1]} : vector<2x8x64xf32> to vector<2x8x8xf32>
    %772 = arith.truncf %771 : vector<2x8x8xf32> to vector<2x8x8xbf16>
    "tpu.trace_start"() <{level = 10 : i32, message = "bqk,bkd->bqd"}> : () -> ()
    %cst_216 = arith.constant dense<0.000000e+00> : vector<2x8x8xf32>
    %773 = tpu.matmul %770, %772, %cst_216 {dimension_numbers = #tpu.dot_dimension_numbers<[2], [1], [1], [2], [0, 0, 0, 1, 1, 2], [0], [0]>} : vector<2x8x8xbf16>, vector<2x8x8xbf16>, vector<2x8x8xf32> -> vector<2x8x8xf32>
    "tpu.trace_stop"() : () -> ()
    %774 = vector.extract_strided_slice %653 {offsets = [0, 0, 40], sizes = [2, 8, 8], strides = [1, 1, 1]} : vector<2x8x64xf32> to vector<2x8x8xf32>
    %775 = arith.truncf %774 : vector<2x8x8xf32> to vector<2x8x8xbf16>
    %776 = vector.extract_strided_slice %658 {offsets = [0, 0, 40], sizes = [2, 8, 8], strides = [1, 1, 1]} : vector<2x8x64xf32> to vector<2x8x8xf32>
    %777 = arith.truncf %776 : vector<2x8x8xf32> to vector<2x8x8xbf16>
    "tpu.trace_start"() <{level = 10 : i32, message = "bqd,bkd->bqk"}> : () -> ()
    %cst_217 = arith.constant dense<0.000000e+00> : vector<2x8x8xf32>
    %778 = tpu.matmul %775, %777, %cst_217 {dimension_numbers = #tpu.dot_dimension_numbers<[2], [2], [1], [1], [0, 0, 0, 1, 1, 1], [0], [0]>} : vector<2x8x8xbf16>, vector<2x8x8xbf16>, vector<2x8x8xf32> -> vector<2x8x8xf32>
    "tpu.trace_stop"() : () -> ()
    %cst_218 = arith.constant 0.353553385 : f32
    %779 = vector.broadcast %cst_218 : f32 to vector<2x8x8xf32>
    %780 = arith.mulf %778, %779 : vector<2x8x8xf32>
    %781 = vector.broadcast %5 : vector<2x1x8xf32> to vector<2x8x8xf32>
    %782 = arith.addf %780, %781 : vector<2x8x8xf32>
    %cst_219 = arith.constant dense<0xFF800000> : vector<2x8xf32>
    %783 = vector.multi_reduction <maximumf>, %782, %cst_219 [2] : vector<2x8x8xf32> to vector<2x8xf32>
    %784 = vector.shape_cast %783 : vector<2x8xf32> to vector<2x8x1xf32>
    %785 = vector.broadcast %784 : vector<2x8x1xf32> to vector<2x8x8xf32>
    %786 = arith.subf %782, %785 : vector<2x8x8xf32>
    %787 = math.exp %786 : vector<2x8x8xf32>
    %cst_220 = arith.constant dense<0.000000e+00> : vector<2x8xf32>
    %788 = vector.multi_reduction <add>, %787, %cst_220 [2] : vector<2x8x8xf32> to vector<2x8xf32>
    %789 = vector.shape_cast %788 : vector<2x8xf32> to vector<2x8x1xf32>
    %790 = vector.broadcast %789 : vector<2x8x1xf32> to vector<2x8x8xf32>
    %791 = arith.divf %787, %790 : vector<2x8x8xf32>
    %792 = arith.truncf %791 : vector<2x8x8xf32> to vector<2x8x8xbf16>
    %793 = vector.extract_strided_slice %663 {offsets = [0, 0, 40], sizes = [2, 8, 8], strides = [1, 1, 1]} : vector<2x8x64xf32> to vector<2x8x8xf32>
    %794 = arith.truncf %793 : vector<2x8x8xf32> to vector<2x8x8xbf16>
    "tpu.trace_start"() <{level = 10 : i32, message = "bqk,bkd->bqd"}> : () -> ()
    %cst_221 = arith.constant dense<0.000000e+00> : vector<2x8x8xf32>
    %795 = tpu.matmul %792, %794, %cst_221 {dimension_numbers = #tpu.dot_dimension_numbers<[2], [1], [1], [2], [0, 0, 0, 1, 1, 2], [0], [0]>} : vector<2x8x8xbf16>, vector<2x8x8xbf16>, vector<2x8x8xf32> -> vector<2x8x8xf32>
    "tpu.trace_stop"() : () -> ()
    %796 = vector.extract_strided_slice %653 {offsets = [0, 0, 48], sizes = [2, 8, 8], strides = [1, 1, 1]} : vector<2x8x64xf32> to vector<2x8x8xf32>
    %797 = arith.truncf %796 : vector<2x8x8xf32> to vector<2x8x8xbf16>
    %798 = vector.extract_strided_slice %658 {offsets = [0, 0, 48], sizes = [2, 8, 8], strides = [1, 1, 1]} : vector<2x8x64xf32> to vector<2x8x8xf32>
    %799 = arith.truncf %798 : vector<2x8x8xf32> to vector<2x8x8xbf16>
    "tpu.trace_start"() <{level = 10 : i32, message = "bqd,bkd->bqk"}> : () -> ()
    %cst_222 = arith.constant dense<0.000000e+00> : vector<2x8x8xf32>
    %800 = tpu.matmul %797, %799, %cst_222 {dimension_numbers = #tpu.dot_dimension_numbers<[2], [2], [1], [1], [0, 0, 0, 1, 1, 1], [0], [0]>} : vector<2x8x8xbf16>, vector<2x8x8xbf16>, vector<2x8x8xf32> -> vector<2x8x8xf32>
    "tpu.trace_stop"() : () -> ()
    %cst_223 = arith.constant 0.353553385 : f32
    %801 = vector.broadcast %cst_223 : f32 to vector<2x8x8xf32>
    %802 = arith.mulf %800, %801 : vector<2x8x8xf32>
    %803 = vector.broadcast %5 : vector<2x1x8xf32> to vector<2x8x8xf32>
    %804 = arith.addf %802, %803 : vector<2x8x8xf32>
    %cst_224 = arith.constant dense<0xFF800000> : vector<2x8xf32>
    %805 = vector.multi_reduction <maximumf>, %804, %cst_224 [2] : vector<2x8x8xf32> to vector<2x8xf32>
    %806 = vector.shape_cast %805 : vector<2x8xf32> to vector<2x8x1xf32>
    %807 = vector.broadcast %806 : vector<2x8x1xf32> to vector<2x8x8xf32>
    %808 = arith.subf %804, %807 : vector<2x8x8xf32>
    %809 = math.exp %808 : vector<2x8x8xf32>
    %cst_225 = arith.constant dense<0.000000e+00> : vector<2x8xf32>
    %810 = vector.multi_reduction <add>, %809, %cst_225 [2] : vector<2x8x8xf32> to vector<2x8xf32>
    %811 = vector.shape_cast %810 : vector<2x8xf32> to vector<2x8x1xf32>
    %812 = vector.broadcast %811 : vector<2x8x1xf32> to vector<2x8x8xf32>
    %813 = arith.divf %809, %812 : vector<2x8x8xf32>
    %814 = arith.truncf %813 : vector<2x8x8xf32> to vector<2x8x8xbf16>
    %815 = vector.extract_strided_slice %663 {offsets = [0, 0, 48], sizes = [2, 8, 8], strides = [1, 1, 1]} : vector<2x8x64xf32> to vector<2x8x8xf32>
    %816 = arith.truncf %815 : vector<2x8x8xf32> to vector<2x8x8xbf16>
    "tpu.trace_start"() <{level = 10 : i32, message = "bqk,bkd->bqd"}> : () -> ()
    %cst_226 = arith.constant dense<0.000000e+00> : vector<2x8x8xf32>
    %817 = tpu.matmul %814, %816, %cst_226 {dimension_numbers = #tpu.dot_dimension_numbers<[2], [1], [1], [2], [0, 0, 0, 1, 1, 2], [0], [0]>} : vector<2x8x8xbf16>, vector<2x8x8xbf16>, vector<2x8x8xf32> -> vector<2x8x8xf32>
    "tpu.trace_stop"() : () -> ()
    %818 = vector.extract_strided_slice %653 {offsets = [0, 0, 56], sizes = [2, 8, 8], strides = [1, 1, 1]} : vector<2x8x64xf32> to vector<2x8x8xf32>
    %819 = arith.truncf %818 : vector<2x8x8xf32> to vector<2x8x8xbf16>
    %820 = vector.extract_strided_slice %658 {offsets = [0, 0, 56], sizes = [2, 8, 8], strides = [1, 1, 1]} : vector<2x8x64xf32> to vector<2x8x8xf32>
    %821 = arith.truncf %820 : vector<2x8x8xf32> to vector<2x8x8xbf16>
    "tpu.trace_start"() <{level = 10 : i32, message = "bqd,bkd->bqk"}> : () -> ()
    %cst_227 = arith.constant dense<0.000000e+00> : vector<2x8x8xf32>
    %822 = tpu.matmul %819, %821, %cst_227 {dimension_numbers = #tpu.dot_dimension_numbers<[2], [2], [1], [1], [0, 0, 0, 1, 1, 1], [0], [0]>} : vector<2x8x8xbf16>, vector<2x8x8xbf16>, vector<2x8x8xf32> -> vector<2x8x8xf32>
    "tpu.trace_stop"() : () -> ()
    %cst_228 = arith.constant 0.353553385 : f32
    %823 = vector.broadcast %cst_228 : f32 to vector<2x8x8xf32>
    %824 = arith.mulf %822, %823 : vector<2x8x8xf32>
    %825 = vector.broadcast %5 : vector<2x1x8xf32> to vector<2x8x8xf32>
    %826 = arith.addf %824, %825 : vector<2x8x8xf32>
    %cst_229 = arith.constant dense<0xFF800000> : vector<2x8xf32>
    %827 = vector.multi_reduction <maximumf>, %826, %cst_229 [2] : vector<2x8x8xf32> to vector<2x8xf32>
    %828 = vector.shape_cast %827 : vector<2x8xf32> to vector<2x8x1xf32>
    %829 = vector.broadcast %828 : vector<2x8x1xf32> to vector<2x8x8xf32>
    %830 = arith.subf %826, %829 : vector<2x8x8xf32>
    %831 = math.exp %830 : vector<2x8x8xf32>
    %cst_230 = arith.constant dense<0.000000e+00> : vector<2x8xf32>
    %832 = vector.multi_reduction <add>, %831, %cst_230 [2] : vector<2x8x8xf32> to vector<2x8xf32>
    %833 = vector.shape_cast %832 : vector<2x8xf32> to vector<2x8x1xf32>
    %834 = vector.broadcast %833 : vector<2x8x1xf32> to vector<2x8x8xf32>
    %835 = arith.divf %831, %834 : vector<2x8x8xf32>
    %836 = arith.truncf %835 : vector<2x8x8xf32> to vector<2x8x8xbf16>
    %837 = vector.extract_strided_slice %663 {offsets = [0, 0, 56], sizes = [2, 8, 8], strides = [1, 1, 1]} : vector<2x8x64xf32> to vector<2x8x8xf32>
    %838 = arith.truncf %837 : vector<2x8x8xf32> to vector<2x8x8xbf16>
    "tpu.trace_start"() <{level = 10 : i32, message = "bqk,bkd->bqd"}> : () -> ()
    %cst_231 = arith.constant dense<0.000000e+00> : vector<2x8x8xf32>
    %839 = tpu.matmul %836, %838, %cst_231 {dimension_numbers = #tpu.dot_dimension_numbers<[2], [1], [1], [2], [0, 0, 0, 1, 1, 2], [0], [0]>} : vector<2x8x8xbf16>, vector<2x8x8xbf16>, vector<2x8x8xf32> -> vector<2x8x8xf32>
    "tpu.trace_stop"() : () -> ()
    %840 = tpu.concatenate %685, %707, %729, %751, %773, %795, %817, %839 in 2 : vector<2x8x8xf32>, vector<2x8x8xf32>, vector<2x8x8xf32>, vector<2x8x8xf32>, vector<2x8x8xf32>, vector<2x8x8xf32>, vector<2x8x8xf32>, vector<2x8x8xf32> -> vector<2x8x64xf32>
    %841 = vector.shape_cast %840 : vector<2x8x64xf32> to vector<16x64xf32>
    %842 = arith.truncf %841 : vector<16x64xf32> to vector<16x64xbf16>
    %c2_232 = arith.constant 2 : index
    %c0_233 = arith.constant 0 : index
    %c0_234 = arith.constant 0 : index
    %843 = vector.load %arg3[%c2_232, %c0_233, %c0_234] : memref<3x64x64xbf16, #tpu.memory_space<vmem>>, vector<1x64x64xbf16>
    %844 = vector.shape_cast %843 : vector<1x64x64xbf16> to vector<64x64xbf16>
    %cst_235 = arith.constant dense<0.000000e+00> : vector<16x64xf32>
    %845 = tpu.matmul %842, %844, %cst_235 {dimension_numbers = #tpu.dot_dimension_numbers<[1], [0], [0], [1], [0, 0, 1, 1], [], []>} : vector<16x64xbf16>, vector<64x64xbf16>, vector<16x64xf32> -> vector<16x64xf32>
    %846 = vector.extract_strided_slice %644 {offsets = [3, 0], sizes = [1, 64], strides = [1, 1]} : vector<9x64xf32> to vector<1x64xf32>
    %847 = vector.broadcast %846 : vector<1x64xf32> to vector<16x64xf32>
    %848 = arith.addf %845, %847 : vector<16x64xf32>
    %849 = arith.addf %642, %848 : vector<16x64xf32>
    %850 = vector.extract_strided_slice %644 {offsets = [4, 0], sizes = [1, 64], strides = [1, 1]} : vector<9x64xf32> to vector<1x64xf32>
    %851 = vector.extract_strided_slice %644 {offsets = [5, 0], sizes = [1, 64], strides = [1, 1]} : vector<9x64xf32> to vector<1x64xf32>
    %cst_236 = arith.constant dense<0.000000e+00> : vector<16xf32>
    %852 = vector.multi_reduction <add>, %849, %cst_236 [1] : vector<16x64xf32> to vector<16xf32>
    %853 = vector.shape_cast %852 : vector<16xf32> to vector<16x1xf32>
    %cst_237 = arith.constant 6.400000e+01 : f32
    %854 = vector.broadcast %cst_237 : f32 to vector<16x1xf32>
    %855 = arith.divf %853, %854 : vector<16x1xf32>
    %856 = vector.broadcast %855 : vector<16x1xf32> to vector<16x64xf32>
    %857 = arith.subf %849, %856 : vector<16x64xf32>
    %858 = arith.mulf %857, %857 : vector<16x64xf32>
    %cst_238 = arith.constant dense<0.000000e+00> : vector<16xf32>
    %859 = vector.multi_reduction <add>, %858, %cst_238 [1] : vector<16x64xf32> to vector<16xf32>
    %860 = vector.shape_cast %859 : vector<16xf32> to vector<16x1xf32>
    %cst_239 = arith.constant 6.400000e+01 : f32
    %861 = vector.broadcast %cst_239 : f32 to vector<16x1xf32>
    %862 = arith.divf %860, %861 : vector<16x1xf32>
    %cst_240 = arith.constant 9.99999996E-13 : f32
    %863 = vector.broadcast %cst_240 : f32 to vector<16x1xf32>
    %864 = arith.addf %862, %863 : vector<16x1xf32>
    %865 = math.rsqrt %864 : vector<16x1xf32>
    %866 = vector.broadcast %865 : vector<16x1xf32> to vector<16x64xf32>
    %867 = arith.mulf %857, %866 : vector<16x64xf32>
    %868 = vector.broadcast %850 : vector<1x64xf32> to vector<16x64xf32>
    %869 = arith.mulf %867, %868 : vector<16x64xf32>
    %870 = vector.broadcast %851 : vector<1x64xf32> to vector<16x64xf32>
    %871 = arith.addf %869, %870 : vector<16x64xf32>
    %872 = arith.truncf %871 : vector<16x64xf32> to vector<16x64xbf16>
    %c2_241 = arith.constant 2 : index
    %c0_242 = arith.constant 0 : index
    %c0_243 = arith.constant 0 : index
    %873 = vector.load %arg4[%c2_241, %c0_242, %c0_243] : memref<3x64x256xbf16, #tpu.memory_space<vmem>>, vector<1x64x256xbf16>
    %874 = vector.shape_cast %873 : vector<1x64x256xbf16> to vector<64x256xbf16>
    %cst_244 = arith.constant dense<0.000000e+00> : vector<16x256xf32>
    %875 = tpu.matmul %872, %874, %cst_244 {dimension_numbers = #tpu.dot_dimension_numbers<[1], [0], [0], [1], [0, 0, 1, 1], [], []>} : vector<16x64xbf16>, vector<64x256xbf16>, vector<16x256xf32> -> vector<16x256xf32>
    %c2_245 = arith.constant 2 : index
    %c0_246 = arith.constant 0 : index
    %c0_247 = arith.constant 0 : index
    %876 = vector.load %arg7[%c2_245, %c0_246, %c0_247] : memref<3x1x256xf32, #tpu.memory_space<vmem>>, vector<1x1x256xf32>
    %877 = vector.shape_cast %876 : vector<1x1x256xf32> to vector<1x256xf32>
    %878 = vector.broadcast %877 : vector<1x256xf32> to vector<16x256xf32>
    %879 = arith.addf %875, %878 : vector<16x256xf32>
    %cst_248 = arith.constant 0.707106769 : f32
    %880 = vector.broadcast %cst_248 : f32 to vector<16x256xf32>
    %881 = arith.mulf %879, %880 : vector<16x256xf32>
    %882 = math.absf %881 : vector<16x256xf32>
    %cst_249 = arith.constant 0.327591091 : f32
    %883 = vector.broadcast %cst_249 : f32 to vector<16x256xf32>
    %884 = arith.mulf %883, %882 : vector<16x256xf32>
    %cst_250 = arith.constant 1.000000e+00 : f32
    %885 = vector.broadcast %cst_250 : f32 to vector<16x256xf32>
    %886 = arith.addf %885, %884 : vector<16x256xf32>
    %cst_251 = arith.constant 1.000000e+00 : f32
    %887 = vector.broadcast %cst_251 : f32 to vector<16x256xf32>
    %888 = arith.divf %887, %886 : vector<16x256xf32>
    %cst_252 = arith.constant 1.06140542 : f32
    %889 = vector.broadcast %cst_252 : f32 to vector<16x256xf32>
    %890 = arith.mulf %888, %889 : vector<16x256xf32>
    %cst_253 = arith.constant -1.45315206 : f32
    %891 = vector.broadcast %cst_253 : f32 to vector<16x256xf32>
    %892 = arith.addf %891, %890 : vector<16x256xf32>
    %893 = arith.mulf %888, %892 : vector<16x256xf32>
    %cst_254 = arith.constant 1.42141378 : f32
    %894 = vector.broadcast %cst_254 : f32 to vector<16x256xf32>
    %895 = arith.addf %894, %893 : vector<16x256xf32>
    %896 = arith.mulf %888, %895 : vector<16x256xf32>
    %cst_255 = arith.constant -0.284496725 : f32
    %897 = vector.broadcast %cst_255 : f32 to vector<16x256xf32>
    %898 = arith.addf %897, %896 : vector<16x256xf32>
    %899 = arith.mulf %888, %898 : vector<16x256xf32>
    %cst_256 = arith.constant 0.254829586 : f32
    %900 = vector.broadcast %cst_256 : f32 to vector<16x256xf32>
    %901 = arith.addf %900, %899 : vector<16x256xf32>
    %902 = arith.mulf %888, %901 : vector<16x256xf32>
    %cst_257 = arith.constant 0.000000e+00 : f32
    %903 = vector.broadcast %cst_257 : f32 to vector<16x256xf32>
    %904 = arith.subf %903, %882 : vector<16x256xf32>
    %905 = arith.mulf %904, %882 : vector<16x256xf32>
    %906 = math.exp %905 : vector<16x256xf32>
    %907 = arith.mulf %902, %906 : vector<16x256xf32>
    %cst_258 = arith.constant 1.000000e+00 : f32
    %908 = vector.broadcast %cst_258 : f32 to vector<16x256xf32>
    %909 = arith.subf %908, %907 : vector<16x256xf32>
    %cst_259 = arith.constant 0.000000e+00 : f32
    %910 = vector.broadcast %cst_259 : f32 to vector<16x256xf32>
    %911 = arith.cmpf oge, %881, %910 : vector<16x256xf32>
    %cst_260 = arith.constant 0.000000e+00 : f32
    %912 = vector.broadcast %cst_260 : f32 to vector<16x256xf32>
    %913 = arith.subf %912, %909 : vector<16x256xf32>
    %914 = arith.select %911, %909, %913 : vector<16x256xi1>, vector<16x256xf32>
    %cst_261 = arith.constant 5.000000e-01 : f32
    %915 = vector.broadcast %cst_261 : f32 to vector<16x256xf32>
    %916 = arith.mulf %915, %879 : vector<16x256xf32>
    %cst_262 = arith.constant 1.000000e+00 : f32
    %917 = vector.broadcast %cst_262 : f32 to vector<16x256xf32>
    %918 = arith.addf %917, %914 : vector<16x256xf32>
    %919 = arith.mulf %916, %918 : vector<16x256xf32>
    %920 = arith.truncf %919 : vector<16x256xf32> to vector<16x256xbf16>
    %c2_263 = arith.constant 2 : index
    %c0_264 = arith.constant 0 : index
    %c0_265 = arith.constant 0 : index
    %921 = vector.load %arg5[%c2_263, %c0_264, %c0_265] : memref<3x256x64xbf16, #tpu.memory_space<vmem>>, vector<1x256x64xbf16>
    %922 = vector.shape_cast %921 : vector<1x256x64xbf16> to vector<256x64xbf16>
    %cst_266 = arith.constant dense<0.000000e+00> : vector<16x64xf32>
    %923 = tpu.matmul %920, %922, %cst_266 {dimension_numbers = #tpu.dot_dimension_numbers<[1], [0], [0], [1], [0, 0, 1, 1], [], []>} : vector<16x256xbf16>, vector<256x64xbf16>, vector<16x64xf32> -> vector<16x64xf32>
    %924 = vector.extract_strided_slice %644 {offsets = [6, 0], sizes = [1, 64], strides = [1, 1]} : vector<9x64xf32> to vector<1x64xf32>
    %925 = vector.broadcast %924 : vector<1x64xf32> to vector<16x64xf32>
    %926 = arith.addf %923, %925 : vector<16x64xf32>
    %927 = arith.addf %871, %926 : vector<16x64xf32>
    %928 = vector.extract_strided_slice %644 {offsets = [7, 0], sizes = [1, 64], strides = [1, 1]} : vector<9x64xf32> to vector<1x64xf32>
    %929 = vector.extract_strided_slice %644 {offsets = [8, 0], sizes = [1, 64], strides = [1, 1]} : vector<9x64xf32> to vector<1x64xf32>
    %cst_267 = arith.constant dense<0.000000e+00> : vector<16xf32>
    %930 = vector.multi_reduction <add>, %927, %cst_267 [1] : vector<16x64xf32> to vector<16xf32>
    %931 = vector.shape_cast %930 : vector<16xf32> to vector<16x1xf32>
    %cst_268 = arith.constant 6.400000e+01 : f32
    %932 = vector.broadcast %cst_268 : f32 to vector<16x1xf32>
    %933 = arith.divf %931, %932 : vector<16x1xf32>
    %934 = vector.broadcast %933 : vector<16x1xf32> to vector<16x64xf32>
    %935 = arith.subf %927, %934 : vector<16x64xf32>
    %936 = arith.mulf %935, %935 : vector<16x64xf32>
    %cst_269 = arith.constant dense<0.000000e+00> : vector<16xf32>
    %937 = vector.multi_reduction <add>, %936, %cst_269 [1] : vector<16x64xf32> to vector<16xf32>
    %938 = vector.shape_cast %937 : vector<16xf32> to vector<16x1xf32>
    %cst_270 = arith.constant 6.400000e+01 : f32
    %939 = vector.broadcast %cst_270 : f32 to vector<16x1xf32>
    %940 = arith.divf %938, %939 : vector<16x1xf32>
    %cst_271 = arith.constant 9.99999996E-13 : f32
    %941 = vector.broadcast %cst_271 : f32 to vector<16x1xf32>
    %942 = arith.addf %940, %941 : vector<16x1xf32>
    %943 = math.rsqrt %942 : vector<16x1xf32>
    %944 = vector.broadcast %943 : vector<16x1xf32> to vector<16x64xf32>
    %945 = arith.mulf %935, %944 : vector<16x64xf32>
    %946 = vector.broadcast %928 : vector<1x64xf32> to vector<16x64xf32>
    %947 = arith.mulf %945, %946 : vector<16x64xf32>
    %948 = vector.broadcast %929 : vector<1x64xf32> to vector<16x64xf32>
    %949 = arith.addf %947, %948 : vector<16x64xf32>
    %cst_272 = arith.constant dense<0.000000e+00> : vector<2xf32>
    %950 = vector.multi_reduction <add>, %0, %cst_272 [1] : vector<2x8xf32> to vector<2xf32>
    %951 = vector.shape_cast %950 : vector<2xf32> to vector<2x1xf32>
    %cst_273 = arith.constant 1.000000e+00 : f32
    %952 = vector.broadcast %cst_273 : f32 to vector<2x1xf32>
    %953 = arith.maximumf %951, %952 : vector<2x1xf32>
    %954 = vector.broadcast %953 : vector<2x1xf32> to vector<2x8xf32>
    %955 = arith.divf %0, %954 : vector<2x8xf32>
    %956 = vector.shape_cast %949 : vector<16x64xf32> to vector<2x8x64xf32>
    %957 = vector.shape_cast %955 : vector<2x8xf32> to vector<2x8x1xf32>
    %958 = vector.broadcast %957 : vector<2x8x1xf32> to vector<2x8x64xf32>
    %959 = arith.mulf %956, %958 : vector<2x8x64xf32>
    %cst_274 = arith.constant dense<0.000000e+00> : vector<2x64xf32>
    %960 = vector.multi_reduction <add>, %959, %cst_274 [1] : vector<2x8x64xf32> to vector<2x64xf32>
    %961 = arith.truncf %960 : vector<2x64xf32> to vector<2x64xbf16>
    %c0_275 = arith.constant 0 : index
    %c0_276 = arith.constant 0 : index
    %c0_277 = arith.constant 0 : index
    %962 = vector.load %arg8[%c0_275, %c0_276, %c0_277] : memref<2x64x64xbf16, #tpu.memory_space<vmem>>, vector<1x64x64xbf16>
    %963 = vector.shape_cast %962 : vector<1x64x64xbf16> to vector<64x64xbf16>
    %cst_278 = arith.constant dense<0.000000e+00> : vector<2x64xf32>
    %964 = tpu.matmul %961, %963, %cst_278 {dimension_numbers = #tpu.dot_dimension_numbers<[1], [0], [0], [1], [0, 0, 1, 1], [], []>} : vector<2x64xbf16>, vector<64x64xbf16>, vector<2x64xf32> -> vector<2x64xf32>
    %c2_279 = arith.constant 2 : index
    %c0_280 = arith.constant 0 : index
    %965 = vector.load %arg9[%c2_279, %c0_280] : memref<6x64xf32, #tpu.memory_space<vmem>>, vector<1x64xf32>
    %966 = vector.broadcast %965 : vector<1x64xf32> to vector<2x64xf32>
    %967 = arith.addf %964, %966 : vector<2x64xf32>
    %cst_281 = arith.constant 0.707106769 : f32
    %968 = vector.broadcast %cst_281 : f32 to vector<2x64xf32>
    %969 = arith.mulf %967, %968 : vector<2x64xf32>
    %970 = math.absf %969 : vector<2x64xf32>
    %cst_282 = arith.constant 0.327591091 : f32
    %971 = vector.broadcast %cst_282 : f32 to vector<2x64xf32>
    %972 = arith.mulf %971, %970 : vector<2x64xf32>
    %cst_283 = arith.constant 1.000000e+00 : f32
    %973 = vector.broadcast %cst_283 : f32 to vector<2x64xf32>
    %974 = arith.addf %973, %972 : vector<2x64xf32>
    %cst_284 = arith.constant 1.000000e+00 : f32
    %975 = vector.broadcast %cst_284 : f32 to vector<2x64xf32>
    %976 = arith.divf %975, %974 : vector<2x64xf32>
    %cst_285 = arith.constant 1.06140542 : f32
    %977 = vector.broadcast %cst_285 : f32 to vector<2x64xf32>
    %978 = arith.mulf %976, %977 : vector<2x64xf32>
    %cst_286 = arith.constant -1.45315206 : f32
    %979 = vector.broadcast %cst_286 : f32 to vector<2x64xf32>
    %980 = arith.addf %979, %978 : vector<2x64xf32>
    %981 = arith.mulf %976, %980 : vector<2x64xf32>
    %cst_287 = arith.constant 1.42141378 : f32
    %982 = vector.broadcast %cst_287 : f32 to vector<2x64xf32>
    %983 = arith.addf %982, %981 : vector<2x64xf32>
    %984 = arith.mulf %976, %983 : vector<2x64xf32>
    %cst_288 = arith.constant -0.284496725 : f32
    %985 = vector.broadcast %cst_288 : f32 to vector<2x64xf32>
    %986 = arith.addf %985, %984 : vector<2x64xf32>
    %987 = arith.mulf %976, %986 : vector<2x64xf32>
    %cst_289 = arith.constant 0.254829586 : f32
    %988 = vector.broadcast %cst_289 : f32 to vector<2x64xf32>
    %989 = arith.addf %988, %987 : vector<2x64xf32>
    %990 = arith.mulf %976, %989 : vector<2x64xf32>
    %cst_290 = arith.constant 0.000000e+00 : f32
    %991 = vector.broadcast %cst_290 : f32 to vector<2x64xf32>
    %992 = arith.subf %991, %970 : vector<2x64xf32>
    %993 = arith.mulf %992, %970 : vector<2x64xf32>
    %994 = math.exp %993 : vector<2x64xf32>
    %995 = arith.mulf %990, %994 : vector<2x64xf32>
    %cst_291 = arith.constant 1.000000e+00 : f32
    %996 = vector.broadcast %cst_291 : f32 to vector<2x64xf32>
    %997 = arith.subf %996, %995 : vector<2x64xf32>
    %cst_292 = arith.constant 0.000000e+00 : f32
    %998 = vector.broadcast %cst_292 : f32 to vector<2x64xf32>
    %999 = arith.cmpf oge, %969, %998 : vector<2x64xf32>
    %cst_293 = arith.constant 0.000000e+00 : f32
    %1000 = vector.broadcast %cst_293 : f32 to vector<2x64xf32>
    %1001 = arith.subf %1000, %997 : vector<2x64xf32>
    %1002 = arith.select %999, %997, %1001 : vector<2x64xi1>, vector<2x64xf32>
    %cst_294 = arith.constant 5.000000e-01 : f32
    %1003 = vector.broadcast %cst_294 : f32 to vector<2x64xf32>
    %1004 = arith.mulf %1003, %967 : vector<2x64xf32>
    %cst_295 = arith.constant 1.000000e+00 : f32
    %1005 = vector.broadcast %cst_295 : f32 to vector<2x64xf32>
    %1006 = arith.addf %1005, %1002 : vector<2x64xf32>
    %1007 = arith.mulf %1004, %1006 : vector<2x64xf32>
    %1008 = arith.truncf %1007 : vector<2x64xf32> to vector<2x64xbf16>
    %c1_296 = arith.constant 1 : index
    %c0_297 = arith.constant 0 : index
    %c0_298 = arith.constant 0 : index
    %1009 = vector.load %arg8[%c1_296, %c0_297, %c0_298] : memref<2x64x64xbf16, #tpu.memory_space<vmem>>, vector<1x64x64xbf16>
    %1010 = vector.shape_cast %1009 : vector<1x64x64xbf16> to vector<64x64xbf16>
    %cst_299 = arith.constant dense<0.000000e+00> : vector<2x64xf32>
    %1011 = tpu.matmul %1008, %1010, %cst_299 {dimension_numbers = #tpu.dot_dimension_numbers<[1], [0], [0], [1], [0, 0, 1, 1], [], []>} : vector<2x64xbf16>, vector<64x64xbf16>, vector<2x64xf32> -> vector<2x64xf32>
    %c3 = arith.constant 3 : index
    %c0_300 = arith.constant 0 : index
    %1012 = vector.load %arg9[%c3, %c0_300] : memref<6x64xf32, #tpu.memory_space<vmem>>, vector<1x64xf32>
    %1013 = vector.broadcast %1012 : vector<1x64xf32> to vector<2x64xf32>
    %1014 = arith.addf %1011, %1013 : vector<2x64xf32>
    %cst_301 = arith.constant 0.707106769 : f32
    %1015 = vector.broadcast %cst_301 : f32 to vector<2x64xf32>
    %1016 = arith.mulf %1014, %1015 : vector<2x64xf32>
    %1017 = math.absf %1016 : vector<2x64xf32>
    %cst_302 = arith.constant 0.327591091 : f32
    %1018 = vector.broadcast %cst_302 : f32 to vector<2x64xf32>
    %1019 = arith.mulf %1018, %1017 : vector<2x64xf32>
    %cst_303 = arith.constant 1.000000e+00 : f32
    %1020 = vector.broadcast %cst_303 : f32 to vector<2x64xf32>
    %1021 = arith.addf %1020, %1019 : vector<2x64xf32>
    %cst_304 = arith.constant 1.000000e+00 : f32
    %1022 = vector.broadcast %cst_304 : f32 to vector<2x64xf32>
    %1023 = arith.divf %1022, %1021 : vector<2x64xf32>
    %cst_305 = arith.constant 1.06140542 : f32
    %1024 = vector.broadcast %cst_305 : f32 to vector<2x64xf32>
    %1025 = arith.mulf %1023, %1024 : vector<2x64xf32>
    %cst_306 = arith.constant -1.45315206 : f32
    %1026 = vector.broadcast %cst_306 : f32 to vector<2x64xf32>
    %1027 = arith.addf %1026, %1025 : vector<2x64xf32>
    %1028 = arith.mulf %1023, %1027 : vector<2x64xf32>
    %cst_307 = arith.constant 1.42141378 : f32
    %1029 = vector.broadcast %cst_307 : f32 to vector<2x64xf32>
    %1030 = arith.addf %1029, %1028 : vector<2x64xf32>
    %1031 = arith.mulf %1023, %1030 : vector<2x64xf32>
    %cst_308 = arith.constant -0.284496725 : f32
    %1032 = vector.broadcast %cst_308 : f32 to vector<2x64xf32>
    %1033 = arith.addf %1032, %1031 : vector<2x64xf32>
    %1034 = arith.mulf %1023, %1033 : vector<2x64xf32>
    %cst_309 = arith.constant 0.254829586 : f32
    %1035 = vector.broadcast %cst_309 : f32 to vector<2x64xf32>
    %1036 = arith.addf %1035, %1034 : vector<2x64xf32>
    %1037 = arith.mulf %1023, %1036 : vector<2x64xf32>
    %cst_310 = arith.constant 0.000000e+00 : f32
    %1038 = vector.broadcast %cst_310 : f32 to vector<2x64xf32>
    %1039 = arith.subf %1038, %1017 : vector<2x64xf32>
    %1040 = arith.mulf %1039, %1017 : vector<2x64xf32>
    %1041 = math.exp %1040 : vector<2x64xf32>
    %1042 = arith.mulf %1037, %1041 : vector<2x64xf32>
    %cst_311 = arith.constant 1.000000e+00 : f32
    %1043 = vector.broadcast %cst_311 : f32 to vector<2x64xf32>
    %1044 = arith.subf %1043, %1042 : vector<2x64xf32>
    %cst_312 = arith.constant 0.000000e+00 : f32
    %1045 = vector.broadcast %cst_312 : f32 to vector<2x64xf32>
    %1046 = arith.cmpf oge, %1016, %1045 : vector<2x64xf32>
    %cst_313 = arith.constant 0.000000e+00 : f32
    %1047 = vector.broadcast %cst_313 : f32 to vector<2x64xf32>
    %1048 = arith.subf %1047, %1044 : vector<2x64xf32>
    %1049 = arith.select %1046, %1044, %1048 : vector<2x64xi1>, vector<2x64xf32>
    %cst_314 = arith.constant 5.000000e-01 : f32
    %1050 = vector.broadcast %cst_314 : f32 to vector<2x64xf32>
    %1051 = arith.mulf %1050, %1014 : vector<2x64xf32>
    %cst_315 = arith.constant 1.000000e+00 : f32
    %1052 = vector.broadcast %cst_315 : f32 to vector<2x64xf32>
    %1053 = arith.addf %1052, %1049 : vector<2x64xf32>
    %1054 = arith.mulf %1051, %1053 : vector<2x64xf32>
    %c4 = arith.constant 4 : index
    %c0_316 = arith.constant 0 : index
    %1055 = vector.load %arg9[%c4, %c0_316] : memref<6x64xf32, #tpu.memory_space<vmem>>, vector<1x64xf32>
    %1056 = vector.broadcast %1055 : vector<1x64xf32> to vector<2x64xf32>
    %1057 = arith.mulf %1054, %1056 : vector<2x64xf32>
    %cst_317 = arith.constant dense<0.000000e+00> : vector<2xf32>
    %1058 = vector.multi_reduction <add>, %1057, %cst_317 [1] : vector<2x64xf32> to vector<2xf32>
    %1059 = vector.shape_cast %1058 : vector<2xf32> to vector<2x1xf32>
    %c5 = arith.constant 5 : index
    %c0_318 = arith.constant 0 : index
    %1060 = vector.load %arg9[%c5, %c0_318] : memref<6x64xf32, #tpu.memory_space<vmem>>, vector<1x1xf32>
    %1061 = vector.broadcast %1060 : vector<1x1xf32> to vector<2x1xf32>
    %1062 = arith.addf %1059, %1061 : vector<2x1xf32>
    %c0_319 = arith.constant 0 : index
    %c0_320 = arith.constant 0 : index
    %1063 = vector.load %arg10[%c0_319, %c0_320] : memref<2x1xf32, #tpu.memory_space<vmem>>, vector<2x1xf32>
    tpu.vector_store %arg10[%c0_319, %c0_320], %1062 {strides = array<i32>} : memref<2x1xf32, #tpu.memory_space<vmem>>, vector<2x1xf32>,
    return
  }
}

</mosaic_0001>

<llo_original>
// kernel: tpu_custom_call.1
$region0: #{tpu_custom_call.1}
  #allocation0 [shape = 'u32[]', space=smem, size = 0x4, offset = 0x4, fixed_abs, tag = 'smem constant byte address 0x4 - core index']
  #allocation1 [shape = 'u32[72,128]{1,0:T(1,128)}', space=vmem, size = 0x9000, scoped, tag = 'internal scratch']
  %s0 = inlined_call_operand.vmem [shape: f32[16,64], index: 0, kind: input, shape index: {}]
  %s1 = inlined_call_operand.vmem [shape: f32[2,8], index: 1, kind: input, shape index: {}]
  %s2 = inlined_call_operand.vmem [shape: bf16[3,64,192], index: 2, kind: input, shape index: {}]
  %s3 = inlined_call_operand.vmem [shape: bf16[3,64,64], index: 3, kind: input, shape index: {}]
  %s4 = inlined_call_operand.vmem [shape: bf16[3,64,256], index: 4, kind: input, shape index: {}]
  %s5 = inlined_call_operand.vmem [shape: bf16[3,256,64], index: 5, kind: input, shape index: {}]
  %s6 = inlined_call_operand.vmem [shape: f32[3,9,64], index: 6, kind: input, shape index: {}]
  %s7 = inlined_call_operand.vmem [shape: f32[3,1,256], index: 7, kind: input, shape index: {}]
  %s8 = inlined_call_operand.vmem [shape: bf16[2,64,64], index: 8, kind: input, shape index: {}]
  %s9 = inlined_call_operand.vmem [shape: f32[6,64], index: 9, kind: input, shape index: {}]
  %s10 = inlined_call_operand.vmem [shape: f32[2,1], index: 10, kind: output, shape index: {}]
  %s11 = sld [smem:[#allocation0]]
  $region50: #{tpu_custom_call.1} parent=0
    _
  %s13 = ssub.s32 1, %s11
  %s14 = scalar_select 0, %s13, %s11
  // Predicated region
  $region2: #{tpu_custom_call.1} parent=0 // pred_check
    _
  $region3: #{tpu_custom_call.1} parent=0 // pred_check_branch
    %16 = sbr.rel (0) target = $region5
  $region4: #{tpu_custom_call.1} parent=0 // pred_region
    _
  $region5: #{tpu_custom_call.1} parent=0 // pred_fallthru
    _
  // Predicated region
  $region6: #{tpu_custom_call.1} parent=0 // pred_check
    _
  $region7: #{tpu_custom_call.1} parent=0 // pred_check_branch
    %18 = sbr.rel (0) target = $region9
  $region8: #{tpu_custom_call.1} parent=0 // pred_region
    _
  $region9: #{tpu_custom_call.1} parent=0 // pred_fallthru
    _
  // Predicated region
  $region10: #{tpu_custom_call.1} parent=0 // pred_check
    _
  $region11: #{tpu_custom_call.1} parent=0 // pred_check_branch
    %20 = sbr.rel (0) target = $region13
  $region12: #{tpu_custom_call.1} parent=0 // pred_region
    _
  $region13: #{tpu_custom_call.1} parent=0 // pred_fallthru
    _
  // Predicated region
  $region14: #{tpu_custom_call.1} parent=0 // pred_check
    _
  $region15: #{tpu_custom_call.1} parent=0 // pred_check_branch
    %22 = sbr.rel (0) target = $region17
  $region16: #{tpu_custom_call.1} parent=0 // pred_region
    _
  $region17: #{tpu_custom_call.1} parent=0 // pred_fallthru
    _
  // Predicated region
  $region18: #{tpu_custom_call.1} parent=0 // pred_check
    _
  $region19: #{tpu_custom_call.1} parent=0 // pred_check_branch
    %24 = sbr.rel (0) target = $region21
  $region20: #{tpu_custom_call.1} parent=0 // pred_region
    _
  $region21: #{tpu_custom_call.1} parent=0 // pred_fallthru
    _
  // Predicated region
  $region22: #{tpu_custom_call.1} parent=0 // pred_check
    _
  $region23: #{tpu_custom_call.1} parent=0 // pred_check_branch
    %26 = sbr.rel (0) target = $region25
  $region24: #{tpu_custom_call.1} parent=0 // pred_region
    _
  $region25: #{tpu_custom_call.1} parent=0 // pred_fallthru
    _
  // Predicated region
  $region26: #{tpu_custom_call.1} parent=0 // pred_check
    _
  $region27: #{tpu_custom_call.1} parent=0 // pred_check_branch
    %28 = sbr.rel (0) target = $region29
  $region28: #{tpu_custom_call.1} parent=0 // pred_region
    _
  $region29: #{tpu_custom_call.1} parent=0 // pred_fallthru
    _
  // Predicated region
  $region30: #{tpu_custom_call.1} parent=0 // pred_check
    _
  $region31: #{tpu_custom_call.1} parent=0 // pred_check_branch
    %30 = sbr.rel (0) target = $region33
  $region32: #{tpu_custom_call.1} parent=0 // pred_region
    _
  $region33: #{tpu_custom_call.1} parent=0 // pred_fallthru
    _
  // Predicated region
  $region34: #{tpu_custom_call.1} parent=0 // pred_check
    _
  $region35: #{tpu_custom_call.1} parent=0 // pred_check_branch
    %32 = sbr.rel (0) target = $region37
  $region36: #{tpu_custom_call.1} parent=0 // pred_region
    _
  $region37: #{tpu_custom_call.1} parent=0 // pred_fallthru
    _
  // Predicated region
  $region38: #{tpu_custom_call.1} parent=0 // pred_check
    _
  $region39: #{tpu_custom_call.1} parent=0 // pred_check_branch
    %34 = sbr.rel (0) target = $region41
  $region40: #{tpu_custom_call.1} parent=0 // pred_region
    _
  $region41: #{tpu_custom_call.1} parent=0 // pred_fallthru
    _
  %v36 = vld [vmem:[%s1] sm:$0x3]
  %v37 = vsub.f32 %v36, 1.0
  %v38 = vmul.f32 %v37, 10000.0
  %v40 = vrot.slane %v38, 1
  %v41 = vld [vmem:[%s0] sm:$0xff]
  %v42 = vld [vmem:[%s0 + $0x8] sm:$0xff]
  %v43 = vld [vmem:[%s9] sm:$0x1]
  %v44 = vld [vmem:[%s9 + $0x1] sm:$0x1]
  %vm45 = vcmask 523264
  %v46 = vsel %vm45, %v41, 0.0
  %47 = vadd.xlane.f32.xlu0 %v46
  %v48 = vpop.xlane.xlu0 %47
  %v49 = vsel %vm45, %v42, 0.0
  %50 = vadd.xlane.f32.xlu0 %v49
  %v51 = vpop.xlane.xlu0 %50
  %v52 = vrcp.pop 64.0
  %v53 = vmul.f32 64.0, %v52
  %v54 = vsub.f32 1.0, %v53
  %v55 = vmul.f32 %v52, %v54
  %v56 = vadd.f32 %v52, %v55
  %vm57 = vweird.f32 %v52
  %v58 = vsel %vm57, %v52, %v56
  %v59 = vmul.f32 %v48, %v58
  %v60 = vmul.f32 %v51, %v58
  %v61 = vsub.f32 %v41, %v59
  %v62 = vsub.f32 %v42, %v60
  %v63 = vmul.f32 %v61, %v61
  %v64 = vmul.f32 %v62, %v62
  %v65 = vsel %vm45, %v63, 0.0
  %66 = vadd.xlane.f32.xlu0 %v65
  %v67 = vpop.xlane.xlu0 %66
  %v68 = vsel %vm45, %v64, 0.0
  %69 = vadd.xlane.f32.xlu0 %v68
  %v70 = vpop.xlane.xlu0 %69
  %v71 = vmul.f32 %v67, %v58
  %v72 = vmul.f32 %v70, %v58
  %v73 = vadd.f32 %v71, 1e-12
  %v74 = vadd.f32 %v72, 1e-12
  %v75 = vrsqrt.pop %v73
  %v76 = vmul.f32 %v75, %v73
  %v77 = vmul.f32 %v76, %v75
  %v78 = vmul.f32 0.5, %v77
  %v79 = vsub.f32 1.5, %v78
  %v80 = vmul.f32 %v75, %v79
  %vm81 = vweird.f32 %v73
  %vm82 = vweird.f32 %v75
  %vm83 = vmor %vm81, %vm82
  %v84 = vsel %vm83, %v75, %v80
  %v85 = vrsqrt.pop %v74
  %v86 = vmul.f32 %v85, %v74
  %v87 = vmul.f32 %v86, %v85
  %v88 = vmul.f32 0.5, %v87
  %v89 = vsub.f32 1.5, %v88
  %v90 = vmul.f32 %v85, %v89
  %vm91 = vweird.f32 %v74
  %vm92 = vweird.f32 %v85
  %vm93 = vmor %vm91, %vm92
  %v94 = vsel %vm93, %v85, %v90
  %v95 = vmul.f32 %v61, %v84
  %v96 = vmul.f32 %v62, %v94
  %v97 = vperm.slane %v43, 0
  %v98 = vmul.f32 %v95, %v97
  %v99 = vmul.f32 %v96, %v97
  %v100 = vperm.slane %v44, 0
  %v101 = vadd.f32 %v98, %v100
  %v102 = vadd.f32 %v99, %v100
  %v103 = vld [vmem:[%s6] sm:$0xff]
  %v104 = vld [vmem:[%s6 + $0x8] sm:$0x1]
  %v105 = vpack.c.bf16 %v102, %v101
  %v106 = vld [vmem:[%s2] sm:$0xff]
  %v107 = vld [vmem:[%s2 + $0x8] sm:$0xff]
  %v108 = vld [vmem:[%s2 + $0x10] sm:$0xff]
  %v109 = vld [vmem:[%s2 + $0x18] sm:$0xff]
  %v110 = vld [vmem:[%s2 + $0x20] sm:$0xff]
  %v111 = vld [vmem:[%s2 + $0x28] sm:$0xff]
  %v112 = vld [vmem:[%s2 + $0x30] sm:$0xff]
  %v113 = vld [vmem:[%s2 + $0x38] sm:$0xff]
  %v122 = vunpack.c.l.b16 %v106
  %v123 = vunpack.c.h.b16 %v106
  %v124 = vunpack.c.l.b16 %v107
  %v125 = vunpack.c.h.b16 %v107
  %v126 = vunpack.c.l.b16 %v108
  %v127 = vunpack.c.h.b16 %v108
  %v128 = vunpack.c.l.b16 %v109
  %v129 = vunpack.c.h.b16 %v109
  %v130 = vunpack.c.l.b16 %v110
  %v131 = vunpack.c.h.b16 %v110
  %v132 = vunpack.c.l.b16 %v111
  %v133 = vunpack.c.h.b16 %v111
  %v134 = vunpack.c.l.b16 %v112
  %v135 = vunpack.c.h.b16 %v112
  %v136 = vunpack.c.l.b16 %v113
  %v137 = vunpack.c.h.b16 %v113
  %v138 = vpack.c.b16 %v124, %v122
  %v139 = vpack.c.b16 %v125, %v123
  %v140 = vpack.c.b16 %v128, %v126
  %v141 = vpack.c.b16 %v129, %v127
  %v142 = vpack.c.b16 %v132, %v130
  %v143 = vpack.c.b16 %v133, %v131
  %v144 = vpack.c.b16 %v136, %v134
  %v145 = vpack.c.b16 %v137, %v135
  %v155 = vsel %vm45, %v105, 0
  %157 = vmatpush.bf16.msra.mxu0 0
  %158 = vmatpush.bf16.msra.mxu0 0
  %159 = vmatpush.bf16.msra.mxu0 0
  %160 = vmatpush.bf16.msra.mxu0 0
  %161 = vmatpush.bf16.msra.mxu0 %v144
  %162 = vmatpush.bf16.msra.mxu0 %v142
  %163 = vmatpush.bf16.msra.mxu0 %v140
  %164 = vmatpush.bf16.msra.mxu0 %v138
  %165 = vmatmul.bf16.gmra.mxu0 %v155
  %v166 = vpop.f32.mrf.mxu0
  %v167 = vadd.f32 0.0, %v166
  %v168 = vpop.f32.mrf.mxu0
  %v169 = vadd.f32 0.0, %v168
  %170 = vdwg.mxu0
  %171 = vmatpush.bf16.msra.mxu0 0
  %172 = vmatpush.bf16.msra.mxu0 0
  %173 = vmatpush.bf16.msra.mxu0 0
  %174 = vmatpush.bf16.msra.mxu0 0
  %175 = vmatpush.bf16.msra.mxu0 %v145
  %176 = vmatpush.bf16.msra.mxu0 %v143
  %177 = vmatpush.bf16.msra.mxu0 %v141
  %178 = vmatpush.bf16.msra.mxu0 %v139
  %179 = vmatmul.bf16.gmra.mxu0 %v155
  %v180 = vpop.f32.mrf.mxu0
  %v181 = vadd.f32 0.0, %v180
  %v182 = vpop.f32.mrf.mxu0
  %v183 = vadd.f32 0.0, %v182
  %184 = vdwg.mxu0
  %v185 = vperm.slane %v103, 0
  %v186 = vadd.f32 %v167, %v185
  %v187 = vadd.f32 %v169, %v185
  %v188 = vperm.slane %v103, 1
  %190 = vrot.lane.b32.xlu0 %v188, 64
  %v191 = vpop.permute.xlu0 %190
  %v193 = vadd.f32 %v167, %v191
  %v194 = vadd.f32 %v169, %v191
  %v195 = vperm.slane %v103, 2
  %v196 = vadd.f32 %v181, %v195
  %v197 = vadd.f32 %v183, %v195
  %v198 = vpack.c.bf16 %v186, %v186
  %v199 = vpack.c.bf16 %v187, %v187
  %v200 = vpack.c.bf16 %v193, %v193
  %v201 = vpack.c.bf16 %v194, %v194
  %v203 = vunpack.c.l.b16 %v200
  %v204 = vpack.c.b16 %v203, %v203
  %205 = vrot.lane.b32.xlu0 %v204, 64
  %v206 = vpop.permute.xlu0 %205
  %vm207 = vcmask 64512
  %v209 = vsel %vm207, %v198, 0
  %v212 = vsel %vm207, %v206, 0
  %214 = vmatpush.bf16.xpose.msra.mxu0 0
  %215 = vmatpush.bf16.xpose.msra.mxu0 0
  %216 = vmatpush.bf16.xpose.msra.mxu0 0
  %217 = vmatpush.bf16.xpose.msra.mxu0 0
  %218 = vmatpush.bf16.xpose.msra.mxu0 0
  %219 = vmatpush.bf16.xpose.msra.mxu0 0
  %220 = vmatpush.bf16.xpose.msra.mxu0 0
  %221 = vmatpush.bf16.xpose.msra.mxu0 %v212
  %222 = vmatmul.bf16.gmra.mxu0 %v209
  %v223 = vpop.f32.mrf.mxu0
  %v224 = vadd.f32 0.0, %v223
  %v225 = vpop.f32.mrf.mxu0
  %226 = vdwg.mxu0
  %v228 = vunpack.c.l.b16 %v201
  %v229 = vpack.c.b16 %v228, %v228
  %230 = vrot.lane.b32.xlu0 %v229, 64
  %v231 = vpop.permute.xlu0 %230
  %v233 = vsel %vm207, %v199, 0
  %v236 = vsel %vm207, %v231, 0
  %238 = vmatpush.bf16.xpose.msra.mxu0 0
  %239 = vmatpush.bf16.xpose.msra.mxu0 0
  %240 = vmatpush.bf16.xpose.msra.mxu0 0
  %241 = vmatpush.bf16.xpose.msra.mxu0 0
  %242 = vmatpush.bf16.xpose.msra.mxu0 0
  %243 = vmatpush.bf16.xpose.msra.mxu0 0
  %244 = vmatpush.bf16.xpose.msra.mxu0 0
  %245 = vmatpush.bf16.xpose.msra.mxu0 %v236
  %246 = vmatmul.bf16.gmra.mxu0 %v233
  %v247 = vpop.f32.mrf.mxu0
  %v248 = vadd.f32 0.0, %v247
  %v249 = vpop.f32.mrf.mxu0
  %250 = vdwg.mxu0
  %v251 = vmul.f32 %v224, 0.35355338
  %v252 = vmul.f32 %v248, 0.35355338
  %v253 = vperm.slane %v38, 0
  %v254 = vperm.slane %v40, 0
  %v257 = vadd.f32 %v251, %v253
  %v258 = vadd.f32 %v252, %v254
  %v259 = vsel %vm207, %v257, -inf
  %260 = vmax.xlane.f32.xlu0 %v259
  %v261 = vpop.xlane.xlu0 %260
  %v262 = vsel %vm207, %v258, -inf
  %263 = vmax.xlane.f32.xlu0 %v262
  %v264 = vpop.xlane.xlu0 %263
  %v265 = vsub.f32 %v257, %v261
  %v266 = vsub.f32 %v258, %v264
  %v267 = vmul.f32 %v265, 1.442695
  %v268 = vpow.pop %v267
  %v269 = vmul.f32 %v266, 1.442695
  %v270 = vpow.pop %v269
  %v271 = vsel %vm207, %v268, 0.0
  %272 = vadd.xlane.f32.xlu0 %v271
  %v273 = vpop.xlane.xlu0 %272
  %v274 = vsel %vm207, %v270, 0.0
  %275 = vadd.xlane.f32.xlu0 %v274
  %v276 = vpop.xlane.xlu0 %275
  %v277 = vrcp.pop %v273
  %v278 = vmul.f32 %v273, %v277
  %v279 = vsub.f32 1.0, %v278
  %v280 = vmul.f32 %v277, %v279
  %v281 = vadd.f32 %v277, %v280
  %vm282 = vweird.f32 %v273
  %vm283 = vweird.f32 %v277
  %vm284 = vmor %vm282, %vm283
  %v285 = vsel %vm284, %v277, %v281
  %v286 = vand.u32 2147483647, %v273
  %vm287 = vcmp.eq.f32.partialorder %v286, 8.507059e+37
  %v288 = vand.u32 %v273, 2147483648
  %v289 = vor.u32 1.1754944e-38, %v288
  %v290 = vsel %vm287, %v289, %v285
  %v291 = vmul.f32 %v268, %v290
  %v292 = vrcp.pop %v276
  %v293 = vmul.f32 %v276, %v292
  %v294 = vsub.f32 1.0, %v293
  %v295 = vmul.f32 %v292, %v294
  %v296 = vadd.f32 %v292, %v295
  %vm297 = vweird.f32 %v276
  %vm298 = vweird.f32 %v292
  %vm299 = vmor %vm297, %vm298
  %v300 = vsel %vm299, %v292, %v296
  %v301 = vand.u32 2147483647, %v276
  %vm302 = vcmp.eq.f32.partialorder %v301, 8.507059e+37
  %v303 = vand.u32 %v276, 2147483648
  %v304 = vor.u32 1.1754944e-38, %v303
  %v305 = vsel %vm302, %v304, %v300
  %v306 = vmul.f32 %v270, %v305
  %v307 = vpack.c.bf16 %v291, %v291
  %v308 = vpack.c.bf16 %v306, %v306
  %v309 = vpack.c.bf16 %v196, %v196
  %v310 = vpack.c.bf16 %v197, %v197
  %v312 = vsel %vm207, %v307, 0
  %vm314 = vcmask 1043456
  %v316 = vsel %vm314, %v309, 0
  %318 = vmatpush.bf16.msra.mxu0 0
  %319 = vmatpush.bf16.msra.mxu0 0
  %320 = vmatpush.bf16.msra.mxu0 0
  %321 = vmatpush.bf16.msra.mxu0 0
  %322 = vmatpush.bf16.msra.mxu0 0
  %323 = vmatpush.bf16.msra.mxu0 0
  %324 = vmatpush.bf16.msra.mxu0 0
  %325 = vmatpush.bf16.msra.mxu0 %v316
  %326 = vmatmul.bf16.gmra.mxu0 %v312
  %v327 = vpop.f32.mrf.mxu0
  %v328 = vadd.f32 0.0, %v327
  %v329 = vpop.f32.mrf.mxu0
  %330 = vdwg.mxu0
  %v332 = vsel %vm207, %v308, 0
  %v335 = vsel %vm314, %v310, 0
  %337 = vmatpush.bf16.msra.mxu0 0
  %338 = vmatpush.bf16.msra.mxu0 0
  %339 = vmatpush.bf16.msra.mxu0 0
  %340 = vmatpush.bf16.msra.mxu0 0
  %341 = vmatpush.bf16.msra.mxu0 0
  %342 = vmatpush.bf16.msra.mxu0 0
  %343 = vmatpush.bf16.msra.mxu0 0
  %344 = vmatpush.bf16.msra.mxu0 %v335
  %345 = vmatmul.bf16.gmra.mxu0 %v332
  %v346 = vpop.f32.mrf.mxu0
  %v347 = vadd.f32 0.0, %v346
  %v348 = vpop.f32.mrf.mxu0
  %349 = vdwg.mxu0
  %v351 = vunpack.c.l.b16 %v198
  %v352 = vpack.c.b16 %v351, %v351
  %353 = vrot.lane.b32.xlu0 %v352, 120
  %v354 = vpop.permute.xlu0 %353
  %355 = vrot.lane.b32.xlu0 %v204, 56
  %v356 = vpop.permute.xlu0 %355
  %v358 = vsel %vm207, %v354, 0
  %v361 = vsel %vm207, %v356, 0
  %363 = vmatpush.bf16.xpose.msra.mxu0 0
  %364 = vmatpush.bf16.xpose.msra.mxu0 0
  %365 = vmatpush.bf16.xpose.msra.mxu0 0
  %366 = vmatpush.bf16.xpose.msra.mxu0 0
  %367 = vmatpush.bf16.xpose.msra.mxu0 0
  %368 = vmatpush.bf16.xpose.msra.mxu0 0
  %369 = vmatpush.bf16.xpose.msra.mxu0 0
  %370 = vmatpush.bf16.xpose.msra.mxu0 %v361
  %371 = vmatmul.bf16.gmra.mxu0 %v358
  %v372 = vpop.f32.mrf.mxu0
  %v373 = vadd.f32 0.0, %v372
  %v374 = vpop.f32.mrf.mxu0
  %375 = vdwg.mxu0
  %v377 = vunpack.c.l.b16 %v199
  %v378 = vpack.c.b16 %v377, %v377
  %379 = vrot.lane.b32.xlu0 %v378, 120
  %v380 = vpop.permute.xlu0 %379
  %381 = vrot.lane.b32.xlu0 %v229, 56
  %v382 = vpop.permute.xlu0 %381
  %v384 = vsel %vm207, %v380, 0
  %v387 = vsel %vm207, %v382, 0
  %389 = vmatpush.bf16.xpose.msra.mxu0 0
  %390 = vmatpush.bf16.xpose.msra.mxu0 0
  %391 = vmatpush.bf16.xpose.msra.mxu0 0
  %392 = vmatpush.bf16.xpose.msra.mxu0 0
  %393 = vmatpush.bf16.xpose.msra.mxu0 0
  %394 = vmatpush.bf16.xpose.msra.mxu0 0
  %395 = vmatpush.bf16.xpose.msra.mxu0 0
  %396 = vmatpush.bf16.xpose.msra.mxu0 %v387
  %397 = vmatmul.bf16.gmra.mxu0 %v384
  %v398 = vpop.f32.mrf.mxu0
  %v399 = vadd.f32 0.0, %v398
  %v400 = vpop.f32.mrf.mxu0
  %401 = vdwg.mxu0
  %v402 = vmul.f32 %v373, 0.35355338
  %v403 = vmul.f32 %v399, 0.35355338
  %v404 = vadd.f32 %v402, %v253
  %v405 = vadd.f32 %v403, %v254
  %v406 = vsel %vm207, %v404, -inf
  %407 = vmax.xlane.f32.xlu0 %v406
  %v408 = vpop.xlane.xlu0 %407
  %v409 = vsel %vm207, %v405, -inf
  %410 = vmax.xlane.f32.xlu0 %v409
  %v411 = vpop.xlane.xlu0 %410
  %v412 = vsub.f32 %v404, %v408
  %v413 = vsub.f32 %v405, %v411
  %v414 = vmul.f32 %v412, 1.442695
  %v415 = vpow.pop %v414
  %v416 = vmul.f32 %v413, 1.442695
  %v417 = vpow.pop %v416
  %v418 = vsel %vm207, %v415, 0.0
  %419 = vadd.xlane.f32.xlu0 %v418
  %v420 = vpop.xlane.xlu0 %419
  %v421 = vsel %vm207, %v417, 0.0
  %422 = vadd.xlane.f32.xlu0 %v421
  %v423 = vpop.xlane.xlu0 %422
  %v424 = vrcp.pop %v420
  %v425 = vmul.f32 %v420, %v424
  %v426 = vsub.f32 1.0, %v425
  %v427 = vmul.f32 %v424, %v426
  %v428 = vadd.f32 %v424, %v427
  %vm429 = vweird.f32 %v420
  %vm430 = vweird.f32 %v424
  %vm431 = vmor %vm429, %vm430
  %v432 = vsel %vm431, %v424, %v428
  %v433 = vand.u32 2147483647, %v420
  %vm434 = vcmp.eq.f32.partialorder %v433, 8.507059e+37
  %v435 = vand.u32 %v420, 2147483648
  %v436 = vor.u32 1.1754944e-38, %v435
  %v437 = vsel %vm434, %v436, %v432
  %v438 = vmul.f32 %v415, %v437
  %v439 = vrcp.pop %v423
  %v440 = vmul.f32 %v423, %v439
  %v441 = vsub.f32 1.0, %v440
  %v442 = vmul.f32 %v439, %v441
  %v443 = vadd.f32 %v439, %v442
  %vm444 = vweird.f32 %v423
  %vm445 = vweird.f32 %v439
  %vm446 = vmor %vm444, %vm445
  %v447 = vsel %vm446, %v439, %v443
  %v448 = vand.u32 2147483647, %v423
  %vm449 = vcmp.eq.f32.partialorder %v448, 8.507059e+37
  %v450 = vand.u32 %v423, 2147483648
  %v451 = vor.u32 1.1754944e-38, %v450
  %v452 = vsel %vm449, %v451, %v447
  %v453 = vmul.f32 %v417, %v452
  %v454 = vpack.c.bf16 %v438, %v438
  %v455 = vpack.c.bf16 %v453, %v453
  %v457 = vunpack.c.l.b16 %v309
  %v458 = vpack.c.b16 %v457, %v457
  %459 = vrot.lane.b32.xlu0 %v458, 120
  %v460 = vpop.permute.xlu0 %459
  %v462 = vsel %vm207, %v454, 0
  %v465 = vsel %vm314, %v460, 0
  %467 = vmatpush.bf16.msra.mxu0 0
  %468 = vmatpush.bf16.msra.mxu0 0
  %469 = vmatpush.bf16.msra.mxu0 0
  %470 = vmatpush.bf16.msra.mxu0 0
  %471 = vmatpush.bf16.msra.mxu0 0
  %472 = vmatpush.bf16.msra.mxu0 0
  %473 = vmatpush.bf16.msra.mxu0 0
  %474 = vmatpush.bf16.msra.mxu0 %v465
  %475 = vmatmul.bf16.gmra.mxu0 %v462
  %v476 = vpop.f32.mrf.mxu0
  %v477 = vadd.f32 0.0, %v476
  %v478 = vpop.f32.mrf.mxu0
  %479 = vdwg.mxu0
  %v481 = vunpack.c.l.b16 %v310
  %v482 = vpack.c.b16 %v481, %v481
  %483 = vrot.lane.b32.xlu0 %v482, 120
  %v484 = vpop.permute.xlu0 %483
  %v486 = vsel %vm207, %v455, 0
  %v489 = vsel %vm314, %v484, 0
  %491 = vmatpush.bf16.msra.mxu0 0
  %492 = vmatpush.bf16.msra.mxu0 0
  %493 = vmatpush.bf16.msra.mxu0 0
  %494 = vmatpush.bf16.msra.mxu0 0
  %495 = vmatpush.bf16.msra.mxu0 0
  %496 = vmatpush.bf16.msra.mxu0 0
  %497 = vmatpush.bf16.msra.mxu0 0
  %498 = vmatpush.bf16.msra.mxu0 %v489
  %499 = vmatmul.bf16.gmra.mxu0 %v486
  %v500 = vpop.f32.mrf.mxu0
  %v501 = vadd.f32 0.0, %v500
  %v502 = vpop.f32.mrf.mxu0
  %503 = vdwg.mxu0
  %504 = vrot.lane.b32.xlu0 %v352, 112
  %v505 = vpop.permute.xlu0 %504
  %506 = vrot.lane.b32.xlu0 %v204, 48
  %v507 = vpop.permute.xlu0 %506
  %v509 = vsel %vm207, %v505, 0
  %v512 = vsel %vm207, %v507, 0
  %514 = vmatpush.bf16.xpose.msra.mxu0 0
  %515 = vmatpush.bf16.xpose.msra.mxu0 0
  %516 = vmatpush.bf16.xpose.msra.mxu0 0
  %517 = vmatpush.bf16.xpose.msra.mxu0 0
  %518 = vmatpush.bf16.xpose.msra.mxu0 0
  %519 = vmatpush.bf16.xpose.msra.mxu0 0
  %520 = vmatpush.bf16.xpose.msra.mxu0 0
  %521 = vmatpush.bf16.xpose.msra.mxu0 %v512
  %522 = vmatmul.bf16.gmra.mxu0 %v509
  %v523 = vpop.f32.mrf.mxu0
  %v524 = vadd.f32 0.0, %v523
  %v525 = vpop.f32.mrf.mxu0
  %526 = vdwg.mxu0
  %527 = vrot.lane.b32.xlu0 %v378, 112
  %v528 = vpop.permute.xlu0 %527
  %529 = vrot.lane.b32.xlu0 %v229, 48
  %v530 = vpop.permute.xlu0 %529
  %v532 = vsel %vm207, %v528, 0
  %v535 = vsel %vm207, %v530, 0
  %537 = vmatpush.bf16.xpose.msra.mxu0 0
  %538 = vmatpush.bf16.xpose.msra.mxu0 0
  %539 = vmatpush.bf16.xpose.msra.mxu0 0
  %540 = vmatpush.bf16.xpose.msra.mxu0 0
  %541 = vmatpush.bf16.xpose.msra.mxu0 0
  %542 = vmatpush.bf16.xpose.msra.mxu0 0
  %543 = vmatpush.bf16.xpose.msra.mxu0 0
  %544 = vmatpush.bf16.xpose.msra.mxu0 %v535
  %545 = vmatmul.bf16.gmra.mxu0 %v532
  %v546 = vpop.f32.mrf.mxu0
  %v547 = vadd.f32 0.0, %v546
  %v548 = vpop.f32.mrf.mxu0
  %549 = vdwg.mxu0
  %v550 = vmul.f32 %v524, 0.35355338
  %v551 = vmul.f32 %v547, 0.35355338
  %v552 = vadd.f32 %v550, %v253
  %v553 = vadd.f32 %v551, %v254
  %v554 = vsel %vm207, %v552, -inf
  %555 = vmax.xlane.f32.xlu0 %v554
  %v556 = vpop.xlane.xlu0 %555
  %v557 = vsel %vm207, %v553, -inf
  %558 = vmax.xlane.f32.xlu0 %v557
  %v559 = vpop.xlane.xlu0 %558
  %v560 = vsub.f32 %v552, %v556
  %v561 = vsub.f32 %v553, %v559
  %v562 = vmul.f32 %v560, 1.442695
  %v563 = vpow.pop %v562
  %v564 = vmul.f32 %v561, 1.442695
  %v565 = vpow.pop %v564
  %v566 = vsel %vm207, %v563, 0.0
  %567 = vadd.xlane.f32.xlu0 %v566
  %v568 = vpop.xlane.xlu0 %567
  %v569 = vsel %vm207, %v565, 0.0
  %570 = vadd.xlane.f32.xlu0 %v569
  %v571 = vpop.xlane.xlu0 %570
  %v572 = vrcp.pop %v568
  %v573 = vmul.f32 %v568, %v572
  %v574 = vsub.f32 1.0, %v573
  %v575 = vmul.f32 %v572, %v574
  %v576 = vadd.f32 %v572, %v575
  %vm577 = vweird.f32 %v568
  %vm578 = vweird.f32 %v572
  %vm579 = vmor %vm577, %vm578
  %v580 = vsel %vm579, %v572, %v576
  %v581 = vand.u32 2147483647, %v568
  %vm582 = vcmp.eq.f32.partialorder %v581, 8.507059e+37
  %v583 = vand.u32 %v568, 2147483648
  %v584 = vor.u32 1.1754944e-38, %v583
  %v585 = vsel %vm582, %v584, %v580
  %v586 = vmul.f32 %v563, %v585
  %v587 = vrcp.pop %v571
  %v588 = vmul.f32 %v571, %v587
  %v589 = vsub.f32 1.0, %v588
  %v590 = vmul.f32 %v587, %v589
  %v591 = vadd.f32 %v587, %v590
  %vm592 = vweird.f32 %v571
  %vm593 = vweird.f32 %v587
  %vm594 = vmor %vm592, %vm593
  %v595 = vsel %vm594, %v587, %v591
  %v596 = vand.u32 2147483647, %v571
  %vm597 = vcmp.eq.f32.partialorder %v596, 8.507059e+37
  %v598 = vand.u32 %v571, 2147483648
  %v599 = vor.u32 1.1754944e-38, %v598
  %v600 = vsel %vm597, %v599, %v595
  %v601 = vmul.f32 %v565, %v600
  %v602 = vpack.c.bf16 %v586, %v586
  %v603 = vpack.c.bf16 %v601, %v601
  %604 = vrot.lane.b32.xlu0 %v458, 112
  %v605 = vpop.permute.xlu0 %604
  %v607 = vsel %vm207, %v602, 0
  %v610 = vsel %vm314, %v605, 0
  %612 = vmatpush.bf16.msra.mxu0 0
  %613 = vmatpush.bf16.msra.mxu0 0
  %614 = vmatpush.bf16.msra.mxu0 0
  %615 = vmatpush.bf16.msra.mxu0 0
  %616 = vmatpush.bf16.msra.mxu0 0
  %617 = vmatpush.bf16.msra.mxu0 0
  %618 = vmatpush.bf16.msra.mxu0 0
  %619 = vmatpush.bf16.msra.mxu0 %v610
  %620 = vmatmul.bf16.gmra.mxu0 %v607
  %v621 = vpop.f32.mrf.mxu0
  %v622 = vadd.f32 0.0, %v621
  %v623 = vpop.f32.mrf.mxu0
  %624 = vdwg.mxu0
  %625 = vrot.lane.b32.xlu0 %v482, 112
  %v626 = vpop.permute.xlu0 %625
  %v628 = vsel %vm207, %v603, 0
  %v631 = vsel %vm314, %v626, 0
  %633 = vmatpush.bf16.msra.mxu0 0
  %634 = vmatpush.bf16.msra.mxu0 0
  %635 = vmatpush.bf16.msra.mxu0 0
  %636 = vmatpush.bf16.msra.mxu0 0
  %637 = vmatpush.bf16.msra.mxu0 0
  %638 = vmatpush.bf16.msra.mxu0 0
  %639 = vmatpush.bf16.msra.mxu0 0
  %640 = vmatpush.bf16.msra.mxu0 %v631
  %641 = vmatmul.bf16.gmra.mxu0 %v628
  %v642 = vpop.f32.mrf.mxu0
  %v643 = vadd.f32 0.0, %v642
  %v644 = vpop.f32.mrf.mxu0
  %645 = vdwg.mxu0
  %646 = vrot.lane.b32.xlu0 %v352, 104
  %v647 = vpop.permute.xlu0 %646
  %648 = vrot.lane.b32.xlu0 %v204, 40
  %v649 = vpop.permute.xlu0 %648
  %v651 = vsel %vm207, %v647, 0
  %v654 = vsel %vm207, %v649, 0
  %656 = vmatpush.bf16.xpose.msra.mxu0 0
  %657 = vmatpush.bf16.xpose.msra.mxu0 0
  %658 = vmatpush.bf16.xpose.msra.mxu0 0
  %659 = vmatpush.bf16.xpose.msra.mxu0 0
  %660 = vmatpush.bf16.xpose.msra.mxu0 0
  %661 = vmatpush.bf16.xpose.msra.mxu0 0
  %662 = vmatpush.bf16.xpose.msra.mxu0 0
  %663 = vmatpush.bf16.xpose.msra.mxu0 %v654
  %664 = vmatmul.bf16.gmra.mxu0 %v651
  %v665 = vpop.f32.mrf.mxu0
  %v666 = vadd.f32 0.0, %v665
  %v667 = vpop.f32.mrf.mxu0
  %668 = vdwg.mxu0
  %669 = vrot.lane.b32.xlu0 %v378, 104
  %v670 = vpop.permute.xlu0 %669
  %671 = vrot.lane.b32.xlu0 %v229, 40
  %v672 = vpop.permute.xlu0 %671
  %v674 = vsel %vm207, %v670, 0
  %v677 = vsel %vm207, %v672, 0
  %679 = vmatpush.bf16.xpose.msra.mxu0 0
  %680 = vmatpush.bf16.xpose.msra.mxu0 0
  %681 = vmatpush.bf16.xpose.msra.mxu0 0
  %682 = vmatpush.bf16.xpose.msra.mxu0 0
  %683 = vmatpush.bf16.xpose.msra.mxu0 0
  %684 = vmatpush.bf16.xpose.msra.mxu0 0
  %685 = vmatpush.bf16.xpose.msra.mxu0 0
  %686 = vmatpush.bf16.xpose.msra.mxu0 %v677
  %687 = vmatmul.bf16.gmra.mxu0 %v674
  %v688 = vpop.f32.mrf.mxu0
  %v689 = vadd.f32 0.0, %v688
  %v690 = vpop.f32.mrf.mxu0
  %691 = vdwg.mxu0
  %v692 = vmul.f32 %v666, 0.35355338
  %v693 = vmul.f32 %v689, 0.35355338
  %v694 = vadd.f32 %v692, %v253
  %v695 = vadd.f32 %v693, %v254
  %v696 = vsel %vm207, %v694, -inf
  %697 = vmax.xlane.f32.xlu0 %v696
  %v698 = vpop.xlane.xlu0 %697
  %v699 = vsel %vm207, %v695, -inf
  %700 = vmax.xlane.f32.xlu0 %v699
  %v701 = vpop.xlane.xlu0 %700
  %v702 = vsub.f32 %v694, %v698
  %v703 = vsub.f32 %v695, %v701
  %v704 = vmul.f32 %v702, 1.442695
  %v705 = vpow.pop %v704
  %v706 = vmul.f32 %v703, 1.442695
  %v707 = vpow.pop %v706
  %v708 = vsel %vm207, %v705, 0.0
  %709 = vadd.xlane.f32.xlu0 %v708
  %v710 = vpop.xlane.xlu0 %709
  %v711 = vsel %vm207, %v707, 0.0
  %712 = vadd.xlane.f32.xlu0 %v711
  %v713 = vpop.xlane.xlu0 %712
  %v714 = vrcp.pop %v710
  %v715 = vmul.f32 %v710, %v714
  %v716 = vsub.f32 1.0, %v715
  %v717 = vmul.f32 %v714, %v716
  %v718 = vadd.f32 %v714, %v717
  %vm719 = vweird.f32 %v710
  %vm720 = vweird.f32 %v714
  %vm721 = vmor %vm719, %vm720
  %v722 = vsel %vm721, %v714, %v718
  %v723 = vand.u32 2147483647, %v710
  %vm724 = vcmp.eq.f32.partialorder %v723, 8.507059e+37
  %v725 = vand.u32 %v710, 2147483648
  %v726 = vor.u32 1.1754944e-38, %v725
  %v727 = vsel %vm724, %v726, %v722
  %v728 = vmul.f32 %v705, %v727
  %v729 = vrcp.pop %v713
  %v730 = vmul.f32 %v713, %v729
  %v731 = vsub.f32 1.0, %v730
  %v732 = vmul.f32 %v729, %v731
  %v733 = vadd.f32 %v729, %v732
  %vm734 = vweird.f32 %v713
  %vm735 = vweird.f32 %v729
  %vm736 = vmor %vm734, %vm735
  %v737 = vsel %vm736, %v729, %v733
  %v738 = vand.u32 2147483647, %v713
  %vm739 = vcmp.eq.f32.partialorder %v738, 8.507059e+37
  %v740 = vand.u32 %v713, 2147483648
  %v741 = vor.u32 1.1754944e-38, %v740
  %v742 = vsel %vm739, %v741, %v737
  %v743 = vmul.f32 %v707, %v742
  %v744 = vpack.c.bf16 %v728, %v728
  %v745 = vpack.c.bf16 %v743, %v743
  %746 = vrot.lane.b32.xlu0 %v458, 104
  %v747 = vpop.permute.xlu0 %746
  %v749 = vsel %vm207, %v744, 0
  %v752 = vsel %vm314, %v747, 0
  %754 = vmatpush.bf16.msra.mxu0 0
  %755 = vmatpush.bf16.msra.mxu0 0
  %756 = vmatpush.bf16.msra.mxu0 0
  %757 = vmatpush.bf16.msra.mxu0 0
  %758 = vmatpush.bf16.msra.mxu0 0
  %759 = vmatpush.bf16.msra.mxu0 0
  %760 = vmatpush.bf16.msra.mxu0 0
  %761 = vmatpush.bf16.msra.mxu0 %v752
  %762 = vmatmul.bf16.gmra.mxu0 %v749
  %v763 = vpop.f32.mrf.mxu0
  %v764 = vadd.f32 0.0, %v763
  %v765 = vpop.f32.mrf.mxu0
  %766 = vdwg.mxu0
  %767 = vrot.lane.b32.xlu0 %v482, 104
  %v768 = vpop.permute.xlu0 %767
  %v770 = vsel %vm207, %v745, 0
  %v773 = vsel %vm314, %v768, 0
  %775 = vmatpush.bf16.msra.mxu0 0
  %776 = vmatpush.bf16.msra.mxu0 0
  %777 = vmatpush.bf16.msra.mxu0 0
  %778 = vmatpush.bf16.msra.mxu0 0
  %779 = vmatpush.bf16.msra.mxu0 0
  %780 = vmatpush.bf16.msra.mxu0 0
  %781 = vmatpush.bf16.msra.mxu0 0
  %782 = vmatpush.bf16.msra.mxu0 %v773
  %783 = vmatmul.bf16.gmra.mxu0 %v770
  %v784 = vpop.f32.mrf.mxu0
  %v785 = vadd.f32 0.0, %v784
  %v786 = vpop.f32.mrf.mxu0
  %787 = vdwg.mxu0
  %788 = vrot.lane.b32.xlu0 %v352, 96
  %v789 = vpop.permute.xlu0 %788
  %790 = vrot.lane.b32.xlu0 %v204, 32
  %v791 = vpop.permute.xlu0 %790
  %v793 = vsel %vm207, %v789, 0
  %v796 = vsel %vm207, %v791, 0
  %798 = vmatpush.bf16.xpose.msra.mxu0 0
  %799 = vmatpush.bf16.xpose.msra.mxu0 0
  %800 = vmatpush.bf16.xpose.msra.mxu0 0
  %801 = vmatpush.bf16.xpose.msra.mxu0 0
  %802 = vmatpush.bf16.xpose.msra.mxu0 0
  %803 = vmatpush.bf16.xpose.msra.mxu0 0
  %804 = vmatpush.bf16.xpose.msra.mxu0 0
  %805 = vmatpush.bf16.xpose.msra.mxu0 %v796
  %806 = vmatmul.bf16.gmra.mxu0 %v793
  %v807 = vpop.f32.mrf.mxu0
  %v808 = vadd.f32 0.0, %v807
  %v809 = vpop.f32.mrf.mxu0
  %810 = vdwg.mxu0
  %811 = vrot.lane.b32.xlu0 %v378, 96
  %v812 = vpop.permute.xlu0 %811
  %813 = vrot.lane.b32.xlu0 %v229, 32
  %v814 = vpop.permute.xlu0 %813
  %v816 = vsel %vm207, %v812, 0
  %v819 = vsel %vm207, %v814, 0
  %821 = vmatpush.bf16.xpose.msra.mxu0 0
  %822 = vmatpush.bf16.xpose.msra.mxu0 0
  %823 = vmatpush.bf16.xpose.msra.mxu0 0
  %824 = vmatpush.bf16.xpose.msra.mxu0 0
  %825 = vmatpush.bf16.xpose.msra.mxu0 0
  %826 = vmatpush.bf16.xpose.msra.mxu0 0
  %827 = vmatpush.bf16.xpose.msra.mxu0 0
  %828 = vmatpush.bf16.xpose.msra.mxu0 %v819
  %829 = vmatmul.bf16.gmra.mxu0 %v816
  %v830 = vpop.f32.mrf.mxu0
  %v831 = vadd.f32 0.0, %v830
  %v832 = vpop.f32.mrf.mxu0
  %833 = vdwg.mxu0
  %v834 = vmul.f32 %v808, 0.35355338
  %v835 = vmul.f32 %v831, 0.35355338
  %v836 = vadd.f32 %v834, %v253
  %v837 = vadd.f32 %v835, %v254
  %v838 = vsel %vm207, %v836, -inf
  %839 = vmax.xlane.f32.xlu0 %v838
  %v840 = vpop.xlane.xlu0 %839
  %v841 = vsel %vm207, %v837, -inf
  %842 = vmax.xlane.f32.xlu0 %v841
  %v843 = vpop.xlane.xlu0 %842
  %v844 = vsub.f32 %v836, %v840
  %v845 = vsub.f32 %v837, %v843
  %v846 = vmul.f32 %v844, 1.442695
  %v847 = vpow.pop %v846
  %v848 = vmul.f32 %v845, 1.442695
  %v849 = vpow.pop %v848
  %v850 = vsel %vm207, %v847, 0.0
  %851 = vadd.xlane.f32.xlu0 %v850
  %v852 = vpop.xlane.xlu0 %851
  %v853 = vsel %vm207, %v849, 0.0
  %854 = vadd.xlane.f32.xlu0 %v853
  %v855 = vpop.xlane.xlu0 %854
  %v856 = vrcp.pop %v852
  %v857 = vmul.f32 %v852, %v856
  %v858 = vsub.f32 1.0, %v857
  %v859 = vmul.f32 %v856, %v858
  %v860 = vadd.f32 %v856, %v859
  %vm861 = vweird.f32 %v852
  %vm862 = vweird.f32 %v856
  %vm863 = vmor %vm861, %vm862
  %v864 = vsel %vm863, %v856, %v860
  %v865 = vand.u32 2147483647, %v852
  %vm866 = vcmp.eq.f32.partialorder %v865, 8.507059e+37
  %v867 = vand.u32 %v852, 2147483648
  %v868 = vor.u32 1.1754944e-38, %v867
  %v869 = vsel %vm866, %v868, %v864
  %v870 = vmul.f32 %v847, %v869
  %v871 = vrcp.pop %v855
  %v872 = vmul.f32 %v855, %v871
  %v873 = vsub.f32 1.0, %v872
  %v874 = vmul.f32 %v871, %v873
  %v875 = vadd.f32 %v871, %v874
  %vm876 = vweird.f32 %v855
  %vm877 = vweird.f32 %v871
  %vm878 = vmor %vm876, %vm877
  %v879 = vsel %vm878, %v871, %v875
  %v880 = vand.u32 2147483647, %v855
  %vm881 = vcmp.eq.f32.partialorder %v880, 8.507059e+37
  %v882 = vand.u32 %v855, 2147483648
  %v883 = vor.u32 1.1754944e-38, %v882
  %v884 = vsel %vm881, %v883, %v879
  %v885 = vmul.f32 %v849, %v884
  %v886 = vpack.c.bf16 %v870, %v870
  %v887 = vpack.c.bf16 %v885, %v885
  %888 = vrot.lane.b32.xlu0 %v458, 96
  %v889 = vpop.permute.xlu0 %888
  %v891 = vsel %vm207, %v886, 0
  %v894 = vsel %vm314, %v889, 0
  %896 = vmatpush.bf16.msra.mxu0 0
  %897 = vmatpush.bf16.msra.mxu0 0
  %898 = vmatpush.bf16.msra.mxu0 0
  %899 = vmatpush.bf16.msra.mxu0 0
  %900 = vmatpush.bf16.msra.mxu0 0
  %901 = vmatpush.bf16.msra.mxu0 0
  %902 = vmatpush.bf16.msra.mxu0 0
  %903 = vmatpush.bf16.msra.mxu0 %v894
  %904 = vmatmul.bf16.gmra.mxu0 %v891
  %v905 = vpop.f32.mrf.mxu0
  %v906 = vadd.f32 0.0, %v905
  %v907 = vpop.f32.mrf.mxu0
  %908 = vdwg.mxu0
  %909 = vrot.lane.b32.xlu0 %v482, 96
  %v910 = vpop.permute.xlu0 %909
  %v912 = vsel %vm207, %v887, 0
  %v915 = vsel %vm314, %v910, 0
  %917 = vmatpush.bf16.msra.mxu0 0
  %918 = vmatpush.bf16.msra.mxu0 0
  %919 = vmatpush.bf16.msra.mxu0 0
  %920 = vmatpush.bf16.msra.mxu0 0
  %921 = vmatpush.bf16.msra.mxu0 0
  %922 = vmatpush.bf16.msra.mxu0 0
  %923 = vmatpush.bf16.msra.mxu0 0
  %924 = vmatpush.bf16.msra.mxu0 %v915
  %925 = vmatmul.bf16.gmra.mxu0 %v912
  %v926 = vpop.f32.mrf.mxu0
  %v927 = vadd.f32 0.0, %v926
  %v928 = vpop.f32.mrf.mxu0
  %929 = vdwg.mxu0
  %930 = vrot.lane.b32.xlu0 %v352, 88
  %v931 = vpop.permute.xlu0 %930
  %932 = vrot.lane.b32.xlu0 %v204, 24
  %v933 = vpop.permute.xlu0 %932
  %v935 = vsel %vm207, %v931, 0
  %v938 = vsel %vm207, %v933, 0
  %940 = vmatpush.bf16.xpose.msra.mxu0 0
  %941 = vmatpush.bf16.xpose.msra.mxu0 0
  %942 = vmatpush.bf16.xpose.msra.mxu0 0
  %943 = vmatpush.bf16.xpose.msra.mxu0 0
  %944 = vmatpush.bf16.xpose.msra.mxu0 0
  %945 = vmatpush.bf16.xpose.msra.mxu0 0
  %946 = vmatpush.bf16.xpose.msra.mxu0 0
  %947 = vmatpush.bf16.xpose.msra.mxu0 %v938
  %948 = vmatmul.bf16.gmra.mxu0 %v935
  %v949 = vpop.f32.mrf.mxu0
  %v950 = vadd.f32 0.0, %v949
  %v951 = vpop.f32.mrf.mxu0
  %952 = vdwg.mxu0
  %953 = vrot.lane.b32.xlu0 %v378, 88
  %v954 = vpop.permute.xlu0 %953
  %955 = vrot.lane.b32.xlu0 %v229, 24
  %v956 = vpop.permute.xlu0 %955
  %v958 = vsel %vm207, %v954, 0
  %v961 = vsel %vm207, %v956, 0
  %963 = vmatpush.bf16.xpose.msra.mxu0 0
  %964 = vmatpush.bf16.xpose.msra.mxu0 0
  %965 = vmatpush.bf16.xpose.msra.mxu0 0
  %966 = vmatpush.bf16.xpose.msra.mxu0 0
  %967 = vmatpush.bf16.xpose.msra.mxu0 0
  %968 = vmatpush.bf16.xpose.msra.mxu0 0
  %969 = vmatpush.bf16.xpose.msra.mxu0 0
  %970 = vmatpush.bf16.xpose.msra.mxu0 %v961
  %971 = vmatmul.bf16.gmra.mxu0 %v958
  %v972 = vpop.f32.mrf.mxu0
  %v973 = vadd.f32 0.0, %v972
  %v974 = vpop.f32.mrf.mxu0
  %975 = vdwg.mxu0
  %v976 = vmul.f32 %v950, 0.35355338
  %v977 = vmul.f32 %v973, 0.35355338
  %v978 = vadd.f32 %v976, %v253
  %v979 = vadd.f32 %v977, %v254
  %v980 = vsel %vm207, %v978, -inf
  %981 = vmax.xlane.f32.xlu0 %v980
  %v982 = vpop.xlane.xlu0 %981
  %v983 = vsel %vm207, %v979, -inf
  %984 = vmax.xlane.f32.xlu0 %v983
  %v985 = vpop.xlane.xlu0 %984
  %v986 = vsub.f32 %v978, %v982
  %v987 = vsub.f32 %v979, %v985
  %v988 = vmul.f32 %v986, 1.442695
  %v989 = vpow.pop %v988
  %v990 = vmul.f32 %v987, 1.442695
  %v991 = vpow.pop %v990
  %v992 = vsel %vm207, %v989, 0.0
  %993 = vadd.xlane.f32.xlu0 %v992
  %v994 = vpop.xlane.xlu0 %993
  %v995 = vsel %vm207, %v991, 0.0
  %996 = vadd.xlane.f32.xlu0 %v995
  %v997 = vpop.xlane.xlu0 %996
  %v998 = vrcp.pop %v994
  %v999 = vmul.f32 %v994, %v998
  %v1000 = vsub.f32 1.0, %v999
  %v1001 = vmul.f32 %v998, %v1000
  %v1002 = vadd.f32 %v998, %v1001
  %vm1003 = vweird.f32 %v994
  %vm1004 = vweird.f32 %v998
  %vm1005 = vmor %vm1003, %vm1004
  %v1006 = vsel %vm1005, %v998, %v1002
  %v1007 = vand.u32 2147483647, %v994
  %vm1008 = vcmp.eq.f32.partialorder %v1007, 8.507059e+37
  %v1009 = vand.u32 %v994, 2147483648
  %v1010 = vor.u32 1.1754944e-38, %v1009
  %v1011 = vsel %vm1008, %v1010, %v1006
  %v1012 = vmul.f32 %v989, %v1011
  %v1013 = vrcp.pop %v997
  %v1014 = vmul.f32 %v997, %v1013
  %v1015 = vsub.f32 1.0, %v1014
  %v1016 = vmul.f32 %v1013, %v1015
  %v1017 = vadd.f32 %v1013, %v1016
  %vm1018 = vweird.f32 %v997
  %vm1019 = vweird.f32 %v1013
  %vm1020 = vmor %vm1018, %vm1019
  %v1021 = vsel %vm1020, %v1013, %v1017
  %v1022 = vand.u32 2147483647, %v997
  %vm1023 = vcmp.eq.f32.partialorder %v1022, 8.507059e+37
  %v1024 = vand.u32 %v997, 2147483648
  %v1025 = vor.u32 1.1754944e-38, %v1024
  %v1026 = vsel %vm1023, %v1025, %v1021
  %v1027 = vmul.f32 %v991, %v1026
  %v1028 = vpack.c.bf16 %v1012, %v1012
  %v1029 = vpack.c.bf16 %v1027, %v1027
  %1030 = vrot.lane.b32.xlu0 %v458, 88
  %v1031 = vpop.permute.xlu0 %1030
  %v1033 = vsel %vm207, %v1028, 0
  %v1036 = vsel %vm314, %v1031, 0
  %1038 = vmatpush.bf16.msra.mxu0 0
  %1039 = vmatpush.bf16.msra.mxu0 0
  %1040 = vmatpush.bf16.msra.mxu0 0
  %1041 = vmatpush.bf16.msra.mxu0 0
  %1042 = vmatpush.bf16.msra.mxu0 0
  %1043 = vmatpush.bf16.msra.mxu0 0
  %1044 = vmatpush.bf16.msra.mxu0 0
  %1045 = vmatpush.bf16.msra.mxu0 %v1036
  %1046 = vmatmul.bf16.gmra.mxu0 %v1033
  %v1047 = vpop.f32.mrf.mxu0
  %v1048 = vadd.f32 0.0, %v1047
  %v1049 = vpop.f32.mrf.mxu0
  %1050 = vdwg.mxu0
  %1051 = vrot.lane.b32.xlu0 %v482, 88
  %v1052 = vpop.permute.xlu0 %1051
  %v1054 = vsel %vm207, %v1029, 0
  %v1057 = vsel %vm314, %v1052, 0
  %1059 = vmatpush.bf16.msra.mxu0 0
  %1060 = vmatpush.bf16.msra.mxu0 0
  %1061 = vmatpush.bf16.msra.mxu0 0
  %1062 = vmatpush.bf16.msra.mxu0 0
  %1063 = vmatpush.bf16.msra.mxu0 0
  %1064 = vmatpush.bf16.msra.mxu0 0
  %1065 = vmatpush.bf16.msra.mxu0 0
  %1066 = vmatpush.bf16.msra.mxu0 %v1057
  %1067 = vmatmul.bf16.gmra.mxu0 %v1054
  %v1068 = vpop.f32.mrf.mxu0
  %v1069 = vadd.f32 0.0, %v1068
  %v1070 = vpop.f32.mrf.mxu0
  %1071 = vdwg.mxu0
  %1072 = vrot.lane.b32.xlu0 %v352, 80
  %v1073 = vpop.permute.xlu0 %1072
  %1074 = vrot.lane.b32.xlu0 %v204, 16
  %v1075 = vpop.permute.xlu0 %1074
  %v1077 = vsel %vm207, %v1073, 0
  %v1080 = vsel %vm207, %v1075, 0
  %1082 = vmatpush.bf16.xpose.msra.mxu0 0
  %1083 = vmatpush.bf16.xpose.msra.mxu0 0
  %1084 = vmatpush.bf16.xpose.msra.mxu0 0
  %1085 = vmatpush.bf16.xpose.msra.mxu0 0
  %1086 = vmatpush.bf16.xpose.msra.mxu0 0
  %1087 = vmatpush.bf16.xpose.msra.mxu0 0
  %1088 = vmatpush.bf16.xpose.msra.mxu0 0
  %1089 = vmatpush.bf16.xpose.msra.mxu0 %v1080
  %1090 = vmatmul.bf16.gmra.mxu0 %v1077
  %v1091 = vpop.f32.mrf.mxu0
  %v1092 = vadd.f32 0.0, %v1091
  %v1093 = vpop.f32.mrf.mxu0
  %1094 = vdwg.mxu0
  %1095 = vrot.lane.b32.xlu0 %v378, 80
  %v1096 = vpop.permute.xlu0 %1095
  %1097 = vrot.lane.b32.xlu0 %v229, 16
  %v1098 = vpop.permute.xlu0 %1097
  %v1100 = vsel %vm207, %v1096, 0
  %v1103 = vsel %vm207, %v1098, 0
  %1105 = vmatpush.bf16.xpose.msra.mxu0 0
  %1106 = vmatpush.bf16.xpose.msra.mxu0 0
  %1107 = vmatpush.bf16.xpose.msra.mxu0 0
  %1108 = vmatpush.bf16.xpose.msra.mxu0 0
  %1109 = vmatpush.bf16.xpose.msra.mxu0 0
  %1110 = vmatpush.bf16.xpose.msra.mxu0 0
  %1111 = vmatpush.bf16.xpose.msra.mxu0 0
  %1112 = vmatpush.bf16.xpose.msra.mxu0 %v1103
  %1113 = vmatmul.bf16.gmra.mxu0 %v1100
  %v1114 = vpop.f32.mrf.mxu0
  %v1115 = vadd.f32 0.0, %v1114
  %v1116 = vpop.f32.mrf.mxu0
  %1117 = vdwg.mxu0
  %v1118 = vmul.f32 %v1092, 0.35355338
  %v1119 = vmul.f32 %v1115, 0.35355338
  %v1120 = vadd.f32 %v1118, %v253
  %v1121 = vadd.f32 %v1119, %v254
  %v1122 = vsel %vm207, %v1120, -inf
  %1123 = vmax.xlane.f32.xlu0 %v1122
  %v1124 = vpop.xlane.xlu0 %1123
  %v1125 = vsel %vm207, %v1121, -inf
  %1126 = vmax.xlane.f32.xlu0 %v1125
  %v1127 = vpop.xlane.xlu0 %1126
  %v1128 = vsub.f32 %v1120, %v1124
  %v1129 = vsub.f32 %v1121, %v1127
  %v1130 = vmul.f32 %v1128, 1.442695
  %v1131 = vpow.pop %v1130
  %v1132 = vmul.f32 %v1129, 1.442695
  %v1133 = vpow.pop %v1132
  %v1134 = vsel %vm207, %v1131, 0.0
  %1135 = vadd.xlane.f32.xlu0 %v1134
  %v1136 = vpop.xlane.xlu0 %1135
  %v1137 = vsel %vm207, %v1133, 0.0
  %1138 = vadd.xlane.f32.xlu0 %v1137
  %v1139 = vpop.xlane.xlu0 %1138
  %v1140 = vrcp.pop %v1136
  %v1141 = vmul.f32 %v1136, %v1140
  %v1142 = vsub.f32 1.0, %v1141
  %v1143 = vmul.f32 %v1140, %v1142
  %v1144 = vadd.f32 %v1140, %v1143
  %vm1145 = vweird.f32 %v1136
  %vm1146 = vweird.f32 %v1140
  %vm1147 = vmor %vm1145, %vm1146
  %v1148 = vsel %vm1147, %v1140, %v1144
  %v1149 = vand.u32 2147483647, %v1136
  %vm1150 = vcmp.eq.f32.partialorder %v1149, 8.507059e+37
  %v1151 = vand.u32 %v1136, 2147483648
  %v1152 = vor.u32 1.1754944e-38, %v1151
  %v1153 = vsel %vm1150, %v1152, %v1148
  %v1154 = vmul.f32 %v1131, %v1153
  %v1155 = vrcp.pop %v1139
  %v1156 = vmul.f32 %v1139, %v1155
  %v1157 = vsub.f32 1.0, %v1156
  %v1158 = vmul.f32 %v1155, %v1157
  %v1159 = vadd.f32 %v1155, %v1158
  %vm1160 = vweird.f32 %v1139
  %vm1161 = vweird.f32 %v1155
  %vm1162 = vmor %vm1160, %vm1161
  %v1163 = vsel %vm1162, %v1155, %v1159
  %v1164 = vand.u32 2147483647, %v1139
  %vm1165 = vcmp.eq.f32.partialorder %v1164, 8.507059e+37
  %v1166 = vand.u32 %v1139, 2147483648
  %v1167 = vor.u32 1.1754944e-38, %v1166
  %v1168 = vsel %vm1165, %v1167, %v1163
  %v1169 = vmul.f32 %v1133, %v1168
  %v1170 = vpack.c.bf16 %v1154, %v1154
  %v1171 = vpack.c.bf16 %v1169, %v1169
  %1172 = vrot.lane.b32.xlu0 %v458, 80
  %v1173 = vpop.permute.xlu0 %1172
  %v1175 = vsel %vm207, %v1170, 0
  %v1178 = vsel %vm314, %v1173, 0
  %1180 = vmatpush.bf16.msra.mxu0 0
  %1181 = vmatpush.bf16.msra.mxu0 0
  %1182 = vmatpush.bf16.msra.mxu0 0
  %1183 = vmatpush.bf16.msra.mxu0 0
  %1184 = vmatpush.bf16.msra.mxu0 0
  %1185 = vmatpush.bf16.msra.mxu0 0
  %1186 = vmatpush.bf16.msra.mxu0 0
  %1187 = vmatpush.bf16.msra.mxu0 %v1178
  %1188 = vmatmul.bf16.gmra.mxu0 %v1175
  %v1189 = vpop.f32.mrf.mxu0
  %v1190 = vadd.f32 0.0, %v1189
  %v1191 = vpop.f32.mrf.mxu0
  %1192 = vdwg.mxu0
  %1193 = vrot.lane.b32.xlu0 %v482, 80
  %v1194 = vpop.permute.xlu0 %1193
  %v1196 = vsel %vm207, %v1171, 0
  %v1199 = vsel %vm314, %v1194, 0
  %1201 = vmatpush.bf16.msra.mxu0 0
  %1202 = vmatpush.bf16.msra.mxu0 0
  %1203 = vmatpush.bf16.msra.mxu0 0
  %1204 = vmatpush.bf16.msra.mxu0 0
  %1205 = vmatpush.bf16.msra.mxu0 0
  %1206 = vmatpush.bf16.msra.mxu0 0
  %1207 = vmatpush.bf16.msra.mxu0 0
  %1208 = vmatpush.bf16.msra.mxu0 %v1199
  %1209 = vmatmul.bf16.gmra.mxu0 %v1196
  %v1210 = vpop.f32.mrf.mxu0
  %v1211 = vadd.f32 0.0, %v1210
  %v1212 = vpop.f32.mrf.mxu0
  %1213 = vdwg.mxu0
  %1214 = vrot.lane.b32.xlu0 %v352, 72
  %v1215 = vpop.permute.xlu0 %1214
  %1216 = vrot.lane.b32.xlu0 %v204, 8
  %v1217 = vpop.permute.xlu0 %1216
  %v1219 = vsel %vm207, %v1215, 0
  %v1222 = vsel %vm207, %v1217, 0
  %1224 = vmatpush.bf16.xpose.msra.mxu0 0
  %1225 = vmatpush.bf16.xpose.msra.mxu0 0
  %1226 = vmatpush.bf16.xpose.msra.mxu0 0
  %1227 = vmatpush.bf16.xpose.msra.mxu0 0
  %1228 = vmatpush.bf16.xpose.msra.mxu0 0
  %1229 = vmatpush.bf16.xpose.msra.mxu0 0
  %1230 = vmatpush.bf16.xpose.msra.mxu0 0
  %1231 = vmatpush.bf16.xpose.msra.mxu0 %v1222
  %1232 = vmatmul.bf16.gmra.mxu0 %v1219
  %v1233 = vpop.f32.mrf.mxu0
  %v1234 = vadd.f32 0.0, %v1233
  %v1235 = vpop.f32.mrf.mxu0
  %1236 = vdwg.mxu0
  %1237 = vrot.lane.b32.xlu0 %v378, 72
  %v1238 = vpop.permute.xlu0 %1237
  %1239 = vrot.lane.b32.xlu0 %v229, 8
  %v1240 = vpop.permute.xlu0 %1239
  %v1242 = vsel %vm207, %v1238, 0
  %v1245 = vsel %vm207, %v1240, 0
  %1247 = vmatpush.bf16.xpose.msra.mxu0 0
  %1248 = vmatpush.bf16.xpose.msra.mxu0 0
  %1249 = vmatpush.bf16.xpose.msra.mxu0 0
  %1250 = vmatpush.bf16.xpose.msra.mxu0 0
  %1251 = vmatpush.bf16.xpose.msra.mxu0 0
  %1252 = vmatpush.bf16.xpose.msra.mxu0 0
  %1253 = vmatpush.bf16.xpose.msra.mxu0 0
  %1254 = vmatpush.bf16.xpose.msra.mxu0 %v1245
  %1255 = vmatmul.bf16.gmra.mxu0 %v1242
  %v1256 = vpop.f32.mrf.mxu0
  %v1257 = vadd.f32 0.0, %v1256
  %v1258 = vpop.f32.mrf.mxu0
  %1259 = vdwg.mxu0
  %v1260 = vmul.f32 %v1234, 0.35355338
  %v1261 = vmul.f32 %v1257, 0.35355338
  %v1262 = vadd.f32 %v1260, %v253
  %v1263 = vadd.f32 %v1261, %v254
  %v1264 = vsel %vm207, %v1262, -inf
  %1265 = vmax.xlane.f32.xlu0 %v1264
  %v1266 = vpop.xlane.xlu0 %1265
  %v1267 = vsel %vm207, %v1263, -inf
  %1268 = vmax.xlane.f32.xlu0 %v1267
  %v1269 = vpop.xlane.xlu0 %1268
  %v1270 = vsub.f32 %v1262, %v1266
  %v1271 = vsub.f32 %v1263, %v1269
  %v1272 = vmul.f32 %v1270, 1.442695
  %v1273 = vpow.pop %v1272
  %v1274 = vmul.f32 %v1271, 1.442695
  %v1275 = vpow.pop %v1274
  %v1276 = vsel %vm207, %v1273, 0.0
  %1277 = vadd.xlane.f32.xlu0 %v1276
  %v1278 = vpop.xlane.xlu0 %1277
  %v1279 = vsel %vm207, %v1275, 0.0
  %1280 = vadd.xlane.f32.xlu0 %v1279
  %v1281 = vpop.xlane.xlu0 %1280
  %v1282 = vrcp.pop %v1278
  %v1283 = vmul.f32 %v1278, %v1282
  %v1284 = vsub.f32 1.0, %v1283
  %v1285 = vmul.f32 %v1282, %v1284
  %v1286 = vadd.f32 %v1282, %v1285
  %vm1287 = vweird.f32 %v1278
  %vm1288 = vweird.f32 %v1282
  %vm1289 = vmor %vm1287, %vm1288
  %v1290 = vsel %vm1289, %v1282, %v1286
  %v1291 = vand.u32 2147483647, %v1278
  %vm1292 = vcmp.eq.f32.partialorder %v1291, 8.507059e+37
  %v1293 = vand.u32 %v1278, 2147483648
  %v1294 = vor.u32 1.1754944e-38, %v1293
  %v1295 = vsel %vm1292, %v1294, %v1290
  %v1296 = vmul.f32 %v1273, %v1295
  %v1297 = vrcp.pop %v1281
  %v1298 = vmul.f32 %v1281, %v1297
  %v1299 = vsub.f32 1.0, %v1298
  %v1300 = vmul.f32 %v1297, %v1299
  %v1301 = vadd.f32 %v1297, %v1300
  %vm1302 = vweird.f32 %v1281
  %vm1303 = vweird.f32 %v1297
  %vm1304 = vmor %vm1302, %vm1303
  %v1305 = vsel %vm1304, %v1297, %v1301
  %v1306 = vand.u32 2147483647, %v1281
  %vm1307 = vcmp.eq.f32.partialorder %v1306, 8.507059e+37
  %v1308 = vand.u32 %v1281, 2147483648
  %v1309 = vor.u32 1.1754944e-38, %v1308
  %v1310 = vsel %vm1307, %v1309, %v1305
  %v1311 = vmul.f32 %v1275, %v1310
  %v1312 = vpack.c.bf16 %v1296, %v1296
  %v1313 = vpack.c.bf16 %v1311, %v1311
  %1314 = vrot.lane.b32.xlu0 %v458, 72
  %v1315 = vpop.permute.xlu0 %1314
  %v1317 = vsel %vm207, %v1312, 0
  %v1320 = vsel %vm314, %v1315, 0
  %1322 = vmatpush.bf16.msra.mxu0 0
  %1323 = vmatpush.bf16.msra.mxu0 0
  %1324 = vmatpush.bf16.msra.mxu0 0
  %1325 = vmatpush.bf16.msra.mxu0 0
  %1326 = vmatpush.bf16.msra.mxu0 0
  %1327 = vmatpush.bf16.msra.mxu0 0
  %1328 = vmatpush.bf16.msra.mxu0 0
  %1329 = vmatpush.bf16.msra.mxu0 %v1320
  %1330 = vmatmul.bf16.gmra.mxu0 %v1317
  %v1331 = vpop.f32.mrf.mxu0
  %v1332 = vadd.f32 0.0, %v1331
  %v1333 = vpop.f32.mrf.mxu0
  %1334 = vdwg.mxu0
  %1335 = vrot.lane.b32.xlu0 %v482, 72
  %v1336 = vpop.permute.xlu0 %1335
  %v1338 = vsel %vm207, %v1313, 0
  %v1341 = vsel %vm314, %v1336, 0
  %1343 = vmatpush.bf16.msra.mxu0 0
  %1344 = vmatpush.bf16.msra.mxu0 0
  %1345 = vmatpush.bf16.msra.mxu0 0
  %1346 = vmatpush.bf16.msra.mxu0 0
  %1347 = vmatpush.bf16.msra.mxu0 0
  %1348 = vmatpush.bf16.msra.mxu0 0
  %1349 = vmatpush.bf16.msra.mxu0 0
  %1350 = vmatpush.bf16.msra.mxu0 %v1341
  %1351 = vmatmul.bf16.gmra.mxu0 %v1338
  %v1352 = vpop.f32.mrf.mxu0
  %v1353 = vadd.f32 0.0, %v1352
  %v1354 = vpop.f32.mrf.mxu0
  %1355 = vdwg.mxu0
  %1358 = vrot.lane.b32.xlu0 %v477, 8
  %v1359 = vpop.permute.xlu0 %1358
  %1360 = vrot.lane.b32.xlu0 %v501, 8
  %v1361 = vpop.permute.xlu0 %1360
  %1366 = vrot.lane.b32.xlu0 %v622, 16
  %v1367 = vpop.permute.xlu0 %1366
  %1368 = vrot.lane.b32.xlu0 %v643, 16
  %v1369 = vpop.permute.xlu0 %1368
  %1374 = vrot.lane.b32.xlu0 %v764, 24
  %v1375 = vpop.permute.xlu0 %1374
  %1376 = vrot.lane.b32.xlu0 %v785, 24
  %v1377 = vpop.permute.xlu0 %1376
  %1382 = vrot.lane.b32.xlu0 %v906, 32
  %v1383 = vpop.permute.xlu0 %1382
  %1384 = vrot.lane.b32.xlu0 %v927, 32
  %v1385 = vpop.permute.xlu0 %1384
  %1390 = vrot.lane.b32.xlu0 %v1048, 40
  %v1391 = vpop.permute.xlu0 %1390
  %1392 = vrot.lane.b32.xlu0 %v1069, 40
  %v1393 = vpop.permute.xlu0 %1392
  %1398 = vrot.lane.b32.xlu0 %v1190, 48
  %v1399 = vpop.permute.xlu0 %1398
  %1400 = vrot.lane.b32.xlu0 %v1211, 48
  %v1401 = vpop.permute.xlu0 %1400
  %1406 = vrot.lane.b32.xlu0 %v1332, 56
  %v1407 = vpop.permute.xlu0 %1406
  %1408 = vrot.lane.b32.xlu0 %v1353, 56
  %v1409 = vpop.permute.xlu0 %1408
  %v1412 = vsel %vm207, %v328, %v1359
  %v1413 = vsel %vm207, %v347, %v1361
  %vm1414 = vcmask 130048
  %v1415 = vsel %vm1414, %v1412, %v1367
  %v1416 = vsel %vm1414, %v1413, %v1369
  %vm1417 = vcmask 195584
  %v1418 = vsel %vm1417, %v1415, %v1375
  %v1419 = vsel %vm1417, %v1416, %v1377
  %vm1420 = vcmask 261120
  %v1421 = vsel %vm1420, %v1418, %v1383
  %v1422 = vsel %vm1420, %v1419, %v1385
  %vm1423 = vcmask 326656
  %v1424 = vsel %vm1423, %v1421, %v1391
  %v1425 = vsel %vm1423, %v1422, %v1393
  %vm1426 = vcmask 392192
  %v1427 = vsel %vm1426, %v1424, %v1399
  %v1428 = vsel %vm1426, %v1425, %v1401
  %vm1429 = vcmask 457728
  %v1430 = vsel %vm1429, %v1427, %v1407
  %v1431 = vsel %vm1429, %v1428, %v1409
  %v1432 = vpack.c.bf16 %v1431, %v1430
  %v1433 = vld [vmem:[%s3] sm:$0xf]
  %v1434 = vld [vmem:[%s3 + $0x4] sm:$0xf]
  %v1435 = vld [vmem:[%s3 + $0x8] sm:$0xf]
  %v1436 = vld [vmem:[%s3 + $0xc] sm:$0xf]
  %v1437 = vld [vmem:[%s3 + $0x10] sm:$0xf]
  %v1438 = vld [vmem:[%s3 + $0x14] sm:$0xf]
  %v1439 = vld [vmem:[%s3 + $0x18] sm:$0xf]
  %v1440 = vld [vmem:[%s3 + $0x1c] sm:$0xf]
  %v1441 = vperm.slane %v103, 3
  %v1450 = vunpack.c.l.b16 %v1433
  %v1451 = vunpack.c.l.b16 %v1434
  %v1452 = vunpack.c.l.b16 %v1435
  %v1453 = vunpack.c.l.b16 %v1436
  %v1454 = vunpack.c.l.b16 %v1437
  %v1455 = vunpack.c.l.b16 %v1438
  %v1456 = vunpack.c.l.b16 %v1439
  %v1457 = vunpack.c.l.b16 %v1440
  %v1458 = vpack.c.b16 %v1451, %v1450
  %v1459 = vpack.c.b16 %v1453, %v1452
  %v1460 = vpack.c.b16 %v1455, %v1454
  %v1461 = vpack.c.b16 %v1457, %v1456
  %v1467 = vsel %vm45, %v1432, 0
  %1469 = vmatpush.bf16.msra.mxu0 0
  %1470 = vmatpush.bf16.msra.mxu0 0
  %1471 = vmatpush.bf16.msra.mxu0 0
  %1472 = vmatpush.bf16.msra.mxu0 0
  %1473 = vmatpush.bf16.msra.mxu0 %v1461
  %1474 = vmatpush.bf16.msra.mxu0 %v1460
  %1475 = vmatpush.bf16.msra.mxu0 %v1459
  %1476 = vmatpush.bf16.msra.mxu0 %v1458
  %1477 = vmatmul.bf16.gmra.mxu0 %v1467
  %v1478 = vpop.f32.mrf.mxu0
  %v1479 = vadd.f32 %v1441, %v1478
  %v1480 = vpop.f32.mrf.mxu0
  %v1481 = vadd.f32 %v1441, %v1480
  %1482 = vdwg.mxu0
  %v1483 = vadd.f32 %v101, %v1479
  %v1484 = vadd.f32 %v102, %v1481
  %v1485 = vsel %vm45, %v1483, 0.0
  %1486 = vadd.xlane.f32.xlu0 %v1485
  %v1487 = vpop.xlane.xlu0 %1486
  %v1488 = vsel %vm45, %v1484, 0.0
  %1489 = vadd.xlane.f32.xlu0 %v1488
  %v1490 = vpop.xlane.xlu0 %1489
  %v1491 = vmul.f32 %v1487, %v58
  %v1492 = vmul.f32 %v1490, %v58
  %v1493 = vsub.f32 %v1483, %v1491
  %v1494 = vsub.f32 %v1484, %v1492
  %v1495 = vmul.f32 %v1493, %v1493
  %v1496 = vmul.f32 %v1494, %v1494
  %v1497 = vsel %vm45, %v1495, 0.0
  %1498 = vadd.xlane.f32.xlu0 %v1497
  %v1499 = vpop.xlane.xlu0 %1498
  %v1500 = vsel %vm45, %v1496, 0.0
  %1501 = vadd.xlane.f32.xlu0 %v1500
  %v1502 = vpop.xlane.xlu0 %1501
  %v1503 = vmul.f32 %v1499, %v58
  %v1504 = vmul.f32 %v1502, %v58
  %v1505 = vadd.f32 %v1503, 1e-12
  %v1506 = vadd.f32 %v1504, 1e-12
  %v1507 = vrsqrt.pop %v1505
  %v1508 = vmul.f32 %v1507, %v1505
  %v1509 = vmul.f32 %v1508, %v1507
  %v1510 = vmul.f32 0.5, %v1509
  %v1511 = vsub.f32 1.5, %v1510
  %v1512 = vmul.f32 %v1507, %v1511
  %vm1513 = vweird.f32 %v1505
  %vm1514 = vweird.f32 %v1507
  %vm1515 = vmor %vm1513, %vm1514
  %v1516 = vsel %vm1515, %v1507, %v1512
  %v1517 = vrsqrt.pop %v1506
  %v1518 = vmul.f32 %v1517, %v1506
  %v1519 = vmul.f32 %v1518, %v1517
  %v1520 = vmul.f32 0.5, %v1519
  %v1521 = vsub.f32 1.5, %v1520
  %v1522 = vmul.f32 %v1517, %v1521
  %vm1523 = vweird.f32 %v1506
  %vm1524 = vweird.f32 %v1517
  %vm1525 = vmor %vm1523, %vm1524
  %v1526 = vsel %vm1525, %v1517, %v1522
  %v1527 = vmul.f32 %v1493, %v1516
  %v1528 = vmul.f32 %v1494, %v1526
  %v1529 = vperm.slane %v103, 4
  %v1530 = vmul.f32 %v1527, %v1529
  %v1531 = vmul.f32 %v1528, %v1529
  %v1532 = vperm.slane %v103, 5
  %v1533 = vadd.f32 %v1530, %v1532
  %v1534 = vadd.f32 %v1531, %v1532
  %v1535 = vpack.c.bf16 %v1534, %v1533
  %v1536 = vld [vmem:[%s4] sm:$0xff]
  %v1537 = vld [vmem:[%s4 + $0x8] sm:$0xff]
  %v1538 = vld [vmem:[%s4 + $0x10] sm:$0xff]
  %v1539 = vld [vmem:[%s4 + $0x18] sm:$0xff]
  %v1540 = vld [vmem:[%s4 + $0x20] sm:$0xff]
  %v1541 = vld [vmem:[%s4 + $0x28] sm:$0xff]
  %v1542 = vld [vmem:[%s4 + $0x30] sm:$0xff]
  %v1543 = vld [vmem:[%s4 + $0x38] sm:$0xff]
  %v1544 = vld [vmem:[%s7] sm:$0x3]
  %v1546 = vperm.slane %v1544, 0
  %v1547 = vperm.slane %v1544, 1
  %v1558 = vunpack.c.l.b16 %v1536
  %v1559 = vunpack.c.h.b16 %v1536
  %v1560 = vunpack.c.l.b16 %v1537
  %v1561 = vunpack.c.h.b16 %v1537
  %v1562 = vunpack.c.l.b16 %v1538
  %v1563 = vunpack.c.h.b16 %v1538
  %v1564 = vunpack.c.l.b16 %v1539
  %v1565 = vunpack.c.h.b16 %v1539
  %v1566 = vunpack.c.l.b16 %v1540
  %v1567 = vunpack.c.h.b16 %v1540
  %v1568 = vunpack.c.l.b16 %v1541
  %v1569 = vunpack.c.h.b16 %v1541
  %v1570 = vunpack.c.l.b16 %v1542
  %v1571 = vunpack.c.h.b16 %v1542
  %v1572 = vunpack.c.l.b16 %v1543
  %v1573 = vunpack.c.h.b16 %v1543
  %v1574 = vpack.c.b16 %v1560, %v1558
  %v1575 = vpack.c.b16 %v1561, %v1559
  %v1576 = vpack.c.b16 %v1564, %v1562
  %v1577 = vpack.c.b16 %v1565, %v1563
  %v1578 = vpack.c.b16 %v1568, %v1566
  %v1579 = vpack.c.b16 %v1569, %v1567
  %v1580 = vpack.c.b16 %v1572, %v1570
  %v1581 = vpack.c.b16 %v1573, %v1571
  %v1591 = vsel %vm45, %v1535, 0
  %1593 = vmatpush.bf16.msra.mxu0 0
  %1594 = vmatpush.bf16.msra.mxu0 0
  %1595 = vmatpush.bf16.msra.mxu0 0
  %1596 = vmatpush.bf16.msra.mxu0 0
  %1597 = vmatpush.bf16.msra.mxu0 %v1580
  %1598 = vmatpush.bf16.msra.mxu0 %v1578
  %1599 = vmatpush.bf16.msra.mxu0 %v1576
  %1600 = vmatpush.bf16.msra.mxu0 %v1574
  %1601 = vmatmul.bf16.gmra.mxu0 %v1591
  %v1602 = vpop.f32.mrf.mxu0
  %v1603 = vadd.f32 %v1546, %v1602
  %v1604 = vpop.f32.mrf.mxu0
  %v1605 = vadd.f32 %v1546, %v1604
  %1606 = vdwg.mxu0
  %1607 = vmatpush.bf16.msra.mxu0 0
  %1608 = vmatpush.bf16.msra.mxu0 0
  %1609 = vmatpush.bf16.msra.mxu0 0
  %1610 = vmatpush.bf16.msra.mxu0 0
  %1611 = vmatpush.bf16.msra.mxu0 %v1581
  %1612 = vmatpush.bf16.msra.mxu0 %v1579
  %1613 = vmatpush.bf16.msra.mxu0 %v1577
  %1614 = vmatpush.bf16.msra.mxu0 %v1575
  %1615 = vmatmul.bf16.gmra.mxu0 %v1591
  %v1616 = vpop.f32.mrf.mxu0
  %v1617 = vadd.f32 %v1547, %v1616
  %v1618 = vpop.f32.mrf.mxu0
  %v1619 = vadd.f32 %v1547, %v1618
  %1620 = vdwg.mxu0
  %v1621 = vmul.f32 %v1603, 0.70710677
  %v1622 = vmul.f32 %v1617, 0.70710677
  %v1623 = vmul.f32 %v1605, 0.70710677
  %v1624 = vmul.f32 %v1619, 0.70710677
  %v1625 = vand.u32 2147483647, %v1621
  %v1626 = vand.u32 2147483647, %v1622
  %v1627 = vand.u32 2147483647, %v1623
  %v1628 = vand.u32 2147483647, %v1624
  %v1629 = vmul.f32 %v1625, 0.3275911
  %v1630 = vmul.f32 %v1626, 0.3275911
  %v1631 = vmul.f32 %v1627, 0.3275911
  %v1632 = vmul.f32 %v1628, 0.3275911
  %v1633 = vadd.f32 %v1629, 1.0
  %v1634 = vadd.f32 %v1630, 1.0
  %v1635 = vadd.f32 %v1631, 1.0
  %v1636 = vadd.f32 %v1632, 1.0
  %v1637 = vrcp.pop %v1633
  %v1638 = vmul.f32 %v1633, %v1637
  %v1639 = vsub.f32 1.0, %v1638
  %v1640 = vmul.f32 %v1637, %v1639
  %v1641 = vadd.f32 %v1637, %v1640
  %vm1642 = vweird.f32 %v1633
  %vm1643 = vweird.f32 %v1637
  %vm1644 = vmor %vm1642, %vm1643
  %v1645 = vsel %vm1644, %v1637, %v1641
  %v1646 = vand.u32 2147483647, %v1633
  %vm1647 = vcmp.eq.f32.partialorder %v1646, 8.507059e+37
  %v1648 = vand.u32 %v1633, 2147483648
  %v1649 = vor.u32 1.1754944e-38, %v1648
  %v1650 = vsel %vm1647, %v1649, %v1645
  %v1651 = vmul.f32 1.0, %v1650
  %v1652 = vrcp.pop %v1634
  %v1653 = vmul.f32 %v1634, %v1652
  %v1654 = vsub.f32 1.0, %v1653
  %v1655 = vmul.f32 %v1652, %v1654
  %v1656 = vadd.f32 %v1652, %v1655
  %vm1657 = vweird.f32 %v1634
  %vm1658 = vweird.f32 %v1652
  %vm1659 = vmor %vm1657, %vm1658
  %v1660 = vsel %vm1659, %v1652, %v1656
  %v1661 = vand.u32 2147483647, %v1634
  %vm1662 = vcmp.eq.f32.partialorder %v1661, 8.507059e+37
  %v1663 = vand.u32 %v1634, 2147483648
  %v1664 = vor.u32 1.1754944e-38, %v1663
  %v1665 = vsel %vm1662, %v1664, %v1660
  %v1666 = vmul.f32 1.0, %v1665
  %v1667 = vrcp.pop %v1635
  %v1668 = vmul.f32 %v1635, %v1667
  %v1669 = vsub.f32 1.0, %v1668
  %v1670 = vmul.f32 %v1667, %v1669
  %v1671 = vadd.f32 %v1667, %v1670
  %vm1672 = vweird.f32 %v1635
  %vm1673 = vweird.f32 %v1667
  %vm1674 = vmor %vm1672, %vm1673
  %v1675 = vsel %vm1674, %v1667, %v1671
  %v1676 = vand.u32 2147483647, %v1635
  %vm1677 = vcmp.eq.f32.partialorder %v1676, 8.507059e+37
  %v1678 = vand.u32 %v1635, 2147483648
  %v1679 = vor.u32 1.1754944e-38, %v1678
  %v1680 = vsel %vm1677, %v1679, %v1675
  %v1681 = vmul.f32 1.0, %v1680
  %v1682 = vrcp.pop %v1636
  %v1683 = vmul.f32 %v1636, %v1682
  %v1684 = vsub.f32 1.0, %v1683
  %v1685 = vmul.f32 %v1682, %v1684
  %v1686 = vadd.f32 %v1682, %v1685
  %vm1687 = vweird.f32 %v1636
  %vm1688 = vweird.f32 %v1682
  %vm1689 = vmor %vm1687, %vm1688
  %v1690 = vsel %vm1689, %v1682, %v1686
  %v1691 = vand.u32 2147483647, %v1636
  %vm1692 = vcmp.eq.f32.partialorder %v1691, 8.507059e+37
  %v1693 = vand.u32 %v1636, 2147483648
  %v1694 = vor.u32 1.1754944e-38, %v1693
  %v1695 = vsel %vm1692, %v1694, %v1690
  %v1696 = vmul.f32 1.0, %v1695
  %v1697 = vmul.f32 %v1651, 1.0614054
  %v1698 = vmul.f32 %v1666, 1.0614054
  %v1699 = vmul.f32 %v1681, 1.0614054
  %v1700 = vmul.f32 %v1696, 1.0614054
  %v1701 = vadd.f32 %v1697, -1.4531521
  %v1702 = vadd.f32 %v1698, -1.4531521
  %v1703 = vadd.f32 %v1699, -1.4531521
  %v1704 = vadd.f32 %v1700, -1.4531521
  %v1705 = vmul.f32 %v1651, %v1701
  %v1706 = vmul.f32 %v1666, %v1702
  %v1707 = vmul.f32 %v1681, %v1703
  %v1708 = vmul.f32 %v1696, %v1704
  %v1709 = vadd.f32 %v1705, 1.4214138
  %v1710 = vadd.f32 %v1706, 1.4214138
  %v1711 = vadd.f32 %v1707, 1.4214138
  %v1712 = vadd.f32 %v1708, 1.4214138
  %v1713 = vmul.f32 %v1651, %v1709
  %v1714 = vmul.f32 %v1666, %v1710
  %v1715 = vmul.f32 %v1681, %v1711
  %v1716 = vmul.f32 %v1696, %v1712
  %v1717 = vadd.f32 %v1713, -0.28449672
  %v1718 = vadd.f32 %v1714, -0.28449672
  %v1719 = vadd.f32 %v1715, -0.28449672
  %v1720 = vadd.f32 %v1716, -0.28449672
  %v1721 = vmul.f32 %v1651, %v1717
  %v1722 = vmul.f32 %v1666, %v1718
  %v1723 = vmul.f32 %v1681, %v1719
  %v1724 = vmul.f32 %v1696, %v1720
  %v1725 = vadd.f32 %v1721, 0.2548296
  %v1726 = vadd.f32 %v1722, 0.2548296
  %v1727 = vadd.f32 %v1723, 0.2548296
  %v1728 = vadd.f32 %v1724, 0.2548296
  %v1729 = vmul.f32 %v1651, %v1725
  %v1730 = vmul.f32 %v1666, %v1726
  %v1731 = vmul.f32 %v1681, %v1727
  %v1732 = vmul.f32 %v1696, %v1728
  %v1733 = vsub.f32 0.0, %v1625
  %v1734 = vsub.f32 0.0, %v1626
  %v1735 = vsub.f32 0.0, %v1627
  %v1736 = vsub.f32 0.0, %v1628
  %v1737 = vmul.f32 %v1733, %v1625
  %v1738 = vmul.f32 %v1734, %v1626
  %v1739 = vmul.f32 %v1735, %v1627
  %v1740 = vmul.f32 %v1736, %v1628
  %v1741 = vmul.f32 %v1737, 1.442695
  %v1742 = vpow.pop %v1741
  %v1743 = vmul.f32 %v1738, 1.442695
  %v1744 = vpow.pop %v1743
  %v1745 = vmul.f32 %v1739, 1.442695
  %v1746 = vpow.pop %v1745
  %v1747 = vmul.f32 %v1740, 1.442695
  %v1748 = vpow.pop %v1747
  %v1749 = vmul.f32 %v1729, %v1742
  %v1750 = vmul.f32 %v1730, %v1744
  %v1751 = vmul.f32 %v1731, %v1746
  %v1752 = vmul.f32 %v1732, %v1748
  %v1753 = vsub.f32 1.0, %v1749
  %v1754 = vsub.f32 1.0, %v1750
  %v1755 = vsub.f32 1.0, %v1751
  %v1756 = vsub.f32 1.0, %v1752
  %vm1757 = vcmp.ge.f32.partialorder %v1621, 0.0
  %vm1758 = vcmp.ge.f32.partialorder %v1622, 0.0
  %vm1759 = vcmp.ge.f32.partialorder %v1623, 0.0
  %vm1760 = vcmp.ge.f32.partialorder %v1624, 0.0
  %v1761 = vsub.f32 0.0, %v1753
  %v1762 = vsub.f32 0.0, %v1754
  %v1763 = vsub.f32 0.0, %v1755
  %v1764 = vsub.f32 0.0, %v1756
  %v1765 = vsel %vm1757, %v1753, %v1761
  %v1766 = vsel %vm1758, %v1754, %v1762
  %v1767 = vsel %vm1759, %v1755, %v1763
  %v1768 = vsel %vm1760, %v1756, %v1764
  %v1769 = vmul.f32 %v1603, 0.5
  %v1770 = vmul.f32 %v1617, 0.5
  %v1771 = vmul.f32 %v1605, 0.5
  %v1772 = vmul.f32 %v1619, 0.5
  %v1773 = vadd.f32 %v1765, 1.0
  %v1774 = vadd.f32 %v1766, 1.0
  %v1775 = vadd.f32 %v1767, 1.0
  %v1776 = vadd.f32 %v1768, 1.0
  %v1777 = vmul.f32 %v1769, %v1773
  %v1778 = vmul.f32 %v1770, %v1774
  %v1779 = vmul.f32 %v1771, %v1775
  %v1780 = vmul.f32 %v1772, %v1776
  %v1781 = vpack.c.bf16 %v1779, %v1777
  %v1782 = vpack.c.bf16 %v1780, %v1778
  %v1783 = vld [vmem:[%s5] sm:$0xf]
  %v1784 = vld [vmem:[%s5 + $0x4] sm:$0xf]
  %v1785 = vld [vmem:[%s5 + $0x8] sm:$0xf]
  %v1786 = vld [vmem:[%s5 + $0xc] sm:$0xf]
  %v1787 = vld [vmem:[%s5 + $0x10] sm:$0xf]
  %v1788 = vld [vmem:[%s5 + $0x14] sm:$0xf]
  %v1789 = vld [vmem:[%s5 + $0x18] sm:$0xf]
  %v1790 = vld [vmem:[%s5 + $0x1c] sm:$0xf]
  %v1791 = vld [vmem:[%s5 + $0x20] sm:$0xf]
  %v1792 = vld [vmem:[%s5 + $0x24] sm:$0xf]
  %v1793 = vld [vmem:[%s5 + $0x28] sm:$0xf]
  %v1794 = vld [vmem:[%s5 + $0x2c] sm:$0xf]
  %v1795 = vld [vmem:[%s5 + $0x30] sm:$0xf]
  %v1796 = vld [vmem:[%s5 + $0x34] sm:$0xf]
  %v1797 = vld [vmem:[%s5 + $0x38] sm:$0xf]
  %v1798 = vld [vmem:[%s5 + $0x3c] sm:$0xf]
  %v1799 = vld [vmem:[%s5 + $0x40] sm:$0xf]
  %v1800 = vld [vmem:[%s5 + $0x44] sm:$0xf]
  %v1801 = vld [vmem:[%s5 + $0x48] sm:$0xf]
  %v1802 = vld [vmem:[%s5 + $0x4c] sm:$0xf]
  %v1803 = vld [vmem:[%s5 + $0x50] sm:$0xf]
  %v1804 = vld [vmem:[%s5 + $0x54] sm:$0xf]
  %v1805 = vld [vmem:[%s5 + $0x58] sm:$0xf]
  %v1806 = vld [vmem:[%s5 + $0x5c] sm:$0xf]
  %v1807 = vld [vmem:[%s5 + $0x60] sm:$0xf]
  %v1808 = vld [vmem:[%s5 + $0x64] sm:$0xf]
  %v1809 = vld [vmem:[%s5 + $0x68] sm:$0xf]
  %v1810 = vld [vmem:[%s5 + $0x6c] sm:$0xf]
  %v1811 = vld [vmem:[%s5 + $0x70] sm:$0xf]
  %v1812 = vld [vmem:[%s5 + $0x74] sm:$0xf]
  %v1813 = vld [vmem:[%s5 + $0x78] sm:$0xf]
  %v1814 = vld [vmem:[%s5 + $0x7c] sm:$0xf]
  %v1815 = vperm.slane %v103, 6
  %v1848 = vunpack.c.l.b16 %v1783
  %v1849 = vunpack.c.l.b16 %v1784
  %v1850 = vunpack.c.l.b16 %v1785
  %v1851 = vunpack.c.l.b16 %v1786
  %v1852 = vunpack.c.l.b16 %v1787
  %v1853 = vunpack.c.l.b16 %v1788
  %v1854 = vunpack.c.l.b16 %v1789
  %v1855 = vunpack.c.l.b16 %v1790
  %v1856 = vunpack.c.l.b16 %v1791
  %v1857 = vunpack.c.l.b16 %v1792
  %v1858 = vunpack.c.l.b16 %v1793
  %v1859 = vunpack.c.l.b16 %v1794
  %v1860 = vunpack.c.l.b16 %v1795
  %v1861 = vunpack.c.l.b16 %v1796
  %v1862 = vunpack.c.l.b16 %v1797
  %v1863 = vunpack.c.l.b16 %v1798
  %v1864 = vunpack.c.l.b16 %v1799
  %v1865 = vunpack.c.l.b16 %v1800
  %v1866 = vunpack.c.l.b16 %v1801
  %v1867 = vunpack.c.l.b16 %v1802
  %v1868 = vunpack.c.l.b16 %v1803
  %v1869 = vunpack.c.l.b16 %v1804
  %v1870 = vunpack.c.l.b16 %v1805
  %v1871 = vunpack.c.l.b16 %v1806
  %v1872 = vunpack.c.l.b16 %v1807
  %v1873 = vunpack.c.l.b16 %v1808
  %v1874 = vunpack.c.l.b16 %v1809
  %v1875 = vunpack.c.l.b16 %v1810
  %v1876 = vunpack.c.l.b16 %v1811
  %v1877 = vunpack.c.l.b16 %v1812
  %v1878 = vunpack.c.l.b16 %v1813
  %v1879 = vunpack.c.l.b16 %v1814
  %v1880 = vpack.c.b16 %v1849, %v1848
  %v1881 = vpack.c.b16 %v1851, %v1850
  %v1882 = vpack.c.b16 %v1853, %v1852
  %v1883 = vpack.c.b16 %v1855, %v1854
  %v1884 = vpack.c.b16 %v1857, %v1856
  %v1885 = vpack.c.b16 %v1859, %v1858
  %v1886 = vpack.c.b16 %v1861, %v1860
  %v1887 = vpack.c.b16 %v1863, %v1862
  %v1888 = vpack.c.b16 %v1865, %v1864
  %v1889 = vpack.c.b16 %v1867, %v1866
  %v1890 = vpack.c.b16 %v1869, %v1868
  %v1891 = vpack.c.b16 %v1871, %v1870
  %v1892 = vpack.c.b16 %v1873, %v1872
  %v1893 = vpack.c.b16 %v1875, %v1874
  %v1894 = vpack.c.b16 %v1877, %v1876
  %v1895 = vpack.c.b16 %v1879, %v1878
  %1912 = vmatpush.bf16.msra.mxu0 %v1887
  %1913 = vmatpush.bf16.msra.mxu0 %v1886
  %1914 = vmatpush.bf16.msra.mxu0 %v1885
  %1915 = vmatpush.bf16.msra.mxu0 %v1884
  %1916 = vmatpush.bf16.msra.mxu0 %v1883
  %1917 = vmatpush.bf16.msra.mxu0 %v1882
  %1918 = vmatpush.bf16.msra.mxu0 %v1881
  %1919 = vmatpush.bf16.msra.mxu0 %v1880
  %1920 = vmatmul.bf16.gmra.mxu0 %v1781
  %v1921 = vpop.f32.mrf.mxu0
  %v1922 = vadd.f32 %v1815, %v1921
  %v1923 = vpop.f32.mrf.mxu0
  %v1924 = vadd.f32 %v1815, %v1923
  %1925 = vdwg.mxu0
  %1926 = vmatpush.bf16.msra.mxu0 %v1895
  %1927 = vmatpush.bf16.msra.mxu0 %v1894
  %1928 = vmatpush.bf16.msra.mxu0 %v1893
  %1929 = vmatpush.bf16.msra.mxu0 %v1892
  %1930 = vmatpush.bf16.msra.mxu0 %v1891
  %1931 = vmatpush.bf16.msra.mxu0 %v1890
  %1932 = vmatpush.bf16.msra.mxu0 %v1889
  %1933 = vmatpush.bf16.msra.mxu0 %v1888
  %1934 = vmatmul.bf16.gmra.mxu0 %v1782
  %v1935 = vpop.f32.mrf.mxu0
  %v1936 = vadd.f32 %v1922, %v1935
  %v1937 = vpop.f32.mrf.mxu0
  %v1938 = vadd.f32 %v1924, %v1937
  %1939 = vdwg.mxu0
  %v1940 = vadd.f32 %v1533, %v1936
  %v1941 = vadd.f32 %v1534, %v1938
  %v1942 = vsel %vm45, %v1940, 0.0
  %1943 = vadd.xlane.f32.xlu0 %v1942
  %v1944 = vpop.xlane.xlu0 %1943
  %v1945 = vsel %vm45, %v1941, 0.0
  %1946 = vadd.xlane.f32.xlu0 %v1945
  %v1947 = vpop.xlane.xlu0 %1946
  %v1948 = vmul.f32 %v1944, %v58
  %v1949 = vmul.f32 %v1947, %v58
  %v1950 = vsub.f32 %v1940, %v1948
  %v1951 = vsub.f32 %v1941, %v1949
  %v1952 = vmul.f32 %v1950, %v1950
  %v1953 = vmul.f32 %v1951, %v1951
  %v1954 = vsel %vm45, %v1952, 0.0
  %1955 = vadd.xlane.f32.xlu0 %v1954
  %v1956 = vpop.xlane.xlu0 %1955
  %v1957 = vsel %vm45, %v1953, 0.0
  %1958 = vadd.xlane.f32.xlu0 %v1957
  %v1959 = vpop.xlane.xlu0 %1958
  %v1960 = vmul.f32 %v1956, %v58
  %v1961 = vmul.f32 %v1959, %v58
  %v1962 = vadd.f32 %v1960, 1e-12
  %v1963 = vadd.f32 %v1961, 1e-12
  %v1964 = vrsqrt.pop %v1962
  %v1965 = vmul.f32 %v1964, %v1962
  %v1966 = vmul.f32 %v1965, %v1964
  %v1967 = vmul.f32 0.5, %v1966
  %v1968 = vsub.f32 1.5, %v1967
  %v1969 = vmul.f32 %v1964, %v1968
  %vm1970 = vweird.f32 %v1962
  %vm1971 = vweird.f32 %v1964
  %vm1972 = vmor %vm1970, %vm1971
  %v1973 = vsel %vm1972, %v1964, %v1969
  %v1974 = vrsqrt.pop %v1963
  %v1975 = vmul.f32 %v1974, %v1963
  %v1976 = vmul.f32 %v1975, %v1974
  %v1977 = vmul.f32 0.5, %v1976
  %v1978 = vsub.f32 1.5, %v1977
  %v1979 = vmul.f32 %v1974, %v1978
  %vm1980 = vweird.f32 %v1963
  %vm1981 = vweird.f32 %v1974
  %vm1982 = vmor %vm1980, %vm1981
  %v1983 = vsel %vm1982, %v1974, %v1979
  %v1984 = vmul.f32 %v1950, %v1973
  %v1985 = vmul.f32 %v1951, %v1983
  %v1986 = vperm.slane %v103, 7
  %v1987 = vmul.f32 %v1984, %v1986
  %v1988 = vmul.f32 %v1985, %v1986
  %v1989 = vperm.slane %v104, 0
  %v1990 = vadd.f32 %v1987, %v1989
  %v1991 = vadd.f32 %v1988, %v1989
  %s1992 = scalar_lea.vmem %s6, 16
  %v1993 = vld [vmem:[%s1992] sm:$0xff]
  %v1994 = vld [vmem:[%s1992 + $0x8] sm:$0x1]
  %v1995 = vpack.c.bf16 %v1991, %v1990
  %s1996 = scalar_lea.vmem %s2, 64
  %v1997 = vld [vmem:[%s1996] sm:$0xff]
  %v1998 = vld [vmem:[%s1996 + $0x8] sm:$0xff]
  %v1999 = vld [vmem:[%s1996 + $0x10] sm:$0xff]
  %v2000 = vld [vmem:[%s1996 + $0x18] sm:$0xff]
  %v2001 = vld [vmem:[%s1996 + $0x20] sm:$0xff]
  %v2002 = vld [vmem:[%s1996 + $0x28] sm:$0xff]
  %v2003 = vld [vmem:[%s1996 + $0x30] sm:$0xff]
  %v2004 = vld [vmem:[%s1996 + $0x38] sm:$0xff]
  %v2013 = vunpack.c.l.b16 %v1997
  %v2014 = vunpack.c.h.b16 %v1997
  %v2015 = vunpack.c.l.b16 %v1998
  %v2016 = vunpack.c.h.b16 %v1998
  %v2017 = vunpack.c.l.b16 %v1999
  %v2018 = vunpack.c.h.b16 %v1999
  %v2019 = vunpack.c.l.b16 %v2000
  %v2020 = vunpack.c.h.b16 %v2000
  %v2021 = vunpack.c.l.b16 %v2001
  %v2022 = vunpack.c.h.b16 %v2001
  %v2023 = vunpack.c.l.b16 %v2002
  %v2024 = vunpack.c.h.b16 %v2002
  %v2025 = vunpack.c.l.b16 %v2003
  %v2026 = vunpack.c.h.b16 %v2003
  %v2027 = vunpack.c.l.b16 %v2004
  %v2028 = vunpack.c.h.b16 %v2004
  %v2029 = vpack.c.b16 %v2015, %v2013
  %v2030 = vpack.c.b16 %v2016, %v2014
  %v2031 = vpack.c.b16 %v2019, %v2017
  %v2032 = vpack.c.b16 %v2020, %v2018
  %v2033 = vpack.c.b16 %v2023, %v2021
  %v2034 = vpack.c.b16 %v2024, %v2022
  %v2035 = vpack.c.b16 %v2027, %v2025
  %v2036 = vpack.c.b16 %v2028, %v2026
  %v2046 = vsel %vm45, %v1995, 0
  %2048 = vmatpush.bf16.msra.mxu0 0
  %2049 = vmatpush.bf16.msra.mxu0 0
  %2050 = vmatpush.bf16.msra.mxu0 0
  %2051 = vmatpush.bf16.msra.mxu0 0
  %2052 = vmatpush.bf16.msra.mxu0 %v2035
  %2053 = vmatpush.bf16.msra.mxu0 %v2033
  %2054 = vmatpush.bf16.msra.mxu0 %v2031
  %2055 = vmatpush.bf16.msra.mxu0 %v2029
  %2056 = vmatmul.bf16.gmra.mxu0 %v2046
  %v2057 = vpop.f32.mrf.mxu0
  %v2058 = vadd.f32 0.0, %v2057
  %v2059 = vpop.f32.mrf.mxu0
  %v2060 = vadd.f32 0.0, %v2059
  %2061 = vdwg.mxu0
  %2062 = vmatpush.bf16.msra.mxu0 0
  %2063 = vmatpush.bf16.msra.mxu0 0
  %2064 = vmatpush.bf16.msra.mxu0 0
  %2065 = vmatpush.bf16.msra.mxu0 0
  %2066 = vmatpush.bf16.msra.mxu0 %v2036
  %2067 = vmatpush.bf16.msra.mxu0 %v2034
  %2068 = vmatpush.bf16.msra.mxu0 %v2032
  %2069 = vmatpush.bf16.msra.mxu0 %v2030
  %2070 = vmatmul.bf16.gmra.mxu0 %v2046
  %v2071 = vpop.f32.mrf.mxu0
  %v2072 = vadd.f32 0.0, %v2071
  %v2073 = vpop.f32.mrf.mxu0
  %v2074 = vadd.f32 0.0, %v2073
  %2075 = vdwg.mxu0
  %v2076 = vperm.slane %v1993, 0
  %v2077 = vadd.f32 %v2058, %v2076
  %v2078 = vadd.f32 %v2060, %v2076
  %v2079 = vperm.slane %v1993, 1
  %2081 = vrot.lane.b32.xlu0 %v2079, 64
  %v2082 = vpop.permute.xlu0 %2081
  %v2084 = vadd.f32 %v2058, %v2082
  %v2085 = vadd.f32 %v2060, %v2082
  %v2086 = vperm.slane %v1993, 2
  %v2087 = vadd.f32 %v2072, %v2086
  %v2088 = vadd.f32 %v2074, %v2086
  %v2089 = vpack.c.bf16 %v2077, %v2077
  %v2090 = vpack.c.bf16 %v2078, %v2078
  %v2091 = vpack.c.bf16 %v2084, %v2084
  %v2092 = vpack.c.bf16 %v2085, %v2085
  %v2094 = vunpack.c.l.b16 %v2091
  %v2095 = vpack.c.b16 %v2094, %v2094
  %2096 = vrot.lane.b32.xlu0 %v2095, 64
  %v2097 = vpop.permute.xlu0 %2096
  %v2099 = vsel %vm207, %v2089, 0
  %v2102 = vsel %vm207, %v2097, 0
  %2104 = vmatpush.bf16.xpose.msra.mxu0 0
  %2105 = vmatpush.bf16.xpose.msra.mxu0 0
  %2106 = vmatpush.bf16.xpose.msra.mxu0 0
  %2107 = vmatpush.bf16.xpose.msra.mxu0 0
  %2108 = vmatpush.bf16.xpose.msra.mxu0 0
  %2109 = vmatpush.bf16.xpose.msra.mxu0 0
  %2110 = vmatpush.bf16.xpose.msra.mxu0 0
  %2111 = vmatpush.bf16.xpose.msra.mxu0 %v2102
  %2112 = vmatmul.bf16.gmra.mxu0 %v2099
  %v2113 = vpop.f32.mrf.mxu0
  %v2114 = vadd.f32 0.0, %v2113
  %v2115 = vpop.f32.mrf.mxu0
  %2116 = vdwg.mxu0
  %v2118 = vunpack.c.l.b16 %v2092
  %v2119 = vpack.c.b16 %v2118, %v2118
  %2120 = vrot.lane.b32.xlu0 %v2119, 64
  %v2121 = vpop.permute.xlu0 %2120
  %v2123 = vsel %vm207, %v2090, 0
  %v2126 = vsel %vm207, %v2121, 0
  %2128 = vmatpush.bf16.xpose.msra.mxu0 0
  %2129 = vmatpush.bf16.xpose.msra.mxu0 0
  %2130 = vmatpush.bf16.xpose.msra.mxu0 0
  %2131 = vmatpush.bf16.xpose.msra.mxu0 0
  %2132 = vmatpush.bf16.xpose.msra.mxu0 0
  %2133 = vmatpush.bf16.xpose.msra.mxu0 0
  %2134 = vmatpush.bf16.xpose.msra.mxu0 0
  %2135 = vmatpush.bf16.xpose.msra.mxu0 %v2126
  %2136 = vmatmul.bf16.gmra.mxu0 %v2123
  %v2137 = vpop.f32.mrf.mxu0
  %v2138 = vadd.f32 0.0, %v2137
  %v2139 = vpop.f32.mrf.mxu0
  %2140 = vdwg.mxu0
  %v2141 = vmul.f32 %v2114, 0.35355338
  %v2142 = vmul.f32 %v2138, 0.35355338
  %v2143 = vadd.f32 %v2141, %v253
  %v2144 = vadd.f32 %v2142, %v254
  %v2145 = vsel %vm207, %v2143, -inf
  %2146 = vmax.xlane.f32.xlu0 %v2145
  %v2147 = vpop.xlane.xlu0 %2146
  %v2148 = vsel %vm207, %v2144, -inf
  %2149 = vmax.xlane.f32.xlu0 %v2148
  %v2150 = vpop.xlane.xlu0 %2149
  %v2151 = vsub.f32 %v2143, %v2147
  %v2152 = vsub.f32 %v2144, %v2150
  %v2153 = vmul.f32 %v2151, 1.442695
  %v2154 = vpow.pop %v2153
  %v2155 = vmul.f32 %v2152, 1.442695
  %v2156 = vpow.pop %v2155
  %v2157 = vsel %vm207, %v2154, 0.0
  %2158 = vadd.xlane.f32.xlu0 %v2157
  %v2159 = vpop.xlane.xlu0 %2158
  %v2160 = vsel %vm207, %v2156, 0.0
  %2161 = vadd.xlane.f32.xlu0 %v2160
  %v2162 = vpop.xlane.xlu0 %2161
  %v2163 = vrcp.pop %v2159
  %v2164 = vmul.f32 %v2159, %v2163
  %v2165 = vsub.f32 1.0, %v2164
  %v2166 = vmul.f32 %v2163, %v2165
  %v2167 = vadd.f32 %v2163, %v2166
  %vm2168 = vweird.f32 %v2159
  %vm2169 = vweird.f32 %v2163
  %vm2170 = vmor %vm2168, %vm2169
  %v2171 = vsel %vm2170, %v2163, %v2167
  %v2172 = vand.u32 2147483647, %v2159
  %vm2173 = vcmp.eq.f32.partialorder %v2172, 8.507059e+37
  %v2174 = vand.u32 %v2159, 2147483648
  %v2175 = vor.u32 1.1754944e-38, %v2174
  %v2176 = vsel %vm2173, %v2175, %v2171
  %v2177 = vmul.f32 %v2154, %v2176
  %v2178 = vrcp.pop %v2162
  %v2179 = vmul.f32 %v2162, %v2178
  %v2180 = vsub.f32 1.0, %v2179
  %v2181 = vmul.f32 %v2178, %v2180
  %v2182 = vadd.f32 %v2178, %v2181
  %vm2183 = vweird.f32 %v2162
  %vm2184 = vweird.f32 %v2178
  %vm2185 = vmor %vm2183, %vm2184
  %v2186 = vsel %vm2185, %v2178, %v2182
  %v2187 = vand.u32 2147483647, %v2162
  %vm2188 = vcmp.eq.f32.partialorder %v2187, 8.507059e+37
  %v2189 = vand.u32 %v2162, 2147483648
  %v2190 = vor.u32 1.1754944e-38, %v2189
  %v2191 = vsel %vm2188, %v2190, %v2186
  %v2192 = vmul.f32 %v2156, %v2191
  %v2193 = vpack.c.bf16 %v2177, %v2177
  %v2194 = vpack.c.bf16 %v2192, %v2192
  %v2195 = vpack.c.bf16 %v2087, %v2087
  %v2196 = vpack.c.bf16 %v2088, %v2088
  %v2198 = vsel %vm207, %v2193, 0
  %v2201 = vsel %vm314, %v2195, 0
  %2203 = vmatpush.bf16.msra.mxu0 0
  %2204 = vmatpush.bf16.msra.mxu0 0
  %2205 = vmatpush.bf16.msra.mxu0 0
  %2206 = vmatpush.bf16.msra.mxu0 0
  %2207 = vmatpush.bf16.msra.mxu0 0
  %2208 = vmatpush.bf16.msra.mxu0 0
  %2209 = vmatpush.bf16.msra.mxu0 0
  %2210 = vmatpush.bf16.msra.mxu0 %v2201
  %2211 = vmatmul.bf16.gmra.mxu0 %v2198
  %v2212 = vpop.f32.mrf.mxu0
  %v2213 = vadd.f32 0.0, %v2212
  %v2214 = vpop.f32.mrf.mxu0
  %2215 = vdwg.mxu0
  %v2217 = vsel %vm207, %v2194, 0
  %v2220 = vsel %vm314, %v2196, 0
  %2222 = vmatpush.bf16.msra.mxu0 0
  %2223 = vmatpush.bf16.msra.mxu0 0
  %2224 = vmatpush.bf16.msra.mxu0 0
  %2225 = vmatpush.bf16.msra.mxu0 0
  %2226 = vmatpush.bf16.msra.mxu0 0
  %2227 = vmatpush.bf16.msra.mxu0 0
  %2228 = vmatpush.bf16.msra.mxu0 0
  %2229 = vmatpush.bf16.msra.mxu0 %v2220
  %2230 = vmatmul.bf16.gmra.mxu0 %v2217
  %v2231 = vpop.f32.mrf.mxu0
  %v2232 = vadd.f32 0.0, %v2231
  %v2233 = vpop.f32.mrf.mxu0
  %2234 = vdwg.mxu0
  %v2236 = vunpack.c.l.b16 %v2089
  %v2237 = vpack.c.b16 %v2236, %v2236
  %2238 = vrot.lane.b32.xlu0 %v2237, 120
  %v2239 = vpop.permute.xlu0 %2238
  %2240 = vrot.lane.b32.xlu0 %v2095, 56
  %v2241 = vpop.permute.xlu0 %2240
  %v2243 = vsel %vm207, %v2239, 0
  %v2246 = vsel %vm207, %v2241, 0
  %2248 = vmatpush.bf16.xpose.msra.mxu0 0
  %2249 = vmatpush.bf16.xpose.msra.mxu0 0
  %2250 = vmatpush.bf16.xpose.msra.mxu0 0
  %2251 = vmatpush.bf16.xpose.msra.mxu0 0
  %2252 = vmatpush.bf16.xpose.msra.mxu0 0
  %2253 = vmatpush.bf16.xpose.msra.mxu0 0
  %2254 = vmatpush.bf16.xpose.msra.mxu0 0
  %2255 = vmatpush.bf16.xpose.msra.mxu0 %v2246
  %2256 = vmatmul.bf16.gmra.mxu0 %v2243
  %v2257 = vpop.f32.mrf.mxu0
  %v2258 = vadd.f32 0.0, %v2257
  %v2259 = vpop.f32.mrf.mxu0
  %2260 = vdwg.mxu0
  %v2262 = vunpack.c.l.b16 %v2090
  %v2263 = vpack.c.b16 %v2262, %v2262
  %2264 = vrot.lane.b32.xlu0 %v2263, 120
  %v2265 = vpop.permute.xlu0 %2264
  %2266 = vrot.lane.b32.xlu0 %v2119, 56
  %v2267 = vpop.permute.xlu0 %2266
  %v2269 = vsel %vm207, %v2265, 0
  %v2272 = vsel %vm207, %v2267, 0
  %2274 = vmatpush.bf16.xpose.msra.mxu0 0
  %2275 = vmatpush.bf16.xpose.msra.mxu0 0
  %2276 = vmatpush.bf16.xpose.msra.mxu0 0
  %2277 = vmatpush.bf16.xpose.msra.mxu0 0
  %2278 = vmatpush.bf16.xpose.msra.mxu0 0
  %2279 = vmatpush.bf16.xpose.msra.mxu0 0
  %2280 = vmatpush.bf16.xpose.msra.mxu0 0
  %2281 = vmatpush.bf16.xpose.msra.mxu0 %v2272
  %2282 = vmatmul.bf16.gmra.mxu0 %v2269
  %v2283 = vpop.f32.mrf.mxu0
  %v2284 = vadd.f32 0.0, %v2283
  %v2285 = vpop.f32.mrf.mxu0
  %2286 = vdwg.mxu0
  %v2287 = vmul.f32 %v2258, 0.35355338
  %v2288 = vmul.f32 %v2284, 0.35355338
  %v2289 = vadd.f32 %v2287, %v253
  %v2290 = vadd.f32 %v2288, %v254
  %v2291 = vsel %vm207, %v2289, -inf
  %2292 = vmax.xlane.f32.xlu0 %v2291
  %v2293 = vpop.xlane.xlu0 %2292
  %v2294 = vsel %vm207, %v2290, -inf
  %2295 = vmax.xlane.f32.xlu0 %v2294
  %v2296 = vpop.xlane.xlu0 %2295
  %v2297 = vsub.f32 %v2289, %v2293
  %v2298 = vsub.f32 %v2290, %v2296
  %v2299 = vmul.f32 %v2297, 1.442695
  %v2300 = vpow.pop %v2299
  %v2301 = vmul.f32 %v2298, 1.442695
  %v2302 = vpow.pop %v2301
  %v2303 = vsel %vm207, %v2300, 0.0
  %2304 = vadd.xlane.f32.xlu0 %v2303
  %v2305 = vpop.xlane.xlu0 %2304
  %v2306 = vsel %vm207, %v2302, 0.0
  %2307 = vadd.xlane.f32.xlu0 %v2306
  %v2308 = vpop.xlane.xlu0 %2307
  %v2309 = vrcp.pop %v2305
  %v2310 = vmul.f32 %v2305, %v2309
  %v2311 = vsub.f32 1.0, %v2310
  %v2312 = vmul.f32 %v2309, %v2311
  %v2313 = vadd.f32 %v2309, %v2312
  %vm2314 = vweird.f32 %v2305
  %vm2315 = vweird.f32 %v2309
  %vm2316 = vmor %vm2314, %vm2315
  %v2317 = vsel %vm2316, %v2309, %v2313
  %v2318 = vand.u32 2147483647, %v2305
  %vm2319 = vcmp.eq.f32.partialorder %v2318, 8.507059e+37
  %v2320 = vand.u32 %v2305, 2147483648
  %v2321 = vor.u32 1.1754944e-38, %v2320
  %v2322 = vsel %vm2319, %v2321, %v2317
  %v2323 = vmul.f32 %v2300, %v2322
  %v2324 = vrcp.pop %v2308
  %v2325 = vmul.f32 %v2308, %v2324
  %v2326 = vsub.f32 1.0, %v2325
  %v2327 = vmul.f32 %v2324, %v2326
  %v2328 = vadd.f32 %v2324, %v2327
  %vm2329 = vweird.f32 %v2308
  %vm2330 = vweird.f32 %v2324
  %vm2331 = vmor %vm2329, %vm2330
  %v2332 = vsel %vm2331, %v2324, %v2328
  %v2333 = vand.u32 2147483647, %v2308
  %vm2334 = vcmp.eq.f32.partialorder %v2333, 8.507059e+37
  %v2335 = vand.u32 %v2308, 2147483648
  %v2336 = vor.u32 1.1754944e-38, %v2335
  %v2337 = vsel %vm2334, %v2336, %v2332
  %v2338 = vmul.f32 %v2302, %v2337
  %v2339 = vpack.c.bf16 %v2323, %v2323
  %v2340 = vpack.c.bf16 %v2338, %v2338
  %v2342 = vunpack.c.l.b16 %v2195
  %v2343 = vpack.c.b16 %v2342, %v2342
  %2344 = vrot.lane.b32.xlu0 %v2343, 120
  %v2345 = vpop.permute.xlu0 %2344
  %v2347 = vsel %vm207, %v2339, 0
  %v2350 = vsel %vm314, %v2345, 0
  %2352 = vmatpush.bf16.msra.mxu0 0
  %2353 = vmatpush.bf16.msra.mxu0 0
  %2354 = vmatpush.bf16.msra.mxu0 0
  %2355 = vmatpush.bf16.msra.mxu0 0
  %2356 = vmatpush.bf16.msra.mxu0 0
  %2357 = vmatpush.bf16.msra.mxu0 0
  %2358 = vmatpush.bf16.msra.mxu0 0
  %2359 = vmatpush.bf16.msra.mxu0 %v2350
  %2360 = vmatmul.bf16.gmra.mxu0 %v2347
  %v2361 = vpop.f32.mrf.mxu0
  %v2362 = vadd.f32 0.0, %v2361
  %v2363 = vpop.f32.mrf.mxu0
  %2364 = vdwg.mxu0
  %v2366 = vunpack.c.l.b16 %v2196
  %v2367 = vpack.c.b16 %v2366, %v2366
  %2368 = vrot.lane.b32.xlu0 %v2367, 120
  %v2369 = vpop.permute.xlu0 %2368
  %v2371 = vsel %vm207, %v2340, 0
  %v2374 = vsel %vm314, %v2369, 0
  %2376 = vmatpush.bf16.msra.mxu0 0
  %2377 = vmatpush.bf16.msra.mxu0 0
  %2378 = vmatpush.bf16.msra.mxu0 0
  %2379 = vmatpush.bf16.msra.mxu0 0
  %2380 = vmatpush.bf16.msra.mxu0 0
  %2381 = vmatpush.bf16.msra.mxu0 0
  %2382 = vmatpush.bf16.msra.mxu0 0
  %2383 = vmatpush.bf16.msra.mxu0 %v2374
  %2384 = vmatmul.bf16.gmra.mxu0 %v2371
  %v2385 = vpop.f32.mrf.mxu0
  %v2386 = vadd.f32 0.0, %v2385
  %v2387 = vpop.f32.mrf.mxu0
  %2388 = vdwg.mxu0
  %2389 = vrot.lane.b32.xlu0 %v2237, 112
  %v2390 = vpop.permute.xlu0 %2389
  %2391 = vrot.lane.b32.xlu0 %v2095, 48
  %v2392 = vpop.permute.xlu0 %2391
  %v2394 = vsel %vm207, %v2390, 0
  %v2397 = vsel %vm207, %v2392, 0
  %2399 = vmatpush.bf16.xpose.msra.mxu0 0
  %2400 = vmatpush.bf16.xpose.msra.mxu0 0
  %2401 = vmatpush.bf16.xpose.msra.mxu0 0
  %2402 = vmatpush.bf16.xpose.msra.mxu0 0
  %2403 = vmatpush.bf16.xpose.msra.mxu0 0
  %2404 = vmatpush.bf16.xpose.msra.mxu0 0
  %2405 = vmatpush.bf16.xpose.msra.mxu0 0
  %2406 = vmatpush.bf16.xpose.msra.mxu0 %v2397
  %2407 = vmatmul.bf16.gmra.mxu0 %v2394
  %v2408 = vpop.f32.mrf.mxu0
  %v2409 = vadd.f32 0.0, %v2408
  %v2410 = vpop.f32.mrf.mxu0
  %2411 = vdwg.mxu0
  %2412 = vrot.lane.b32.xlu0 %v2263, 112
  %v2413 = vpop.permute.xlu0 %2412
  %2414 = vrot.lane.b32.xlu0 %v2119, 48
  %v2415 = vpop.permute.xlu0 %2414
  %v2417 = vsel %vm207, %v2413, 0
  %v2420 = vsel %vm207, %v2415, 0
  %2422 = vmatpush.bf16.xpose.msra.mxu0 0
  %2423 = vmatpush.bf16.xpose.msra.mxu0 0
  %2424 = vmatpush.bf16.xpose.msra.mxu0 0
  %2425 = vmatpush.bf16.xpose.msra.mxu0 0
  %2426 = vmatpush.bf16.xpose.msra.mxu0 0
  %2427 = vmatpush.bf16.xpose.msra.mxu0 0
  %2428 = vmatpush.bf16.xpose.msra.mxu0 0
  %2429 = vmatpush.bf16.xpose.msra.mxu0 %v2420
  %2430 = vmatmul.bf16.gmra.mxu0 %v2417
  %v2431 = vpop.f32.mrf.mxu0
  %v2432 = vadd.f32 0.0, %v2431
  %v2433 = vpop.f32.mrf.mxu0
  %2434 = vdwg.mxu0
  %v2435 = vmul.f32 %v2409, 0.35355338
  %v2436 = vmul.f32 %v2432, 0.35355338
  %v2437 = vadd.f32 %v2435, %v253
  %v2438 = vadd.f32 %v2436, %v254
  %v2439 = vsel %vm207, %v2437, -inf
  %2440 = vmax.xlane.f32.xlu0 %v2439
  %v2441 = vpop.xlane.xlu0 %2440
  %v2442 = vsel %vm207, %v2438, -inf
  %2443 = vmax.xlane.f32.xlu0 %v2442
  %v2444 = vpop.xlane.xlu0 %2443
  %v2445 = vsub.f32 %v2437, %v2441
  %v2446 = vsub.f32 %v2438, %v2444
  %v2447 = vmul.f32 %v2445, 1.442695
  %v2448 = vpow.pop %v2447
  %v2449 = vmul.f32 %v2446, 1.442695
  %v2450 = vpow.pop %v2449
  %v2451 = vsel %vm207, %v2448, 0.0
  %2452 = vadd.xlane.f32.xlu0 %v2451
  %v2453 = vpop.xlane.xlu0 %2452
  %v2454 = vsel %vm207, %v2450, 0.0
  %2455 = vadd.xlane.f32.xlu0 %v2454
  %v2456 = vpop.xlane.xlu0 %2455
  %v2457 = vrcp.pop %v2453
  %v2458 = vmul.f32 %v2453, %v2457
  %v2459 = vsub.f32 1.0, %v2458
  %v2460 = vmul.f32 %v2457, %v2459
  %v2461 = vadd.f32 %v2457, %v2460
  %vm2462 = vweird.f32 %v2453
  %vm2463 = vweird.f32 %v2457
  %vm2464 = vmor %vm2462, %vm2463
  %v2465 = vsel %vm2464, %v2457, %v2461
  %v2466 = vand.u32 2147483647, %v2453
  %vm2467 = vcmp.eq.f32.partialorder %v2466, 8.507059e+37
  %v2468 = vand.u32 %v2453, 2147483648
  %v2469 = vor.u32 1.1754944e-38, %v2468
  %v2470 = vsel %vm2467, %v2469, %v2465
  %v2471 = vmul.f32 %v2448, %v2470
  %v2472 = vrcp.pop %v2456
  %v2473 = vmul.f32 %v2456, %v2472
  %v2474 = vsub.f32 1.0, %v2473
  %v2475 = vmul.f32 %v2472, %v2474
  %v2476 = vadd.f32 %v2472, %v2475
  %vm2477 = vweird.f32 %v2456
  %vm2478 = vweird.f32 %v2472
  %vm2479 = vmor %vm2477, %vm2478
  %v2480 = vsel %vm2479, %v2472, %v2476
  %v2481 = vand.u32 2147483647, %v2456
  %vm2482 = vcmp.eq.f32.partialorder %v2481, 8.507059e+37
  %v2483 = vand.u32 %v2456, 2147483648
  %v2484 = vor.u32 1.1754944e-38, %v2483
  %v2485 = vsel %vm2482, %v2484, %v2480
  %v2486 = vmul.f32 %v2450, %v2485
  %v2487 = vpack.c.bf16 %v2471, %v2471
  %v2488 = vpack.c.bf16 %v2486, %v2486
  %2489 = vrot.lane.b32.xlu0 %v2343, 112
  %v2490 = vpop.permute.xlu0 %2489
  %v2492 = vsel %vm207, %v2487, 0
  %v2495 = vsel %vm314, %v2490, 0
  %2497 = vmatpush.bf16.msra.mxu0 0
  %2498 = vmatpush.bf16.msra.mxu0 0
  %2499 = vmatpush.bf16.msra.mxu0 0
  %2500 = vmatpush.bf16.msra.mxu0 0
  %2501 = vmatpush.bf16.msra.mxu0 0
  %2502 = vmatpush.bf16.msra.mxu0 0
  %2503 = vmatpush.bf16.msra.mxu0 0
  %2504 = vmatpush.bf16.msra.mxu0 %v2495
  %2505 = vmatmul.bf16.gmra.mxu0 %v2492
  %v2506 = vpop.f32.mrf.mxu0
  %v2507 = vadd.f32 0.0, %v2506
  %v2508 = vpop.f32.mrf.mxu0
  %2509 = vdwg.mxu0
  %2510 = vrot.lane.b32.xlu0 %v2367, 112
  %v2511 = vpop.permute.xlu0 %2510
  %v2513 = vsel %vm207, %v2488, 0
  %v2516 = vsel %vm314, %v2511, 0
  %2518 = vmatpush.bf16.msra.mxu0 0
  %2519 = vmatpush.bf16.msra.mxu0 0
  %2520 = vmatpush.bf16.msra.mxu0 0
  %2521 = vmatpush.bf16.msra.mxu0 0
  %2522 = vmatpush.bf16.msra.mxu0 0
  %2523 = vmatpush.bf16.msra.mxu0 0
  %2524 = vmatpush.bf16.msra.mxu0 0
  %2525 = vmatpush.bf16.msra.mxu0 %v2516
  %2526 = vmatmul.bf16.gmra.mxu0 %v2513
  %v2527 = vpop.f32.mrf.mxu0
  %v2528 = vadd.f32 0.0, %v2527
  %v2529 = vpop.f32.mrf.mxu0
  %2530 = vdwg.mxu0
  %2531 = vrot.lane.b32.xlu0 %v2237, 104
  %v2532 = vpop.permute.xlu0 %2531
  %2533 = vrot.lane.b32.xlu0 %v2095, 40
  %v2534 = vpop.permute.xlu0 %2533
  %v2536 = vsel %vm207, %v2532, 0
  %v2539 = vsel %vm207, %v2534, 0
  %2541 = vmatpush.bf16.xpose.msra.mxu0 0
  %2542 = vmatpush.bf16.xpose.msra.mxu0 0
  %2543 = vmatpush.bf16.xpose.msra.mxu0 0
  %2544 = vmatpush.bf16.xpose.msra.mxu0 0
  %2545 = vmatpush.bf16.xpose.msra.mxu0 0
  %2546 = vmatpush.bf16.xpose.msra.mxu0 0
  %2547 = vmatpush.bf16.xpose.msra.mxu0 0
  %2548 = vmatpush.bf16.xpose.msra.mxu0 %v2539
  %2549 = vmatmul.bf16.gmra.mxu0 %v2536
  %v2550 = vpop.f32.mrf.mxu0
  %v2551 = vadd.f32 0.0, %v2550
  %v2552 = vpop.f32.mrf.mxu0
  %2553 = vdwg.mxu0
  %2554 = vrot.lane.b32.xlu0 %v2263, 104
  %v2555 = vpop.permute.xlu0 %2554
  %2556 = vrot.lane.b32.xlu0 %v2119, 40
  %v2557 = vpop.permute.xlu0 %2556
  %v2559 = vsel %vm207, %v2555, 0
  %v2562 = vsel %vm207, %v2557, 0
  %2564 = vmatpush.bf16.xpose.msra.mxu0 0
  %2565 = vmatpush.bf16.xpose.msra.mxu0 0
  %2566 = vmatpush.bf16.xpose.msra.mxu0 0
  %2567 = vmatpush.bf16.xpose.msra.mxu0 0
  %2568 = vmatpush.bf16.xpose.msra.mxu0 0
  %2569 = vmatpush.bf16.xpose.msra.mxu0 0
  %2570 = vmatpush.bf16.xpose.msra.mxu0 0
  %2571 = vmatpush.bf16.xpose.msra.mxu0 %v2562
  %2572 = vmatmul.bf16.gmra.mxu0 %v2559
  %v2573 = vpop.f32.mrf.mxu0
  %v2574 = vadd.f32 0.0, %v2573
  %v2575 = vpop.f32.mrf.mxu0
  %2576 = vdwg.mxu0
  %v2577 = vmul.f32 %v2551, 0.35355338
  %v2578 = vmul.f32 %v2574, 0.35355338
  %v2579 = vadd.f32 %v2577, %v253
  %v2580 = vadd.f32 %v2578, %v254
  %v2581 = vsel %vm207, %v2579, -inf
  %2582 = vmax.xlane.f32.xlu0 %v2581
  %v2583 = vpop.xlane.xlu0 %2582
  %v2584 = vsel %vm207, %v2580, -inf
  %2585 = vmax.xlane.f32.xlu0 %v2584
  %v2586 = vpop.xlane.xlu0 %2585
  %v2587 = vsub.f32 %v2579, %v2583
  %v2588 = vsub.f32 %v2580, %v2586
  %v2589 = vmul.f32 %v2587, 1.442695
  %v2590 = vpow.pop %v2589
  %v2591 = vmul.f32 %v2588, 1.442695
  %v2592 = vpow.pop %v2591
  %v2593 = vsel %vm207, %v2590, 0.0
  %2594 = vadd.xlane.f32.xlu0 %v2593
  %v2595 = vpop.xlane.xlu0 %2594
  %v2596 = vsel %vm207, %v2592, 0.0
  %2597 = vadd.xlane.f32.xlu0 %v2596
  %v2598 = vpop.xlane.xlu0 %2597
  %v2599 = vrcp.pop %v2595
  %v2600 = vmul.f32 %v2595, %v2599
  %v2601 = vsub.f32 1.0, %v2600
  %v2602 = vmul.f32 %v2599, %v2601
  %v2603 = vadd.f32 %v2599, %v2602
  %vm2604 = vweird.f32 %v2595
  %vm2605 = vweird.f32 %v2599
  %vm2606 = vmor %vm2604, %vm2605
  %v2607 = vsel %vm2606, %v2599, %v2603
  %v2608 = vand.u32 2147483647, %v2595
  %vm2609 = vcmp.eq.f32.partialorder %v2608, 8.507059e+37
  %v2610 = vand.u32 %v2595, 2147483648
  %v2611 = vor.u32 1.1754944e-38, %v2610
  %v2612 = vsel %vm2609, %v2611, %v2607
  %v2613 = vmul.f32 %v2590, %v2612
  %v2614 = vrcp.pop %v2598
  %v2615 = vmul.f32 %v2598, %v2614
  %v2616 = vsub.f32 1.0, %v2615
  %v2617 = vmul.f32 %v2614, %v2616
  %v2618 = vadd.f32 %v2614, %v2617
  %vm2619 = vweird.f32 %v2598
  %vm2620 = vweird.f32 %v2614
  %vm2621 = vmor %vm2619, %vm2620
  %v2622 = vsel %vm2621, %v2614, %v2618
  %v2623 = vand.u32 2147483647, %v2598
  %vm2624 = vcmp.eq.f32.partialorder %v2623, 8.507059e+37
  %v2625 = vand.u32 %v2598, 2147483648
  %v2626 = vor.u32 1.1754944e-38, %v2625
  %v2627 = vsel %vm2624, %v2626, %v2622
  %v2628 = vmul.f32 %v2592, %v2627
  %v2629 = vpack.c.bf16 %v2613, %v2613
  %v2630 = vpack.c.bf16 %v2628, %v2628
  %2631 = vrot.lane.b32.xlu0 %v2343, 104
  %v2632 = vpop.permute.xlu0 %2631
  %v2634 = vsel %vm207, %v2629, 0
  %v2637 = vsel %vm314, %v2632, 0
  %2639 = vmatpush.bf16.msra.mxu0 0
  %2640 = vmatpush.bf16.msra.mxu0 0
  %2641 = vmatpush.bf16.msra.mxu0 0
  %2642 = vmatpush.bf16.msra.mxu0 0
  %2643 = vmatpush.bf16.msra.mxu0 0
  %2644 = vmatpush.bf16.msra.mxu0 0
  %2645 = vmatpush.bf16.msra.mxu0 0
  %2646 = vmatpush.bf16.msra.mxu0 %v2637
  %2647 = vmatmul.bf16.gmra.mxu0 %v2634
  %v2648 = vpop.f32.mrf.mxu0
  %v2649 = vadd.f32 0.0, %v2648
  %v2650 = vpop.f32.mrf.mxu0
  %2651 = vdwg.mxu0
  %2652 = vrot.lane.b32.xlu0 %v2367, 104
  %v2653 = vpop.permute.xlu0 %2652
  %v2655 = vsel %vm207, %v2630, 0
  %v2658 = vsel %vm314, %v2653, 0
  %2660 = vmatpush.bf16.msra.mxu0 0
  %2661 = vmatpush.bf16.msra.mxu0 0
  %2662 = vmatpush.bf16.msra.mxu0 0
  %2663 = vmatpush.bf16.msra.mxu0 0
  %2664 = vmatpush.bf16.msra.mxu0 0
  %2665 = vmatpush.bf16.msra.mxu0 0
  %2666 = vmatpush.bf16.msra.mxu0 0
  %2667 = vmatpush.bf16.msra.mxu0 %v2658
  %2668 = vmatmul.bf16.gmra.mxu0 %v2655
  %v2669 = vpop.f32.mrf.mxu0
  %v2670 = vadd.f32 0.0, %v2669
  %v2671 = vpop.f32.mrf.mxu0
  %2672 = vdwg.mxu0
  %2673 = vrot.lane.b32.xlu0 %v2237, 96
  %v2674 = vpop.permute.xlu0 %2673
  %2675 = vrot.lane.b32.xlu0 %v2095, 32
  %v2676 = vpop.permute.xlu0 %2675
  %v2678 = vsel %vm207, %v2674, 0
  %v2681 = vsel %vm207, %v2676, 0
  %2683 = vmatpush.bf16.xpose.msra.mxu0 0
  %2684 = vmatpush.bf16.xpose.msra.mxu0 0
  %2685 = vmatpush.bf16.xpose.msra.mxu0 0
  %2686 = vmatpush.bf16.xpose.msra.mxu0 0
  %2687 = vmatpush.bf16.xpose.msra.mxu0 0
  %2688 = vmatpush.bf16.xpose.msra.mxu0 0
  %2689 = vmatpush.bf16.xpose.msra.mxu0 0
  %2690 = vmatpush.bf16.xpose.msra.mxu0 %v2681
  %2691 = vmatmul.bf16.gmra.mxu0 %v2678
  %v2692 = vpop.f32.mrf.mxu0
  %v2693 = vadd.f32 0.0, %v2692
  %v2694 = vpop.f32.mrf.mxu0
  %2695 = vdwg.mxu0
  %2696 = vrot.lane.b32.xlu0 %v2263, 96
  %v2697 = vpop.permute.xlu0 %2696
  %2698 = vrot.lane.b32.xlu0 %v2119, 32
  %v2699 = vpop.permute.xlu0 %2698
  %v2701 = vsel %vm207, %v2697, 0
  %v2704 = vsel %vm207, %v2699, 0
  %2706 = vmatpush.bf16.xpose.msra.mxu0 0
  %2707 = vmatpush.bf16.xpose.msra.mxu0 0
  %2708 = vmatpush.bf16.xpose.msra.mxu0 0
  %2709 = vmatpush.bf16.xpose.msra.mxu0 0
  %2710 = vmatpush.bf16.xpose.msra.mxu0 0
  %2711 = vmatpush.bf16.xpose.msra.mxu0 0
  %2712 = vmatpush.bf16.xpose.msra.mxu0 0
  %2713 = vmatpush.bf16.xpose.msra.mxu0 %v2704
  %2714 = vmatmul.bf16.gmra.mxu0 %v2701
  %v2715 = vpop.f32.mrf.mxu0
  %v2716 = vadd.f32 0.0, %v2715
  %v2717 = vpop.f32.mrf.mxu0
  %2718 = vdwg.mxu0
  %v2719 = vmul.f32 %v2693, 0.35355338
  %v2720 = vmul.f32 %v2716, 0.35355338
  %v2721 = vadd.f32 %v2719, %v253
  %v2722 = vadd.f32 %v2720, %v254
  %v2723 = vsel %vm207, %v2721, -inf
  %2724 = vmax.xlane.f32.xlu0 %v2723
  %v2725 = vpop.xlane.xlu0 %2724
  %v2726 = vsel %vm207, %v2722, -inf
  %2727 = vmax.xlane.f32.xlu0 %v2726
  %v2728 = vpop.xlane.xlu0 %2727
  %v2729 = vsub.f32 %v2721, %v2725
  %v2730 = vsub.f32 %v2722, %v2728
  %v2731 = vmul.f32 %v2729, 1.442695
  %v2732 = vpow.pop %v2731
  %v2733 = vmul.f32 %v2730, 1.442695
  %v2734 = vpow.pop %v2733
  %v2735 = vsel %vm207, %v2732, 0.0
  %2736 = vadd.xlane.f32.xlu0 %v2735
  %v2737 = vpop.xlane.xlu0 %2736
  %v2738 = vsel %vm207, %v2734, 0.0
  %2739 = vadd.xlane.f32.xlu0 %v2738
  %v2740 = vpop.xlane.xlu0 %2739
  %v2741 = vrcp.pop %v2737
  %v2742 = vmul.f32 %v2737, %v2741
  %v2743 = vsub.f32 1.0, %v2742
  %v2744 = vmul.f32 %v2741, %v2743
  %v2745 = vadd.f32 %v2741, %v2744
  %vm2746 = vweird.f32 %v2737
  %vm2747 = vweird.f32 %v2741
  %vm2748 = vmor %vm2746, %vm2747
  %v2749 = vsel %vm2748, %v2741, %v2745
  %v2750 = vand.u32 2147483647, %v2737
  %vm2751 = vcmp.eq.f32.partialorder %v2750, 8.507059e+37
  %v2752 = vand.u32 %v2737, 2147483648
  %v2753 = vor.u32 1.1754944e-38, %v2752
  %v2754 = vsel %vm2751, %v2753, %v2749
  %v2755 = vmul.f32 %v2732, %v2754
  %v2756 = vrcp.pop %v2740
  %v2757 = vmul.f32 %v2740, %v2756
  %v2758 = vsub.f32 1.0, %v2757
  %v2759 = vmul.f32 %v2756, %v2758
  %v2760 = vadd.f32 %v2756, %v2759
  %vm2761 = vweird.f32 %v2740
  %vm2762 = vweird.f32 %v2756
  %vm2763 = vmor %vm2761, %vm2762
  %v2764 = vsel %vm2763, %v2756, %v2760
  %v2765 = vand.u32 2147483647, %v2740
  %vm2766 = vcmp.eq.f32.partialorder %v2765, 8.507059e+37
  %v2767 = vand.u32 %v2740, 2147483648
  %v2768 = vor.u32 1.1754944e-38, %v2767
  %v2769 = vsel %vm2766, %v2768, %v2764
  %v2770 = vmul.f32 %v2734, %v2769
  %v2771 = vpack.c.bf16 %v2755, %v2755
  %v2772 = vpack.c.bf16 %v2770, %v2770
  %2773 = vrot.lane.b32.xlu0 %v2343, 96
  %v2774 = vpop.permute.xlu0 %2773
  %v2776 = vsel %vm207, %v2771, 0
  %v2779 = vsel %vm314, %v2774, 0
  %2781 = vmatpush.bf16.msra.mxu0 0
  %2782 = vmatpush.bf16.msra.mxu0 0
  %2783 = vmatpush.bf16.msra.mxu0 0
  %2784 = vmatpush.bf16.msra.mxu0 0
  %2785 = vmatpush.bf16.msra.mxu0 0
  %2786 = vmatpush.bf16.msra.mxu0 0
  %2787 = vmatpush.bf16.msra.mxu0 0
  %2788 = vmatpush.bf16.msra.mxu0 %v2779
  %2789 = vmatmul.bf16.gmra.mxu0 %v2776
  %v2790 = vpop.f32.mrf.mxu0
  %v2791 = vadd.f32 0.0, %v2790
  %v2792 = vpop.f32.mrf.mxu0
  %2793 = vdwg.mxu0
  %2794 = vrot.lane.b32.xlu0 %v2367, 96
  %v2795 = vpop.permute.xlu0 %2794
  %v2797 = vsel %vm207, %v2772, 0
  %v2800 = vsel %vm314, %v2795, 0
  %2802 = vmatpush.bf16.msra.mxu0 0
  %2803 = vmatpush.bf16.msra.mxu0 0
  %2804 = vmatpush.bf16.msra.mxu0 0
  %2805 = vmatpush.bf16.msra.mxu0 0
  %2806 = vmatpush.bf16.msra.mxu0 0
  %2807 = vmatpush.bf16.msra.mxu0 0
  %2808 = vmatpush.bf16.msra.mxu0 0
  %2809 = vmatpush.bf16.msra.mxu0 %v2800
  %2810 = vmatmul.bf16.gmra.mxu0 %v2797
  %v2811 = vpop.f32.mrf.mxu0
  %v2812 = vadd.f32 0.0, %v2811
  %v2813 = vpop.f32.mrf.mxu0
  %2814 = vdwg.mxu0
  %2815 = vrot.lane.b32.xlu0 %v2237, 88
  %v2816 = vpop.permute.xlu0 %2815
  %2817 = vrot.lane.b32.xlu0 %v2095, 24
  %v2818 = vpop.permute.xlu0 %2817
  %v2820 = vsel %vm207, %v2816, 0
  %v2823 = vsel %vm207, %v2818, 0
  %2825 = vmatpush.bf16.xpose.msra.mxu0 0
  %2826 = vmatpush.bf16.xpose.msra.mxu0 0
  %2827 = vmatpush.bf16.xpose.msra.mxu0 0
  %2828 = vmatpush.bf16.xpose.msra.mxu0 0
  %2829 = vmatpush.bf16.xpose.msra.mxu0 0
  %2830 = vmatpush.bf16.xpose.msra.mxu0 0
  %2831 = vmatpush.bf16.xpose.msra.mxu0 0
  %2832 = vmatpush.bf16.xpose.msra.mxu0 %v2823
  %2833 = vmatmul.bf16.gmra.mxu0 %v2820
  %v2834 = vpop.f32.mrf.mxu0
  %v2835 = vadd.f32 0.0, %v2834
  %v2836 = vpop.f32.mrf.mxu0
  %2837 = vdwg.mxu0
  %2838 = vrot.lane.b32.xlu0 %v2263, 88
  %v2839 = vpop.permute.xlu0 %2838
  %2840 = vrot.lane.b32.xlu0 %v2119, 24
  %v2841 = vpop.permute.xlu0 %2840
  %v2843 = vsel %vm207, %v2839, 0
  %v2846 = vsel %vm207, %v2841, 0
  %2848 = vmatpush.bf16.xpose.msra.mxu0 0
  %2849 = vmatpush.bf16.xpose.msra.mxu0 0
  %2850 = vmatpush.bf16.xpose.msra.mxu0 0
  %2851 = vmatpush.bf16.xpose.msra.mxu0 0
  %2852 = vmatpush.bf16.xpose.msra.mxu0 0
  %2853 = vmatpush.bf16.xpose.msra.mxu0 0
  %2854 = vmatpush.bf16.xpose.msra.mxu0 0
  %2855 = vmatpush.bf16.xpose.msra.mxu0 %v2846
  %2856 = vmatmul.bf16.gmra.mxu0 %v2843
  %v2857 = vpop.f32.mrf.mxu0
  %v2858 = vadd.f32 0.0, %v2857
  %v2859 = vpop.f32.mrf.mxu0
  %2860 = vdwg.mxu0
  %v2861 = vmul.f32 %v2835, 0.35355338
  %v2862 = vmul.f32 %v2858, 0.35355338
  %v2863 = vadd.f32 %v2861, %v253
  %v2864 = vadd.f32 %v2862, %v254
  %v2865 = vsel %vm207, %v2863, -inf
  %2866 = vmax.xlane.f32.xlu0 %v2865
  %v2867 = vpop.xlane.xlu0 %2866
  %v2868 = vsel %vm207, %v2864, -inf
  %2869 = vmax.xlane.f32.xlu0 %v2868
  %v2870 = vpop.xlane.xlu0 %2869
  %v2871 = vsub.f32 %v2863, %v2867
  %v2872 = vsub.f32 %v2864, %v2870
  %v2873 = vmul.f32 %v2871, 1.442695
  %v2874 = vpow.pop %v2873
  %v2875 = vmul.f32 %v2872, 1.442695
  %v2876 = vpow.pop %v2875
  %v2877 = vsel %vm207, %v2874, 0.0
  %2878 = vadd.xlane.f32.xlu0 %v2877
  %v2879 = vpop.xlane.xlu0 %2878
  %v2880 = vsel %vm207, %v2876, 0.0
  %2881 = vadd.xlane.f32.xlu0 %v2880
  %v2882 = vpop.xlane.xlu0 %2881
  %v2883 = vrcp.pop %v2879
  %v2884 = vmul.f32 %v2879, %v2883
  %v2885 = vsub.f32 1.0, %v2884
  %v2886 = vmul.f32 %v2883, %v2885
  %v2887 = vadd.f32 %v2883, %v2886
  %vm2888 = vweird.f32 %v2879
  %vm2889 = vweird.f32 %v2883
  %vm2890 = vmor %vm2888, %vm2889
  %v2891 = vsel %vm2890, %v2883, %v2887
  %v2892 = vand.u32 2147483647, %v2879
  %vm2893 = vcmp.eq.f32.partialorder %v2892, 8.507059e+37
  %v2894 = vand.u32 %v2879, 2147483648
  %v2895 = vor.u32 1.1754944e-38, %v2894
  %v2896 = vsel %vm2893, %v2895, %v2891
  %v2897 = vmul.f32 %v2874, %v2896
  %v2898 = vrcp.pop %v2882
  %v2899 = vmul.f32 %v2882, %v2898
  %v2900 = vsub.f32 1.0, %v2899
  %v2901 = vmul.f32 %v2898, %v2900
  %v2902 = vadd.f32 %v2898, %v2901
  %vm2903 = vweird.f32 %v2882
  %vm2904 = vweird.f32 %v2898
  %vm2905 = vmor %vm2903, %vm2904
  %v2906 = vsel %vm2905, %v2898, %v2902
  %v2907 = vand.u32 2147483647, %v2882
  %vm2908 = vcmp.eq.f32.partialorder %v2907, 8.507059e+37
  %v2909 = vand.u32 %v2882, 2147483648
  %v2910 = vor.u32 1.1754944e-38, %v2909
  %v2911 = vsel %vm2908, %v2910, %v2906
  %v2912 = vmul.f32 %v2876, %v2911
  %v2913 = vpack.c.bf16 %v2897, %v2897
  %v2914 = vpack.c.bf16 %v2912, %v2912
  %2915 = vrot.lane.b32.xlu0 %v2343, 88
  %v2916 = vpop.permute.xlu0 %2915
  %v2918 = vsel %vm207, %v2913, 0
  %v2921 = vsel %vm314, %v2916, 0
  %2923 = vmatpush.bf16.msra.mxu0 0
  %2924 = vmatpush.bf16.msra.mxu0 0
  %2925 = vmatpush.bf16.msra.mxu0 0
  %2926 = vmatpush.bf16.msra.mxu0 0
  %2927 = vmatpush.bf16.msra.mxu0 0
  %2928 = vmatpush.bf16.msra.mxu0 0
  %2929 = vmatpush.bf16.msra.mxu0 0
  %2930 = vmatpush.bf16.msra.mxu0 %v2921
  %2931 = vmatmul.bf16.gmra.mxu0 %v2918
  %v2932 = vpop.f32.mrf.mxu0
  %v2933 = vadd.f32 0.0, %v2932
  %v2934 = vpop.f32.mrf.mxu0
  %2935 = vdwg.mxu0
  %2936 = vrot.lane.b32.xlu0 %v2367, 88
  %v2937 = vpop.permute.xlu0 %2936
  %v2939 = vsel %vm207, %v2914, 0
  %v2942 = vsel %vm314, %v2937, 0
  %2944 = vmatpush.bf16.msra.mxu0 0
  %2945 = vmatpush.bf16.msra.mxu0 0
  %2946 = vmatpush.bf16.msra.mxu0 0
  %2947 = vmatpush.bf16.msra.mxu0 0
  %2948 = vmatpush.bf16.msra.mxu0 0
  %2949 = vmatpush.bf16.msra.mxu0 0
  %2950 = vmatpush.bf16.msra.mxu0 0
  %2951 = vmatpush.bf16.msra.mxu0 %v2942
  %2952 = vmatmul.bf16.gmra.mxu0 %v2939
  %v2953 = vpop.f32.mrf.mxu0
  %v2954 = vadd.f32 0.0, %v2953
  %v2955 = vpop.f32.mrf.mxu0
  %2956 = vdwg.mxu0
  %2957 = vrot.lane.b32.xlu0 %v2237, 80
  %v2958 = vpop.permute.xlu0 %2957
  %2959 = vrot.lane.b32.xlu0 %v2095, 16
  %v2960 = vpop.permute.xlu0 %2959
  %v2962 = vsel %vm207, %v2958, 0
  %v2965 = vsel %vm207, %v2960, 0
  %2967 = vmatpush.bf16.xpose.msra.mxu0 0
  %2968 = vmatpush.bf16.xpose.msra.mxu0 0
  %2969 = vmatpush.bf16.xpose.msra.mxu0 0
  %2970 = vmatpush.bf16.xpose.msra.mxu0 0
  %2971 = vmatpush.bf16.xpose.msra.mxu0 0
  %2972 = vmatpush.bf16.xpose.msra.mxu0 0
  %2973 = vmatpush.bf16.xpose.msra.mxu0 0
  %2974 = vmatpush.bf16.xpose.msra.mxu0 %v2965
  %2975 = vmatmul.bf16.gmra.mxu0 %v2962
  %v2976 = vpop.f32.mrf.mxu0
  %v2977 = vadd.f32 0.0, %v2976
  %v2978 = vpop.f32.mrf.mxu0
  %2979 = vdwg.mxu0
  %2980 = vrot.lane.b32.xlu0 %v2263, 80
  %v2981 = vpop.permute.xlu0 %2980
  %2982 = vrot.lane.b32.xlu0 %v2119, 16
  %v2983 = vpop.permute.xlu0 %2982
  %v2985 = vsel %vm207, %v2981, 0
  %v2988 = vsel %vm207, %v2983, 0
  %2990 = vmatpush.bf16.xpose.msra.mxu0 0
  %2991 = vmatpush.bf16.xpose.msra.mxu0 0
  %2992 = vmatpush.bf16.xpose.msra.mxu0 0
  %2993 = vmatpush.bf16.xpose.msra.mxu0 0
  %2994 = vmatpush.bf16.xpose.msra.mxu0 0
  %2995 = vmatpush.bf16.xpose.msra.mxu0 0
  %2996 = vmatpush.bf16.xpose.msra.mxu0 0
  %2997 = vmatpush.bf16.xpose.msra.mxu0 %v2988
  %2998 = vmatmul.bf16.gmra.mxu0 %v2985
  %v2999 = vpop.f32.mrf.mxu0
  %v3000 = vadd.f32 0.0, %v2999
  %v3001 = vpop.f32.mrf.mxu0
  %3002 = vdwg.mxu0
  %v3003 = vmul.f32 %v2977, 0.35355338
  %v3004 = vmul.f32 %v3000, 0.35355338
  %v3005 = vadd.f32 %v3003, %v253
  %v3006 = vadd.f32 %v3004, %v254
  %v3007 = vsel %vm207, %v3005, -inf
  %3008 = vmax.xlane.f32.xlu0 %v3007
  %v3009 = vpop.xlane.xlu0 %3008
  %v3010 = vsel %vm207, %v3006, -inf
  %3011 = vmax.xlane.f32.xlu0 %v3010
  %v3012 = vpop.xlane.xlu0 %3011
  %v3013 = vsub.f32 %v3005, %v3009
  %v3014 = vsub.f32 %v3006, %v3012
  %v3015 = vmul.f32 %v3013, 1.442695
  %v3016 = vpow.pop %v3015
  %v3017 = vmul.f32 %v3014, 1.442695
  %v3018 = vpow.pop %v3017
  %v3019 = vsel %vm207, %v3016, 0.0
  %3020 = vadd.xlane.f32.xlu0 %v3019
  %v3021 = vpop.xlane.xlu0 %3020
  %v3022 = vsel %vm207, %v3018, 0.0
  %3023 = vadd.xlane.f32.xlu0 %v3022
  %v3024 = vpop.xlane.xlu0 %3023
  %v3025 = vrcp.pop %v3021
  %v3026 = vmul.f32 %v3021, %v3025
  %v3027 = vsub.f32 1.0, %v3026
  %v3028 = vmul.f32 %v3025, %v3027
  %v3029 = vadd.f32 %v3025, %v3028
  %vm3030 = vweird.f32 %v3021
  %vm3031 = vweird.f32 %v3025
  %vm3032 = vmor %vm3030, %vm3031
  %v3033 = vsel %vm3032, %v3025, %v3029
  %v3034 = vand.u32 2147483647, %v3021
  %vm3035 = vcmp.eq.f32.partialorder %v3034, 8.507059e+37
  %v3036 = vand.u32 %v3021, 2147483648
  %v3037 = vor.u32 1.1754944e-38, %v3036
  %v3038 = vsel %vm3035, %v3037, %v3033
  %v3039 = vmul.f32 %v3016, %v3038
  %v3040 = vrcp.pop %v3024
  %v3041 = vmul.f32 %v3024, %v3040
  %v3042 = vsub.f32 1.0, %v3041
  %v3043 = vmul.f32 %v3040, %v3042
  %v3044 = vadd.f32 %v3040, %v3043
  %vm3045 = vweird.f32 %v3024
  %vm3046 = vweird.f32 %v3040
  %vm3047 = vmor %vm3045, %vm3046
  %v3048 = vsel %vm3047, %v3040, %v3044
  %v3049 = vand.u32 2147483647, %v3024
  %vm3050 = vcmp.eq.f32.partialorder %v3049, 8.507059e+37
  %v3051 = vand.u32 %v3024, 2147483648
  %v3052 = vor.u32 1.1754944e-38, %v3051
  %v3053 = vsel %vm3050, %v3052, %v3048
  %v3054 = vmul.f32 %v3018, %v3053
  %v3055 = vpack.c.bf16 %v3039, %v3039
  %v3056 = vpack.c.bf16 %v3054, %v3054
  %3057 = vrot.lane.b32.xlu0 %v2343, 80
  %v3058 = vpop.permute.xlu0 %3057
  %v3060 = vsel %vm207, %v3055, 0
  %v3063 = vsel %vm314, %v3058, 0
  %3065 = vmatpush.bf16.msra.mxu0 0
  %3066 = vmatpush.bf16.msra.mxu0 0
  %3067 = vmatpush.bf16.msra.mxu0 0
  %3068 = vmatpush.bf16.msra.mxu0 0
  %3069 = vmatpush.bf16.msra.mxu0 0
  %3070 = vmatpush.bf16.msra.mxu0 0
  %3071 = vmatpush.bf16.msra.mxu0 0
  %3072 = vmatpush.bf16.msra.mxu0 %v3063
  %3073 = vmatmul.bf16.gmra.mxu0 %v3060
  %v3074 = vpop.f32.mrf.mxu0
  %v3075 = vadd.f32 0.0, %v3074
  %v3076 = vpop.f32.mrf.mxu0
  %3077 = vdwg.mxu0
  %3078 = vrot.lane.b32.xlu0 %v2367, 80
  %v3079 = vpop.permute.xlu0 %3078
  %v3081 = vsel %vm207, %v3056, 0
  %v3084 = vsel %vm314, %v3079, 0
  %3086 = vmatpush.bf16.msra.mxu0 0
  %3087 = vmatpush.bf16.msra.mxu0 0
  %3088 = vmatpush.bf16.msra.mxu0 0
  %3089 = vmatpush.bf16.msra.mxu0 0
  %3090 = vmatpush.bf16.msra.mxu0 0
  %3091 = vmatpush.bf16.msra.mxu0 0
  %3092 = vmatpush.bf16.msra.mxu0 0
  %3093 = vmatpush.bf16.msra.mxu0 %v3084
  %3094 = vmatmul.bf16.gmra.mxu0 %v3081
  %v3095 = vpop.f32.mrf.mxu0
  %v3096 = vadd.f32 0.0, %v3095
  %v3097 = vpop.f32.mrf.mxu0
  %3098 = vdwg.mxu0
  %3099 = vrot.lane.b32.xlu0 %v2237, 72
  %v3100 = vpop.permute.xlu0 %3099
  %3101 = vrot.lane.b32.xlu0 %v2095, 8
  %v3102 = vpop.permute.xlu0 %3101
  %v3104 = vsel %vm207, %v3100, 0
  %v3107 = vsel %vm207, %v3102, 0
  %3109 = vmatpush.bf16.xpose.msra.mxu0 0
  %3110 = vmatpush.bf16.xpose.msra.mxu0 0
  %3111 = vmatpush.bf16.xpose.msra.mxu0 0
  %3112 = vmatpush.bf16.xpose.msra.mxu0 0
  %3113 = vmatpush.bf16.xpose.msra.mxu0 0
  %3114 = vmatpush.bf16.xpose.msra.mxu0 0
  %3115 = vmatpush.bf16.xpose.msra.mxu0 0
  %3116 = vmatpush.bf16.xpose.msra.mxu0 %v3107
  %3117 = vmatmul.bf16.gmra.mxu0 %v3104
  %v3118 = vpop.f32.mrf.mxu0
  %v3119 = vadd.f32 0.0, %v3118
  %v3120 = vpop.f32.mrf.mxu0
  %3121 = vdwg.mxu0
  %3122 = vrot.lane.b32.xlu0 %v2263, 72
  %v3123 = vpop.permute.xlu0 %3122
  %3124 = vrot.lane.b32.xlu0 %v2119, 8
  %v3125 = vpop.permute.xlu0 %3124
  %v3127 = vsel %vm207, %v3123, 0
  %v3130 = vsel %vm207, %v3125, 0
  %3132 = vmatpush.bf16.xpose.msra.mxu0 0
  %3133 = vmatpush.bf16.xpose.msra.mxu0 0
  %3134 = vmatpush.bf16.xpose.msra.mxu0 0
  %3135 = vmatpush.bf16.xpose.msra.mxu0 0
  %3136 = vmatpush.bf16.xpose.msra.mxu0 0
  %3137 = vmatpush.bf16.xpose.msra.mxu0 0
  %3138 = vmatpush.bf16.xpose.msra.mxu0 0
  %3139 = vmatpush.bf16.xpose.msra.mxu0 %v3130
  %3140 = vmatmul.bf16.gmra.mxu0 %v3127
  %v3141 = vpop.f32.mrf.mxu0
  %v3142 = vadd.f32 0.0, %v3141
  %v3143 = vpop.f32.mrf.mxu0
  %3144 = vdwg.mxu0
  %v3145 = vmul.f32 %v3119, 0.35355338
  %v3146 = vmul.f32 %v3142, 0.35355338
  %v3147 = vadd.f32 %v3145, %v253
  %v3148 = vadd.f32 %v3146, %v254
  %v3149 = vsel %vm207, %v3147, -inf
  %3150 = vmax.xlane.f32.xlu0 %v3149
  %v3151 = vpop.xlane.xlu0 %3150
  %v3152 = vsel %vm207, %v3148, -inf
  %3153 = vmax.xlane.f32.xlu0 %v3152
  %v3154 = vpop.xlane.xlu0 %3153
  %v3155 = vsub.f32 %v3147, %v3151
  %v3156 = vsub.f32 %v3148, %v3154
  %v3157 = vmul.f32 %v3155, 1.442695
  %v3158 = vpow.pop %v3157
  %v3159 = vmul.f32 %v3156, 1.442695
  %v3160 = vpow.pop %v3159
  %v3161 = vsel %vm207, %v3158, 0.0
  %3162 = vadd.xlane.f32.xlu0 %v3161
  %v3163 = vpop.xlane.xlu0 %3162
  %v3164 = vsel %vm207, %v3160, 0.0
  %3165 = vadd.xlane.f32.xlu0 %v3164
  %v3166 = vpop.xlane.xlu0 %3165
  %v3167 = vrcp.pop %v3163
  %v3168 = vmul.f32 %v3163, %v3167
  %v3169 = vsub.f32 1.0, %v3168
  %v3170 = vmul.f32 %v3167, %v3169
  %v3171 = vadd.f32 %v3167, %v3170
  %vm3172 = vweird.f32 %v3163
  %vm3173 = vweird.f32 %v3167
  %vm3174 = vmor %vm3172, %vm3173
  %v3175 = vsel %vm3174, %v3167, %v3171
  %v3176 = vand.u32 2147483647, %v3163
  %vm3177 = vcmp.eq.f32.partialorder %v3176, 8.507059e+37
  %v3178 = vand.u32 %v3163, 2147483648
  %v3179 = vor.u32 1.1754944e-38, %v3178
  %v3180 = vsel %vm3177, %v3179, %v3175
  %v3181 = vmul.f32 %v3158, %v3180
  %v3182 = vrcp.pop %v3166
  %v3183 = vmul.f32 %v3166, %v3182
  %v3184 = vsub.f32 1.0, %v3183
  %v3185 = vmul.f32 %v3182, %v3184
  %v3186 = vadd.f32 %v3182, %v3185
  %vm3187 = vweird.f32 %v3166
  %vm3188 = vweird.f32 %v3182
  %vm3189 = vmor %vm3187, %vm3188
  %v3190 = vsel %vm3189, %v3182, %v3186
  %v3191 = vand.u32 2147483647, %v3166
  %vm3192 = vcmp.eq.f32.partialorder %v3191, 8.507059e+37
  %v3193 = vand.u32 %v3166, 2147483648
  %v3194 = vor.u32 1.1754944e-38, %v3193
  %v3195 = vsel %vm3192, %v3194, %v3190
  %v3196 = vmul.f32 %v3160, %v3195
  %v3197 = vpack.c.bf16 %v3181, %v3181
  %v3198 = vpack.c.bf16 %v3196, %v3196
  %3199 = vrot.lane.b32.xlu0 %v2343, 72
  %v3200 = vpop.permute.xlu0 %3199
  %v3202 = vsel %vm207, %v3197, 0
  %v3205 = vsel %vm314, %v3200, 0
  %3207 = vmatpush.bf16.msra.mxu0 0
  %3208 = vmatpush.bf16.msra.mxu0 0
  %3209 = vmatpush.bf16.msra.mxu0 0
  %3210 = vmatpush.bf16.msra.mxu0 0
  %3211 = vmatpush.bf16.msra.mxu0 0
  %3212 = vmatpush.bf16.msra.mxu0 0
  %3213 = vmatpush.bf16.msra.mxu0 0
  %3214 = vmatpush.bf16.msra.mxu0 %v3205
  %3215 = vmatmul.bf16.gmra.mxu0 %v3202
  %v3216 = vpop.f32.mrf.mxu0
  %v3217 = vadd.f32 0.0, %v3216
  %v3218 = vpop.f32.mrf.mxu0
  %3219 = vdwg.mxu0
  %3220 = vrot.lane.b32.xlu0 %v2367, 72
  %v3221 = vpop.permute.xlu0 %3220
  %v3223 = vsel %vm207, %v3198, 0
  %v3226 = vsel %vm314, %v3221, 0
  %3228 = vmatpush.bf16.msra.mxu0 0
  %3229 = vmatpush.bf16.msra.mxu0 0
  %3230 = vmatpush.bf16.msra.mxu0 0
  %3231 = vmatpush.bf16.msra.mxu0 0
  %3232 = vmatpush.bf16.msra.mxu0 0
  %3233 = vmatpush.bf16.msra.mxu0 0
  %3234 = vmatpush.bf16.msra.mxu0 0
  %3235 = vmatpush.bf16.msra.mxu0 %v3226
  %3236 = vmatmul.bf16.gmra.mxu0 %v3223
  %v3237 = vpop.f32.mrf.mxu0
  %v3238 = vadd.f32 0.0, %v3237
  %v3239 = vpop.f32.mrf.mxu0
  %3240 = vdwg.mxu0
  %3243 = vrot.lane.b32.xlu0 %v2362, 8
  %v3244 = vpop.permute.xlu0 %3243
  %3245 = vrot.lane.b32.xlu0 %v2386, 8
  %v3246 = vpop.permute.xlu0 %3245
  %3251 = vrot.lane.b32.xlu0 %v2507, 16
  %v3252 = vpop.permute.xlu0 %3251
  %3253 = vrot.lane.b32.xlu0 %v2528, 16
  %v3254 = vpop.permute.xlu0 %3253
  %3259 = vrot.lane.b32.xlu0 %v2649, 24
  %v3260 = vpop.permute.xlu0 %3259
  %3261 = vrot.lane.b32.xlu0 %v2670, 24
  %v3262 = vpop.permute.xlu0 %3261
  %3267 = vrot.lane.b32.xlu0 %v2791, 32
  %v3268 = vpop.permute.xlu0 %3267
  %3269 = vrot.lane.b32.xlu0 %v2812, 32
  %v3270 = vpop.permute.xlu0 %3269
  %3275 = vrot.lane.b32.xlu0 %v2933, 40
  %v3276 = vpop.permute.xlu0 %3275
  %3277 = vrot.lane.b32.xlu0 %v2954, 40
  %v3278 = vpop.permute.xlu0 %3277
  %3283 = vrot.lane.b32.xlu0 %v3075, 48
  %v3284 = vpop.permute.xlu0 %3283
  %3285 = vrot.lane.b32.xlu0 %v3096, 48
  %v3286 = vpop.permute.xlu0 %3285
  %3291 = vrot.lane.b32.xlu0 %v3217, 56
  %v3292 = vpop.permute.xlu0 %3291
  %3293 = vrot.lane.b32.xlu0 %v3238, 56
  %v3294 = vpop.permute.xlu0 %3293
  %v3297 = vsel %vm207, %v2213, %v3244
  %v3298 = vsel %vm207, %v2232, %v3246
  %v3299 = vsel %vm1414, %v3297, %v3252
  %v3300 = vsel %vm1414, %v3298, %v3254
  %v3301 = vsel %vm1417, %v3299, %v3260
  %v3302 = vsel %vm1417, %v3300, %v3262
  %v3303 = vsel %vm1420, %v3301, %v3268
  %v3304 = vsel %vm1420, %v3302, %v3270
  %v3305 = vsel %vm1423, %v3303, %v3276
  %v3306 = vsel %vm1423, %v3304, %v3278
  %v3307 = vsel %vm1426, %v3305, %v3284
  %v3308 = vsel %vm1426, %v3306, %v3286
  %v3309 = vsel %vm1429, %v3307, %v3292
  %v3310 = vsel %vm1429, %v3308, %v3294
  %v3311 = vpack.c.bf16 %v3310, %v3309
  %s3312 = scalar_lea.vmem %s3, 32
  %v3313 = vld [vmem:[%s3312] sm:$0xf]
  %v3314 = vld [vmem:[%s3312 + $0x4] sm:$0xf]
  %v3315 = vld [vmem:[%s3312 + $0x8] sm:$0xf]
  %v3316 = vld [vmem:[%s3312 + $0xc] sm:$0xf]
  %v3317 = vld [vmem:[%s3312 + $0x10] sm:$0xf]
  %v3318 = vld [vmem:[%s3312 + $0x14] sm:$0xf]
  %v3319 = vld [vmem:[%s3312 + $0x18] sm:$0xf]
  %v3320 = vld [vmem:[%s3312 + $0x1c] sm:$0xf]
  %v3321 = vperm.slane %v1993, 3
  %v3330 = vunpack.c.l.b16 %v3313
  %v3331 = vunpack.c.l.b16 %v3314
  %v3332 = vunpack.c.l.b16 %v3315
  %v3333 = vunpack.c.l.b16 %v3316
  %v3334 = vunpack.c.l.b16 %v3317
  %v3335 = vunpack.c.l.b16 %v3318
  %v3336 = vunpack.c.l.b16 %v3319
  %v3337 = vunpack.c.l.b16 %v3320
  %v3338 = vpack.c.b16 %v3331, %v3330
  %v3339 = vpack.c.b16 %v3333, %v3332
  %v3340 = vpack.c.b16 %v3335, %v3334
  %v3341 = vpack.c.b16 %v3337, %v3336
  %v3347 = vsel %vm45, %v3311, 0
  %3349 = vmatpush.bf16.msra.mxu0 0
  %3350 = vmatpush.bf16.msra.mxu0 0
  %3351 = vmatpush.bf16.msra.mxu0 0
  %3352 = vmatpush.bf16.msra.mxu0 0
  %3353 = vmatpush.bf16.msra.mxu0 %v3341
  %3354 = vmatpush.bf16.msra.mxu0 %v3340
  %3355 = vmatpush.bf16.msra.mxu0 %v3339
  %3356 = vmatpush.bf16.msra.mxu0 %v3338
  %3357 = vmatmul.bf16.gmra.mxu0 %v3347
  %v3358 = vpop.f32.mrf.mxu0
  %v3359 = vadd.f32 %v3321, %v3358
  %v3360 = vpop.f32.mrf.mxu0
  %v3361 = vadd.f32 %v3321, %v3360
  %3362 = vdwg.mxu0
  %v3363 = vadd.f32 %v1990, %v3359
  %v3364 = vadd.f32 %v1991, %v3361
  %v3365 = vsel %vm45, %v3363, 0.0
  %3366 = vadd.xlane.f32.xlu0 %v3365
  %v3367 = vpop.xlane.xlu0 %3366
  %v3368 = vsel %vm45, %v3364, 0.0
  %3369 = vadd.xlane.f32.xlu0 %v3368
  %v3370 = vpop.xlane.xlu0 %3369
  %v3371 = vmul.f32 %v3367, %v58
  %v3372 = vmul.f32 %v3370, %v58
  %v3373 = vsub.f32 %v3363, %v3371
  %v3374 = vsub.f32 %v3364, %v3372
  %v3375 = vmul.f32 %v3373, %v3373
  %v3376 = vmul.f32 %v3374, %v3374
  %v3377 = vsel %vm45, %v3375, 0.0
  %3378 = vadd.xlane.f32.xlu0 %v3377
  %v3379 = vpop.xlane.xlu0 %3378
  %v3380 = vsel %vm45, %v3376, 0.0
  %3381 = vadd.xlane.f32.xlu0 %v3380
  %v3382 = vpop.xlane.xlu0 %3381
  %v3383 = vmul.f32 %v3379, %v58
  %v3384 = vmul.f32 %v3382, %v58
  %v3385 = vadd.f32 %v3383, 1e-12
  %v3386 = vadd.f32 %v3384, 1e-12
  %v3387 = vrsqrt.pop %v3385
  %v3388 = vmul.f32 %v3387, %v3385
  %v3389 = vmul.f32 %v3388, %v3387
  %v3390 = vmul.f32 0.5, %v3389
  %v3391 = vsub.f32 1.5, %v3390
  %v3392 = vmul.f32 %v3387, %v3391
  %vm3393 = vweird.f32 %v3385
  %vm3394 = vweird.f32 %v3387
  %vm3395 = vmor %vm3393, %vm3394
  %v3396 = vsel %vm3395, %v3387, %v3392
  %v3397 = vrsqrt.pop %v3386
  %v3398 = vmul.f32 %v3397, %v3386
  %v3399 = vmul.f32 %v3398, %v3397
  %v3400 = vmul.f32 0.5, %v3399
  %v3401 = vsub.f32 1.5, %v3400
  %v3402 = vmul.f32 %v3397, %v3401
  %vm3403 = vweird.f32 %v3386
  %vm3404 = vweird.f32 %v3397
  %vm3405 = vmor %vm3403, %vm3404
  %v3406 = vsel %vm3405, %v3397, %v3402
  %v3407 = vmul.f32 %v3373, %v3396
  %v3408 = vmul.f32 %v3374, %v3406
  %v3409 = vperm.slane %v1993, 4
  %v3410 = vmul.f32 %v3407, %v3409
  %v3411 = vmul.f32 %v3408, %v3409
  %v3412 = vperm.slane %v1993, 5
  %v3413 = vadd.f32 %v3410, %v3412
  %v3414 = vadd.f32 %v3411, %v3412
  %v3415 = vpack.c.bf16 %v3414, %v3413
  %s3416 = scalar_lea.vmem %s4, 64
  %v3417 = vld [vmem:[%s3416] sm:$0xff]
  %v3418 = vld [vmem:[%s3416 + $0x8] sm:$0xff]
  %v3419 = vld [vmem:[%s3416 + $0x10] sm:$0xff]
  %v3420 = vld [vmem:[%s3416 + $0x18] sm:$0xff]
  %v3421 = vld [vmem:[%s3416 + $0x20] sm:$0xff]
  %v3422 = vld [vmem:[%s3416 + $0x28] sm:$0xff]
  %v3423 = vld [vmem:[%s3416 + $0x30] sm:$0xff]
  %v3424 = vld [vmem:[%s3416 + $0x38] sm:$0xff]
  %s3425 = scalar_lea.vmem %s7, 2
  %v3426 = vld [vmem:[%s3425] sm:$0x3]
  %v3428 = vperm.slane %v3426, 0
  %v3429 = vperm.slane %v3426, 1
  %v3440 = vunpack.c.l.b16 %v3417
  %v3441 = vunpack.c.h.b16 %v3417
  %v3442 = vunpack.c.l.b16 %v3418
  %v3443 = vunpack.c.h.b16 %v3418
  %v3444 = vunpack.c.l.b16 %v3419
  %v3445 = vunpack.c.h.b16 %v3419
  %v3446 = vunpack.c.l.b16 %v3420
  %v3447 = vunpack.c.h.b16 %v3420
  %v3448 = vunpack.c.l.b16 %v3421
  %v3449 = vunpack.c.h.b16 %v3421
  %v3450 = vunpack.c.l.b16 %v3422
  %v3451 = vunpack.c.h.b16 %v3422
  %v3452 = vunpack.c.l.b16 %v3423
  %v3453 = vunpack.c.h.b16 %v3423
  %v3454 = vunpack.c.l.b16 %v3424
  %v3455 = vunpack.c.h.b16 %v3424
  %v3456 = vpack.c.b16 %v3442, %v3440
  %v3457 = vpack.c.b16 %v3443, %v3441
  %v3458 = vpack.c.b16 %v3446, %v3444
  %v3459 = vpack.c.b16 %v3447, %v3445
  %v3460 = vpack.c.b16 %v3450, %v3448
  %v3461 = vpack.c.b16 %v3451, %v3449
  %v3462 = vpack.c.b16 %v3454, %v3452
  %v3463 = vpack.c.b16 %v3455, %v3453
  %v3473 = vsel %vm45, %v3415, 0
  %3475 = vmatpush.bf16.msra.mxu0 0
  %3476 = vmatpush.bf16.msra.mxu0 0
  %3477 = vmatpush.bf16.msra.mxu0 0
  %3478 = vmatpush.bf16.msra.mxu0 0
  %3479 = vmatpush.bf16.msra.mxu0 %v3462
  %3480 = vmatpush.bf16.msra.mxu0 %v3460
  %3481 = vmatpush.bf16.msra.mxu0 %v3458
  %3482 = vmatpush.bf16.msra.mxu0 %v3456
  %3483 = vmatmul.bf16.gmra.mxu0 %v3473
  %v3484 = vpop.f32.mrf.mxu0
  %v3485 = vadd.f32 %v3428, %v3484
  %v3486 = vpop.f32.mrf.mxu0
  %v3487 = vadd.f32 %v3428, %v3486
  %3488 = vdwg.mxu0
  %3489 = vmatpush.bf16.msra.mxu0 0
  %3490 = vmatpush.bf16.msra.mxu0 0
  %3491 = vmatpush.bf16.msra.mxu0 0
  %3492 = vmatpush.bf16.msra.mxu0 0
  %3493 = vmatpush.bf16.msra.mxu0 %v3463
  %3494 = vmatpush.bf16.msra.mxu0 %v3461
  %3495 = vmatpush.bf16.msra.mxu0 %v3459
  %3496 = vmatpush.bf16.msra.mxu0 %v3457
  %3497 = vmatmul.bf16.gmra.mxu0 %v3473
  %v3498 = vpop.f32.mrf.mxu0
  %v3499 = vadd.f32 %v3429, %v3498
  %v3500 = vpop.f32.mrf.mxu0
  %v3501 = vadd.f32 %v3429, %v3500
  %3502 = vdwg.mxu0
  %v3503 = vmul.f32 %v3485, 0.70710677
  %v3504 = vmul.f32 %v3499, 0.70710677
  %v3505 = vmul.f32 %v3487, 0.70710677
  %v3506 = vmul.f32 %v3501, 0.70710677
  %v3507 = vand.u32 2147483647, %v3503
  %v3508 = vand.u32 2147483647, %v3504
  %v3509 = vand.u32 2147483647, %v3505
  %v3510 = vand.u32 2147483647, %v3506
  %v3511 = vmul.f32 %v3507, 0.3275911
  %v3512 = vmul.f32 %v3508, 0.3275911
  %v3513 = vmul.f32 %v3509, 0.3275911
  %v3514 = vmul.f32 %v3510, 0.3275911
  %v3515 = vadd.f32 %v3511, 1.0
  %v3516 = vadd.f32 %v3512, 1.0
  %v3517 = vadd.f32 %v3513, 1.0
  %v3518 = vadd.f32 %v3514, 1.0
  %v3519 = vrcp.pop %v3515
  %v3520 = vmul.f32 %v3515, %v3519
  %v3521 = vsub.f32 1.0, %v3520
  %v3522 = vmul.f32 %v3519, %v3521
  %v3523 = vadd.f32 %v3519, %v3522
  %vm3524 = vweird.f32 %v3515
  %vm3525 = vweird.f32 %v3519
  %vm3526 = vmor %vm3524, %vm3525
  %v3527 = vsel %vm3526, %v3519, %v3523
  %v3528 = vand.u32 2147483647, %v3515
  %vm3529 = vcmp.eq.f32.partialorder %v3528, 8.507059e+37
  %v3530 = vand.u32 %v3515, 2147483648
  %v3531 = vor.u32 1.1754944e-38, %v3530
  %v3532 = vsel %vm3529, %v3531, %v3527
  %v3533 = vmul.f32 1.0, %v3532
  %v3534 = vrcp.pop %v3516
  %v3535 = vmul.f32 %v3516, %v3534
  %v3536 = vsub.f32 1.0, %v3535
  %v3537 = vmul.f32 %v3534, %v3536
  %v3538 = vadd.f32 %v3534, %v3537
  %vm3539 = vweird.f32 %v3516
  %vm3540 = vweird.f32 %v3534
  %vm3541 = vmor %vm3539, %vm3540
  %v3542 = vsel %vm3541, %v3534, %v3538
  %v3543 = vand.u32 2147483647, %v3516
  %vm3544 = vcmp.eq.f32.partialorder %v3543, 8.507059e+37
  %v3545 = vand.u32 %v3516, 2147483648
  %v3546 = vor.u32 1.1754944e-38, %v3545
  %v3547 = vsel %vm3544, %v3546, %v3542
  %v3548 = vmul.f32 1.0, %v3547
  %v3549 = vrcp.pop %v3517
  %v3550 = vmul.f32 %v3517, %v3549
  %v3551 = vsub.f32 1.0, %v3550
  %v3552 = vmul.f32 %v3549, %v3551
  %v3553 = vadd.f32 %v3549, %v3552
  %vm3554 = vweird.f32 %v3517
  %vm3555 = vweird.f32 %v3549
  %vm3556 = vmor %vm3554, %vm3555
  %v3557 = vsel %vm3556, %v3549, %v3553
  %v3558 = vand.u32 2147483647, %v3517
  %vm3559 = vcmp.eq.f32.partialorder %v3558, 8.507059e+37
  %v3560 = vand.u32 %v3517, 2147483648
  %v3561 = vor.u32 1.1754944e-38, %v3560
  %v3562 = vsel %vm3559, %v3561, %v3557
  %v3563 = vmul.f32 1.0, %v3562
  %v3564 = vrcp.pop %v3518
  %v3565 = vmul.f32 %v3518, %v3564
  %v3566 = vsub.f32 1.0, %v3565
  %v3567 = vmul.f32 %v3564, %v3566
  %v3568 = vadd.f32 %v3564, %v3567
  %vm3569 = vweird.f32 %v3518
  %vm3570 = vweird.f32 %v3564
  %vm3571 = vmor %vm3569, %vm3570
  %v3572 = vsel %vm3571, %v3564, %v3568
  %v3573 = vand.u32 2147483647, %v3518
  %vm3574 = vcmp.eq.f32.partialorder %v3573, 8.507059e+37
  %v3575 = vand.u32 %v3518, 2147483648
  %v3576 = vor.u32 1.1754944e-38, %v3575
  %v3577 = vsel %vm3574, %v3576, %v3572
  %v3578 = vmul.f32 1.0, %v3577
  %v3579 = vmul.f32 %v3533, 1.0614054
  %v3580 = vmul.f32 %v3548, 1.0614054
  %v3581 = vmul.f32 %v3563, 1.0614054
  %v3582 = vmul.f32 %v3578, 1.0614054
  %v3583 = vadd.f32 %v3579, -1.4531521
  %v3584 = vadd.f32 %v3580, -1.4531521
  %v3585 = vadd.f32 %v3581, -1.4531521
  %v3586 = vadd.f32 %v3582, -1.4531521
  %v3587 = vmul.f32 %v3533, %v3583
  %v3588 = vmul.f32 %v3548, %v3584
  %v3589 = vmul.f32 %v3563, %v3585
  %v3590 = vmul.f32 %v3578, %v3586
  %v3591 = vadd.f32 %v3587, 1.4214138
  %v3592 = vadd.f32 %v3588, 1.4214138
  %v3593 = vadd.f32 %v3589, 1.4214138
  %v3594 = vadd.f32 %v3590, 1.4214138
  %v3595 = vmul.f32 %v3533, %v3591
  %v3596 = vmul.f32 %v3548, %v3592
  %v3597 = vmul.f32 %v3563, %v3593
  %v3598 = vmul.f32 %v3578, %v3594
  %v3599 = vadd.f32 %v3595, -0.28449672
  %v3600 = vadd.f32 %v3596, -0.28449672
  %v3601 = vadd.f32 %v3597, -0.28449672
  %v3602 = vadd.f32 %v3598, -0.28449672
  %v3603 = vmul.f32 %v3533, %v3599
  %v3604 = vmul.f32 %v3548, %v3600
  %v3605 = vmul.f32 %v3563, %v3601
  %v3606 = vmul.f32 %v3578, %v3602
  %v3607 = vadd.f32 %v3603, 0.2548296
  %v3608 = vadd.f32 %v3604, 0.2548296
  %v3609 = vadd.f32 %v3605, 0.2548296
  %v3610 = vadd.f32 %v3606, 0.2548296
  %v3611 = vmul.f32 %v3533, %v3607
  %v3612 = vmul.f32 %v3548, %v3608
  %v3613 = vmul.f32 %v3563, %v3609
  %v3614 = vmul.f32 %v3578, %v3610
  %v3615 = vsub.f32 0.0, %v3507
  %v3616 = vsub.f32 0.0, %v3508
  %v3617 = vsub.f32 0.0, %v3509
  %v3618 = vsub.f32 0.0, %v3510
  %v3619 = vmul.f32 %v3615, %v3507
  %v3620 = vmul.f32 %v3616, %v3508
  %v3621 = vmul.f32 %v3617, %v3509
  %v3622 = vmul.f32 %v3618, %v3510
  %v3623 = vmul.f32 %v3619, 1.442695
  %v3624 = vpow.pop %v3623
  %v3625 = vmul.f32 %v3620, 1.442695
  %v3626 = vpow.pop %v3625
  %v3627 = vmul.f32 %v3621, 1.442695
  %v3628 = vpow.pop %v3627
  %v3629 = vmul.f32 %v3622, 1.442695
  %v3630 = vpow.pop %v3629
  %v3631 = vmul.f32 %v3611, %v3624
  %v3632 = vmul.f32 %v3612, %v3626
  %v3633 = vmul.f32 %v3613, %v3628
  %v3634 = vmul.f32 %v3614, %v3630
  %v3635 = vsub.f32 1.0, %v3631
  %v3636 = vsub.f32 1.0, %v3632
  %v3637 = vsub.f32 1.0, %v3633
  %v3638 = vsub.f32 1.0, %v3634
  %vm3639 = vcmp.ge.f32.partialorder %v3503, 0.0
  %vm3640 = vcmp.ge.f32.partialorder %v3504, 0.0
  %vm3641 = vcmp.ge.f32.partialorder %v3505, 0.0
  %vm3642 = vcmp.ge.f32.partialorder %v3506, 0.0
  %v3643 = vsub.f32 0.0, %v3635
  %v3644 = vsub.f32 0.0, %v3636
  %v3645 = vsub.f32 0.0, %v3637
  %v3646 = vsub.f32 0.0, %v3638
  %v3647 = vsel %vm3639, %v3635, %v3643
  %v3648 = vsel %vm3640, %v3636, %v3644
  %v3649 = vsel %vm3641, %v3637, %v3645
  %v3650 = vsel %vm3642, %v3638, %v3646
  %v3651 = vmul.f32 %v3485, 0.5
  %v3652 = vmul.f32 %v3499, 0.5
  %v3653 = vmul.f32 %v3487, 0.5
  %v3654 = vmul.f32 %v3501, 0.5
  %v3655 = vadd.f32 %v3647, 1.0
  %v3656 = vadd.f32 %v3648, 1.0
  %v3657 = vadd.f32 %v3649, 1.0
  %v3658 = vadd.f32 %v3650, 1.0
  %v3659 = vmul.f32 %v3651, %v3655
  %v3660 = vmul.f32 %v3652, %v3656
  %v3661 = vmul.f32 %v3653, %v3657
  %v3662 = vmul.f32 %v3654, %v3658
  %v3663 = vpack.c.bf16 %v3661, %v3659
  %v3664 = vpack.c.bf16 %v3662, %v3660
  %s3665 = scalar_lea.vmem %s5, 128
  %v3666 = vld [vmem:[%s3665] sm:$0xf]
  %v3667 = vld [vmem:[%s3665 + $0x4] sm:$0xf]
  %v3668 = vld [vmem:[%s3665 + $0x8] sm:$0xf]
  %v3669 = vld [vmem:[%s3665 + $0xc] sm:$0xf]
  %v3670 = vld [vmem:[%s3665 + $0x10] sm:$0xf]
  %v3671 = vld [vmem:[%s3665 + $0x14] sm:$0xf]
  %v3672 = vld [vmem:[%s3665 + $0x18] sm:$0xf]
  %v3673 = vld [vmem:[%s3665 + $0x1c] sm:$0xf]
  %v3674 = vld [vmem:[%s3665 + $0x20] sm:$0xf]
  %v3675 = vld [vmem:[%s3665 + $0x24] sm:$0xf]
  %v3676 = vld [vmem:[%s3665 + $0x28] sm:$0xf]
  %v3677 = vld [vmem:[%s3665 + $0x2c] sm:$0xf]
  %v3678 = vld [vmem:[%s3665 + $0x30] sm:$0xf]
  %v3679 = vld [vmem:[%s3665 + $0x34] sm:$0xf]
  %v3680 = vld [vmem:[%s3665 + $0x38] sm:$0xf]
  %v3681 = vld [vmem:[%s3665 + $0x3c] sm:$0xf]
  %v3682 = vld [vmem:[%s3665 + $0x40] sm:$0xf]
  %v3683 = vld [vmem:[%s3665 + $0x44] sm:$0xf]
  %v3684 = vld [vmem:[%s3665 + $0x48] sm:$0xf]
  %v3685 = vld [vmem:[%s3665 + $0x4c] sm:$0xf]
  %v3686 = vld [vmem:[%s3665 + $0x50] sm:$0xf]
  %v3687 = vld [vmem:[%s3665 + $0x54] sm:$0xf]
  %v3688 = vld [vmem:[%s3665 + $0x58] sm:$0xf]
  %v3689 = vld [vmem:[%s3665 + $0x5c] sm:$0xf]
  %v3690 = vld [vmem:[%s3665 + $0x60] sm:$0xf]
  %v3691 = vld [vmem:[%s3665 + $0x64] sm:$0xf]
  %v3692 = vld [vmem:[%s3665 + $0x68] sm:$0xf]
  %v3693 = vld [vmem:[%s3665 + $0x6c] sm:$0xf]
  %v3694 = vld [vmem:[%s3665 + $0x70] sm:$0xf]
  %v3695 = vld [vmem:[%s3665 + $0x74] sm:$0xf]
  %v3696 = vld [vmem:[%s3665 + $0x78] sm:$0xf]
  %v3697 = vld [vmem:[%s3665 + $0x7c] sm:$0xf]
  %v3698 = vperm.slane %v1993, 6
  %v3731 = vunpack.c.l.b16 %v3666
  %v3732 = vunpack.c.l.b16 %v3667
  %v3733 = vunpack.c.l.b16 %v3668
  %v3734 = vunpack.c.l.b16 %v3669
  %v3735 = vunpack.c.l.b16 %v3670
  %v3736 = vunpack.c.l.b16 %v3671
  %v3737 = vunpack.c.l.b16 %v3672
  %v3738 = vunpack.c.l.b16 %v3673
  %v3739 = vunpack.c.l.b16 %v3674
  %v3740 = vunpack.c.l.b16 %v3675
  %v3741 = vunpack.c.l.b16 %v3676
  %v3742 = vunpack.c.l.b16 %v3677
  %v3743 = vunpack.c.l.b16 %v3678
  %v3744 = vunpack.c.l.b16 %v3679
  %v3745 = vunpack.c.l.b16 %v3680
  %v3746 = vunpack.c.l.b16 %v3681
  %v3747 = vunpack.c.l.b16 %v3682
  %v3748 = vunpack.c.l.b16 %v3683
  %v3749 = vunpack.c.l.b16 %v3684
  %v3750 = vunpack.c.l.b16 %v3685
  %v3751 = vunpack.c.l.b16 %v3686
  %v3752 = vunpack.c.l.b16 %v3687
  %v3753 = vunpack.c.l.b16 %v3688
  %v3754 = vunpack.c.l.b16 %v3689
  %v3755 = vunpack.c.l.b16 %v3690
  %v3756 = vunpack.c.l.b16 %v3691
  %v3757 = vunpack.c.l.b16 %v3692
  %v3758 = vunpack.c.l.b16 %v3693
  %v3759 = vunpack.c.l.b16 %v3694
  %v3760 = vunpack.c.l.b16 %v3695
  %v3761 = vunpack.c.l.b16 %v3696
  %v3762 = vunpack.c.l.b16 %v3697
  %v3763 = vpack.c.b16 %v3732, %v3731
  %v3764 = vpack.c.b16 %v3734, %v3733
  %v3765 = vpack.c.b16 %v3736, %v3735
  %v3766 = vpack.c.b16 %v3738, %v3737
  %v3767 = vpack.c.b16 %v3740, %v3739
  %v3768 = vpack.c.b16 %v3742, %v3741
  %v3769 = vpack.c.b16 %v3744, %v3743
  %v3770 = vpack.c.b16 %v3746, %v3745
  %v3771 = vpack.c.b16 %v3748, %v3747
  %v3772 = vpack.c.b16 %v3750, %v3749
  %v3773 = vpack.c.b16 %v3752, %v3751
  %v3774 = vpack.c.b16 %v3754, %v3753
  %v3775 = vpack.c.b16 %v3756, %v3755
  %v3776 = vpack.c.b16 %v3758, %v3757
  %v3777 = vpack.c.b16 %v3760, %v3759
  %v3778 = vpack.c.b16 %v3762, %v3761
  %3795 = vmatpush.bf16.msra.mxu0 %v3770
  %3796 = vmatpush.bf16.msra.mxu0 %v3769
  %3797 = vmatpush.bf16.msra.mxu0 %v3768
  %3798 = vmatpush.bf16.msra.mxu0 %v3767
  %3799 = vmatpush.bf16.msra.mxu0 %v3766
  %3800 = vmatpush.bf16.msra.mxu0 %v3765
  %3801 = vmatpush.bf16.msra.mxu0 %v3764
  %3802 = vmatpush.bf16.msra.mxu0 %v3763
  %3803 = vmatmul.bf16.gmra.mxu0 %v3663
  %v3804 = vpop.f32.mrf.mxu0
  %v3805 = vadd.f32 %v3698, %v3804
  %v3806 = vpop.f32.mrf.mxu0
  %v3807 = vadd.f32 %v3698, %v3806
  %3808 = vdwg.mxu0
  %3809 = vmatpush.bf16.msra.mxu0 %v3778
  %3810 = vmatpush.bf16.msra.mxu0 %v3777
  %3811 = vmatpush.bf16.msra.mxu0 %v3776
  %3812 = vmatpush.bf16.msra.mxu0 %v3775
  %3813 = vmatpush.bf16.msra.mxu0 %v3774
  %3814 = vmatpush.bf16.msra.mxu0 %v3773
  %3815 = vmatpush.bf16.msra.mxu0 %v3772
  %3816 = vmatpush.bf16.msra.mxu0 %v3771
  %3817 = vmatmul.bf16.gmra.mxu0 %v3664
  %v3818 = vpop.f32.mrf.mxu0
  %v3819 = vadd.f32 %v3805, %v3818
  %v3820 = vpop.f32.mrf.mxu0
  %v3821 = vadd.f32 %v3807, %v3820
  %3822 = vdwg.mxu0
  %v3823 = vadd.f32 %v3413, %v3819
  %v3824 = vadd.f32 %v3414, %v3821
  %v3825 = vsel %vm45, %v3823, 0.0
  %3826 = vadd.xlane.f32.xlu0 %v3825
  %v3827 = vpop.xlane.xlu0 %3826
  %v3828 = vsel %vm45, %v3824, 0.0
  %3829 = vadd.xlane.f32.xlu0 %v3828
  %v3830 = vpop.xlane.xlu0 %3829
  %v3831 = vmul.f32 %v3827, %v58
  %v3832 = vmul.f32 %v3830, %v58
  %v3833 = vsub.f32 %v3823, %v3831
  %v3834 = vsub.f32 %v3824, %v3832
  %v3835 = vmul.f32 %v3833, %v3833
  %v3836 = vmul.f32 %v3834, %v3834
  %v3837 = vsel %vm45, %v3835, 0.0
  %3838 = vadd.xlane.f32.xlu0 %v3837
  %v3839 = vpop.xlane.xlu0 %3838
  %v3840 = vsel %vm45, %v3836, 0.0
  %3841 = vadd.xlane.f32.xlu0 %v3840
  %v3842 = vpop.xlane.xlu0 %3841
  %v3843 = vmul.f32 %v3839, %v58
  %v3844 = vmul.f32 %v3842, %v58
  %v3845 = vadd.f32 %v3843, 1e-12
  %v3846 = vadd.f32 %v3844, 1e-12
  %v3847 = vrsqrt.pop %v3845
  %v3848 = vmul.f32 %v3847, %v3845
  %v3849 = vmul.f32 %v3848, %v3847
  %v3850 = vmul.f32 0.5, %v3849
  %v3851 = vsub.f32 1.5, %v3850
  %v3852 = vmul.f32 %v3847, %v3851
  %vm3853 = vweird.f32 %v3845
  %vm3854 = vweird.f32 %v3847
  %vm3855 = vmor %vm3853, %vm3854
  %v3856 = vsel %vm3855, %v3847, %v3852
  %v3857 = vrsqrt.pop %v3846
  %v3858 = vmul.f32 %v3857, %v3846
  %v3859 = vmul.f32 %v3858, %v3857
  %v3860 = vmul.f32 0.5, %v3859
  %v3861 = vsub.f32 1.5, %v3860
  %v3862 = vmul.f32 %v3857, %v3861
  %vm3863 = vweird.f32 %v3846
  %vm3864 = vweird.f32 %v3857
  %vm3865 = vmor %vm3863, %vm3864
  %v3866 = vsel %vm3865, %v3857, %v3862
  %v3867 = vmul.f32 %v3833, %v3856
  %v3868 = vmul.f32 %v3834, %v3866
  %v3869 = vperm.slane %v1993, 7
  %v3870 = vmul.f32 %v3867, %v3869
  %v3871 = vmul.f32 %v3868, %v3869
  %v3872 = vperm.slane %v1994, 0
  %v3873 = vadd.f32 %v3870, %v3872
  %v3874 = vadd.f32 %v3871, %v3872
  %s3875 = scalar_lea.vmem %s6, 32
  %v3876 = vld [vmem:[%s3875] sm:$0xff]
  %v3877 = vld [vmem:[%s3875 + $0x8] sm:$0x1]
  %v3878 = vpack.c.bf16 %v3874, %v3873
  %s3879 = scalar_lea.vmem %s2, 128
  %v3880 = vld [vmem:[%s3879] sm:$0xff]
  %v3881 = vld [vmem:[%s3879 + $0x8] sm:$0xff]
  %v3882 = vld [vmem:[%s3879 + $0x10] sm:$0xff]
  %v3883 = vld [vmem:[%s3879 + $0x18] sm:$0xff]
  %v3884 = vld [vmem:[%s3879 + $0x20] sm:$0xff]
  %v3885 = vld [vmem:[%s3879 + $0x28] sm:$0xff]
  %v3886 = vld [vmem:[%s3879 + $0x30] sm:$0xff]
  %v3887 = vld [vmem:[%s3879 + $0x38] sm:$0xff]
  %v3896 = vunpack.c.l.b16 %v3880
  %v3897 = vunpack.c.h.b16 %v3880
  %v3898 = vunpack.c.l.b16 %v3881
  %v3899 = vunpack.c.h.b16 %v3881
  %v3900 = vunpack.c.l.b16 %v3882
  %v3901 = vunpack.c.h.b16 %v3882
  %v3902 = vunpack.c.l.b16 %v3883
  %v3903 = vunpack.c.h.b16 %v3883
  %v3904 = vunpack.c.l.b16 %v3884
  %v3905 = vunpack.c.h.b16 %v3884
  %v3906 = vunpack.c.l.b16 %v3885
  %v3907 = vunpack.c.h.b16 %v3885
  %v3908 = vunpack.c.l.b16 %v3886
  %v3909 = vunpack.c.h.b16 %v3886
  %v3910 = vunpack.c.l.b16 %v3887
  %v3911 = vunpack.c.h.b16 %v3887
  %v3912 = vpack.c.b16 %v3898, %v3896
  %v3913 = vpack.c.b16 %v3899, %v3897
  %v3914 = vpack.c.b16 %v3902, %v3900
  %v3915 = vpack.c.b16 %v3903, %v3901
  %v3916 = vpack.c.b16 %v3906, %v3904
  %v3917 = vpack.c.b16 %v3907, %v3905
  %v3918 = vpack.c.b16 %v3910, %v3908
  %v3919 = vpack.c.b16 %v3911, %v3909
  %v3929 = vsel %vm45, %v3878, 0
  %3931 = vmatpush.bf16.msra.mxu0 0
  %3932 = vmatpush.bf16.msra.mxu0 0
  %3933 = vmatpush.bf16.msra.mxu0 0
  %3934 = vmatpush.bf16.msra.mxu0 0
  %3935 = vmatpush.bf16.msra.mxu0 %v3918
  %3936 = vmatpush.bf16.msra.mxu0 %v3916
  %3937 = vmatpush.bf16.msra.mxu0 %v3914
  %3938 = vmatpush.bf16.msra.mxu0 %v3912
  %3939 = vmatmul.bf16.gmra.mxu0 %v3929
  %v3940 = vpop.f32.mrf.mxu0
  %v3941 = vadd.f32 0.0, %v3940
  %v3942 = vpop.f32.mrf.mxu0
  %v3943 = vadd.f32 0.0, %v3942
  %3944 = vdwg.mxu0
  %3945 = vmatpush.bf16.msra.mxu0 0
  %3946 = vmatpush.bf16.msra.mxu0 0
  %3947 = vmatpush.bf16.msra.mxu0 0
  %3948 = vmatpush.bf16.msra.mxu0 0
  %3949 = vmatpush.bf16.msra.mxu0 %v3919
  %3950 = vmatpush.bf16.msra.mxu0 %v3917
  %3951 = vmatpush.bf16.msra.mxu0 %v3915
  %3952 = vmatpush.bf16.msra.mxu0 %v3913
  %3953 = vmatmul.bf16.gmra.mxu0 %v3929
  %v3954 = vpop.f32.mrf.mxu0
  %v3955 = vadd.f32 0.0, %v3954
  %v3956 = vpop.f32.mrf.mxu0
  %v3957 = vadd.f32 0.0, %v3956
  %3958 = vdwg.mxu0
  %v3959 = vperm.slane %v3876, 0
  %v3960 = vadd.f32 %v3941, %v3959
  %v3961 = vadd.f32 %v3943, %v3959
  %v3962 = vperm.slane %v3876, 1
  %3964 = vrot.lane.b32.xlu0 %v3962, 64
  %v3965 = vpop.permute.xlu0 %3964
  %v3967 = vadd.f32 %v3941, %v3965
  %v3968 = vadd.f32 %v3943, %v3965
  %v3969 = vperm.slane %v3876, 2
  %v3970 = vadd.f32 %v3955, %v3969
  %v3971 = vadd.f32 %v3957, %v3969
  %v3972 = vpack.c.bf16 %v3960, %v3960
  %v3973 = vpack.c.bf16 %v3961, %v3961
  %v3974 = vpack.c.bf16 %v3967, %v3967
  %v3975 = vpack.c.bf16 %v3968, %v3968
  %v3977 = vunpack.c.l.b16 %v3974
  %v3978 = vpack.c.b16 %v3977, %v3977
  %3979 = vrot.lane.b32.xlu0 %v3978, 64
  %v3980 = vpop.permute.xlu0 %3979
  %v3982 = vsel %vm207, %v3972, 0
  %v3985 = vsel %vm207, %v3980, 0
  %3987 = vmatpush.bf16.xpose.msra.mxu0 0
  %3988 = vmatpush.bf16.xpose.msra.mxu0 0
  %3989 = vmatpush.bf16.xpose.msra.mxu0 0
  %3990 = vmatpush.bf16.xpose.msra.mxu0 0
  %3991 = vmatpush.bf16.xpose.msra.mxu0 0
  %3992 = vmatpush.bf16.xpose.msra.mxu0 0
  %3993 = vmatpush.bf16.xpose.msra.mxu0 0
  %3994 = vmatpush.bf16.xpose.msra.mxu0 %v3985
  %3995 = vmatmul.bf16.gmra.mxu0 %v3982
  %v3996 = vpop.f32.mrf.mxu0
  %v3997 = vadd.f32 0.0, %v3996
  %v3998 = vpop.f32.mrf.mxu0
  %3999 = vdwg.mxu0
  %v4001 = vunpack.c.l.b16 %v3975
  %v4002 = vpack.c.b16 %v4001, %v4001
  %4003 = vrot.lane.b32.xlu0 %v4002, 64
  %v4004 = vpop.permute.xlu0 %4003
  %v4006 = vsel %vm207, %v3973, 0
  %v4009 = vsel %vm207, %v4004, 0
  %4011 = vmatpush.bf16.xpose.msra.mxu0 0
  %4012 = vmatpush.bf16.xpose.msra.mxu0 0
  %4013 = vmatpush.bf16.xpose.msra.mxu0 0
  %4014 = vmatpush.bf16.xpose.msra.mxu0 0
  %4015 = vmatpush.bf16.xpose.msra.mxu0 0
  %4016 = vmatpush.bf16.xpose.msra.mxu0 0
  %4017 = vmatpush.bf16.xpose.msra.mxu0 0
  %4018 = vmatpush.bf16.xpose.msra.mxu0 %v4009
  %4019 = vmatmul.bf16.gmra.mxu0 %v4006
  %v4020 = vpop.f32.mrf.mxu0
  %v4021 = vadd.f32 0.0, %v4020
  %v4022 = vpop.f32.mrf.mxu0
  %4023 = vdwg.mxu0
  %v4024 = vmul.f32 %v3997, 0.35355338
  %v4025 = vmul.f32 %v4021, 0.35355338
  %v4026 = vadd.f32 %v4024, %v253
  %v4027 = vadd.f32 %v4025, %v254
  %v4028 = vsel %vm207, %v4026, -inf
  %4029 = vmax.xlane.f32.xlu0 %v4028
  %v4030 = vpop.xlane.xlu0 %4029
  %v4031 = vsel %vm207, %v4027, -inf
  %4032 = vmax.xlane.f32.xlu0 %v4031
  %v4033 = vpop.xlane.xlu0 %4032
  %v4034 = vsub.f32 %v4026, %v4030
  %v4035 = vsub.f32 %v4027, %v4033
  %v4036 = vmul.f32 %v4034, 1.442695
  %v4037 = vpow.pop %v4036
  %v4038 = vmul.f32 %v4035, 1.442695
  %v4039 = vpow.pop %v4038
  %v4040 = vsel %vm207, %v4037, 0.0
  %4041 = vadd.xlane.f32.xlu0 %v4040
  %v4042 = vpop.xlane.xlu0 %4041
  %v4043 = vsel %vm207, %v4039, 0.0
  %4044 = vadd.xlane.f32.xlu0 %v4043
  %v4045 = vpop.xlane.xlu0 %4044
  %v4046 = vrcp.pop %v4042
  %v4047 = vmul.f32 %v4042, %v4046
  %v4048 = vsub.f32 1.0, %v4047
  %v4049 = vmul.f32 %v4046, %v4048
  %v4050 = vadd.f32 %v4046, %v4049
  %vm4051 = vweird.f32 %v4042
  %vm4052 = vweird.f32 %v4046
  %vm4053 = vmor %vm4051, %vm4052
  %v4054 = vsel %vm4053, %v4046, %v4050
  %v4055 = vand.u32 2147483647, %v4042
  %vm4056 = vcmp.eq.f32.partialorder %v4055, 8.507059e+37
  %v4057 = vand.u32 %v4042, 2147483648
  %v4058 = vor.u32 1.1754944e-38, %v4057
  %v4059 = vsel %vm4056, %v4058, %v4054
  %v4060 = vmul.f32 %v4037, %v4059
  %v4061 = vrcp.pop %v4045
  %v4062 = vmul.f32 %v4045, %v4061
  %v4063 = vsub.f32 1.0, %v4062
  %v4064 = vmul.f32 %v4061, %v4063
  %v4065 = vadd.f32 %v4061, %v4064
  %vm4066 = vweird.f32 %v4045
  %vm4067 = vweird.f32 %v4061
  %vm4068 = vmor %vm4066, %vm4067
  %v4069 = vsel %vm4068, %v4061, %v4065
  %v4070 = vand.u32 2147483647, %v4045
  %vm4071 = vcmp.eq.f32.partialorder %v4070, 8.507059e+37
  %v4072 = vand.u32 %v4045, 2147483648
  %v4073 = vor.u32 1.1754944e-38, %v4072
  %v4074 = vsel %vm4071, %v4073, %v4069
  %v4075 = vmul.f32 %v4039, %v4074
  %v4076 = vpack.c.bf16 %v4060, %v4060
  %v4077 = vpack.c.bf16 %v4075, %v4075
  %v4078 = vpack.c.bf16 %v3970, %v3970
  %v4079 = vpack.c.bf16 %v3971, %v3971
  %v4081 = vsel %vm207, %v4076, 0
  %v4084 = vsel %vm314, %v4078, 0
  %4086 = vmatpush.bf16.msra.mxu0 0
  %4087 = vmatpush.bf16.msra.mxu0 0
  %4088 = vmatpush.bf16.msra.mxu0 0
  %4089 = vmatpush.bf16.msra.mxu0 0
  %4090 = vmatpush.bf16.msra.mxu0 0
  %4091 = vmatpush.bf16.msra.mxu0 0
  %4092 = vmatpush.bf16.msra.mxu0 0
  %4093 = vmatpush.bf16.msra.mxu0 %v4084
  %4094 = vmatmul.bf16.gmra.mxu0 %v4081
  %v4095 = vpop.f32.mrf.mxu0
  %v4096 = vadd.f32 0.0, %v4095
  %v4097 = vpop.f32.mrf.mxu0
  %4098 = vdwg.mxu0
  %v4100 = vsel %vm207, %v4077, 0
  %v4103 = vsel %vm314, %v4079, 0
  %4105 = vmatpush.bf16.msra.mxu0 0
  %4106 = vmatpush.bf16.msra.mxu0 0
  %4107 = vmatpush.bf16.msra.mxu0 0
  %4108 = vmatpush.bf16.msra.mxu0 0
  %4109 = vmatpush.bf16.msra.mxu0 0
  %4110 = vmatpush.bf16.msra.mxu0 0
  %4111 = vmatpush.bf16.msra.mxu0 0
  %4112 = vmatpush.bf16.msra.mxu0 %v4103
  %4113 = vmatmul.bf16.gmra.mxu0 %v4100
  %v4114 = vpop.f32.mrf.mxu0
  %v4115 = vadd.f32 0.0, %v4114
  %v4116 = vpop.f32.mrf.mxu0
  %4117 = vdwg.mxu0
  %v4119 = vunpack.c.l.b16 %v3972
  %v4120 = vpack.c.b16 %v4119, %v4119
  %4121 = vrot.lane.b32.xlu0 %v4120, 120
  %v4122 = vpop.permute.xlu0 %4121
  %4123 = vrot.lane.b32.xlu0 %v3978, 56
  %v4124 = vpop.permute.xlu0 %4123
  %v4126 = vsel %vm207, %v4122, 0
  %v4129 = vsel %vm207, %v4124, 0
  %4131 = vmatpush.bf16.xpose.msra.mxu0 0
  %4132 = vmatpush.bf16.xpose.msra.mxu0 0
  %4133 = vmatpush.bf16.xpose.msra.mxu0 0
  %4134 = vmatpush.bf16.xpose.msra.mxu0 0
  %4135 = vmatpush.bf16.xpose.msra.mxu0 0
  %4136 = vmatpush.bf16.xpose.msra.mxu0 0
  %4137 = vmatpush.bf16.xpose.msra.mxu0 0
  %4138 = vmatpush.bf16.xpose.msra.mxu0 %v4129
  %4139 = vmatmul.bf16.gmra.mxu0 %v4126
  %v4140 = vpop.f32.mrf.mxu0
  %v4141 = vadd.f32 0.0, %v4140
  %v4142 = vpop.f32.mrf.mxu0
  %4143 = vdwg.mxu0
  %v4145 = vunpack.c.l.b16 %v3973
  %v4146 = vpack.c.b16 %v4145, %v4145
  %4147 = vrot.lane.b32.xlu0 %v4146, 120
  %v4148 = vpop.permute.xlu0 %4147
  %4149 = vrot.lane.b32.xlu0 %v4002, 56
  %v4150 = vpop.permute.xlu0 %4149
  %v4152 = vsel %vm207, %v4148, 0
  %v4155 = vsel %vm207, %v4150, 0
  %4157 = vmatpush.bf16.xpose.msra.mxu0 0
  %4158 = vmatpush.bf16.xpose.msra.mxu0 0
  %4159 = vmatpush.bf16.xpose.msra.mxu0 0
  %4160 = vmatpush.bf16.xpose.msra.mxu0 0
  %4161 = vmatpush.bf16.xpose.msra.mxu0 0
  %4162 = vmatpush.bf16.xpose.msra.mxu0 0
  %4163 = vmatpush.bf16.xpose.msra.mxu0 0
  %4164 = vmatpush.bf16.xpose.msra.mxu0 %v4155
  %4165 = vmatmul.bf16.gmra.mxu0 %v4152
  %v4166 = vpop.f32.mrf.mxu0
  %v4167 = vadd.f32 0.0, %v4166
  %v4168 = vpop.f32.mrf.mxu0
  %4169 = vdwg.mxu0
  %v4170 = vmul.f32 %v4141, 0.35355338
  %v4171 = vmul.f32 %v4167, 0.35355338
  %v4172 = vadd.f32 %v4170, %v253
  %v4173 = vadd.f32 %v4171, %v254
  %v4174 = vsel %vm207, %v4172, -inf
  %4175 = vmax.xlane.f32.xlu0 %v4174
  %v4176 = vpop.xlane.xlu0 %4175
  %v4177 = vsel %vm207, %v4173, -inf
  %4178 = vmax.xlane.f32.xlu0 %v4177
  %v4179 = vpop.xlane.xlu0 %4178
  %v4180 = vsub.f32 %v4172, %v4176
  %v4181 = vsub.f32 %v4173, %v4179
  %v4182 = vmul.f32 %v4180, 1.442695
  %v4183 = vpow.pop %v4182
  %v4184 = vmul.f32 %v4181, 1.442695
  %v4185 = vpow.pop %v4184
  %v4186 = vsel %vm207, %v4183, 0.0
  %4187 = vadd.xlane.f32.xlu0 %v4186
  %v4188 = vpop.xlane.xlu0 %4187
  %v4189 = vsel %vm207, %v4185, 0.0
  %4190 = vadd.xlane.f32.xlu0 %v4189
  %v4191 = vpop.xlane.xlu0 %4190
  %v4192 = vrcp.pop %v4188
  %v4193 = vmul.f32 %v4188, %v4192
  %v4194 = vsub.f32 1.0, %v4193
  %v4195 = vmul.f32 %v4192, %v4194
  %v4196 = vadd.f32 %v4192, %v4195
  %vm4197 = vweird.f32 %v4188
  %vm4198 = vweird.f32 %v4192
  %vm4199 = vmor %vm4197, %vm4198
  %v4200 = vsel %vm4199, %v4192, %v4196
  %v4201 = vand.u32 2147483647, %v4188
  %vm4202 = vcmp.eq.f32.partialorder %v4201, 8.507059e+37
  %v4203 = vand.u32 %v4188, 2147483648
  %v4204 = vor.u32 1.1754944e-38, %v4203
  %v4205 = vsel %vm4202, %v4204, %v4200
  %v4206 = vmul.f32 %v4183, %v4205
  %v4207 = vrcp.pop %v4191
  %v4208 = vmul.f32 %v4191, %v4207
  %v4209 = vsub.f32 1.0, %v4208
  %v4210 = vmul.f32 %v4207, %v4209
  %v4211 = vadd.f32 %v4207, %v4210
  %vm4212 = vweird.f32 %v4191
  %vm4213 = vweird.f32 %v4207
  %vm4214 = vmor %vm4212, %vm4213
  %v4215 = vsel %vm4214, %v4207, %v4211
  %v4216 = vand.u32 2147483647, %v4191
  %vm4217 = vcmp.eq.f32.partialorder %v4216, 8.507059e+37
  %v4218 = vand.u32 %v4191, 2147483648
  %v4219 = vor.u32 1.1754944e-38, %v4218
  %v4220 = vsel %vm4217, %v4219, %v4215
  %v4221 = vmul.f32 %v4185, %v4220
  %v4222 = vpack.c.bf16 %v4206, %v4206
  %v4223 = vpack.c.bf16 %v4221, %v4221
  %v4225 = vunpack.c.l.b16 %v4078
  %v4226 = vpack.c.b16 %v4225, %v4225
  %4227 = vrot.lane.b32.xlu0 %v4226, 120
  %v4228 = vpop.permute.xlu0 %4227
  %v4230 = vsel %vm207, %v4222, 0
  %v4233 = vsel %vm314, %v4228, 0
  %4235 = vmatpush.bf16.msra.mxu0 0
  %4236 = vmatpush.bf16.msra.mxu0 0
  %4237 = vmatpush.bf16.msra.mxu0 0
  %4238 = vmatpush.bf16.msra.mxu0 0
  %4239 = vmatpush.bf16.msra.mxu0 0
  %4240 = vmatpush.bf16.msra.mxu0 0
  %4241 = vmatpush.bf16.msra.mxu0 0
  %4242 = vmatpush.bf16.msra.mxu0 %v4233
  %4243 = vmatmul.bf16.gmra.mxu0 %v4230
  %v4244 = vpop.f32.mrf.mxu0
  %v4245 = vadd.f32 0.0, %v4244
  %v4246 = vpop.f32.mrf.mxu0
  %4247 = vdwg.mxu0
  %v4249 = vunpack.c.l.b16 %v4079
  %v4250 = vpack.c.b16 %v4249, %v4249
  %4251 = vrot.lane.b32.xlu0 %v4250, 120
  %v4252 = vpop.permute.xlu0 %4251
  %v4254 = vsel %vm207, %v4223, 0
  %v4257 = vsel %vm314, %v4252, 0
  %4259 = vmatpush.bf16.msra.mxu0 0
  %4260 = vmatpush.bf16.msra.mxu0 0
  %4261 = vmatpush.bf16.msra.mxu0 0
  %4262 = vmatpush.bf16.msra.mxu0 0
  %4263 = vmatpush.bf16.msra.mxu0 0
  %4264 = vmatpush.bf16.msra.mxu0 0
  %4265 = vmatpush.bf16.msra.mxu0 0
  %4266 = vmatpush.bf16.msra.mxu0 %v4257
  %4267 = vmatmul.bf16.gmra.mxu0 %v4254
  %v4268 = vpop.f32.mrf.mxu0
  %v4269 = vadd.f32 0.0, %v4268
  %v4270 = vpop.f32.mrf.mxu0
  %4271 = vdwg.mxu0
  %4272 = vrot.lane.b32.xlu0 %v4120, 112
  %v4273 = vpop.permute.xlu0 %4272
  %4274 = vrot.lane.b32.xlu0 %v3978, 48
  %v4275 = vpop.permute.xlu0 %4274
  %v4277 = vsel %vm207, %v4273, 0
  %v4280 = vsel %vm207, %v4275, 0
  %4282 = vmatpush.bf16.xpose.msra.mxu0 0
  %4283 = vmatpush.bf16.xpose.msra.mxu0 0
  %4284 = vmatpush.bf16.xpose.msra.mxu0 0
  %4285 = vmatpush.bf16.xpose.msra.mxu0 0
  %4286 = vmatpush.bf16.xpose.msra.mxu0 0
  %4287 = vmatpush.bf16.xpose.msra.mxu0 0
  %4288 = vmatpush.bf16.xpose.msra.mxu0 0
  %4289 = vmatpush.bf16.xpose.msra.mxu0 %v4280
  %4290 = vmatmul.bf16.gmra.mxu0 %v4277
  %v4291 = vpop.f32.mrf.mxu0
  %v4292 = vadd.f32 0.0, %v4291
  %v4293 = vpop.f32.mrf.mxu0
  %4294 = vdwg.mxu0
  %4295 = vrot.lane.b32.xlu0 %v4146, 112
  %v4296 = vpop.permute.xlu0 %4295
  %4297 = vrot.lane.b32.xlu0 %v4002, 48
  %v4298 = vpop.permute.xlu0 %4297
  %v4300 = vsel %vm207, %v4296, 0
  %v4303 = vsel %vm207, %v4298, 0
  %4305 = vmatpush.bf16.xpose.msra.mxu0 0
  %4306 = vmatpush.bf16.xpose.msra.mxu0 0
  %4307 = vmatpush.bf16.xpose.msra.mxu0 0
  %4308 = vmatpush.bf16.xpose.msra.mxu0 0
  %4309 = vmatpush.bf16.xpose.msra.mxu0 0
  %4310 = vmatpush.bf16.xpose.msra.mxu0 0
  %4311 = vmatpush.bf16.xpose.msra.mxu0 0
  %4312 = vmatpush.bf16.xpose.msra.mxu0 %v4303
  %4313 = vmatmul.bf16.gmra.mxu0 %v4300
  %v4314 = vpop.f32.mrf.mxu0
  %v4315 = vadd.f32 0.0, %v4314
  %v4316 = vpop.f32.mrf.mxu0
  %4317 = vdwg.mxu0
  %v4318 = vmul.f32 %v4292, 0.35355338
  %v4319 = vmul.f32 %v4315, 0.35355338
  %v4320 = vadd.f32 %v4318, %v253
  %v4321 = vadd.f32 %v4319, %v254
  %v4322 = vsel %vm207, %v4320, -inf
  %4323 = vmax.xlane.f32.xlu0 %v4322
  %v4324 = vpop.xlane.xlu0 %4323
  %v4325 = vsel %vm207, %v4321, -inf
  %4326 = vmax.xlane.f32.xlu0 %v4325
  %v4327 = vpop.xlane.xlu0 %4326
  %v4328 = vsub.f32 %v4320, %v4324
  %v4329 = vsub.f32 %v4321, %v4327
  %v4330 = vmul.f32 %v4328, 1.442695
  %v4331 = vpow.pop %v4330
  %v4332 = vmul.f32 %v4329, 1.442695
  %v4333 = vpow.pop %v4332
  %v4334 = vsel %vm207, %v4331, 0.0
  %4335 = vadd.xlane.f32.xlu0 %v4334
  %v4336 = vpop.xlane.xlu0 %4335
  %v4337 = vsel %vm207, %v4333, 0.0
  %4338 = vadd.xlane.f32.xlu0 %v4337
  %v4339 = vpop.xlane.xlu0 %4338
  %v4340 = vrcp.pop %v4336
  %v4341 = vmul.f32 %v4336, %v4340
  %v4342 = vsub.f32 1.0, %v4341
  %v4343 = vmul.f32 %v4340, %v4342
  %v4344 = vadd.f32 %v4340, %v4343
  %vm4345 = vweird.f32 %v4336
  %vm4346 = vweird.f32 %v4340
  %vm4347 = vmor %vm4345, %vm4346
  %v4348 = vsel %vm4347, %v4340, %v4344
  %v4349 = vand.u32 2147483647, %v4336
  %vm4350 = vcmp.eq.f32.partialorder %v4349, 8.507059e+37
  %v4351 = vand.u32 %v4336, 2147483648
  %v4352 = vor.u32 1.1754944e-38, %v4351
  %v4353 = vsel %vm4350, %v4352, %v4348
  %v4354 = vmul.f32 %v4331, %v4353
  %v4355 = vrcp.pop %v4339
  %v4356 = vmul.f32 %v4339, %v4355
  %v4357 = vsub.f32 1.0, %v4356
  %v4358 = vmul.f32 %v4355, %v4357
  %v4359 = vadd.f32 %v4355, %v4358
  %vm4360 = vweird.f32 %v4339
  %vm4361 = vweird.f32 %v4355
  %vm4362 = vmor %vm4360, %vm4361
  %v4363 = vsel %vm4362, %v4355, %v4359
  %v4364 = vand.u32 2147483647, %v4339
  %vm4365 = vcmp.eq.f32.partialorder %v4364, 8.507059e+37
  %v4366 = vand.u32 %v4339, 2147483648
  %v4367 = vor.u32 1.1754944e-38, %v4366
  %v4368 = vsel %vm4365, %v4367, %v4363
  %v4369 = vmul.f32 %v4333, %v4368
  %v4370 = vpack.c.bf16 %v4354, %v4354
  %v4371 = vpack.c.bf16 %v4369, %v4369
  %4372 = vrot.lane.b32.xlu0 %v4226, 112
  %v4373 = vpop.permute.xlu0 %4372
  %v4375 = vsel %vm207, %v4370, 0
  %v4378 = vsel %vm314, %v4373, 0
  %4380 = vmatpush.bf16.msra.mxu0 0
  %4381 = vmatpush.bf16.msra.mxu0 0
  %4382 = vmatpush.bf16.msra.mxu0 0
  %4383 = vmatpush.bf16.msra.mxu0 0
  %4384 = vmatpush.bf16.msra.mxu0 0
  %4385 = vmatpush.bf16.msra.mxu0 0
  %4386 = vmatpush.bf16.msra.mxu0 0
  %4387 = vmatpush.bf16.msra.mxu0 %v4378
  %4388 = vmatmul.bf16.gmra.mxu0 %v4375
  %v4389 = vpop.f32.mrf.mxu0
  %v4390 = vadd.f32 0.0, %v4389
  %v4391 = vpop.f32.mrf.mxu0
  %4392 = vdwg.mxu0
  %4393 = vrot.lane.b32.xlu0 %v4250, 112
  %v4394 = vpop.permute.xlu0 %4393
  %v4396 = vsel %vm207, %v4371, 0
  %v4399 = vsel %vm314, %v4394, 0
  %4401 = vmatpush.bf16.msra.mxu0 0
  %4402 = vmatpush.bf16.msra.mxu0 0
  %4403 = vmatpush.bf16.msra.mxu0 0
  %4404 = vmatpush.bf16.msra.mxu0 0
  %4405 = vmatpush.bf16.msra.mxu0 0
  %4406 = vmatpush.bf16.msra.mxu0 0
  %4407 = vmatpush.bf16.msra.mxu0 0
  %4408 = vmatpush.bf16.msra.mxu0 %v4399
  %4409 = vmatmul.bf16.gmra.mxu0 %v4396
  %v4410 = vpop.f32.mrf.mxu0
  %v4411 = vadd.f32 0.0, %v4410
  %v4412 = vpop.f32.mrf.mxu0
  %4413 = vdwg.mxu0
  %4414 = vrot.lane.b32.xlu0 %v4120, 104
  %v4415 = vpop.permute.xlu0 %4414
  %4416 = vrot.lane.b32.xlu0 %v3978, 40
  %v4417 = vpop.permute.xlu0 %4416
  %v4419 = vsel %vm207, %v4415, 0
  %v4422 = vsel %vm207, %v4417, 0
  %4424 = vmatpush.bf16.xpose.msra.mxu0 0
  %4425 = vmatpush.bf16.xpose.msra.mxu0 0
  %4426 = vmatpush.bf16.xpose.msra.mxu0 0
  %4427 = vmatpush.bf16.xpose.msra.mxu0 0
  %4428 = vmatpush.bf16.xpose.msra.mxu0 0
  %4429 = vmatpush.bf16.xpose.msra.mxu0 0
  %4430 = vmatpush.bf16.xpose.msra.mxu0 0
  %4431 = vmatpush.bf16.xpose.msra.mxu0 %v4422
  %4432 = vmatmul.bf16.gmra.mxu0 %v4419
  %v4433 = vpop.f32.mrf.mxu0
  %v4434 = vadd.f32 0.0, %v4433
  %v4435 = vpop.f32.mrf.mxu0
  %4436 = vdwg.mxu0
  %4437 = vrot.lane.b32.xlu0 %v4146, 104
  %v4438 = vpop.permute.xlu0 %4437
  %4439 = vrot.lane.b32.xlu0 %v4002, 40
  %v4440 = vpop.permute.xlu0 %4439
  %v4442 = vsel %vm207, %v4438, 0
  %v4445 = vsel %vm207, %v4440, 0
  %4447 = vmatpush.bf16.xpose.msra.mxu0 0
  %4448 = vmatpush.bf16.xpose.msra.mxu0 0
  %4449 = vmatpush.bf16.xpose.msra.mxu0 0
  %4450 = vmatpush.bf16.xpose.msra.mxu0 0
  %4451 = vmatpush.bf16.xpose.msra.mxu0 0
  %4452 = vmatpush.bf16.xpose.msra.mxu0 0
  %4453 = vmatpush.bf16.xpose.msra.mxu0 0
  %4454 = vmatpush.bf16.xpose.msra.mxu0 %v4445
  %4455 = vmatmul.bf16.gmra.mxu0 %v4442
  %v4456 = vpop.f32.mrf.mxu0
  %v4457 = vadd.f32 0.0, %v4456
  %v4458 = vpop.f32.mrf.mxu0
  %4459 = vdwg.mxu0
  %v4460 = vmul.f32 %v4434, 0.35355338
  %v4461 = vmul.f32 %v4457, 0.35355338
  %v4462 = vadd.f32 %v4460, %v253
  %v4463 = vadd.f32 %v4461, %v254
  %v4464 = vsel %vm207, %v4462, -inf
  %4465 = vmax.xlane.f32.xlu0 %v4464
  %v4466 = vpop.xlane.xlu0 %4465
  %v4467 = vsel %vm207, %v4463, -inf
  %4468 = vmax.xlane.f32.xlu0 %v4467
  %v4469 = vpop.xlane.xlu0 %4468
  %v4470 = vsub.f32 %v4462, %v4466
  %v4471 = vsub.f32 %v4463, %v4469
  %v4472 = vmul.f32 %v4470, 1.442695
  %v4473 = vpow.pop %v4472
  %v4474 = vmul.f32 %v4471, 1.442695
  %v4475 = vpow.pop %v4474
  %v4476 = vsel %vm207, %v4473, 0.0
  %4477 = vadd.xlane.f32.xlu0 %v4476
  %v4478 = vpop.xlane.xlu0 %4477
  %v4479 = vsel %vm207, %v4475, 0.0
  %4480 = vadd.xlane.f32.xlu0 %v4479
  %v4481 = vpop.xlane.xlu0 %4480
  %v4482 = vrcp.pop %v4478
  %v4483 = vmul.f32 %v4478, %v4482
  %v4484 = vsub.f32 1.0, %v4483
  %v4485 = vmul.f32 %v4482, %v4484
  %v4486 = vadd.f32 %v4482, %v4485
  %vm4487 = vweird.f32 %v4478
  %vm4488 = vweird.f32 %v4482
  %vm4489 = vmor %vm4487, %vm4488
  %v4490 = vsel %vm4489, %v4482, %v4486
  %v4491 = vand.u32 2147483647, %v4478
  %vm4492 = vcmp.eq.f32.partialorder %v4491, 8.507059e+37
  %v4493 = vand.u32 %v4478, 2147483648
  %v4494 = vor.u32 1.1754944e-38, %v4493
  %v4495 = vsel %vm4492, %v4494, %v4490
  %v4496 = vmul.f32 %v4473, %v4495
  %v4497 = vrcp.pop %v4481
  %v4498 = vmul.f32 %v4481, %v4497
  %v4499 = vsub.f32 1.0, %v4498
  %v4500 = vmul.f32 %v4497, %v4499
  %v4501 = vadd.f32 %v4497, %v4500
  %vm4502 = vweird.f32 %v4481
  %vm4503 = vweird.f32 %v4497
  %vm4504 = vmor %vm4502, %vm4503
  %v4505 = vsel %vm4504, %v4497, %v4501
  %v4506 = vand.u32 2147483647, %v4481
  %vm4507 = vcmp.eq.f32.partialorder %v4506, 8.507059e+37
  %v4508 = vand.u32 %v4481, 2147483648
  %v4509 = vor.u32 1.1754944e-38, %v4508
  %v4510 = vsel %vm4507, %v4509, %v4505
  %v4511 = vmul.f32 %v4475, %v4510
  %v4512 = vpack.c.bf16 %v4496, %v4496
  %v4513 = vpack.c.bf16 %v4511, %v4511
  %4514 = vrot.lane.b32.xlu0 %v4226, 104
  %v4515 = vpop.permute.xlu0 %4514
  %v4517 = vsel %vm207, %v4512, 0
  %v4520 = vsel %vm314, %v4515, 0
  %4522 = vmatpush.bf16.msra.mxu0 0
  %4523 = vmatpush.bf16.msra.mxu0 0
  %4524 = vmatpush.bf16.msra.mxu0 0
  %4525 = vmatpush.bf16.msra.mxu0 0
  %4526 = vmatpush.bf16.msra.mxu0 0
  %4527 = vmatpush.bf16.msra.mxu0 0
  %4528 = vmatpush.bf16.msra.mxu0 0
  %4529 = vmatpush.bf16.msra.mxu0 %v4520
  %4530 = vmatmul.bf16.gmra.mxu0 %v4517
  %v4531 = vpop.f32.mrf.mxu0
  %v4532 = vadd.f32 0.0, %v4531
  %v4533 = vpop.f32.mrf.mxu0
  %4534 = vdwg.mxu0
  %4535 = vrot.lane.b32.xlu0 %v4250, 104
  %v4536 = vpop.permute.xlu0 %4535
  %v4538 = vsel %vm207, %v4513, 0
  %v4541 = vsel %vm314, %v4536, 0
  %4543 = vmatpush.bf16.msra.mxu0 0
  %4544 = vmatpush.bf16.msra.mxu0 0
  %4545 = vmatpush.bf16.msra.mxu0 0
  %4546 = vmatpush.bf16.msra.mxu0 0
  %4547 = vmatpush.bf16.msra.mxu0 0
  %4548 = vmatpush.bf16.msra.mxu0 0
  %4549 = vmatpush.bf16.msra.mxu0 0
  %4550 = vmatpush.bf16.msra.mxu0 %v4541
  %4551 = vmatmul.bf16.gmra.mxu0 %v4538
  %v4552 = vpop.f32.mrf.mxu0
  %v4553 = vadd.f32 0.0, %v4552
  %v4554 = vpop.f32.mrf.mxu0
  %4555 = vdwg.mxu0
  %4556 = vrot.lane.b32.xlu0 %v4120, 96
  %v4557 = vpop.permute.xlu0 %4556
  %4558 = vrot.lane.b32.xlu0 %v3978, 32
  %v4559 = vpop.permute.xlu0 %4558
  %v4561 = vsel %vm207, %v4557, 0
  %v4564 = vsel %vm207, %v4559, 0
  %4566 = vmatpush.bf16.xpose.msra.mxu0 0
  %4567 = vmatpush.bf16.xpose.msra.mxu0 0
  %4568 = vmatpush.bf16.xpose.msra.mxu0 0
  %4569 = vmatpush.bf16.xpose.msra.mxu0 0
  %4570 = vmatpush.bf16.xpose.msra.mxu0 0
  %4571 = vmatpush.bf16.xpose.msra.mxu0 0
  %4572 = vmatpush.bf16.xpose.msra.mxu0 0
  %4573 = vmatpush.bf16.xpose.msra.mxu0 %v4564
  %4574 = vmatmul.bf16.gmra.mxu0 %v4561
  %v4575 = vpop.f32.mrf.mxu0
  %v4576 = vadd.f32 0.0, %v4575
  %v4577 = vpop.f32.mrf.mxu0
  %4578 = vdwg.mxu0
  %4579 = vrot.lane.b32.xlu0 %v4146, 96
  %v4580 = vpop.permute.xlu0 %4579
  %4581 = vrot.lane.b32.xlu0 %v4002, 32
  %v4582 = vpop.permute.xlu0 %4581
  %v4584 = vsel %vm207, %v4580, 0
  %v4587 = vsel %vm207, %v4582, 0
  %4589 = vmatpush.bf16.xpose.msra.mxu0 0
  %4590 = vmatpush.bf16.xpose.msra.mxu0 0
  %4591 = vmatpush.bf16.xpose.msra.mxu0 0
  %4592 = vmatpush.bf16.xpose.msra.mxu0 0
  %4593 = vmatpush.bf16.xpose.msra.mxu0 0
  %4594 = vmatpush.bf16.xpose.msra.mxu0 0
  %4595 = vmatpush.bf16.xpose.msra.mxu0 0
  %4596 = vmatpush.bf16.xpose.msra.mxu0 %v4587
  %4597 = vmatmul.bf16.gmra.mxu0 %v4584
  %v4598 = vpop.f32.mrf.mxu0
  %v4599 = vadd.f32 0.0, %v4598
  %v4600 = vpop.f32.mrf.mxu0
  %4601 = vdwg.mxu0
  %v4602 = vmul.f32 %v4576, 0.35355338
  %v4603 = vmul.f32 %v4599, 0.35355338
  %v4604 = vadd.f32 %v4602, %v253
  %v4605 = vadd.f32 %v4603, %v254
  %v4606 = vsel %vm207, %v4604, -inf
  %4607 = vmax.xlane.f32.xlu0 %v4606
  %v4608 = vpop.xlane.xlu0 %4607
  %v4609 = vsel %vm207, %v4605, -inf
  %4610 = vmax.xlane.f32.xlu0 %v4609
  %v4611 = vpop.xlane.xlu0 %4610
  %v4612 = vsub.f32 %v4604, %v4608
  %v4613 = vsub.f32 %v4605, %v4611
  %v4614 = vmul.f32 %v4612, 1.442695
  %v4615 = vpow.pop %v4614
  %v4616 = vmul.f32 %v4613, 1.442695
  %v4617 = vpow.pop %v4616
  %v4618 = vsel %vm207, %v4615, 0.0
  %4619 = vadd.xlane.f32.xlu0 %v4618
  %v4620 = vpop.xlane.xlu0 %4619
  %v4621 = vsel %vm207, %v4617, 0.0
  %4622 = vadd.xlane.f32.xlu0 %v4621
  %v4623 = vpop.xlane.xlu0 %4622
  %v4624 = vrcp.pop %v4620
  %v4625 = vmul.f32 %v4620, %v4624
  %v4626 = vsub.f32 1.0, %v4625
  %v4627 = vmul.f32 %v4624, %v4626
  %v4628 = vadd.f32 %v4624, %v4627
  %vm4629 = vweird.f32 %v4620
  %vm4630 = vweird.f32 %v4624
  %vm4631 = vmor %vm4629, %vm4630
  %v4632 = vsel %vm4631, %v4624, %v4628
  %v4633 = vand.u32 2147483647, %v4620
  %vm4634 = vcmp.eq.f32.partialorder %v4633, 8.507059e+37
  %v4635 = vand.u32 %v4620, 2147483648
  %v4636 = vor.u32 1.1754944e-38, %v4635
  %v4637 = vsel %vm4634, %v4636, %v4632
  %v4638 = vmul.f32 %v4615, %v4637
  %v4639 = vrcp.pop %v4623
  %v4640 = vmul.f32 %v4623, %v4639
  %v4641 = vsub.f32 1.0, %v4640
  %v4642 = vmul.f32 %v4639, %v4641
  %v4643 = vadd.f32 %v4639, %v4642
  %vm4644 = vweird.f32 %v4623
  %vm4645 = vweird.f32 %v4639
  %vm4646 = vmor %vm4644, %vm4645
  %v4647 = vsel %vm4646, %v4639, %v4643
  %v4648 = vand.u32 2147483647, %v4623
  %vm4649 = vcmp.eq.f32.partialorder %v4648, 8.507059e+37
  %v4650 = vand.u32 %v4623, 2147483648
  %v4651 = vor.u32 1.1754944e-38, %v4650
  %v4652 = vsel %vm4649, %v4651, %v4647
  %v4653 = vmul.f32 %v4617, %v4652
  %v4654 = vpack.c.bf16 %v4638, %v4638
  %v4655 = vpack.c.bf16 %v4653, %v4653
  %4656 = vrot.lane.b32.xlu0 %v4226, 96
  %v4657 = vpop.permute.xlu0 %4656
  %v4659 = vsel %vm207, %v4654, 0
  %v4662 = vsel %vm314, %v4657, 0
  %4664 = vmatpush.bf16.msra.mxu0 0
  %4665 = vmatpush.bf16.msra.mxu0 0
  %4666 = vmatpush.bf16.msra.mxu0 0
  %4667 = vmatpush.bf16.msra.mxu0 0
  %4668 = vmatpush.bf16.msra.mxu0 0
  %4669 = vmatpush.bf16.msra.mxu0 0
  %4670 = vmatpush.bf16.msra.mxu0 0
  %4671 = vmatpush.bf16.msra.mxu0 %v4662
  %4672 = vmatmul.bf16.gmra.mxu0 %v4659
  %v4673 = vpop.f32.mrf.mxu0
  %v4674 = vadd.f32 0.0, %v4673
  %v4675 = vpop.f32.mrf.mxu0
  %4676 = vdwg.mxu0
  %4677 = vrot.lane.b32.xlu0 %v4250, 96
  %v4678 = vpop.permute.xlu0 %4677
  %v4680 = vsel %vm207, %v4655, 0
  %v4683 = vsel %vm314, %v4678, 0
  %4685 = vmatpush.bf16.msra.mxu0 0
  %4686 = vmatpush.bf16.msra.mxu0 0
  %4687 = vmatpush.bf16.msra.mxu0 0
  %4688 = vmatpush.bf16.msra.mxu0 0
  %4689 = vmatpush.bf16.msra.mxu0 0
  %4690 = vmatpush.bf16.msra.mxu0 0
  %4691 = vmatpush.bf16.msra.mxu0 0
  %4692 = vmatpush.bf16.msra.mxu0 %v4683
  %4693 = vmatmul.bf16.gmra.mxu0 %v4680
  %v4694 = vpop.f32.mrf.mxu0
  %v4695 = vadd.f32 0.0, %v4694
  %v4696 = vpop.f32.mrf.mxu0
  %4697 = vdwg.mxu0
  %4698 = vrot.lane.b32.xlu0 %v4120, 88
  %v4699 = vpop.permute.xlu0 %4698
  %4700 = vrot.lane.b32.xlu0 %v3978, 24
  %v4701 = vpop.permute.xlu0 %4700
  %v4703 = vsel %vm207, %v4699, 0
  %v4706 = vsel %vm207, %v4701, 0
  %4708 = vmatpush.bf16.xpose.msra.mxu0 0
  %4709 = vmatpush.bf16.xpose.msra.mxu0 0
  %4710 = vmatpush.bf16.xpose.msra.mxu0 0
  %4711 = vmatpush.bf16.xpose.msra.mxu0 0
  %4712 = vmatpush.bf16.xpose.msra.mxu0 0
  %4713 = vmatpush.bf16.xpose.msra.mxu0 0
  %4714 = vmatpush.bf16.xpose.msra.mxu0 0
  %4715 = vmatpush.bf16.xpose.msra.mxu0 %v4706
  %4716 = vmatmul.bf16.gmra.mxu0 %v4703
  %v4717 = vpop.f32.mrf.mxu0
  %v4718 = vadd.f32 0.0, %v4717
  %v4719 = vpop.f32.mrf.mxu0
  %4720 = vdwg.mxu0
  %4721 = vrot.lane.b32.xlu0 %v4146, 88
  %v4722 = vpop.permute.xlu0 %4721
  %4723 = vrot.lane.b32.xlu0 %v4002, 24
  %v4724 = vpop.permute.xlu0 %4723
  %v4726 = vsel %vm207, %v4722, 0
  %v4729 = vsel %vm207, %v4724, 0
  %4731 = vmatpush.bf16.xpose.msra.mxu0 0
  %4732 = vmatpush.bf16.xpose.msra.mxu0 0
  %4733 = vmatpush.bf16.xpose.msra.mxu0 0
  %4734 = vmatpush.bf16.xpose.msra.mxu0 0
  %4735 = vmatpush.bf16.xpose.msra.mxu0 0
  %4736 = vmatpush.bf16.xpose.msra.mxu0 0
  %4737 = vmatpush.bf16.xpose.msra.mxu0 0
  %4738 = vmatpush.bf16.xpose.msra.mxu0 %v4729
  %4739 = vmatmul.bf16.gmra.mxu0 %v4726
  %v4740 = vpop.f32.mrf.mxu0
  %v4741 = vadd.f32 0.0, %v4740
  %v4742 = vpop.f32.mrf.mxu0
  %4743 = vdwg.mxu0
  %v4744 = vmul.f32 %v4718, 0.35355338
  %v4745 = vmul.f32 %v4741, 0.35355338
  %v4746 = vadd.f32 %v4744, %v253
  %v4747 = vadd.f32 %v4745, %v254
  %v4748 = vsel %vm207, %v4746, -inf
  %4749 = vmax.xlane.f32.xlu0 %v4748
  %v4750 = vpop.xlane.xlu0 %4749
  %v4751 = vsel %vm207, %v4747, -inf
  %4752 = vmax.xlane.f32.xlu0 %v4751
  %v4753 = vpop.xlane.xlu0 %4752
  %v4754 = vsub.f32 %v4746, %v4750
  %v4755 = vsub.f32 %v4747, %v4753
  %v4756 = vmul.f32 %v4754, 1.442695
  %v4757 = vpow.pop %v4756
  %v4758 = vmul.f32 %v4755, 1.442695
  %v4759 = vpow.pop %v4758
  %v4760 = vsel %vm207, %v4757, 0.0
  %4761 = vadd.xlane.f32.xlu0 %v4760
  %v4762 = vpop.xlane.xlu0 %4761
  %v4763 = vsel %vm207, %v4759, 0.0
  %4764 = vadd.xlane.f32.xlu0 %v4763
  %v4765 = vpop.xlane.xlu0 %4764
  %v4766 = vrcp.pop %v4762
  %v4767 = vmul.f32 %v4762, %v4766
  %v4768 = vsub.f32 1.0, %v4767
  %v4769 = vmul.f32 %v4766, %v4768
  %v4770 = vadd.f32 %v4766, %v4769
  %vm4771 = vweird.f32 %v4762
  %vm4772 = vweird.f32 %v4766
  %vm4773 = vmor %vm4771, %vm4772
  %v4774 = vsel %vm4773, %v4766, %v4770
  %v4775 = vand.u32 2147483647, %v4762
  %vm4776 = vcmp.eq.f32.partialorder %v4775, 8.507059e+37
  %v4777 = vand.u32 %v4762, 2147483648
  %v4778 = vor.u32 1.1754944e-38, %v4777
  %v4779 = vsel %vm4776, %v4778, %v4774
  %v4780 = vmul.f32 %v4757, %v4779
  %v4781 = vrcp.pop %v4765
  %v4782 = vmul.f32 %v4765, %v4781
  %v4783 = vsub.f32 1.0, %v4782
  %v4784 = vmul.f32 %v4781, %v4783
  %v4785 = vadd.f32 %v4781, %v4784
  %vm4786 = vweird.f32 %v4765
  %vm4787 = vweird.f32 %v4781
  %vm4788 = vmor %vm4786, %vm4787
  %v4789 = vsel %vm4788, %v4781, %v4785
  %v4790 = vand.u32 2147483647, %v4765
  %vm4791 = vcmp.eq.f32.partialorder %v4790, 8.507059e+37
  %v4792 = vand.u32 %v4765, 2147483648
  %v4793 = vor.u32 1.1754944e-38, %v4792
  %v4794 = vsel %vm4791, %v4793, %v4789
  %v4795 = vmul.f32 %v4759, %v4794
  %v4796 = vpack.c.bf16 %v4780, %v4780
  %v4797 = vpack.c.bf16 %v4795, %v4795
  %4798 = vrot.lane.b32.xlu0 %v4226, 88
  %v4799 = vpop.permute.xlu0 %4798
  %v4801 = vsel %vm207, %v4796, 0
  %v4804 = vsel %vm314, %v4799, 0
  %4806 = vmatpush.bf16.msra.mxu0 0
  %4807 = vmatpush.bf16.msra.mxu0 0
  %4808 = vmatpush.bf16.msra.mxu0 0
  %4809 = vmatpush.bf16.msra.mxu0 0
  %4810 = vmatpush.bf16.msra.mxu0 0
  %4811 = vmatpush.bf16.msra.mxu0 0
  %4812 = vmatpush.bf16.msra.mxu0 0
  %4813 = vmatpush.bf16.msra.mxu0 %v4804
  %4814 = vmatmul.bf16.gmra.mxu0 %v4801
  %v4815 = vpop.f32.mrf.mxu0
  %v4816 = vadd.f32 0.0, %v4815
  %v4817 = vpop.f32.mrf.mxu0
  %4818 = vdwg.mxu0
  %4819 = vrot.lane.b32.xlu0 %v4250, 88
  %v4820 = vpop.permute.xlu0 %4819
  %v4822 = vsel %vm207, %v4797, 0
  %v4825 = vsel %vm314, %v4820, 0
  %4827 = vmatpush.bf16.msra.mxu0 0
  %4828 = vmatpush.bf16.msra.mxu0 0
  %4829 = vmatpush.bf16.msra.mxu0 0
  %4830 = vmatpush.bf16.msra.mxu0 0
  %4831 = vmatpush.bf16.msra.mxu0 0
  %4832 = vmatpush.bf16.msra.mxu0 0
  %4833 = vmatpush.bf16.msra.mxu0 0
  %4834 = vmatpush.bf16.msra.mxu0 %v4825
  %4835 = vmatmul.bf16.gmra.mxu0 %v4822
  %v4836 = vpop.f32.mrf.mxu0
  %v4837 = vadd.f32 0.0, %v4836
  %v4838 = vpop.f32.mrf.mxu0
  %4839 = vdwg.mxu0
  %4840 = vrot.lane.b32.xlu0 %v4120, 80
  %v4841 = vpop.permute.xlu0 %4840
  %4842 = vrot.lane.b32.xlu0 %v3978, 16
  %v4843 = vpop.permute.xlu0 %4842
  %v4845 = vsel %vm207, %v4841, 0
  %v4848 = vsel %vm207, %v4843, 0
  %4850 = vmatpush.bf16.xpose.msra.mxu0 0
  %4851 = vmatpush.bf16.xpose.msra.mxu0 0
  %4852 = vmatpush.bf16.xpose.msra.mxu0 0
  %4853 = vmatpush.bf16.xpose.msra.mxu0 0
  %4854 = vmatpush.bf16.xpose.msra.mxu0 0
  %4855 = vmatpush.bf16.xpose.msra.mxu0 0
  %4856 = vmatpush.bf16.xpose.msra.mxu0 0
  %4857 = vmatpush.bf16.xpose.msra.mxu0 %v4848
  %4858 = vmatmul.bf16.gmra.mxu0 %v4845
  %v4859 = vpop.f32.mrf.mxu0
  %v4860 = vadd.f32 0.0, %v4859
  %v4861 = vpop.f32.mrf.mxu0
  %4862 = vdwg.mxu0
  %4863 = vrot.lane.b32.xlu0 %v4146, 80
  %v4864 = vpop.permute.xlu0 %4863
  %4865 = vrot.lane.b32.xlu0 %v4002, 16
  %v4866 = vpop.permute.xlu0 %4865
  %v4868 = vsel %vm207, %v4864, 0
  %v4871 = vsel %vm207, %v4866, 0
  %4873 = vmatpush.bf16.xpose.msra.mxu0 0
  %4874 = vmatpush.bf16.xpose.msra.mxu0 0
  %4875 = vmatpush.bf16.xpose.msra.mxu0 0
  %4876 = vmatpush.bf16.xpose.msra.mxu0 0
  %4877 = vmatpush.bf16.xpose.msra.mxu0 0
  %4878 = vmatpush.bf16.xpose.msra.mxu0 0
  %4879 = vmatpush.bf16.xpose.msra.mxu0 0
  %4880 = vmatpush.bf16.xpose.msra.mxu0 %v4871
  %4881 = vmatmul.bf16.gmra.mxu0 %v4868
  %v4882 = vpop.f32.mrf.mxu0
  %v4883 = vadd.f32 0.0, %v4882
  %v4884 = vpop.f32.mrf.mxu0
  %4885 = vdwg.mxu0
  %v4886 = vmul.f32 %v4860, 0.35355338
  %v4887 = vmul.f32 %v4883, 0.35355338
  %v4888 = vadd.f32 %v4886, %v253
  %v4889 = vadd.f32 %v4887, %v254
  %v4890 = vsel %vm207, %v4888, -inf
  %4891 = vmax.xlane.f32.xlu0 %v4890
  %v4892 = vpop.xlane.xlu0 %4891
  %v4893 = vsel %vm207, %v4889, -inf
  %4894 = vmax.xlane.f32.xlu0 %v4893
  %v4895 = vpop.xlane.xlu0 %4894
  %v4896 = vsub.f32 %v4888, %v4892
  %v4897 = vsub.f32 %v4889, %v4895
  %v4898 = vmul.f32 %v4896, 1.442695
  %v4899 = vpow.pop %v4898
  %v4900 = vmul.f32 %v4897, 1.442695
  %v4901 = vpow.pop %v4900
  %v4902 = vsel %vm207, %v4899, 0.0
  %4903 = vadd.xlane.f32.xlu0 %v4902
  %v4904 = vpop.xlane.xlu0 %4903
  %v4905 = vsel %vm207, %v4901, 0.0
  %4906 = vadd.xlane.f32.xlu0 %v4905
  %v4907 = vpop.xlane.xlu0 %4906
  %v4908 = vrcp.pop %v4904
  %v4909 = vmul.f32 %v4904, %v4908
  %v4910 = vsub.f32 1.0, %v4909
  %v4911 = vmul.f32 %v4908, %v4910
  %v4912 = vadd.f32 %v4908, %v4911
  %vm4913 = vweird.f32 %v4904
  %vm4914 = vweird.f32 %v4908
  %vm4915 = vmor %vm4913, %vm4914
  %v4916 = vsel %vm4915, %v4908, %v4912
  %v4917 = vand.u32 2147483647, %v4904
  %vm4918 = vcmp.eq.f32.partialorder %v4917, 8.507059e+37
  %v4919 = vand.u32 %v4904, 2147483648
  %v4920 = vor.u32 1.1754944e-38, %v4919
  %v4921 = vsel %vm4918, %v4920, %v4916
  %v4922 = vmul.f32 %v4899, %v4921
  %v4923 = vrcp.pop %v4907
  %v4924 = vmul.f32 %v4907, %v4923
  %v4925 = vsub.f32 1.0, %v4924
  %v4926 = vmul.f32 %v4923, %v4925
  %v4927 = vadd.f32 %v4923, %v4926
  %vm4928 = vweird.f32 %v4907
  %vm4929 = vweird.f32 %v4923
  %vm4930 = vmor %vm4928, %vm4929
  %v4931 = vsel %vm4930, %v4923, %v4927
  %v4932 = vand.u32 2147483647, %v4907
  %vm4933 = vcmp.eq.f32.partialorder %v4932, 8.507059e+37
  %v4934 = vand.u32 %v4907, 2147483648
  %v4935 = vor.u32 1.1754944e-38, %v4934
  %v4936 = vsel %vm4933, %v4935, %v4931
  %v4937 = vmul.f32 %v4901, %v4936
  %v4938 = vpack.c.bf16 %v4922, %v4922
  %v4939 = vpack.c.bf16 %v4937, %v4937
  %4940 = vrot.lane.b32.xlu0 %v4226, 80
  %v4941 = vpop.permute.xlu0 %4940
  %v4943 = vsel %vm207, %v4938, 0
  %v4946 = vsel %vm314, %v4941, 0
  %4948 = vmatpush.bf16.msra.mxu0 0
  %4949 = vmatpush.bf16.msra.mxu0 0
  %4950 = vmatpush.bf16.msra.mxu0 0
  %4951 = vmatpush.bf16.msra.mxu0 0
  %4952 = vmatpush.bf16.msra.mxu0 0
  %4953 = vmatpush.bf16.msra.mxu0 0
  %4954 = vmatpush.bf16.msra.mxu0 0
  %4955 = vmatpush.bf16.msra.mxu0 %v4946
  %4956 = vmatmul.bf16.gmra.mxu0 %v4943
  %v4957 = vpop.f32.mrf.mxu0
  %v4958 = vadd.f32 0.0, %v4957
  %v4959 = vpop.f32.mrf.mxu0
  %4960 = vdwg.mxu0
  %4961 = vrot.lane.b32.xlu0 %v4250, 80
  %v4962 = vpop.permute.xlu0 %4961
  %v4964 = vsel %vm207, %v4939, 0
  %v4967 = vsel %vm314, %v4962, 0
  %4969 = vmatpush.bf16.msra.mxu0 0
  %4970 = vmatpush.bf16.msra.mxu0 0
  %4971 = vmatpush.bf16.msra.mxu0 0
  %4972 = vmatpush.bf16.msra.mxu0 0
  %4973 = vmatpush.bf16.msra.mxu0 0
  %4974 = vmatpush.bf16.msra.mxu0 0
  %4975 = vmatpush.bf16.msra.mxu0 0
  %4976 = vmatpush.bf16.msra.mxu0 %v4967
  %4977 = vmatmul.bf16.gmra.mxu0 %v4964
  %v4978 = vpop.f32.mrf.mxu0
  %v4979 = vadd.f32 0.0, %v4978
  %v4980 = vpop.f32.mrf.mxu0
  %4981 = vdwg.mxu0
  %4982 = vrot.lane.b32.xlu0 %v4120, 72
  %v4983 = vpop.permute.xlu0 %4982
  %4984 = vrot.lane.b32.xlu0 %v3978, 8
  %v4985 = vpop.permute.xlu0 %4984
  %v4987 = vsel %vm207, %v4983, 0
  %v4990 = vsel %vm207, %v4985, 0
  %4992 = vmatpush.bf16.xpose.msra.mxu0 0
  %4993 = vmatpush.bf16.xpose.msra.mxu0 0
  %4994 = vmatpush.bf16.xpose.msra.mxu0 0
  %4995 = vmatpush.bf16.xpose.msra.mxu0 0
  %4996 = vmatpush.bf16.xpose.msra.mxu0 0
  %4997 = vmatpush.bf16.xpose.msra.mxu0 0
  %4998 = vmatpush.bf16.xpose.msra.mxu0 0
  %4999 = vmatpush.bf16.xpose.msra.mxu0 %v4990
  %5000 = vmatmul.bf16.gmra.mxu0 %v4987
  %v5001 = vpop.f32.mrf.mxu0
  %v5002 = vadd.f32 0.0, %v5001
  %v5003 = vpop.f32.mrf.mxu0
  %5004 = vdwg.mxu0
  %5005 = vrot.lane.b32.xlu0 %v4146, 72
  %v5006 = vpop.permute.xlu0 %5005
  %5007 = vrot.lane.b32.xlu0 %v4002, 8
  %v5008 = vpop.permute.xlu0 %5007
  %v5010 = vsel %vm207, %v5006, 0
  %v5013 = vsel %vm207, %v5008, 0
  %5015 = vmatpush.bf16.xpose.msra.mxu0 0
  %5016 = vmatpush.bf16.xpose.msra.mxu0 0
  %5017 = vmatpush.bf16.xpose.msra.mxu0 0
  %5018 = vmatpush.bf16.xpose.msra.mxu0 0
  %5019 = vmatpush.bf16.xpose.msra.mxu0 0
  %5020 = vmatpush.bf16.xpose.msra.mxu0 0
  %5021 = vmatpush.bf16.xpose.msra.mxu0 0
  %5022 = vmatpush.bf16.xpose.msra.mxu0 %v5013
  %5023 = vmatmul.bf16.gmra.mxu0 %v5010
  %v5024 = vpop.f32.mrf.mxu0
  %v5025 = vadd.f32 0.0, %v5024
  %v5026 = vpop.f32.mrf.mxu0
  %5027 = vdwg.mxu0
  %v5028 = vmul.f32 %v5002, 0.35355338
  %v5029 = vmul.f32 %v5025, 0.35355338
  %v5030 = vadd.f32 %v5028, %v253
  %v5031 = vadd.f32 %v5029, %v254
  %v5032 = vsel %vm207, %v5030, -inf
  %5033 = vmax.xlane.f32.xlu0 %v5032
  %v5034 = vpop.xlane.xlu0 %5033
  %v5035 = vsel %vm207, %v5031, -inf
  %5036 = vmax.xlane.f32.xlu0 %v5035
  %v5037 = vpop.xlane.xlu0 %5036
  %v5038 = vsub.f32 %v5030, %v5034
  %v5039 = vsub.f32 %v5031, %v5037
  %v5040 = vmul.f32 %v5038, 1.442695
  %v5041 = vpow.pop %v5040
  %v5042 = vmul.f32 %v5039, 1.442695
  %v5043 = vpow.pop %v5042
  %v5044 = vsel %vm207, %v5041, 0.0
  %5045 = vadd.xlane.f32.xlu0 %v5044
  %v5046 = vpop.xlane.xlu0 %5045
  %v5047 = vsel %vm207, %v5043, 0.0
  %5048 = vadd.xlane.f32.xlu0 %v5047
  %v5049 = vpop.xlane.xlu0 %5048
  %v5050 = vrcp.pop %v5046
  %v5051 = vmul.f32 %v5046, %v5050
  %v5052 = vsub.f32 1.0, %v5051
  %v5053 = vmul.f32 %v5050, %v5052
  %v5054 = vadd.f32 %v5050, %v5053
  %vm5055 = vweird.f32 %v5046
  %vm5056 = vweird.f32 %v5050
  %vm5057 = vmor %vm5055, %vm5056
  %v5058 = vsel %vm5057, %v5050, %v5054
  %v5059 = vand.u32 2147483647, %v5046
  %vm5060 = vcmp.eq.f32.partialorder %v5059, 8.507059e+37
  %v5061 = vand.u32 %v5046, 2147483648
  %v5062 = vor.u32 1.1754944e-38, %v5061
  %v5063 = vsel %vm5060, %v5062, %v5058
  %v5064 = vmul.f32 %v5041, %v5063
  %v5065 = vrcp.pop %v5049
  %v5066 = vmul.f32 %v5049, %v5065
  %v5067 = vsub.f32 1.0, %v5066
  %v5068 = vmul.f32 %v5065, %v5067
  %v5069 = vadd.f32 %v5065, %v5068
  %vm5070 = vweird.f32 %v5049
  %vm5071 = vweird.f32 %v5065
  %vm5072 = vmor %vm5070, %vm5071
  %v5073 = vsel %vm5072, %v5065, %v5069
  %v5074 = vand.u32 2147483647, %v5049
  %vm5075 = vcmp.eq.f32.partialorder %v5074, 8.507059e+37
  %v5076 = vand.u32 %v5049, 2147483648
  %v5077 = vor.u32 1.1754944e-38, %v5076
  %v5078 = vsel %vm5075, %v5077, %v5073
  %v5079 = vmul.f32 %v5043, %v5078
  %v5080 = vpack.c.bf16 %v5064, %v5064
  %v5081 = vpack.c.bf16 %v5079, %v5079
  %5082 = vrot.lane.b32.xlu0 %v4226, 72
  %v5083 = vpop.permute.xlu0 %5082
  %v5085 = vsel %vm207, %v5080, 0
  %v5088 = vsel %vm314, %v5083, 0
  %5090 = vmatpush.bf16.msra.mxu0 0
  %5091 = vmatpush.bf16.msra.mxu0 0
  %5092 = vmatpush.bf16.msra.mxu0 0
  %5093 = vmatpush.bf16.msra.mxu0 0
  %5094 = vmatpush.bf16.msra.mxu0 0
  %5095 = vmatpush.bf16.msra.mxu0 0
  %5096 = vmatpush.bf16.msra.mxu0 0
  %5097 = vmatpush.bf16.msra.mxu0 %v5088
  %5098 = vmatmul.bf16.gmra.mxu0 %v5085
  %v5099 = vpop.f32.mrf.mxu0
  %v5100 = vadd.f32 0.0, %v5099
  %v5101 = vpop.f32.mrf.mxu0
  %5102 = vdwg.mxu0
  %5103 = vrot.lane.b32.xlu0 %v4250, 72
  %v5104 = vpop.permute.xlu0 %5103
  %v5106 = vsel %vm207, %v5081, 0
  %v5109 = vsel %vm314, %v5104, 0
  %5111 = vmatpush.bf16.msra.mxu0 0
  %5112 = vmatpush.bf16.msra.mxu0 0
  %5113 = vmatpush.bf16.msra.mxu0 0
  %5114 = vmatpush.bf16.msra.mxu0 0
  %5115 = vmatpush.bf16.msra.mxu0 0
  %5116 = vmatpush.bf16.msra.mxu0 0
  %5117 = vmatpush.bf16.msra.mxu0 0
  %5118 = vmatpush.bf16.msra.mxu0 %v5109
  %5119 = vmatmul.bf16.gmra.mxu0 %v5106
  %v5120 = vpop.f32.mrf.mxu0
  %v5121 = vadd.f32 0.0, %v5120
  %v5122 = vpop.f32.mrf.mxu0
  %5123 = vdwg.mxu0
  %5126 = vrot.lane.b32.xlu0 %v4245, 8
  %v5127 = vpop.permute.xlu0 %5126
  %5128 = vrot.lane.b32.xlu0 %v4269, 8
  %v5129 = vpop.permute.xlu0 %5128
  %5134 = vrot.lane.b32.xlu0 %v4390, 16
  %v5135 = vpop.permute.xlu0 %5134
  %5136 = vrot.lane.b32.xlu0 %v4411, 16
  %v5137 = vpop.permute.xlu0 %5136
  %5142 = vrot.lane.b32.xlu0 %v4532, 24
  %v5143 = vpop.permute.xlu0 %5142
  %5144 = vrot.lane.b32.xlu0 %v4553, 24
  %v5145 = vpop.permute.xlu0 %5144
  %5150 = vrot.lane.b32.xlu0 %v4674, 32
  %v5151 = vpop.permute.xlu0 %5150
  %5152 = vrot.lane.b32.xlu0 %v4695, 32
  %v5153 = vpop.permute.xlu0 %5152
  %5158 = vrot.lane.b32.xlu0 %v4816, 40
  %v5159 = vpop.permute.xlu0 %5158
  %5160 = vrot.lane.b32.xlu0 %v4837, 40
  %v5161 = vpop.permute.xlu0 %5160
  %5166 = vrot.lane.b32.xlu0 %v4958, 48
  %v5167 = vpop.permute.xlu0 %5166
  %5168 = vrot.lane.b32.xlu0 %v4979, 48
  %v5169 = vpop.permute.xlu0 %5168
  %5174 = vrot.lane.b32.xlu0 %v5100, 56
  %v5175 = vpop.permute.xlu0 %5174
  %5176 = vrot.lane.b32.xlu0 %v5121, 56
  %v5177 = vpop.permute.xlu0 %5176
  %v5180 = vsel %vm207, %v4096, %v5127
  %v5181 = vsel %vm207, %v4115, %v5129
  %v5182 = vsel %vm1414, %v5180, %v5135
  %v5183 = vsel %vm1414, %v5181, %v5137
  %v5184 = vsel %vm1417, %v5182, %v5143
  %v5185 = vsel %vm1417, %v5183, %v5145
  %v5186 = vsel %vm1420, %v5184, %v5151
  %v5187 = vsel %vm1420, %v5185, %v5153
  %v5188 = vsel %vm1423, %v5186, %v5159
  %v5189 = vsel %vm1423, %v5187, %v5161
  %v5190 = vsel %vm1426, %v5188, %v5167
  %v5191 = vsel %vm1426, %v5189, %v5169
  %v5192 = vsel %vm1429, %v5190, %v5175
  %v5193 = vsel %vm1429, %v5191, %v5177
  %v5194 = vpack.c.bf16 %v5193, %v5192
  %s5195 = scalar_lea.vmem %s3, 64
  %v5196 = vld [vmem:[%s5195] sm:$0xf]
  %v5197 = vld [vmem:[%s5195 + $0x4] sm:$0xf]
  %v5198 = vld [vmem:[%s5195 + $0x8] sm:$0xf]
  %v5199 = vld [vmem:[%s5195 + $0xc] sm:$0xf]
  %v5200 = vld [vmem:[%s5195 + $0x10] sm:$0xf]
  %v5201 = vld [vmem:[%s5195 + $0x14] sm:$0xf]
  %v5202 = vld [vmem:[%s5195 + $0x18] sm:$0xf]
  %v5203 = vld [vmem:[%s5195 + $0x1c] sm:$0xf]
  %v5204 = vperm.slane %v3876, 3
  %v5213 = vunpack.c.l.b16 %v5196
  %v5214 = vunpack.c.l.b16 %v5197
  %v5215 = vunpack.c.l.b16 %v5198
  %v5216 = vunpack.c.l.b16 %v5199
  %v5217 = vunpack.c.l.b16 %v5200
  %v5218 = vunpack.c.l.b16 %v5201
  %v5219 = vunpack.c.l.b16 %v5202
  %v5220 = vunpack.c.l.b16 %v5203
  %v5221 = vpack.c.b16 %v5214, %v5213
  %v5222 = vpack.c.b16 %v5216, %v5215
  %v5223 = vpack.c.b16 %v5218, %v5217
  %v5224 = vpack.c.b16 %v5220, %v5219
  %v5230 = vsel %vm45, %v5194, 0
  %5232 = vmatpush.bf16.msra.mxu0 0
  %5233 = vmatpush.bf16.msra.mxu0 0
  %5234 = vmatpush.bf16.msra.mxu0 0
  %5235 = vmatpush.bf16.msra.mxu0 0
  %5236 = vmatpush.bf16.msra.mxu0 %v5224
  %5237 = vmatpush.bf16.msra.mxu0 %v5223
  %5238 = vmatpush.bf16.msra.mxu0 %v5222
  %5239 = vmatpush.bf16.msra.mxu0 %v5221
  %5240 = vmatmul.bf16.gmra.mxu0 %v5230
  %v5241 = vpop.f32.mrf.mxu0
  %v5242 = vadd.f32 %v5204, %v5241
  %v5243 = vpop.f32.mrf.mxu0
  %v5244 = vadd.f32 %v5204, %v5243
  %5245 = vdwg.mxu0
  %v5246 = vadd.f32 %v3873, %v5242
  %v5247 = vadd.f32 %v3874, %v5244
  %v5248 = vsel %vm45, %v5246, 0.0
  %5249 = vadd.xlane.f32.xlu0 %v5248
  %v5250 = vpop.xlane.xlu0 %5249
  %v5251 = vsel %vm45, %v5247, 0.0
  %5252 = vadd.xlane.f32.xlu0 %v5251
  %v5253 = vpop.xlane.xlu0 %5252
  %v5254 = vmul.f32 %v5250, %v58
  %v5255 = vmul.f32 %v5253, %v58
  %v5256 = vsub.f32 %v5246, %v5254
  %v5257 = vsub.f32 %v5247, %v5255
  %v5258 = vmul.f32 %v5256, %v5256
  %v5259 = vmul.f32 %v5257, %v5257
  %v5260 = vsel %vm45, %v5258, 0.0
  %5261 = vadd.xlane.f32.xlu0 %v5260
  %v5262 = vpop.xlane.xlu0 %5261
  %v5263 = vsel %vm45, %v5259, 0.0
  %5264 = vadd.xlane.f32.xlu0 %v5263
  %v5265 = vpop.xlane.xlu0 %5264
  %v5266 = vmul.f32 %v5262, %v58
  %v5267 = vmul.f32 %v5265, %v58
  %v5268 = vadd.f32 %v5266, 1e-12
  %v5269 = vadd.f32 %v5267, 1e-12
  %v5270 = vrsqrt.pop %v5268
  %v5271 = vmul.f32 %v5270, %v5268
  %v5272 = vmul.f32 %v5271, %v5270
  %v5273 = vmul.f32 0.5, %v5272
  %v5274 = vsub.f32 1.5, %v5273
  %v5275 = vmul.f32 %v5270, %v5274
  %vm5276 = vweird.f32 %v5268
  %vm5277 = vweird.f32 %v5270
  %vm5278 = vmor %vm5276, %vm5277
  %v5279 = vsel %vm5278, %v5270, %v5275
  %v5280 = vrsqrt.pop %v5269
  %v5281 = vmul.f32 %v5280, %v5269
  %v5282 = vmul.f32 %v5281, %v5280
  %v5283 = vmul.f32 0.5, %v5282
  %v5284 = vsub.f32 1.5, %v5283
  %v5285 = vmul.f32 %v5280, %v5284
  %vm5286 = vweird.f32 %v5269
  %vm5287 = vweird.f32 %v5280
  %vm5288 = vmor %vm5286, %vm5287
  %v5289 = vsel %vm5288, %v5280, %v5285
  %v5290 = vmul.f32 %v5256, %v5279
  %v5291 = vmul.f32 %v5257, %v5289
  %v5292 = vperm.slane %v3876, 4
  %v5293 = vmul.f32 %v5290, %v5292
  %v5294 = vmul.f32 %v5291, %v5292
  %v5295 = vperm.slane %v3876, 5
  %v5296 = vadd.f32 %v5293, %v5295
  %v5297 = vadd.f32 %v5294, %v5295
  %v5298 = vpack.c.bf16 %v5297, %v5296
  %s5299 = scalar_lea.vmem %s4, 128
  %v5300 = vld [vmem:[%s5299] sm:$0xff]
  %v5301 = vld [vmem:[%s5299 + $0x8] sm:$0xff]
  %v5302 = vld [vmem:[%s5299 + $0x10] sm:$0xff]
  %v5303 = vld [vmem:[%s5299 + $0x18] sm:$0xff]
  %v5304 = vld [vmem:[%s5299 + $0x20] sm:$0xff]
  %v5305 = vld [vmem:[%s5299 + $0x28] sm:$0xff]
  %v5306 = vld [vmem:[%s5299 + $0x30] sm:$0xff]
  %v5307 = vld [vmem:[%s5299 + $0x38] sm:$0xff]
  %s5308 = scalar_lea.vmem %s7, 4
  %v5309 = vld [vmem:[%s5308] sm:$0x3]
  %v5311 = vperm.slane %v5309, 0
  %v5312 = vperm.slane %v5309, 1
  %v5323 = vunpack.c.l.b16 %v5300
  %v5324 = vunpack.c.h.b16 %v5300
  %v5325 = vunpack.c.l.b16 %v5301
  %v5326 = vunpack.c.h.b16 %v5301
  %v5327 = vunpack.c.l.b16 %v5302
  %v5328 = vunpack.c.h.b16 %v5302
  %v5329 = vunpack.c.l.b16 %v5303
  %v5330 = vunpack.c.h.b16 %v5303
  %v5331 = vunpack.c.l.b16 %v5304
  %v5332 = vunpack.c.h.b16 %v5304
  %v5333 = vunpack.c.l.b16 %v5305
  %v5334 = vunpack.c.h.b16 %v5305
  %v5335 = vunpack.c.l.b16 %v5306
  %v5336 = vunpack.c.h.b16 %v5306
  %v5337 = vunpack.c.l.b16 %v5307
  %v5338 = vunpack.c.h.b16 %v5307
  %v5339 = vpack.c.b16 %v5325, %v5323
  %v5340 = vpack.c.b16 %v5326, %v5324
  %v5341 = vpack.c.b16 %v5329, %v5327
  %v5342 = vpack.c.b16 %v5330, %v5328
  %v5343 = vpack.c.b16 %v5333, %v5331
  %v5344 = vpack.c.b16 %v5334, %v5332
  %v5345 = vpack.c.b16 %v5337, %v5335
  %v5346 = vpack.c.b16 %v5338, %v5336
  %v5356 = vsel %vm45, %v5298, 0
  %5358 = vmatpush.bf16.msra.mxu0 0
  %5359 = vmatpush.bf16.msra.mxu0 0
  %5360 = vmatpush.bf16.msra.mxu0 0
  %5361 = vmatpush.bf16.msra.mxu0 0
  %5362 = vmatpush.bf16.msra.mxu0 %v5345
  %5363 = vmatpush.bf16.msra.mxu0 %v5343
  %5364 = vmatpush.bf16.msra.mxu0 %v5341
  %5365 = vmatpush.bf16.msra.mxu0 %v5339
  %5366 = vmatmul.bf16.gmra.mxu0 %v5356
  %v5367 = vpop.f32.mrf.mxu0
  %v5368 = vadd.f32 %v5311, %v5367
  %v5369 = vpop.f32.mrf.mxu0
  %v5370 = vadd.f32 %v5311, %v5369
  %5371 = vdwg.mxu0
  %5372 = vmatpush.bf16.msra.mxu0 0
  %5373 = vmatpush.bf16.msra.mxu0 0
  %5374 = vmatpush.bf16.msra.mxu0 0
  %5375 = vmatpush.bf16.msra.mxu0 0
  %5376 = vmatpush.bf16.msra.mxu0 %v5346
  %5377 = vmatpush.bf16.msra.mxu0 %v5344
  %5378 = vmatpush.bf16.msra.mxu0 %v5342
  %5379 = vmatpush.bf16.msra.mxu0 %v5340
  %5380 = vmatmul.bf16.gmra.mxu0 %v5356
  %v5381 = vpop.f32.mrf.mxu0
  %v5382 = vadd.f32 %v5312, %v5381
  %v5383 = vpop.f32.mrf.mxu0
  %v5384 = vadd.f32 %v5312, %v5383
  %5385 = vdwg.mxu0
  %v5386 = vmul.f32 %v5368, 0.70710677
  %v5387 = vmul.f32 %v5382, 0.70710677
  %v5388 = vmul.f32 %v5370, 0.70710677
  %v5389 = vmul.f32 %v5384, 0.70710677
  %v5390 = vand.u32 2147483647, %v5386
  %v5391 = vand.u32 2147483647, %v5387
  %v5392 = vand.u32 2147483647, %v5388
  %v5393 = vand.u32 2147483647, %v5389
  %v5394 = vmul.f32 %v5390, 0.3275911
  %v5395 = vmul.f32 %v5391, 0.3275911
  %v5396 = vmul.f32 %v5392, 0.3275911
  %v5397 = vmul.f32 %v5393, 0.3275911
  %v5398 = vadd.f32 %v5394, 1.0
  %v5399 = vadd.f32 %v5395, 1.0
  %v5400 = vadd.f32 %v5396, 1.0
  %v5401 = vadd.f32 %v5397, 1.0
  %v5402 = vrcp.pop %v5398
  %v5403 = vmul.f32 %v5398, %v5402
  %v5404 = vsub.f32 1.0, %v5403
  %v5405 = vmul.f32 %v5402, %v5404
  %v5406 = vadd.f32 %v5402, %v5405
  %vm5407 = vweird.f32 %v5398
  %vm5408 = vweird.f32 %v5402
  %vm5409 = vmor %vm5407, %vm5408
  %v5410 = vsel %vm5409, %v5402, %v5406
  %v5411 = vand.u32 2147483647, %v5398
  %vm5412 = vcmp.eq.f32.partialorder %v5411, 8.507059e+37
  %v5413 = vand.u32 %v5398, 2147483648
  %v5414 = vor.u32 1.1754944e-38, %v5413
  %v5415 = vsel %vm5412, %v5414, %v5410
  %v5416 = vmul.f32 1.0, %v5415
  %v5417 = vrcp.pop %v5399
  %v5418 = vmul.f32 %v5399, %v5417
  %v5419 = vsub.f32 1.0, %v5418
  %v5420 = vmul.f32 %v5417, %v5419
  %v5421 = vadd.f32 %v5417, %v5420
  %vm5422 = vweird.f32 %v5399
  %vm5423 = vweird.f32 %v5417
  %vm5424 = vmor %vm5422, %vm5423
  %v5425 = vsel %vm5424, %v5417, %v5421
  %v5426 = vand.u32 2147483647, %v5399
  %vm5427 = vcmp.eq.f32.partialorder %v5426, 8.507059e+37
  %v5428 = vand.u32 %v5399, 2147483648
  %v5429 = vor.u32 1.1754944e-38, %v5428
  %v5430 = vsel %vm5427, %v5429, %v5425
  %v5431 = vmul.f32 1.0, %v5430
  %v5432 = vrcp.pop %v5400
  %v5433 = vmul.f32 %v5400, %v5432
  %v5434 = vsub.f32 1.0, %v5433
  %v5435 = vmul.f32 %v5432, %v5434
  %v5436 = vadd.f32 %v5432, %v5435
  %vm5437 = vweird.f32 %v5400
  %vm5438 = vweird.f32 %v5432
  %vm5439 = vmor %vm5437, %vm5438
  %v5440 = vsel %vm5439, %v5432, %v5436
  %v5441 = vand.u32 2147483647, %v5400
  %vm5442 = vcmp.eq.f32.partialorder %v5441, 8.507059e+37
  %v5443 = vand.u32 %v5400, 2147483648
  %v5444 = vor.u32 1.1754944e-38, %v5443
  %v5445 = vsel %vm5442, %v5444, %v5440
  %v5446 = vmul.f32 1.0, %v5445
  %v5447 = vrcp.pop %v5401
  %v5448 = vmul.f32 %v5401, %v5447
  %v5449 = vsub.f32 1.0, %v5448
  %v5450 = vmul.f32 %v5447, %v5449
  %v5451 = vadd.f32 %v5447, %v5450
  %vm5452 = vweird.f32 %v5401
  %vm5453 = vweird.f32 %v5447
  %vm5454 = vmor %vm5452, %vm5453
  %v5455 = vsel %vm5454, %v5447, %v5451
  %v5456 = vand.u32 2147483647, %v5401
  %vm5457 = vcmp.eq.f32.partialorder %v5456, 8.507059e+37
  %v5458 = vand.u32 %v5401, 2147483648
  %v5459 = vor.u32 1.1754944e-38, %v5458
  %v5460 = vsel %vm5457, %v5459, %v5455
  %v5461 = vmul.f32 1.0, %v5460
  %v5462 = vmul.f32 %v5416, 1.0614054
  %v5463 = vmul.f32 %v5431, 1.0614054
  %v5464 = vmul.f32 %v5446, 1.0614054
  %v5465 = vmul.f32 %v5461, 1.0614054
  %v5466 = vadd.f32 %v5462, -1.4531521
  %v5467 = vadd.f32 %v5463, -1.4531521
  %v5468 = vadd.f32 %v5464, -1.4531521
  %v5469 = vadd.f32 %v5465, -1.4531521
  %v5470 = vmul.f32 %v5416, %v5466
  %v5471 = vmul.f32 %v5431, %v5467
  %v5472 = vmul.f32 %v5446, %v5468
  %v5473 = vmul.f32 %v5461, %v5469
  %v5474 = vadd.f32 %v5470, 1.4214138
  %v5475 = vadd.f32 %v5471, 1.4214138
  %v5476 = vadd.f32 %v5472, 1.4214138
  %v5477 = vadd.f32 %v5473, 1.4214138
  %v5478 = vmul.f32 %v5416, %v5474
  %v5479 = vmul.f32 %v5431, %v5475
  %v5480 = vmul.f32 %v5446, %v5476
  %v5481 = vmul.f32 %v5461, %v5477
  %v5482 = vadd.f32 %v5478, -0.28449672
  %v5483 = vadd.f32 %v5479, -0.28449672
  %v5484 = vadd.f32 %v5480, -0.28449672
  %v5485 = vadd.f32 %v5481, -0.28449672
  %v5486 = vmul.f32 %v5416, %v5482
  %v5487 = vmul.f32 %v5431, %v5483
  %v5488 = vmul.f32 %v5446, %v5484
  %v5489 = vmul.f32 %v5461, %v5485
  %v5490 = vadd.f32 %v5486, 0.2548296
  %v5491 = vadd.f32 %v5487, 0.2548296
  %v5492 = vadd.f32 %v5488, 0.2548296
  %v5493 = vadd.f32 %v5489, 0.2548296
  %v5494 = vmul.f32 %v5416, %v5490
  %v5495 = vmul.f32 %v5431, %v5491
  %v5496 = vmul.f32 %v5446, %v5492
  %v5497 = vmul.f32 %v5461, %v5493
  %v5498 = vsub.f32 0.0, %v5390
  %v5499 = vsub.f32 0.0, %v5391
  %v5500 = vsub.f32 0.0, %v5392
  %v5501 = vsub.f32 0.0, %v5393
  %v5502 = vmul.f32 %v5498, %v5390
  %v5503 = vmul.f32 %v5499, %v5391
  %v5504 = vmul.f32 %v5500, %v5392
  %v5505 = vmul.f32 %v5501, %v5393
  %v5506 = vmul.f32 %v5502, 1.442695
  %v5507 = vpow.pop %v5506
  %v5508 = vmul.f32 %v5503, 1.442695
  %v5509 = vpow.pop %v5508
  %v5510 = vmul.f32 %v5504, 1.442695
  %v5511 = vpow.pop %v5510
  %v5512 = vmul.f32 %v5505, 1.442695
  %v5513 = vpow.pop %v5512
  %v5514 = vmul.f32 %v5494, %v5507
  %v5515 = vmul.f32 %v5495, %v5509
  %v5516 = vmul.f32 %v5496, %v5511
  %v5517 = vmul.f32 %v5497, %v5513
  %v5518 = vsub.f32 1.0, %v5514
  %v5519 = vsub.f32 1.0, %v5515
  %v5520 = vsub.f32 1.0, %v5516
  %v5521 = vsub.f32 1.0, %v5517
  %vm5522 = vcmp.ge.f32.partialorder %v5386, 0.0
  %vm5523 = vcmp.ge.f32.partialorder %v5387, 0.0
  %vm5524 = vcmp.ge.f32.partialorder %v5388, 0.0
  %vm5525 = vcmp.ge.f32.partialorder %v5389, 0.0
  %v5526 = vsub.f32 0.0, %v5518
  %v5527 = vsub.f32 0.0, %v5519
  %v5528 = vsub.f32 0.0, %v5520
  %v5529 = vsub.f32 0.0, %v5521
  %v5530 = vsel %vm5522, %v5518, %v5526
  %v5531 = vsel %vm5523, %v5519, %v5527
  %v5532 = vsel %vm5524, %v5520, %v5528
  %v5533 = vsel %vm5525, %v5521, %v5529
  %v5534 = vmul.f32 %v5368, 0.5
  %v5535 = vmul.f32 %v5382, 0.5
  %v5536 = vmul.f32 %v5370, 0.5
  %v5537 = vmul.f32 %v5384, 0.5
  %v5538 = vadd.f32 %v5530, 1.0
  %v5539 = vadd.f32 %v5531, 1.0
  %v5540 = vadd.f32 %v5532, 1.0
  %v5541 = vadd.f32 %v5533, 1.0
  %v5542 = vmul.f32 %v5534, %v5538
  %v5543 = vmul.f32 %v5535, %v5539
  %v5544 = vmul.f32 %v5536, %v5540
  %v5545 = vmul.f32 %v5537, %v5541
  %v5546 = vpack.c.bf16 %v5544, %v5542
  %v5547 = vpack.c.bf16 %v5545, %v5543
  %s5548 = scalar_lea.vmem %s5, 256
  %v5549 = vld [vmem:[%s5548] sm:$0xf]
  %v5550 = vld [vmem:[%s5548 + $0x4] sm:$0xf]
  %v5551 = vld [vmem:[%s5548 + $0x8] sm:$0xf]
  %v5552 = vld [vmem:[%s5548 + $0xc] sm:$0xf]
  %v5553 = vld [vmem:[%s5548 + $0x10] sm:$0xf]
  %v5554 = vld [vmem:[%s5548 + $0x14] sm:$0xf]
  %v5555 = vld [vmem:[%s5548 + $0x18] sm:$0xf]
  %v5556 = vld [vmem:[%s5548 + $0x1c] sm:$0xf]
  %v5557 = vld [vmem:[%s5548 + $0x20] sm:$0xf]
  %v5558 = vld [vmem:[%s5548 + $0x24] sm:$0xf]
  %v5559 = vld [vmem:[%s5548 + $0x28] sm:$0xf]
  %v5560 = vld [vmem:[%s5548 + $0x2c] sm:$0xf]
  %v5561 = vld [vmem:[%s5548 + $0x30] sm:$0xf]
  %v5562 = vld [vmem:[%s5548 + $0x34] sm:$0xf]
  %v5563 = vld [vmem:[%s5548 + $0x38] sm:$0xf]
  %v5564 = vld [vmem:[%s5548 + $0x3c] sm:$0xf]
  %v5565 = vld [vmem:[%s5548 + $0x40] sm:$0xf]
  %v5566 = vld [vmem:[%s5548 + $0x44] sm:$0xf]
  %v5567 = vld [vmem:[%s5548 + $0x48] sm:$0xf]
  %v5568 = vld [vmem:[%s5548 + $0x4c] sm:$0xf]
  %v5569 = vld [vmem:[%s5548 + $0x50] sm:$0xf]
  %v5570 = vld [vmem:[%s5548 + $0x54] sm:$0xf]
  %v5571 = vld [vmem:[%s5548 + $0x58] sm:$0xf]
  %v5572 = vld [vmem:[%s5548 + $0x5c] sm:$0xf]
  %v5573 = vld [vmem:[%s5548 + $0x60] sm:$0xf]
  %v5574 = vld [vmem:[%s5548 + $0x64] sm:$0xf]
  %v5575 = vld [vmem:[%s5548 + $0x68] sm:$0xf]
  %v5576 = vld [vmem:[%s5548 + $0x6c] sm:$0xf]
  %v5577 = vld [vmem:[%s5548 + $0x70] sm:$0xf]
  %v5578 = vld [vmem:[%s5548 + $0x74] sm:$0xf]
  %v5579 = vld [vmem:[%s5548 + $0x78] sm:$0xf]
  %v5580 = vld [vmem:[%s5548 + $0x7c] sm:$0xf]
  %v5581 = vperm.slane %v3876, 6
  %v5614 = vunpack.c.l.b16 %v5549
  %v5615 = vunpack.c.l.b16 %v5550
  %v5616 = vunpack.c.l.b16 %v5551
  %v5617 = vunpack.c.l.b16 %v5552
  %v5618 = vunpack.c.l.b16 %v5553
  %v5619 = vunpack.c.l.b16 %v5554
  %v5620 = vunpack.c.l.b16 %v5555
  %v5621 = vunpack.c.l.b16 %v5556
  %v5622 = vunpack.c.l.b16 %v5557
  %v5623 = vunpack.c.l.b16 %v5558
  %v5624 = vunpack.c.l.b16 %v5559
  %v5625 = vunpack.c.l.b16 %v5560
  %v5626 = vunpack.c.l.b16 %v5561
  %v5627 = vunpack.c.l.b16 %v5562
  %v5628 = vunpack.c.l.b16 %v5563
  %v5629 = vunpack.c.l.b16 %v5564
  %v5630 = vunpack.c.l.b16 %v5565
  %v5631 = vunpack.c.l.b16 %v5566
  %v5632 = vunpack.c.l.b16 %v5567
  %v5633 = vunpack.c.l.b16 %v5568
  %v5634 = vunpack.c.l.b16 %v5569
  %v5635 = vunpack.c.l.b16 %v5570
  %v5636 = vunpack.c.l.b16 %v5571
  %v5637 = vunpack.c.l.b16 %v5572
  %v5638 = vunpack.c.l.b16 %v5573
  %v5639 = vunpack.c.l.b16 %v5574
  %v5640 = vunpack.c.l.b16 %v5575
  %v5641 = vunpack.c.l.b16 %v5576
  %v5642 = vunpack.c.l.b16 %v5577
  %v5643 = vunpack.c.l.b16 %v5578
  %v5644 = vunpack.c.l.b16 %v5579
  %v5645 = vunpack.c.l.b16 %v5580
  %v5646 = vpack.c.b16 %v5615, %v5614
  %v5647 = vpack.c.b16 %v5617, %v5616
  %v5648 = vpack.c.b16 %v5619, %v5618
  %v5649 = vpack.c.b16 %v5621, %v5620
  %v5650 = vpack.c.b16 %v5623, %v5622
  %v5651 = vpack.c.b16 %v5625, %v5624
  %v5652 = vpack.c.b16 %v5627, %v5626
  %v5653 = vpack.c.b16 %v5629, %v5628
  %v5654 = vpack.c.b16 %v5631, %v5630
  %v5655 = vpack.c.b16 %v5633, %v5632
  %v5656 = vpack.c.b16 %v5635, %v5634
  %v5657 = vpack.c.b16 %v5637, %v5636
  %v5658 = vpack.c.b16 %v5639, %v5638
  %v5659 = vpack.c.b16 %v5641, %v5640
  %v5660 = vpack.c.b16 %v5643, %v5642
  %v5661 = vpack.c.b16 %v5645, %v5644
  %5678 = vmatpush.bf16.msra.mxu0 %v5653
  %5679 = vmatpush.bf16.msra.mxu0 %v5652
  %5680 = vmatpush.bf16.msra.mxu0 %v5651
  %5681 = vmatpush.bf16.msra.mxu0 %v5650
  %5682 = vmatpush.bf16.msra.mxu0 %v5649
  %5683 = vmatpush.bf16.msra.mxu0 %v5648
  %5684 = vmatpush.bf16.msra.mxu0 %v5647
  %5685 = vmatpush.bf16.msra.mxu0 %v5646
  %5686 = vmatmul.bf16.gmra.mxu0 %v5546
  %v5687 = vpop.f32.mrf.mxu0
  %v5688 = vadd.f32 %v5581, %v5687
  %v5689 = vpop.f32.mrf.mxu0
  %v5690 = vadd.f32 %v5581, %v5689
  %5691 = vdwg.mxu0
  %5692 = vmatpush.bf16.msra.mxu0 %v5661
  %5693 = vmatpush.bf16.msra.mxu0 %v5660
  %5694 = vmatpush.bf16.msra.mxu0 %v5659
  %5695 = vmatpush.bf16.msra.mxu0 %v5658
  %5696 = vmatpush.bf16.msra.mxu0 %v5657
  %5697 = vmatpush.bf16.msra.mxu0 %v5656
  %5698 = vmatpush.bf16.msra.mxu0 %v5655
  %5699 = vmatpush.bf16.msra.mxu0 %v5654
  %5700 = vmatmul.bf16.gmra.mxu0 %v5547
  %v5701 = vpop.f32.mrf.mxu0
  %v5702 = vadd.f32 %v5688, %v5701
  %v5703 = vpop.f32.mrf.mxu0
  %v5704 = vadd.f32 %v5690, %v5703
  %5705 = vdwg.mxu0
  %v5706 = vadd.f32 %v5296, %v5702
  %v5707 = vadd.f32 %v5297, %v5704
  %v5708 = vsel %vm45, %v5706, 0.0
  %5709 = vadd.xlane.f32.xlu0 %v5708
  %v5710 = vpop.xlane.xlu0 %5709
  %v5711 = vsel %vm45, %v5707, 0.0
  %5712 = vadd.xlane.f32.xlu0 %v5711
  %v5713 = vpop.xlane.xlu0 %5712
  %v5714 = vmul.f32 %v5710, %v58
  %v5715 = vmul.f32 %v5713, %v58
  %v5716 = vsub.f32 %v5706, %v5714
  %v5717 = vsub.f32 %v5707, %v5715
  %v5718 = vmul.f32 %v5716, %v5716
  %v5719 = vmul.f32 %v5717, %v5717
  %v5720 = vsel %vm45, %v5718, 0.0
  %5721 = vadd.xlane.f32.xlu0 %v5720
  %v5722 = vpop.xlane.xlu0 %5721
  %v5723 = vsel %vm45, %v5719, 0.0
  %5724 = vadd.xlane.f32.xlu0 %v5723
  %v5725 = vpop.xlane.xlu0 %5724
  %v5726 = vmul.f32 %v5722, %v58
  %v5727 = vmul.f32 %v5725, %v58
  %v5728 = vadd.f32 %v5726, 1e-12
  %v5729 = vadd.f32 %v5727, 1e-12
  %v5730 = vrsqrt.pop %v5728
  %v5731 = vmul.f32 %v5730, %v5728
  %v5732 = vmul.f32 %v5731, %v5730
  %v5733 = vmul.f32 0.5, %v5732
  %v5734 = vsub.f32 1.5, %v5733
  %v5735 = vmul.f32 %v5730, %v5734
  %vm5736 = vweird.f32 %v5728
  %vm5737 = vweird.f32 %v5730
  %vm5738 = vmor %vm5736, %vm5737
  %v5739 = vsel %vm5738, %v5730, %v5735
  %v5740 = vrsqrt.pop %v5729
  %v5741 = vmul.f32 %v5740, %v5729
  %v5742 = vmul.f32 %v5741, %v5740
  %v5743 = vmul.f32 0.5, %v5742
  %v5744 = vsub.f32 1.5, %v5743
  %v5745 = vmul.f32 %v5740, %v5744
  %vm5746 = vweird.f32 %v5729
  %vm5747 = vweird.f32 %v5740
  %vm5748 = vmor %vm5746, %vm5747
  %v5749 = vsel %vm5748, %v5740, %v5745
  %v5750 = vmul.f32 %v5716, %v5739
  %v5751 = vmul.f32 %v5717, %v5749
  %v5752 = vperm.slane %v3876, 7
  %v5753 = vmul.f32 %v5750, %v5752
  %v5754 = vmul.f32 %v5751, %v5752
  %v5755 = vperm.slane %v3877, 0
  %v5756 = vadd.f32 %v5753, %v5755
  %v5757 = vadd.f32 %v5754, %v5755
  %vm5758 = vcmask 58368
  %v5759 = vsel %vm5758, %v36, 0.0
  %5760 = vadd.xlane.f32.xlu0 %v5759
  %v5761 = vpop.xlane.xlu0 %5760
  %v5762 = vmax.f32 %v5761, 1.0
  %v5763 = vrcp.pop %v5762
  %v5764 = vmul.f32 %v5762, %v5763
  %v5765 = vsub.f32 1.0, %v5764
  %v5766 = vmul.f32 %v5763, %v5765
  %v5767 = vadd.f32 %v5763, %v5766
  %vm5768 = vweird.f32 %v5762
  %vm5769 = vweird.f32 %v5763
  %vm5770 = vmor %vm5768, %vm5769
  %v5771 = vsel %vm5770, %v5763, %v5767
  %v5772 = vand.u32 2147483647, %v5762
  %vm5773 = vcmp.eq.f32.partialorder %v5772, 8.507059e+37
  %v5774 = vand.u32 %v5762, 2147483648
  %v5775 = vor.u32 1.1754944e-38, %v5774
  %v5776 = vsel %vm5773, %v5775, %v5771
  %v5777 = vmul.f32 %v36, %v5776
  %v5778 = vperm.slane %v5777, 0
  %v5779 = vlaneseq
  %v5780 = vshrl.u32 %v5779, 7
  %5782 = vset.pattern.permute.xlu0 %v5780
  %5783 = vperm.xlu0 %5782, %v5778
  %v5784 = vpop.permute.xlu0 %5783
  %v5785 = vperm.slane %v5777, 1
  %v5786 = vlaneseq
  %v5787 = vshrl.u32 %v5786, 7
  %5789 = vset.pattern.permute.xlu0 %v5787
  %5790 = vperm.xlu0 %5789, %v5785
  %v5791 = vpop.permute.xlu0 %5790
  %v5792 = vmul.f32 %v5756, %v5784
  %v5793 = vmul.f32 %v5757, %v5791
  %v5794 = vsel %vm45, %v5792, 0.0
  %v5795 = vrot.slane %v5794, 4
  %v5796 = vadd.f32 %v5794, %v5795
  %v5797 = vrot.slane %v5796, 2
  %v5798 = vadd.f32 %v5796, %v5797
  %v5799 = vrot.slane %v5798, 1
  %v5800 = vadd.f32 %v5798, %v5799
  %v5801 = vsel %vm45, %v5793, 0.0
  %v5802 = vrot.slane %v5801, 4
  %v5803 = vadd.f32 %v5801, %v5802
  %v5804 = vrot.slane %v5803, 2
  %v5805 = vadd.f32 %v5803, %v5804
  %v5806 = vrot.slane %v5805, 1
  %v5807 = vadd.f32 %v5805, %v5806
  %v5808 = vpack.c.bf16 %v5800, %v5800
  %v5809 = vpack.c.bf16 %v5807, %v5807
  %v5810 = vld [vmem:[%s8] sm:$0xf]
  %v5811 = vld [vmem:[%s8 + $0x4] sm:$0xf]
  %v5812 = vld [vmem:[%s8 + $0x8] sm:$0xf]
  %v5813 = vld [vmem:[%s8 + $0xc] sm:$0xf]
  %v5814 = vld [vmem:[%s8 + $0x10] sm:$0xf]
  %v5815 = vld [vmem:[%s8 + $0x14] sm:$0xf]
  %v5816 = vld [vmem:[%s8 + $0x18] sm:$0xf]
  %v5817 = vld [vmem:[%s8 + $0x1c] sm:$0xf]
  %v5818 = vld [vmem:[%s9 + $0x2] sm:$0x1]
  %v5819 = vperm.slane %v5818, 0
  %v5822 = vunpack.c.l.b16 %v5808
  %v5823 = vunpack.c.l.b16 %v5809
  %vm5824 = vcmask 1041409
  %v5825 = vsel %vm5824, %v5823, %v5822
  %v5826 = vpack.c.b16 %v5825, %v5825
  %v5835 = vunpack.c.l.b16 %v5810
  %v5836 = vunpack.c.l.b16 %v5811
  %v5837 = vunpack.c.l.b16 %v5812
  %v5838 = vunpack.c.l.b16 %v5813
  %v5839 = vunpack.c.l.b16 %v5814
  %v5840 = vunpack.c.l.b16 %v5815
  %v5841 = vunpack.c.l.b16 %v5816
  %v5842 = vunpack.c.l.b16 %v5817
  %v5843 = vpack.c.b16 %v5836, %v5835
  %v5844 = vpack.c.b16 %v5838, %v5837
  %v5845 = vpack.c.b16 %v5840, %v5839
  %v5846 = vpack.c.b16 %v5842, %v5841
  %v5852 = vsel %vm45, %v5826, 0
  %5854 = vmatpush.bf16.msra.mxu0 0
  %5855 = vmatpush.bf16.msra.mxu0 0
  %5856 = vmatpush.bf16.msra.mxu0 0
  %5857 = vmatpush.bf16.msra.mxu0 0
  %5858 = vmatpush.bf16.msra.mxu0 %v5846
  %5859 = vmatpush.bf16.msra.mxu0 %v5845
  %5860 = vmatpush.bf16.msra.mxu0 %v5844
  %5861 = vmatpush.bf16.msra.mxu0 %v5843
  %5862 = vmatmul.bf16.gmra.mxu0 %v5852
  %v5863 = vpop.f32.mrf.mxu0
  %v5864 = vadd.f32 %v5819, %v5863
  %v5865 = vpop.f32.mrf.mxu0
  %5866 = vdwg.mxu0
  %v5867 = vmul.f32 %v5864, 0.70710677
  %v5868 = vand.u32 2147483647, %v5867
  %v5869 = vmul.f32 %v5868, 0.3275911
  %v5870 = vadd.f32 %v5869, 1.0
  %v5871 = vrcp.pop %v5870
  %v5872 = vmul.f32 %v5870, %v5871
  %v5873 = vsub.f32 1.0, %v5872
  %v5874 = vmul.f32 %v5871, %v5873
  %v5875 = vadd.f32 %v5871, %v5874
  %vm5876 = vweird.f32 %v5870
  %vm5877 = vweird.f32 %v5871
  %vm5878 = vmor %vm5876, %vm5877
  %v5879 = vsel %vm5878, %v5871, %v5875
  %v5880 = vand.u32 2147483647, %v5870
  %vm5881 = vcmp.eq.f32.partialorder %v5880, 8.507059e+37
  %v5882 = vand.u32 %v5870, 2147483648
  %v5883 = vor.u32 1.1754944e-38, %v5882
  %v5884 = vsel %vm5881, %v5883, %v5879
  %v5885 = vmul.f32 1.0, %v5884
  %v5886 = vmul.f32 %v5885, 1.0614054
  %v5887 = vadd.f32 %v5886, -1.4531521
  %v5888 = vmul.f32 %v5885, %v5887
  %v5889 = vadd.f32 %v5888, 1.4214138
  %v5890 = vmul.f32 %v5885, %v5889
  %v5891 = vadd.f32 %v5890, -0.28449672
  %v5892 = vmul.f32 %v5885, %v5891
  %v5893 = vadd.f32 %v5892, 0.2548296
  %v5894 = vmul.f32 %v5885, %v5893
  %v5895 = vsub.f32 0.0, %v5868
  %v5896 = vmul.f32 %v5895, %v5868
  %v5897 = vmul.f32 %v5896, 1.442695
  %v5898 = vpow.pop %v5897
  %v5899 = vmul.f32 %v5894, %v5898
  %v5900 = vsub.f32 1.0, %v5899
  %vm5901 = vcmp.ge.f32.partialorder %v5867, 0.0
  %v5902 = vsub.f32 0.0, %v5900
  %v5903 = vsel %vm5901, %v5900, %v5902
  %v5904 = vmul.f32 %v5864, 0.5
  %v5905 = vadd.f32 %v5903, 1.0
  %v5906 = vmul.f32 %v5904, %v5905
  %v5907 = vpack.c.bf16 %v5906, %v5906
  %s5908 = scalar_lea.vmem %s8, 32
  %v5909 = vld [vmem:[%s5908] sm:$0xf]
  %v5910 = vld [vmem:[%s5908 + $0x4] sm:$0xf]
  %v5911 = vld [vmem:[%s5908 + $0x8] sm:$0xf]
  %v5912 = vld [vmem:[%s5908 + $0xc] sm:$0xf]
  %v5913 = vld [vmem:[%s5908 + $0x10] sm:$0xf]
  %v5914 = vld [vmem:[%s5908 + $0x14] sm:$0xf]
  %v5915 = vld [vmem:[%s5908 + $0x18] sm:$0xf]
  %v5916 = vld [vmem:[%s5908 + $0x1c] sm:$0xf]
  %v5917 = vld [vmem:[%s9 + $0x3] sm:$0x1]
  %v5918 = vperm.slane %v5917, 0
  %v5927 = vunpack.c.l.b16 %v5909
  %v5928 = vunpack.c.l.b16 %v5910
  %v5929 = vunpack.c.l.b16 %v5911
  %v5930 = vunpack.c.l.b16 %v5912
  %v5931 = vunpack.c.l.b16 %v5913
  %v5932 = vunpack.c.l.b16 %v5914
  %v5933 = vunpack.c.l.b16 %v5915
  %v5934 = vunpack.c.l.b16 %v5916
  %v5935 = vpack.c.b16 %v5928, %v5927
  %v5936 = vpack.c.b16 %v5930, %v5929
  %v5937 = vpack.c.b16 %v5932, %v5931
  %v5938 = vpack.c.b16 %v5934, %v5933
  %v5944 = vsel %vm45, %v5907, 0
  %5946 = vmatpush.bf16.msra.mxu0 0
  %5947 = vmatpush.bf16.msra.mxu0 0
  %5948 = vmatpush.bf16.msra.mxu0 0
  %5949 = vmatpush.bf16.msra.mxu0 0
  %5950 = vmatpush.bf16.msra.mxu0 %v5938
  %5951 = vmatpush.bf16.msra.mxu0 %v5937
  %5952 = vmatpush.bf16.msra.mxu0 %v5936
  %5953 = vmatpush.bf16.msra.mxu0 %v5935
  %5954 = vmatmul.bf16.gmra.mxu0 %v5944
  %v5955 = vpop.f32.mrf.mxu0
  %v5956 = vadd.f32 %v5918, %v5955
  %v5957 = vpop.f32.mrf.mxu0
  %5958 = vdwg.mxu0
  %v5959 = vmul.f32 %v5956, 0.70710677
  %v5960 = vand.u32 2147483647, %v5959
  %v5961 = vmul.f32 %v5960, 0.3275911
  %v5962 = vadd.f32 %v5961, 1.0
  %v5963 = vrcp.pop %v5962
  %v5964 = vmul.f32 %v5962, %v5963
  %v5965 = vsub.f32 1.0, %v5964
  %v5966 = vmul.f32 %v5963, %v5965
  %v5967 = vadd.f32 %v5963, %v5966
  %vm5968 = vweird.f32 %v5962
  %vm5969 = vweird.f32 %v5963
  %vm5970 = vmor %vm5968, %vm5969
  %v5971 = vsel %vm5970, %v5963, %v5967
  %v5972 = vand.u32 2147483647, %v5962
  %vm5973 = vcmp.eq.f32.partialorder %v5972, 8.507059e+37
  %v5974 = vand.u32 %v5962, 2147483648
  %v5975 = vor.u32 1.1754944e-38, %v5974
  %v5976 = vsel %vm5973, %v5975, %v5971
  %v5977 = vmul.f32 1.0, %v5976
  %v5978 = vmul.f32 %v5977, 1.0614054
  %v5979 = vadd.f32 %v5978, -1.4531521
  %v5980 = vmul.f32 %v5977, %v5979
  %v5981 = vadd.f32 %v5980, 1.4214138
  %v5982 = vmul.f32 %v5977, %v5981
  %v5983 = vadd.f32 %v5982, -0.28449672
  %v5984 = vmul.f32 %v5977, %v5983
  %v5985 = vadd.f32 %v5984, 0.2548296
  %v5986 = vmul.f32 %v5977, %v5985
  %v5987 = vsub.f32 0.0, %v5960
  %v5988 = vmul.f32 %v5987, %v5960
  %v5989 = vmul.f32 %v5988, 1.442695
  %v5990 = vpow.pop %v5989
  %v5991 = vmul.f32 %v5986, %v5990
  %v5992 = vsub.f32 1.0, %v5991
  %vm5993 = vcmp.ge.f32.partialorder %v5959, 0.0
  %v5994 = vsub.f32 0.0, %v5992
  %v5995 = vsel %vm5993, %v5992, %v5994
  %v5996 = vmul.f32 %v5956, 0.5
  %v5997 = vadd.f32 %v5995, 1.0
  %v5998 = vmul.f32 %v5996, %v5997
  %v5999 = vld [vmem:[%s9 + $0x4] sm:$0x1]
  %v6000 = vperm.slane %v5999, 0
  %v6001 = vmul.f32 %v5998, %v6000
  %vm6002 = vcmask 517120
  %v6003 = vsel %vm6002, %v6001, 0.0
  %6004 = vadd.xlane.f32.xlu0 %v6003
  %v6005 = vpop.xlane.xlu0 %6004
  %v6006 = vld [vmem:[%s9 + $0x5] sm:$0x1]
  %v6007 = vperm.slane %v6006, 0
  %v6008 = vadd.f32 %v6005, %v6007
  %vm6009 = vcmask 1024
  %6010 = vst.msk [vmem:[%s10] sm:$0x3] %vm6009, %v6008
  // Predicated region
  $region42: #{tpu_custom_call.1} parent=0 // pred_check
    _
  $region43: #{tpu_custom_call.1} parent=0 // pred_check_branch
    %6012 = sbr.rel (0) target = $region45
  $region44: #{tpu_custom_call.1} parent=0 // pred_region
    _
  $region45: #{tpu_custom_call.1} parent=0 // pred_fallthru
    _
  // Predicated region
  $region46: #{tpu_custom_call.1} parent=0 // pred_check
    _
  $region47: #{tpu_custom_call.1} parent=0 // pred_check_branch
    %6014 = sbr.rel (0) target = $region49
  $region48: #{tpu_custom_call.1} parent=0 // pred_region
    _
  $region49: #{tpu_custom_call.1} parent=0 // pred_fallthru
    _

</llo_original>
